<compile_context>
chip_gen: v6e
topology: v6e:2x2x1
jax: 0.10.0
libtpu: 0.0.40
codegen_flags: <defaults>
</compile_context>

<pallas_src>
import functools

import jax
import jax.numpy as jnp
from jax.experimental import pallas as pl
from jax.experimental.pallas import tpu as pltpu

# Explicit scoped-VMEM budget: safe on v5e/v6e (128 MiB) and v7x (64 MiB phys).
_VMEM_LIMIT = 32 * 1024 * 1024


def _round_up(x, m):
    return ((x + m - 1) // m) * m


# ---------------------------------------------------------------------------
# Fused conv3x3 (pad 1, stride 1) + bias + ReLU + 2x2/stride-2 max-pool kernel
# ---------------------------------------------------------------------------
def _conv3x3_relu_pool_kernel(x_ref, w_ref, b_ref, o_ref, *, H, W):
    """One batch item per grid step.

    x_ref : (1, H+2, W+2, Cin)    bf16  halo-padded input
    w_ref : (9, Cin, Cout)        bf16  3x3 taps ordered di*3+dj
    b_ref : (1, Cout)             f32
    o_ref : (1, H//2, W//2, Cout) bf16  conv+ReLU+pooled output
    """
    cout = w_ref.shape[-1]
    x = x_ref[0]                                        # (H+2, W+2, Cin)
    acc = jnp.zeros((H * W, cout), jnp.float32)
    # In-VMEM im2col: 9 shifted windows accumulated on the MXU (f32 acc).
    for idx in range(9):
        di, dj = idx // 3, idx % 3
        patch = x[di:di + H, dj:dj + W, :].reshape(H * W, -1)   # bf16
        acc = acc + jnp.dot(patch, w_ref[idx],
                            preferred_element_type=jnp.float32)
    y = jnp.maximum(acc + b_ref[...], 0.0)              # (H*W, Cout) f32
    # Fused 2x2 max-pool in the store path (no HBM round trip, no extra launch).
    y = y.reshape(H * W // 2, 2, cout)                  # pair columns (w, w+1)
    y = jnp.maximum(y[:, 0, :], y[:, 1, :])             # (H*W//2, Cout)
    y = y.reshape(H // 2, 2, W // 2, cout)              # pair rows (h, h+1)
    y = jnp.maximum(y[:, 0], y[:, 1])                   # (H//2, W//2, Cout)
    o_ref[0] = y.astype(o_ref.dtype)


def conv3x3_relu_pool(x_nhwc, w9, bias):
    """x_nhwc: (B, H, W, Cin) -> (B, H//2, W//2, Cout) bf16."""
    B, H, W, cin = x_nhwc.shape
    assert H % 2 == 0 and W % 2 == 0
    cout = w9.shape[-1]
    xp = jnp.pad(x_nhwc, ((0, 0), (1, 1), (1, 1), (0, 0))).astype(jnp.bfloat16)
    # TODO(synk): for large images add a second (row-tile + halo) grid axis so
    # per-step M stays in the 256-1024 range; H*W already is at these sizes.
    return pl.pallas_call(
        functools.partial(_conv3x3_relu_pool_kernel, H=H, W=W),
        out_shape=jax.ShapeDtypeStruct((B, H // 2, W // 2, cout), jnp.bfloat16),
        grid=(B,),
        in_specs=[
            pl.BlockSpec((1, H + 2, W + 2, cin), lambda b: (b, 0, 0, 0)),
            pl.BlockSpec((9, cin, cout), lambda b: (0, 0, 0)),
            pl.BlockSpec((1, cout), lambda b: (0, 0)),
        ],
        out_specs=pl.BlockSpec((1, H // 2, W // 2, cout), lambda b: (b, 0, 0, 0)),
        compiler_params=pltpu.CompilerParams(
            dimension_semantics=("parallel",),
            vmem_limit_bytes=_VMEM_LIMIT),
    )(xp, w9, jnp.reshape(bias, (1, cout)).astype(jnp.float32))


# ---------------------------------------------------------------------------
# Fused RPN head kernel: shared 3x3 conv + ReLU + packed 1x1 heads (lane-dense)
# ---------------------------------------------------------------------------
def _rpn_head_kernel(x_ref, wr_ref, br_ref, wh_ref, bh_ref, o_ref, *, Hf, Wf):
    """x_ref: (1, Hf+2, Wf+2, C) bf16; o_ref: (1, Hf*Wf, 128) f32."""
    C = wr_ref.shape[-1]
    M = Hf * Wf
    x = x_ref[0]
    acc = jnp.zeros((M, C), jnp.float32)
    for idx in range(9):
        di, dj = idx // 3, idx % 3
        patch = x[di:di + Hf, dj:dj + Wf, :].reshape(M, -1)
        acc = acc + jnp.dot(patch, wr_ref[idx],
                            preferred_element_type=jnp.float32)
    h = jnp.maximum(acc + br_ref[...], 0.0)             # stays resident in VMEM
    # objectness (A cols) + box deltas (4A cols) packed into one 128-lane matmul;
    # padding columns are zero and sliced off in the wrapper.
    out = jnp.dot(h.astype(jnp.bfloat16), wh_ref[...],
                  preferred_element_type=jnp.float32) + bh_ref[...]
    o_ref[0] = out


# ---------------------------------------------------------------------------
# RPN loss kernel: BCE-with-logits (objectness) + smooth-L1 (deltas), lane-dense
# ---------------------------------------------------------------------------
def _rpn_loss_kernel(z_ref, t_ref, cw_ref, pd_ref, td_ref, bw_ref, o_ref, *,
                     conf_w, bbox_w):
    z = z_ref[...]           # (B, Lc) logits (zero-padded)
    t = t_ref[...]           # (B, Lc) {0,1} targets
    cw = cw_ref[...]         # (B, Lc) classification weights (0 on padding)
    bce = jnp.maximum(z, 0.0) - z * t + jnp.log1p(jnp.exp(-jnp.abs(z)))
    n_cls = jnp.maximum(jnp.sum(cw), 1.0)
    conf_loss = jnp.sum(bce * cw) / n_cls

    d = pd_ref[...] - td_ref[...]                        # (B, Lb)
    ad = jnp.abs(d)
    sl1 = jnp.where(ad < 1.0, 0.5 * d * d, ad - 0.5)
    bw = bw_ref[...]                                     # positive mask x4 (0 on padding)
    n_pos = jnp.maximum(0.25 * jnp.sum(bw), 1.0)         # bw broadcast over 4 delta cols
    bbox_loss = jnp.sum(sl1 * bw) / n_pos

    o_ref[...] = jnp.reshape(conf_w * conf_loss + bbox_w * bbox_loss, (1, 1))
    # TODO(synk): for large B*H*W*A, grid this reduction over M with a scratch
    # accumulator + pl.when init/finalize instead of a single block.


# ---------------------------------------------------------------------------
# Plain-JAX glue: anchors, IoU assignment (tiny, data-dependent)
# ---------------------------------------------------------------------------
def generate_anchors(fm_hw, img_hw, scales, ratios):
    Hf, Wf = fm_hw
    img_h, img_w = img_hw
    sy = img_h / Hf
    sx = img_w / Wf
    cy = (jnp.arange(Hf, dtype=jnp.float32) + 0.5) * sy
    cx = (jnp.arange(Wf, dtype=jnp.float32) + 0.5) * sx
    sc = jnp.asarray(scales, jnp.float32)
    rt = jnp.asarray(ratios, jnp.float32)
    ws = (sc[:, None] * sx / jnp.sqrt(rt)[None, :]).reshape(-1)   # (A,)
    hs = (sc[:, None] * sy * jnp.sqrt(rt)[None, :]).reshape(-1)
    A = ws.shape[0]
    cyg, cxg = jnp.meshgrid(cy, cx, indexing="ij")                # (Hf,Wf)
    centers = jnp.stack([cxg, cyg], axis=-1)                      # (Hf,Wf,2)
    cwh = jnp.concatenate(
        [jnp.broadcast_to(centers[:, :, None, :], (Hf, Wf, A, 2)),
         jnp.broadcast_to(jnp.stack([ws, hs], -1)[None, None], (Hf, Wf, A, 2))],
        axis=-1).reshape(-1, 4)                                   # (Hf*Wf*A,4) cx,cy,w,h
    xyxy = jnp.concatenate([cwh[:, :2] - cwh[:, 2:] * 0.5,
                            cwh[:, :2] + cwh[:, 2:] * 0.5], axis=-1)
    return cwh, xyxy


def _iou(anc_xyxy, gt_xyxy):
    ax1, ay1, ax2, ay2 = (anc_xyxy[:, k] for k in range(4))
    gx1, gy1, gx2, gy2 = (gt_xyxy[:, k] for k in range(4))
    ix1 = jnp.maximum(ax1[:, None], gx1[None, :])
    iy1 = jnp.maximum(ay1[:, None], gy1[None, :])
    ix2 = jnp.minimum(ax2[:, None], gx2[None, :])
    iy2 = jnp.minimum(ay2[:, None], gy2[None, :])
    inter = jnp.clip(ix2 - ix1, 0.0) * jnp.clip(iy2 - iy1, 0.0)
    area_a = (ax2 - ax1) * (ay2 - ay1)
    area_g = (gx2 - gx1) * (gy2 - gy1)
    union = area_a[:, None] + area_g[None, :] - inter
    return inter / jnp.maximum(union, 1e-8)


def _assign(anc_cwh, anc_xyxy, gt_boxes, gt_scores, pos_t, neg_t):
    valid = gt_scores > 0.0                                 # (G,)
    ious = _iou(anc_xyxy, gt_boxes)                         # (A,G)
    ious = jnp.where(valid[None, :], ious, -1.0)
    max_iou = ious.max(axis=1)
    arg_gt = ious.argmax(axis=1)
    best_per_gt = ious.argmax(axis=0)                       # (G,)
    A = anc_xyxy.shape[0]
    pos_best = jnp.zeros((A,), bool).at[best_per_gt].set(valid)
    pos = (max_iou >= pos_t) | pos_best
    neg = (max_iou < neg_t) & (~pos)
    cls_target = pos.astype(jnp.float32)
    cls_weight = (pos | neg).astype(jnp.float32)
    box_weight = pos.astype(jnp.float32)

    matched = gt_boxes[arg_gt]                              # (A,4) xyxy
    gcx = (matched[:, 0] + matched[:, 2]) * 0.5
    gcy = (matched[:, 1] + matched[:, 3]) * 0.5
    gw = jnp.maximum(matched[:, 2] - matched[:, 0], 1e-6)
    gh = jnp.maximum(matched[:, 3] - matched[:, 1], 1e-6)
    acx, acy, aw, ah = (anc_cwh[:, k] for k in range(4))
    tgt = jnp.stack([(gcx - acx) / aw,
                     (gcy - acy) / ah,
                     jnp.log(gw / aw),
                     jnp.log(gh / ah)], axis=-1)
    return cls_target, cls_weight, box_weight, tgt


# ---------------------------------------------------------------------------
# Detector
# ---------------------------------------------------------------------------
class OneStageDetectorPallas:
    def __init__(self, img_size, conf_score_weight=1, bbox_weight=10,
                 pos_anchor_thresh=0.7, neg_anchor_thresh=0.3, anc_ratio=0.5,
                 anchor_scales=(1, 2, 3), anchor_ratios=(0.5, 1, 1.5),
                 stride=1, device=None):
        del anc_ratio, stride, device  # kept for signature fidelity
        self.img_d, self.img_w, self.img_h = img_size
        self.conf_score_weight = float(conf_score_weight)
        self.bbox_weight = float(bbox_weight)
        self.pos_t = float(pos_anchor_thresh)
        self.neg_t = float(neg_anchor_thresh)
        self.num_anchors = len(anchor_scales) * len(anchor_ratios)

        # backbone: conv3x3(d->32)+ReLU+pool2 -> conv3x3(32->64)+ReLU+pool2
        c1, c2 = 32, 64
        self.fm_in_channels = c2
        self.fm_h = self.img_h // 4
        self.fm_w = self.img_w // 4

        k = jax.random.PRNGKey(42)
        ks = jax.random.split(k, 5)
        s = 0.1
        A = self.num_anchors
        # conv weights stored as (9, Cin, Cout) bf16 (MXU-native), biases f32
        self.w1 = (jax.random.normal(ks[0], (9, self.img_d, c1), jnp.float32) * s
                   ).astype(jnp.bfloat16)
        self.b1 = jnp.zeros((c1,), jnp.float32)
        self.w2 = (jax.random.normal(ks[1], (9, c1, c2), jnp.float32) * s
                   ).astype(jnp.bfloat16)
        self.b2 = jnp.zeros((c2,), jnp.float32)
        # RPN shared 3x3 head
        self.wr = (jax.random.normal(ks[2], (9, c2, c2), jnp.float32) * s
                   ).astype(jnp.bfloat16)
        self.br = jnp.zeros((c2,), jnp.float32)
        # objectness + box-delta 1x1 heads packed into one lane-dense (C,128) weight:
        # cols [0:A) = conf logits, cols [A:5A) = deltas (anchor-major [A,4]), rest 0.
        wc = jax.random.normal(ks[3], (c2, A), jnp.float32) * s
        wb = jax.random.normal(ks[4], (c2, 4 * A), jnp.float32) * s
        self.head_cols = 5 * A
        assert self.head_cols <= 128
        self.w_head = jnp.concatenate(
            [wc, wb, jnp.zeros((c2, 128 - self.head_cols), jnp.float32)],
            axis=1).astype(jnp.bfloat16)
        self.b_head = jnp.zeros((1, 128), jnp.float32)

        self.anc_cwh, self.anc_xyxy = generate_anchors(
            (self.fm_h, self.fm_w), (self.img_h, self.img_w),
            anchor_scales, anchor_ratios)

        self._forward = jax.jit(self._forward_impl)

    # -------------------- backbone: 2 fused conv+pool kernels ---------------
    def backbone(self, images_nchw):
        x = jnp.transpose(images_nchw, (0, 2, 3, 1))       # NHWC
        y = conv3x3_relu_pool(x, self.w1, self.b1)         # (B, H/2, W/2, 32) bf16
        y = conv3x3_relu_pool(y, self.w2, self.b2)         # (B, H/4, W/4, 64) bf16
        return y

    # -------------------- fused RPN head (one kernel) -----------------------
    def rpn_head(self, fm):
        B, Hf, Wf, C = fm.shape
        xp = jnp.pad(fm, ((0, 0), (1, 1), (1, 1), (0, 0))).astype(jnp.bfloat16)
        M = Hf * Wf
        out = pl.pallas_call(
            functools.partial(_rpn_head_kernel, Hf=Hf, Wf=Wf),
            out_shape=jax.ShapeDtypeStruct((B, M, 128), jnp.float32),
            grid=(B,),
            in_specs=[
                pl.BlockSpec((1, Hf + 2, Wf + 2, C), lambda b: (b, 0, 0, 0)),
                pl.BlockSpec((9, C, C), lambda b: (0, 0, 0)),
                pl.BlockSpec((1, C), lambda b: (0, 0)),
                pl.BlockSpec((C, 128), lambda b: (0, 0)),
                pl.BlockSpec((1, 128), lambda b: (0, 0)),
            ],
            out_specs=pl.BlockSpec((1, M, 128), lambda b: (b, 0, 0)),
            compiler_params=pltpu.CompilerParams(
                dimension_semantics=("parallel",),
                vmem_limit_bytes=_VMEM_LIMIT),
        )(xp, self.wr, jnp.reshape(self.br, (1, C)), self.w_head, self.b_head)
        A = self.num_anchors
        conf = out[:, :, :A].reshape(B, M * A)             # (B, loc*A)
        reg = out[:, :, A:A + 4 * A].reshape(B, M * A, 4)  # anchor-major deltas
        return conf, reg

    # -------------------- forward = rpn loss ---------------------------------
    def _forward_impl(self, images, bboxes, conf_scores):
        fm = self.backbone(images)
        conf_logits, reg_deltas = self.rpn_head(fm)        # (B,At), (B,At,4)

        assign = jax.vmap(lambda gb, gs: _assign(
            self.anc_cwh, self.anc_xyxy, gb, gs, self.pos_t, self.neg_t))
        cls_t, cls_w, box_w, tgt_d = assign(bboxes, conf_scores)

        B, At = conf_logits.shape
        Lc = _round_up(At, 128)
        Lb = _round_up(4 * At, 128)

        def pad_last(a, L):
            return jnp.pad(a, ((0, 0), (0, L - a.shape[-1])))

        # lane-dense (last dim multiple of 128) loss operands; padding carries
        # zero weight so it contributes nothing to either reduction.
        z = pad_last(conf_logits, Lc)
        t = pad_last(cls_t, Lc)
        cw = pad_last(cls_w, Lc)
        pd = pad_last(reg_deltas.reshape(B, 4 * At), Lb)
        td = pad_last(tgt_d.reshape(B, 4 * At), Lb)
        bw = pad_last(jnp.broadcast_to(box_w[:, :, None],
                                       (B, At, 4)).reshape(B, 4 * At), Lb)

        loss = pl.pallas_call(
            functools.partial(_rpn_loss_kernel,
                              conf_w=self.conf_score_weight,
                              bbox_w=self.bbox_weight),
            out_shape=jax.ShapeDtypeStruct((1, 1), jnp.float32),
            in_specs=[pl.BlockSpec((B, Lc), lambda: (0, 0))] * 3
                    + [pl.BlockSpec((B, Lb), lambda: (0, 0))] * 3,
            out_specs=pl.BlockSpec((1, 1), lambda: (0, 0)),
            compiler_params=pltpu.CompilerParams(vmem_limit_bytes=_VMEM_LIMIT),
        )(z, t, cw, pd, td, bw)
        return loss[0, 0]

    def forward(self, images, bboxes, conf_scores):
        return self._forward(images, bboxes, conf_scores)


# ---------------------------------------------------------------------------
if __name__ == "__main__":
    B, D, H, W = 2, 3, 16, 16
    G = 2  # ground-truth boxes per image

    detector = OneStageDetectorPallas(
        (D, W, H), conf_score_weight=1, bbox_weight=10,
        pos_anchor_thresh=0.7, neg_anchor_thresh=0.3)

    key = jax.random.PRNGKey(0)
    k_img, k_xy, k_wh = jax.random.split(key, 3)
    images = jax.random.normal(k_img, (B, D, H, W), jnp.float32)     # NCHW
    xy1 = jax.random.uniform(k_xy, (B, G, 2), minval=0.0, maxval=8.0)
    wh = jax.random.uniform(k_wh, (B, G, 2), minval=2.0, maxval=8.0)
    bboxes = jnp.concatenate([xy1, jnp.clip(xy1 + wh, 0.0, 16.0)], axis=-1)
    conf_scores = jnp.ones((B, G), jnp.float32)

    rpn_loss = detector.forward(images, bboxes, conf_scores)
    jax.block_until_ready(rpn_loss)
    assert rpn_loss.shape == () and bool(jnp.isfinite(rpn_loss))
    print("KERNEL_OK")
</pallas_src>

<mosaic_0001>
module attributes {stable_mosaic.version = 11 : i64} {
  func.func @_conv3x3_relu_pool_kernel(%arg0: i32, %arg1: memref<1x18x18x3xbf16, #tpu.memory_space<vmem>>, %arg2: memref<9x3x32xbf16, #tpu.memory_space<vmem>>, %arg3: memref<1x32xf32, #tpu.memory_space<vmem>>, %arg4: memref<1x8x8x32xbf16, #tpu.memory_space<vmem>>) attributes {dimension_semantics = [#tpu.dimension_semantics<parallel>], iteration_bounds = array<i64: 2>, scalar_prefetch = 0 : i64, scratch_operands = 0 : i64, tpu.core_type = #tpu.core_type<tc>, window_params = [{transform_indices = @transform_0, window_bounds = array<i64: 1, 18, 18, 3>}, {pipeline_mode = #tpu.pipeline_mode<synchronous>, transform_indices = @transform_1, window_bounds = array<i64: 9, 3, 32>}, {pipeline_mode = #tpu.pipeline_mode<synchronous>, transform_indices = @transform_2, window_bounds = array<i64: 1, 32>}, {transform_indices = @transform_3, window_bounds = array<i64: 1, 8, 8, 32>}]} {
    %c0 = arith.constant 0 : index
    %c0_0 = arith.constant 0 : index
    %c0_1 = arith.constant 0 : index
    %c0_2 = arith.constant 0 : index
    %0 = vector.load %arg1[%c0, %c0_0, %c0_1, %c0_2] : memref<1x18x18x3xbf16, #tpu.memory_space<vmem>>, vector<1x18x18x3xbf16>
    %1 = vector.shape_cast %0 : vector<1x18x18x3xbf16> to vector<18x18x3xbf16>
    %cst = arith.constant 0.000000e+00 : f32
    %2 = vector.broadcast %cst : f32 to vector<256x32xf32>
    %3 = vector.extract_strided_slice %1 {offsets = [0, 0, 0], sizes = [16, 16, 3], strides = [1, 1, 1]} : vector<18x18x3xbf16> to vector<16x16x3xbf16>
    %4 = vector.shape_cast %3 : vector<16x16x3xbf16> to vector<256x3xbf16>
    %c0_3 = arith.constant 0 : index
    %c0_4 = arith.constant 0 : index
    %c0_5 = arith.constant 0 : index
    %5 = vector.load %arg2[%c0_3, %c0_4, %c0_5] : memref<9x3x32xbf16, #tpu.memory_space<vmem>>, vector<1x3x32xbf16>
    %6 = vector.shape_cast %5 : vector<1x3x32xbf16> to vector<3x32xbf16>
    %cst_6 = arith.constant dense<0.000000e+00> : vector<256x32xf32>
    %7 = tpu.matmul %4, %6, %cst_6 {dimension_numbers = #tpu.dot_dimension_numbers<[1], [0], [0], [1], [0, 0, 1, 1], [], []>} : vector<256x3xbf16>, vector<3x32xbf16>, vector<256x32xf32> -> vector<256x32xf32>
    %8 = arith.addf %2, %7 : vector<256x32xf32>
    %9 = vector.extract_strided_slice %1 {offsets = [0, 1, 0], sizes = [16, 16, 3], strides = [1, 1, 1]} : vector<18x18x3xbf16> to vector<16x16x3xbf16>
    %10 = vector.shape_cast %9 : vector<16x16x3xbf16> to vector<256x3xbf16>
    %c1 = arith.constant 1 : index
    %c0_7 = arith.constant 0 : index
    %c0_8 = arith.constant 0 : index
    %11 = vector.load %arg2[%c1, %c0_7, %c0_8] : memref<9x3x32xbf16, #tpu.memory_space<vmem>>, vector<1x3x32xbf16>
    %12 = vector.shape_cast %11 : vector<1x3x32xbf16> to vector<3x32xbf16>
    %cst_9 = arith.constant dense<0.000000e+00> : vector<256x32xf32>
    %13 = tpu.matmul %10, %12, %cst_9 {dimension_numbers = #tpu.dot_dimension_numbers<[1], [0], [0], [1], [0, 0, 1, 1], [], []>} : vector<256x3xbf16>, vector<3x32xbf16>, vector<256x32xf32> -> vector<256x32xf32>
    %14 = arith.addf %8, %13 : vector<256x32xf32>
    %15 = vector.extract_strided_slice %1 {offsets = [0, 2, 0], sizes = [16, 16, 3], strides = [1, 1, 1]} : vector<18x18x3xbf16> to vector<16x16x3xbf16>
    %16 = vector.shape_cast %15 : vector<16x16x3xbf16> to vector<256x3xbf16>
    %c2 = arith.constant 2 : index
    %c0_10 = arith.constant 0 : index
    %c0_11 = arith.constant 0 : index
    %17 = vector.load %arg2[%c2, %c0_10, %c0_11] : memref<9x3x32xbf16, #tpu.memory_space<vmem>>, vector<1x3x32xbf16>
    %18 = vector.shape_cast %17 : vector<1x3x32xbf16> to vector<3x32xbf16>
    %cst_12 = arith.constant dense<0.000000e+00> : vector<256x32xf32>
    %19 = tpu.matmul %16, %18, %cst_12 {dimension_numbers = #tpu.dot_dimension_numbers<[1], [0], [0], [1], [0, 0, 1, 1], [], []>} : vector<256x3xbf16>, vector<3x32xbf16>, vector<256x32xf32> -> vector<256x32xf32>
    %20 = arith.addf %14, %19 : vector<256x32xf32>
    %21 = vector.extract_strided_slice %1 {offsets = [1, 0, 0], sizes = [16, 16, 3], strides = [1, 1, 1]} : vector<18x18x3xbf16> to vector<16x16x3xbf16>
    %22 = vector.shape_cast %21 : vector<16x16x3xbf16> to vector<256x3xbf16>
    %c3 = arith.constant 3 : index
    %c0_13 = arith.constant 0 : index
    %c0_14 = arith.constant 0 : index
    %23 = vector.load %arg2[%c3, %c0_13, %c0_14] : memref<9x3x32xbf16, #tpu.memory_space<vmem>>, vector<1x3x32xbf16>
    %24 = vector.shape_cast %23 : vector<1x3x32xbf16> to vector<3x32xbf16>
    %cst_15 = arith.constant dense<0.000000e+00> : vector<256x32xf32>
    %25 = tpu.matmul %22, %24, %cst_15 {dimension_numbers = #tpu.dot_dimension_numbers<[1], [0], [0], [1], [0, 0, 1, 1], [], []>} : vector<256x3xbf16>, vector<3x32xbf16>, vector<256x32xf32> -> vector<256x32xf32>
    %26 = arith.addf %20, %25 : vector<256x32xf32>
    %27 = vector.extract_strided_slice %1 {offsets = [1, 1, 0], sizes = [16, 16, 3], strides = [1, 1, 1]} : vector<18x18x3xbf16> to vector<16x16x3xbf16>
    %28 = vector.shape_cast %27 : vector<16x16x3xbf16> to vector<256x3xbf16>
    %c4 = arith.constant 4 : index
    %c0_16 = arith.constant 0 : index
    %c0_17 = arith.constant 0 : index
    %29 = vector.load %arg2[%c4, %c0_16, %c0_17] : memref<9x3x32xbf16, #tpu.memory_space<vmem>>, vector<1x3x32xbf16>
    %30 = vector.shape_cast %29 : vector<1x3x32xbf16> to vector<3x32xbf16>
    %cst_18 = arith.constant dense<0.000000e+00> : vector<256x32xf32>
    %31 = tpu.matmul %28, %30, %cst_18 {dimension_numbers = #tpu.dot_dimension_numbers<[1], [0], [0], [1], [0, 0, 1, 1], [], []>} : vector<256x3xbf16>, vector<3x32xbf16>, vector<256x32xf32> -> vector<256x32xf32>
    %32 = arith.addf %26, %31 : vector<256x32xf32>
    %33 = vector.extract_strided_slice %1 {offsets = [1, 2, 0], sizes = [16, 16, 3], strides = [1, 1, 1]} : vector<18x18x3xbf16> to vector<16x16x3xbf16>
    %34 = vector.shape_cast %33 : vector<16x16x3xbf16> to vector<256x3xbf16>
    %c5 = arith.constant 5 : index
    %c0_19 = arith.constant 0 : index
    %c0_20 = arith.constant 0 : index
    %35 = vector.load %arg2[%c5, %c0_19, %c0_20] : memref<9x3x32xbf16, #tpu.memory_space<vmem>>, vector<1x3x32xbf16>
    %36 = vector.shape_cast %35 : vector<1x3x32xbf16> to vector<3x32xbf16>
    %cst_21 = arith.constant dense<0.000000e+00> : vector<256x32xf32>
    %37 = tpu.matmul %34, %36, %cst_21 {dimension_numbers = #tpu.dot_dimension_numbers<[1], [0], [0], [1], [0, 0, 1, 1], [], []>} : vector<256x3xbf16>, vector<3x32xbf16>, vector<256x32xf32> -> vector<256x32xf32>
    %38 = arith.addf %32, %37 : vector<256x32xf32>
    %39 = vector.extract_strided_slice %1 {offsets = [2, 0, 0], sizes = [16, 16, 3], strides = [1, 1, 1]} : vector<18x18x3xbf16> to vector<16x16x3xbf16>
    %40 = vector.shape_cast %39 : vector<16x16x3xbf16> to vector<256x3xbf16>
    %c6 = arith.constant 6 : index
    %c0_22 = arith.constant 0 : index
    %c0_23 = arith.constant 0 : index
    %41 = vector.load %arg2[%c6, %c0_22, %c0_23] : memref<9x3x32xbf16, #tpu.memory_space<vmem>>, vector<1x3x32xbf16>
    %42 = vector.shape_cast %41 : vector<1x3x32xbf16> to vector<3x32xbf16>
    %cst_24 = arith.constant dense<0.000000e+00> : vector<256x32xf32>
    %43 = tpu.matmul %40, %42, %cst_24 {dimension_numbers = #tpu.dot_dimension_numbers<[1], [0], [0], [1], [0, 0, 1, 1], [], []>} : vector<256x3xbf16>, vector<3x32xbf16>, vector<256x32xf32> -> vector<256x32xf32>
    %44 = arith.addf %38, %43 : vector<256x32xf32>
    %45 = vector.extract_strided_slice %1 {offsets = [2, 1, 0], sizes = [16, 16, 3], strides = [1, 1, 1]} : vector<18x18x3xbf16> to vector<16x16x3xbf16>
    %46 = vector.shape_cast %45 : vector<16x16x3xbf16> to vector<256x3xbf16>
    %c7 = arith.constant 7 : index
    %c0_25 = arith.constant 0 : index
    %c0_26 = arith.constant 0 : index
    %47 = vector.load %arg2[%c7, %c0_25, %c0_26] : memref<9x3x32xbf16, #tpu.memory_space<vmem>>, vector<1x3x32xbf16>
    %48 = vector.shape_cast %47 : vector<1x3x32xbf16> to vector<3x32xbf16>
    %cst_27 = arith.constant dense<0.000000e+00> : vector<256x32xf32>
    %49 = tpu.matmul %46, %48, %cst_27 {dimension_numbers = #tpu.dot_dimension_numbers<[1], [0], [0], [1], [0, 0, 1, 1], [], []>} : vector<256x3xbf16>, vector<3x32xbf16>, vector<256x32xf32> -> vector<256x32xf32>
    %50 = arith.addf %44, %49 : vector<256x32xf32>
    %51 = vector.extract_strided_slice %1 {offsets = [2, 2, 0], sizes = [16, 16, 3], strides = [1, 1, 1]} : vector<18x18x3xbf16> to vector<16x16x3xbf16>
    %52 = vector.shape_cast %51 : vector<16x16x3xbf16> to vector<256x3xbf16>
    %c8 = arith.constant 8 : index
    %c0_28 = arith.constant 0 : index
    %c0_29 = arith.constant 0 : index
    %53 = vector.load %arg2[%c8, %c0_28, %c0_29] : memref<9x3x32xbf16, #tpu.memory_space<vmem>>, vector<1x3x32xbf16>
    %54 = vector.shape_cast %53 : vector<1x3x32xbf16> to vector<3x32xbf16>
    %cst_30 = arith.constant dense<0.000000e+00> : vector<256x32xf32>
    %55 = tpu.matmul %52, %54, %cst_30 {dimension_numbers = #tpu.dot_dimension_numbers<[1], [0], [0], [1], [0, 0, 1, 1], [], []>} : vector<256x3xbf16>, vector<3x32xbf16>, vector<256x32xf32> -> vector<256x32xf32>
    %56 = arith.addf %50, %55 : vector<256x32xf32>
    %c0_31 = arith.constant 0 : index
    %c0_32 = arith.constant 0 : index
    %57 = vector.load %arg3[%c0_31, %c0_32] : memref<1x32xf32, #tpu.memory_space<vmem>>, vector<1x32xf32>
    %58 = vector.broadcast %57 : vector<1x32xf32> to vector<256x32xf32>
    %59 = arith.addf %56, %58 : vector<256x32xf32>
    %cst_33 = arith.constant 0.000000e+00 : f32
    %60 = vector.broadcast %cst_33 : f32 to vector<256x32xf32>
    %61 = arith.maximumf %59, %60 : vector<256x32xf32>
    %62 = vector.shape_cast %61 : vector<256x32xf32> to vector<128x2x32xf32>
    %63 = vector.extract_strided_slice %62 {offsets = [0, 0, 0], sizes = [128, 1, 32], strides = [1, 1, 1]} : vector<128x2x32xf32> to vector<128x1x32xf32>
    %64 = vector.shape_cast %63 : vector<128x1x32xf32> to vector<128x32xf32>
    %65 = vector.extract_strided_slice %62 {offsets = [0, 1, 0], sizes = [128, 1, 32], strides = [1, 1, 1]} : vector<128x2x32xf32> to vector<128x1x32xf32>
    %66 = vector.shape_cast %65 : vector<128x1x32xf32> to vector<128x32xf32>
    %67 = arith.maximumf %64, %66 : vector<128x32xf32>
    %68 = vector.shape_cast %67 : vector<128x32xf32> to vector<8x2x8x32xf32>
    %69 = vector.extract_strided_slice %68 {offsets = [0, 0, 0, 0], sizes = [8, 1, 8, 32], strides = [1, 1, 1, 1]} : vector<8x2x8x32xf32> to vector<8x1x8x32xf32>
    %70 = vector.shape_cast %69 : vector<8x1x8x32xf32> to vector<8x8x32xf32>
    %71 = vector.extract_strided_slice %68 {offsets = [0, 1, 0, 0], sizes = [8, 1, 8, 32], strides = [1, 1, 1, 1]} : vector<8x2x8x32xf32> to vector<8x1x8x32xf32>
    %72 = vector.shape_cast %71 : vector<8x1x8x32xf32> to vector<8x8x32xf32>
    %73 = arith.maximumf %70, %72 : vector<8x8x32xf32>
    %74 = arith.truncf %73 : vector<8x8x32xf32> to vector<8x8x32xbf16>
    %c0_34 = arith.constant 0 : index
    %c0_35 = arith.constant 0 : index
    %c0_36 = arith.constant 0 : index
    %c0_37 = arith.constant 0 : index
    %75 = vector.load %arg4[%c0_34, %c0_35, %c0_36, %c0_37] : memref<1x8x8x32xbf16, #tpu.memory_space<vmem>>, vector<1x8x8x32xbf16>
    %76 = vector.shape_cast %75 : vector<1x8x8x32xbf16> to vector<8x8x32xbf16>
    %77 = vector.shape_cast %74 : vector<8x8x32xbf16> to vector<1x8x8x32xbf16>
    tpu.vector_store %arg4[%c0_34, %c0_35, %c0_36, %c0_37], %77 {strides = array<i32>} : memref<1x8x8x32xbf16, #tpu.memory_space<vmem>>, vector<1x8x8x32xbf16>,
    return
  }
  func.func @transform_0(%arg0: i32) -> (i32, i32, i32, i32) {
    %c0_i32 = arith.constant 0 : i32
    %c0_i32_0 = arith.constant 0 : i32
    %c0_i32_1 = arith.constant 0 : i32
    %c0_i32_2 = arith.constant 0 : i32
    return %arg0, %c0_i32, %c0_i32_0, %c0_i32_1 : i32, i32, i32, i32
  }
  func.func @transform_1(%arg0: i32) -> (i32, i32, i32) {
    %c0_i32 = arith.constant 0 : i32
    %c0_i32_0 = arith.constant 0 : i32
    %c0_i32_1 = arith.constant 0 : i32
    %c0_i32_2 = arith.constant 0 : i32
    return %c0_i32, %c0_i32_0, %c0_i32_1 : i32, i32, i32
  }
  func.func @transform_2(%arg0: i32) -> (i32, i32) {
    %c0_i32 = arith.constant 0 : i32
    %c0_i32_0 = arith.constant 0 : i32
    %c0_i32_1 = arith.constant 0 : i32
    return %c0_i32, %c0_i32_0 : i32, i32
  }
  func.func @transform_3(%arg0: i32) -> (i32, i32, i32, i32) {
    %c0_i32 = arith.constant 0 : i32
    %c0_i32_0 = arith.constant 0 : i32
    %c0_i32_1 = arith.constant 0 : i32
    %c0_i32_2 = arith.constant 0 : i32
    return %arg0, %c0_i32, %c0_i32_0, %c0_i32_1 : i32, i32, i32, i32
  }
}

module attributes {stable_mosaic.version = 11 : i64} {
  func.func @_conv3x3_relu_pool_kernel(%arg0: i32, %arg1: memref<1x10x10x32xbf16, #tpu.memory_space<vmem>>, %arg2: memref<9x32x64xbf16, #tpu.memory_space<vmem>>, %arg3: memref<1x64xf32, #tpu.memory_space<vmem>>, %arg4: memref<1x4x4x64xbf16, #tpu.memory_space<vmem>>) attributes {dimension_semantics = [#tpu.dimension_semantics<parallel>], iteration_bounds = array<i64: 2>, scalar_prefetch = 0 : i64, scratch_operands = 0 : i64, tpu.core_type = #tpu.core_type<tc>, window_params = [{transform_indices = @transform_0, window_bounds = array<i64: 1, 10, 10, 32>}, {pipeline_mode = #tpu.pipeline_mode<synchronous>, transform_indices = @transform_1, window_bounds = array<i64: 9, 32, 64>}, {pipeline_mode = #tpu.pipeline_mode<synchronous>, transform_indices = @transform_2, window_bounds = array<i64: 1, 64>}, {transform_indices = @transform_3, window_bounds = array<i64: 1, 4, 4, 64>}]} {
    %c0 = arith.constant 0 : index
    %c0_0 = arith.constant 0 : index
    %c0_1 = arith.constant 0 : index
    %c0_2 = arith.constant 0 : index
    %0 = vector.load %arg1[%c0, %c0_0, %c0_1, %c0_2] : memref<1x10x10x32xbf16, #tpu.memory_space<vmem>>, vector<1x10x10x32xbf16>
    %1 = vector.shape_cast %0 : vector<1x10x10x32xbf16> to vector<10x10x32xbf16>
    %cst = arith.constant 0.000000e+00 : f32
    %2 = vector.broadcast %cst : f32 to vector<64x64xf32>
    %3 = vector.extract_strided_slice %1 {offsets = [0, 0, 0], sizes = [8, 8, 32], strides = [1, 1, 1]} : vector<10x10x32xbf16> to vector<8x8x32xbf16>
    %4 = vector.shape_cast %3 : vector<8x8x32xbf16> to vector<64x32xbf16>
    %c0_3 = arith.constant 0 : index
    %c0_4 = arith.constant 0 : index
    %c0_5 = arith.constant 0 : index
    %5 = vector.load %arg2[%c0_3, %c0_4, %c0_5] : memref<9x32x64xbf16, #tpu.memory_space<vmem>>, vector<1x32x64xbf16>
    %6 = vector.shape_cast %5 : vector<1x32x64xbf16> to vector<32x64xbf16>
    %cst_6 = arith.constant dense<0.000000e+00> : vector<64x64xf32>
    %7 = tpu.matmul %4, %6, %cst_6 {dimension_numbers = #tpu.dot_dimension_numbers<[1], [0], [0], [1], [0, 0, 1, 1], [], []>} : vector<64x32xbf16>, vector<32x64xbf16>, vector<64x64xf32> -> vector<64x64xf32>
    %8 = arith.addf %2, %7 : vector<64x64xf32>
    %9 = vector.extract_strided_slice %1 {offsets = [0, 1, 0], sizes = [8, 8, 32], strides = [1, 1, 1]} : vector<10x10x32xbf16> to vector<8x8x32xbf16>
    %10 = vector.shape_cast %9 : vector<8x8x32xbf16> to vector<64x32xbf16>
    %c1 = arith.constant 1 : index
    %c0_7 = arith.constant 0 : index
    %c0_8 = arith.constant 0 : index
    %11 = vector.load %arg2[%c1, %c0_7, %c0_8] : memref<9x32x64xbf16, #tpu.memory_space<vmem>>, vector<1x32x64xbf16>
    %12 = vector.shape_cast %11 : vector<1x32x64xbf16> to vector<32x64xbf16>
    %cst_9 = arith.constant dense<0.000000e+00> : vector<64x64xf32>
    %13 = tpu.matmul %10, %12, %cst_9 {dimension_numbers = #tpu.dot_dimension_numbers<[1], [0], [0], [1], [0, 0, 1, 1], [], []>} : vector<64x32xbf16>, vector<32x64xbf16>, vector<64x64xf32> -> vector<64x64xf32>
    %14 = arith.addf %8, %13 : vector<64x64xf32>
    %15 = vector.extract_strided_slice %1 {offsets = [0, 2, 0], sizes = [8, 8, 32], strides = [1, 1, 1]} : vector<10x10x32xbf16> to vector<8x8x32xbf16>
    %16 = vector.shape_cast %15 : vector<8x8x32xbf16> to vector<64x32xbf16>
    %c2 = arith.constant 2 : index
    %c0_10 = arith.constant 0 : index
    %c0_11 = arith.constant 0 : index
    %17 = vector.load %arg2[%c2, %c0_10, %c0_11] : memref<9x32x64xbf16, #tpu.memory_space<vmem>>, vector<1x32x64xbf16>
    %18 = vector.shape_cast %17 : vector<1x32x64xbf16> to vector<32x64xbf16>
    %cst_12 = arith.constant dense<0.000000e+00> : vector<64x64xf32>
    %19 = tpu.matmul %16, %18, %cst_12 {dimension_numbers = #tpu.dot_dimension_numbers<[1], [0], [0], [1], [0, 0, 1, 1], [], []>} : vector<64x32xbf16>, vector<32x64xbf16>, vector<64x64xf32> -> vector<64x64xf32>
    %20 = arith.addf %14, %19 : vector<64x64xf32>
    %21 = vector.extract_strided_slice %1 {offsets = [1, 0, 0], sizes = [8, 8, 32], strides = [1, 1, 1]} : vector<10x10x32xbf16> to vector<8x8x32xbf16>
    %22 = vector.shape_cast %21 : vector<8x8x32xbf16> to vector<64x32xbf16>
    %c3 = arith.constant 3 : index
    %c0_13 = arith.constant 0 : index
    %c0_14 = arith.constant 0 : index
    %23 = vector.load %arg2[%c3, %c0_13, %c0_14] : memref<9x32x64xbf16, #tpu.memory_space<vmem>>, vector<1x32x64xbf16>
    %24 = vector.shape_cast %23 : vector<1x32x64xbf16> to vector<32x64xbf16>
    %cst_15 = arith.constant dense<0.000000e+00> : vector<64x64xf32>
    %25 = tpu.matmul %22, %24, %cst_15 {dimension_numbers = #tpu.dot_dimension_numbers<[1], [0], [0], [1], [0, 0, 1, 1], [], []>} : vector<64x32xbf16>, vector<32x64xbf16>, vector<64x64xf32> -> vector<64x64xf32>
    %26 = arith.addf %20, %25 : vector<64x64xf32>
    %27 = vector.extract_strided_slice %1 {offsets = [1, 1, 0], sizes = [8, 8, 32], strides = [1, 1, 1]} : vector<10x10x32xbf16> to vector<8x8x32xbf16>
    %28 = vector.shape_cast %27 : vector<8x8x32xbf16> to vector<64x32xbf16>
    %c4 = arith.constant 4 : index
    %c0_16 = arith.constant 0 : index
    %c0_17 = arith.constant 0 : index
    %29 = vector.load %arg2[%c4, %c0_16, %c0_17] : memref<9x32x64xbf16, #tpu.memory_space<vmem>>, vector<1x32x64xbf16>
    %30 = vector.shape_cast %29 : vector<1x32x64xbf16> to vector<32x64xbf16>
    %cst_18 = arith.constant dense<0.000000e+00> : vector<64x64xf32>
    %31 = tpu.matmul %28, %30, %cst_18 {dimension_numbers = #tpu.dot_dimension_numbers<[1], [0], [0], [1], [0, 0, 1, 1], [], []>} : vector<64x32xbf16>, vector<32x64xbf16>, vector<64x64xf32> -> vector<64x64xf32>
    %32 = arith.addf %26, %31 : vector<64x64xf32>
    %33 = vector.extract_strided_slice %1 {offsets = [1, 2, 0], sizes = [8, 8, 32], strides = [1, 1, 1]} : vector<10x10x32xbf16> to vector<8x8x32xbf16>
    %34 = vector.shape_cast %33 : vector<8x8x32xbf16> to vector<64x32xbf16>
    %c5 = arith.constant 5 : index
    %c0_19 = arith.constant 0 : index
    %c0_20 = arith.constant 0 : index
    %35 = vector.load %arg2[%c5, %c0_19, %c0_20] : memref<9x32x64xbf16, #tpu.memory_space<vmem>>, vector<1x32x64xbf16>
    %36 = vector.shape_cast %35 : vector<1x32x64xbf16> to vector<32x64xbf16>
    %cst_21 = arith.constant dense<0.000000e+00> : vector<64x64xf32>
    %37 = tpu.matmul %34, %36, %cst_21 {dimension_numbers = #tpu.dot_dimension_numbers<[1], [0], [0], [1], [0, 0, 1, 1], [], []>} : vector<64x32xbf16>, vector<32x64xbf16>, vector<64x64xf32> -> vector<64x64xf32>
    %38 = arith.addf %32, %37 : vector<64x64xf32>
    %39 = vector.extract_strided_slice %1 {offsets = [2, 0, 0], sizes = [8, 8, 32], strides = [1, 1, 1]} : vector<10x10x32xbf16> to vector<8x8x32xbf16>
    %40 = vector.shape_cast %39 : vector<8x8x32xbf16> to vector<64x32xbf16>
    %c6 = arith.constant 6 : index
    %c0_22 = arith.constant 0 : index
    %c0_23 = arith.constant 0 : index
    %41 = vector.load %arg2[%c6, %c0_22, %c0_23] : memref<9x32x64xbf16, #tpu.memory_space<vmem>>, vector<1x32x64xbf16>
    %42 = vector.shape_cast %41 : vector<1x32x64xbf16> to vector<32x64xbf16>
    %cst_24 = arith.constant dense<0.000000e+00> : vector<64x64xf32>
    %43 = tpu.matmul %40, %42, %cst_24 {dimension_numbers = #tpu.dot_dimension_numbers<[1], [0], [0], [1], [0, 0, 1, 1], [], []>} : vector<64x32xbf16>, vector<32x64xbf16>, vector<64x64xf32> -> vector<64x64xf32>
    %44 = arith.addf %38, %43 : vector<64x64xf32>
    %45 = vector.extract_strided_slice %1 {offsets = [2, 1, 0], sizes = [8, 8, 32], strides = [1, 1, 1]} : vector<10x10x32xbf16> to vector<8x8x32xbf16>
    %46 = vector.shape_cast %45 : vector<8x8x32xbf16> to vector<64x32xbf16>
    %c7 = arith.constant 7 : index
    %c0_25 = arith.constant 0 : index
    %c0_26 = arith.constant 0 : index
    %47 = vector.load %arg2[%c7, %c0_25, %c0_26] : memref<9x32x64xbf16, #tpu.memory_space<vmem>>, vector<1x32x64xbf16>
    %48 = vector.shape_cast %47 : vector<1x32x64xbf16> to vector<32x64xbf16>
    %cst_27 = arith.constant dense<0.000000e+00> : vector<64x64xf32>
    %49 = tpu.matmul %46, %48, %cst_27 {dimension_numbers = #tpu.dot_dimension_numbers<[1], [0], [0], [1], [0, 0, 1, 1], [], []>} : vector<64x32xbf16>, vector<32x64xbf16>, vector<64x64xf32> -> vector<64x64xf32>
    %50 = arith.addf %44, %49 : vector<64x64xf32>
    %51 = vector.extract_strided_slice %1 {offsets = [2, 2, 0], sizes = [8, 8, 32], strides = [1, 1, 1]} : vector<10x10x32xbf16> to vector<8x8x32xbf16>
    %52 = vector.shape_cast %51 : vector<8x8x32xbf16> to vector<64x32xbf16>
    %c8 = arith.constant 8 : index
    %c0_28 = arith.constant 0 : index
    %c0_29 = arith.constant 0 : index
    %53 = vector.load %arg2[%c8, %c0_28, %c0_29] : memref<9x32x64xbf16, #tpu.memory_space<vmem>>, vector<1x32x64xbf16>
    %54 = vector.shape_cast %53 : vector<1x32x64xbf16> to vector<32x64xbf16>
    %cst_30 = arith.constant dense<0.000000e+00> : vector<64x64xf32>
    %55 = tpu.matmul %52, %54, %cst_30 {dimension_numbers = #tpu.dot_dimension_numbers<[1], [0], [0], [1], [0, 0, 1, 1], [], []>} : vector<64x32xbf16>, vector<32x64xbf16>, vector<64x64xf32> -> vector<64x64xf32>
    %56 = arith.addf %50, %55 : vector<64x64xf32>
    %c0_31 = arith.constant 0 : index
    %c0_32 = arith.constant 0 : index
    %57 = vector.load %arg3[%c0_31, %c0_32] : memref<1x64xf32, #tpu.memory_space<vmem>>, vector<1x64xf32>
    %58 = vector.broadcast %57 : vector<1x64xf32> to vector<64x64xf32>
    %59 = arith.addf %56, %58 : vector<64x64xf32>
    %cst_33 = arith.constant 0.000000e+00 : f32
    %60 = vector.broadcast %cst_33 : f32 to vector<64x64xf32>
    %61 = arith.maximumf %59, %60 : vector<64x64xf32>
    %62 = vector.shape_cast %61 : vector<64x64xf32> to vector<32x2x64xf32>
    %63 = vector.extract_strided_slice %62 {offsets = [0, 0, 0], sizes = [32, 1, 64], strides = [1, 1, 1]} : vector<32x2x64xf32> to vector<32x1x64xf32>
    %64 = vector.shape_cast %63 : vector<32x1x64xf32> to vector<32x64xf32>
    %65 = vector.extract_strided_slice %62 {offsets = [0, 1, 0], sizes = [32, 1, 64], strides = [1, 1, 1]} : vector<32x2x64xf32> to vector<32x1x64xf32>
    %66 = vector.shape_cast %65 : vector<32x1x64xf32> to vector<32x64xf32>
    %67 = arith.maximumf %64, %66 : vector<32x64xf32>
    %68 = vector.shape_cast %67 : vector<32x64xf32> to vector<4x2x4x64xf32>
    %69 = vector.extract_strided_slice %68 {offsets = [0, 0, 0, 0], sizes = [4, 1, 4, 64], strides = [1, 1, 1, 1]} : vector<4x2x4x64xf32> to vector<4x1x4x64xf32>
    %70 = vector.shape_cast %69 : vector<4x1x4x64xf32> to vector<4x4x64xf32>
    %71 = vector.extract_strided_slice %68 {offsets = [0, 1, 0, 0], sizes = [4, 1, 4, 64], strides = [1, 1, 1, 1]} : vector<4x2x4x64xf32> to vector<4x1x4x64xf32>
    %72 = vector.shape_cast %71 : vector<4x1x4x64xf32> to vector<4x4x64xf32>
    %73 = arith.maximumf %70, %72 : vector<4x4x64xf32>
    %74 = arith.truncf %73 : vector<4x4x64xf32> to vector<4x4x64xbf16>
    %c0_34 = arith.constant 0 : index
    %c0_35 = arith.constant 0 : index
    %c0_36 = arith.constant 0 : index
    %c0_37 = arith.constant 0 : index
    %75 = vector.load %arg4[%c0_34, %c0_35, %c0_36, %c0_37] : memref<1x4x4x64xbf16, #tpu.memory_space<vmem>>, vector<1x4x4x64xbf16>
    %76 = vector.shape_cast %75 : vector<1x4x4x64xbf16> to vector<4x4x64xbf16>
    %77 = vector.shape_cast %74 : vector<4x4x64xbf16> to vector<1x4x4x64xbf16>
    tpu.vector_store %arg4[%c0_34, %c0_35, %c0_36, %c0_37], %77 {strides = array<i32>} : memref<1x4x4x64xbf16, #tpu.memory_space<vmem>>, vector<1x4x4x64xbf16>,
    return
  }
  func.func @transform_0(%arg0: i32) -> (i32, i32, i32, i32) {
    %c0_i32 = arith.constant 0 : i32
    %c0_i32_0 = arith.constant 0 : i32
    %c0_i32_1 = arith.constant 0 : i32
    %c0_i32_2 = arith.constant 0 : i32
    return %arg0, %c0_i32, %c0_i32_0, %c0_i32_1 : i32, i32, i32, i32
  }
  func.func @transform_1(%arg0: i32) -> (i32, i32, i32) {
    %c0_i32 = arith.constant 0 : i32
    %c0_i32_0 = arith.constant 0 : i32
    %c0_i32_1 = arith.constant 0 : i32
    %c0_i32_2 = arith.constant 0 : i32
    return %c0_i32, %c0_i32_0, %c0_i32_1 : i32, i32, i32
  }
  func.func @transform_2(%arg0: i32) -> (i32, i32) {
    %c0_i32 = arith.constant 0 : i32
    %c0_i32_0 = arith.constant 0 : i32
    %c0_i32_1 = arith.constant 0 : i32
    return %c0_i32, %c0_i32_0 : i32, i32
  }
  func.func @transform_3(%arg0: i32) -> (i32, i32, i32, i32) {
    %c0_i32 = arith.constant 0 : i32
    %c0_i32_0 = arith.constant 0 : i32
    %c0_i32_1 = arith.constant 0 : i32
    %c0_i32_2 = arith.constant 0 : i32
    return %arg0, %c0_i32, %c0_i32_0, %c0_i32_1 : i32, i32, i32, i32
  }
}

module attributes {stable_mosaic.version = 11 : i64} {
  func.func @_rpn_head_kernel(%arg0: i32, %arg1: memref<1x6x6x64xbf16, #tpu.memory_space<vmem>>, %arg2: memref<9x64x64xbf16, #tpu.memory_space<vmem>>, %arg3: memref<1x64xf32, #tpu.memory_space<vmem>>, %arg4: memref<64x128xbf16, #tpu.memory_space<vmem>>, %arg5: memref<1x128xf32, #tpu.memory_space<vmem>>, %arg6: memref<1x16x128xf32, #tpu.memory_space<vmem>>) attributes {dimension_semantics = [#tpu.dimension_semantics<parallel>], iteration_bounds = array<i64: 2>, scalar_prefetch = 0 : i64, scratch_operands = 0 : i64, tpu.core_type = #tpu.core_type<tc>, window_params = [{transform_indices = @transform_0, window_bounds = array<i64: 1, 6, 6, 64>}, {pipeline_mode = #tpu.pipeline_mode<synchronous>, transform_indices = @transform_1, window_bounds = array<i64: 9, 64, 64>}, {pipeline_mode = #tpu.pipeline_mode<synchronous>, transform_indices = @transform_2, window_bounds = array<i64: 1, 64>}, {pipeline_mode = #tpu.pipeline_mode<synchronous>, transform_indices = @transform_3, window_bounds = array<i64: 64, 128>}, {pipeline_mode = #tpu.pipeline_mode<synchronous>, transform_indices = @transform_4, window_bounds = array<i64: 1, 128>}, {transform_indices = @transform_5, window_bounds = array<i64: 1, 16, 128>}]} {
    %c0 = arith.constant 0 : index
    %c0_0 = arith.constant 0 : index
    %c0_1 = arith.constant 0 : index
    %c0_2 = arith.constant 0 : index
    %0 = vector.load %arg1[%c0, %c0_0, %c0_1, %c0_2] : memref<1x6x6x64xbf16, #tpu.memory_space<vmem>>, vector<1x6x6x64xbf16>
    %1 = vector.shape_cast %0 : vector<1x6x6x64xbf16> to vector<6x6x64xbf16>
    %cst = arith.constant 0.000000e+00 : f32
    %2 = vector.broadcast %cst : f32 to vector<16x64xf32>
    %3 = vector.extract_strided_slice %1 {offsets = [0, 0, 0], sizes = [4, 4, 64], strides = [1, 1, 1]} : vector<6x6x64xbf16> to vector<4x4x64xbf16>
    %4 = vector.shape_cast %3 : vector<4x4x64xbf16> to vector<16x64xbf16>
    %c0_3 = arith.constant 0 : index
    %c0_4 = arith.constant 0 : index
    %c0_5 = arith.constant 0 : index
    %5 = vector.load %arg2[%c0_3, %c0_4, %c0_5] : memref<9x64x64xbf16, #tpu.memory_space<vmem>>, vector<1x64x64xbf16>
    %6 = vector.shape_cast %5 : vector<1x64x64xbf16> to vector<64x64xbf16>
    %cst_6 = arith.constant dense<0.000000e+00> : vector<16x64xf32>
    %7 = tpu.matmul %4, %6, %cst_6 {dimension_numbers = #tpu.dot_dimension_numbers<[1], [0], [0], [1], [0, 0, 1, 1], [], []>} : vector<16x64xbf16>, vector<64x64xbf16>, vector<16x64xf32> -> vector<16x64xf32>
    %8 = arith.addf %2, %7 : vector<16x64xf32>
    %9 = vector.extract_strided_slice %1 {offsets = [0, 1, 0], sizes = [4, 4, 64], strides = [1, 1, 1]} : vector<6x6x64xbf16> to vector<4x4x64xbf16>
    %10 = vector.shape_cast %9 : vector<4x4x64xbf16> to vector<16x64xbf16>
    %c1 = arith.constant 1 : index
    %c0_7 = arith.constant 0 : index
    %c0_8 = arith.constant 0 : index
    %11 = vector.load %arg2[%c1, %c0_7, %c0_8] : memref<9x64x64xbf16, #tpu.memory_space<vmem>>, vector<1x64x64xbf16>
    %12 = vector.shape_cast %11 : vector<1x64x64xbf16> to vector<64x64xbf16>
    %cst_9 = arith.constant dense<0.000000e+00> : vector<16x64xf32>
    %13 = tpu.matmul %10, %12, %cst_9 {dimension_numbers = #tpu.dot_dimension_numbers<[1], [0], [0], [1], [0, 0, 1, 1], [], []>} : vector<16x64xbf16>, vector<64x64xbf16>, vector<16x64xf32> -> vector<16x64xf32>
    %14 = arith.addf %8, %13 : vector<16x64xf32>
    %15 = vector.extract_strided_slice %1 {offsets = [0, 2, 0], sizes = [4, 4, 64], strides = [1, 1, 1]} : vector<6x6x64xbf16> to vector<4x4x64xbf16>
    %16 = vector.shape_cast %15 : vector<4x4x64xbf16> to vector<16x64xbf16>
    %c2 = arith.constant 2 : index
    %c0_10 = arith.constant 0 : index
    %c0_11 = arith.constant 0 : index
    %17 = vector.load %arg2[%c2, %c0_10, %c0_11] : memref<9x64x64xbf16, #tpu.memory_space<vmem>>, vector<1x64x64xbf16>
    %18 = vector.shape_cast %17 : vector<1x64x64xbf16> to vector<64x64xbf16>
    %cst_12 = arith.constant dense<0.000000e+00> : vector<16x64xf32>
    %19 = tpu.matmul %16, %18, %cst_12 {dimension_numbers = #tpu.dot_dimension_numbers<[1], [0], [0], [1], [0, 0, 1, 1], [], []>} : vector<16x64xbf16>, vector<64x64xbf16>, vector<16x64xf32> -> vector<16x64xf32>
    %20 = arith.addf %14, %19 : vector<16x64xf32>
    %21 = vector.extract_strided_slice %1 {offsets = [1, 0, 0], sizes = [4, 4, 64], strides = [1, 1, 1]} : vector<6x6x64xbf16> to vector<4x4x64xbf16>
    %22 = vector.shape_cast %21 : vector<4x4x64xbf16> to vector<16x64xbf16>
    %c3 = arith.constant 3 : index
    %c0_13 = arith.constant 0 : index
    %c0_14 = arith.constant 0 : index
    %23 = vector.load %arg2[%c3, %c0_13, %c0_14] : memref<9x64x64xbf16, #tpu.memory_space<vmem>>, vector<1x64x64xbf16>
    %24 = vector.shape_cast %23 : vector<1x64x64xbf16> to vector<64x64xbf16>
    %cst_15 = arith.constant dense<0.000000e+00> : vector<16x64xf32>
    %25 = tpu.matmul %22, %24, %cst_15 {dimension_numbers = #tpu.dot_dimension_numbers<[1], [0], [0], [1], [0, 0, 1, 1], [], []>} : vector<16x64xbf16>, vector<64x64xbf16>, vector<16x64xf32> -> vector<16x64xf32>
    %26 = arith.addf %20, %25 : vector<16x64xf32>
    %27 = vector.extract_strided_slice %1 {offsets = [1, 1, 0], sizes = [4, 4, 64], strides = [1, 1, 1]} : vector<6x6x64xbf16> to vector<4x4x64xbf16>
    %28 = vector.shape_cast %27 : vector<4x4x64xbf16> to vector<16x64xbf16>
    %c4 = arith.constant 4 : index
    %c0_16 = arith.constant 0 : index
    %c0_17 = arith.constant 0 : index
    %29 = vector.load %arg2[%c4, %c0_16, %c0_17] : memref<9x64x64xbf16, #tpu.memory_space<vmem>>, vector<1x64x64xbf16>
    %30 = vector.shape_cast %29 : vector<1x64x64xbf16> to vector<64x64xbf16>
    %cst_18 = arith.constant dense<0.000000e+00> : vector<16x64xf32>
    %31 = tpu.matmul %28, %30, %cst_18 {dimension_numbers = #tpu.dot_dimension_numbers<[1], [0], [0], [1], [0, 0, 1, 1], [], []>} : vector<16x64xbf16>, vector<64x64xbf16>, vector<16x64xf32> -> vector<16x64xf32>
    %32 = arith.addf %26, %31 : vector<16x64xf32>
    %33 = vector.extract_strided_slice %1 {offsets = [1, 2, 0], sizes = [4, 4, 64], strides = [1, 1, 1]} : vector<6x6x64xbf16> to vector<4x4x64xbf16>
    %34 = vector.shape_cast %33 : vector<4x4x64xbf16> to vector<16x64xbf16>
    %c5 = arith.constant 5 : index
    %c0_19 = arith.constant 0 : index
    %c0_20 = arith.constant 0 : index
    %35 = vector.load %arg2[%c5, %c0_19, %c0_20] : memref<9x64x64xbf16, #tpu.memory_space<vmem>>, vector<1x64x64xbf16>
    %36 = vector.shape_cast %35 : vector<1x64x64xbf16> to vector<64x64xbf16>
    %cst_21 = arith.constant dense<0.000000e+00> : vector<16x64xf32>
    %37 = tpu.matmul %34, %36, %cst_21 {dimension_numbers = #tpu.dot_dimension_numbers<[1], [0], [0], [1], [0, 0, 1, 1], [], []>} : vector<16x64xbf16>, vector<64x64xbf16>, vector<16x64xf32> -> vector<16x64xf32>
    %38 = arith.addf %32, %37 : vector<16x64xf32>
    %39 = vector.extract_strided_slice %1 {offsets = [2, 0, 0], sizes = [4, 4, 64], strides = [1, 1, 1]} : vector<6x6x64xbf16> to vector<4x4x64xbf16>
    %40 = vector.shape_cast %39 : vector<4x4x64xbf16> to vector<16x64xbf16>
    %c6 = arith.constant 6 : index
    %c0_22 = arith.constant 0 : index
    %c0_23 = arith.constant 0 : index
    %41 = vector.load %arg2[%c6, %c0_22, %c0_23] : memref<9x64x64xbf16, #tpu.memory_space<vmem>>, vector<1x64x64xbf16>
    %42 = vector.shape_cast %41 : vector<1x64x64xbf16> to vector<64x64xbf16>
    %cst_24 = arith.constant dense<0.000000e+00> : vector<16x64xf32>
    %43 = tpu.matmul %40, %42, %cst_24 {dimension_numbers = #tpu.dot_dimension_numbers<[1], [0], [0], [1], [0, 0, 1, 1], [], []>} : vector<16x64xbf16>, vector<64x64xbf16>, vector<16x64xf32> -> vector<16x64xf32>
    %44 = arith.addf %38, %43 : vector<16x64xf32>
    %45 = vector.extract_strided_slice %1 {offsets = [2, 1, 0], sizes = [4, 4, 64], strides = [1, 1, 1]} : vector<6x6x64xbf16> to vector<4x4x64xbf16>
    %46 = vector.shape_cast %45 : vector<4x4x64xbf16> to vector<16x64xbf16>
    %c7 = arith.constant 7 : index
    %c0_25 = arith.constant 0 : index
    %c0_26 = arith.constant 0 : index
    %47 = vector.load %arg2[%c7, %c0_25, %c0_26] : memref<9x64x64xbf16, #tpu.memory_space<vmem>>, vector<1x64x64xbf16>
    %48 = vector.shape_cast %47 : vector<1x64x64xbf16> to vector<64x64xbf16>
    %cst_27 = arith.constant dense<0.000000e+00> : vector<16x64xf32>
    %49 = tpu.matmul %46, %48, %cst_27 {dimension_numbers = #tpu.dot_dimension_numbers<[1], [0], [0], [1], [0, 0, 1, 1], [], []>} : vector<16x64xbf16>, vector<64x64xbf16>, vector<16x64xf32> -> vector<16x64xf32>
    %50 = arith.addf %44, %49 : vector<16x64xf32>
    %51 = vector.extract_strided_slice %1 {offsets = [2, 2, 0], sizes = [4, 4, 64], strides = [1, 1, 1]} : vector<6x6x64xbf16> to vector<4x4x64xbf16>
    %52 = vector.shape_cast %51 : vector<4x4x64xbf16> to vector<16x64xbf16>
    %c8 = arith.constant 8 : index
    %c0_28 = arith.constant 0 : index
    %c0_29 = arith.constant 0 : index
    %53 = vector.load %arg2[%c8, %c0_28, %c0_29] : memref<9x64x64xbf16, #tpu.memory_space<vmem>>, vector<1x64x64xbf16>
    %54 = vector.shape_cast %53 : vector<1x64x64xbf16> to vector<64x64xbf16>
    %cst_30 = arith.constant dense<0.000000e+00> : vector<16x64xf32>
    %55 = tpu.matmul %52, %54, %cst_30 {dimension_numbers = #tpu.dot_dimension_numbers<[1], [0], [0], [1], [0, 0, 1, 1], [], []>} : vector<16x64xbf16>, vector<64x64xbf16>, vector<16x64xf32> -> vector<16x64xf32>
    %56 = arith.addf %50, %55 : vector<16x64xf32>
    %c0_31 = arith.constant 0 : index
    %c0_32 = arith.constant 0 : index
    %57 = vector.load %arg3[%c0_31, %c0_32] : memref<1x64xf32, #tpu.memory_space<vmem>>, vector<1x64xf32>
    %58 = vector.broadcast %57 : vector<1x64xf32> to vector<16x64xf32>
    %59 = arith.addf %56, %58 : vector<16x64xf32>
    %cst_33 = arith.constant 0.000000e+00 : f32
    %60 = vector.broadcast %cst_33 : f32 to vector<16x64xf32>
    %61 = arith.maximumf %59, %60 : vector<16x64xf32>
    %62 = arith.truncf %61 : vector<16x64xf32> to vector<16x64xbf16>
    %c0_34 = arith.constant 0 : index
    %c0_35 = arith.constant 0 : index
    %63 = vector.load %arg4[%c0_34, %c0_35] : memref<64x128xbf16, #tpu.memory_space<vmem>>, vector<64x128xbf16>
    %cst_36 = arith.constant dense<0.000000e+00> : vector<16x128xf32>
    %64 = tpu.matmul %62, %63, %cst_36 {dimension_numbers = #tpu.dot_dimension_numbers<[1], [0], [0], [1], [0, 0, 1, 1], [], []>} : vector<16x64xbf16>, vector<64x128xbf16>, vector<16x128xf32> -> vector<16x128xf32>
    %c0_37 = arith.constant 0 : index
    %c0_38 = arith.constant 0 : index
    %65 = vector.load %arg5[%c0_37, %c0_38] : memref<1x128xf32, #tpu.memory_space<vmem>>, vector<1x128xf32>
    %66 = vector.broadcast %65 : vector<1x128xf32> to vector<16x128xf32>
    %67 = arith.addf %64, %66 : vector<16x128xf32>
    %c0_39 = arith.constant 0 : index
    %c0_40 = arith.constant 0 : index
    %c0_41 = arith.constant 0 : index
    %68 = vector.load %arg6[%c0_39, %c0_40, %c0_41] : memref<1x16x128xf32, #tpu.memory_space<vmem>>, vector<1x16x128xf32>
    %69 = vector.shape_cast %68 : vector<1x16x128xf32> to vector<16x128xf32>
    %70 = vector.shape_cast %67 : vector<16x128xf32> to vector<1x16x128xf32>
    tpu.vector_store %arg6[%c0_39, %c0_40, %c0_41], %70 {strides = array<i32>} : memref<1x16x128xf32, #tpu.memory_space<vmem>>, vector<1x16x128xf32>,
    return
  }
  func.func @transform_0(%arg0: i32) -> (i32, i32, i32, i32) {
    %c0_i32 = arith.constant 0 : i32
    %c0_i32_0 = arith.constant 0 : i32
    %c0_i32_1 = arith.constant 0 : i32
    %c0_i32_2 = arith.constant 0 : i32
    return %arg0, %c0_i32, %c0_i32_0, %c0_i32_1 : i32, i32, i32, i32
  }
  func.func @transform_1(%arg0: i32) -> (i32, i32, i32) {
    %c0_i32 = arith.constant 0 : i32
    %c0_i32_0 = arith.constant 0 : i32
    %c0_i32_1 = arith.constant 0 : i32
    %c0_i32_2 = arith.constant 0 : i32
    return %c0_i32, %c0_i32_0, %c0_i32_1 : i32, i32, i32
  }
  func.func @transform_2(%arg0: i32) -> (i32, i32) {
    %c0_i32 = arith.constant 0 : i32
    %c0_i32_0 = arith.constant 0 : i32
    %c0_i32_1 = arith.constant 0 : i32
    return %c0_i32, %c0_i32_0 : i32, i32
  }
  func.func @transform_3(%arg0: i32) -> (i32, i32) {
    %c0_i32 = arith.constant 0 : i32
    %c0_i32_0 = arith.constant 0 : i32
    %c0_i32_1 = arith.constant 0 : i32
    return %c0_i32, %c0_i32_0 : i32, i32
  }
  func.func @transform_4(%arg0: i32) -> (i32, i32) {
    %c0_i32 = arith.constant 0 : i32
    %c0_i32_0 = arith.constant 0 : i32
    %c0_i32_1 = arith.constant 0 : i32
    return %c0_i32, %c0_i32_0 : i32, i32
  }
  func.func @transform_5(%arg0: i32) -> (i32, i32, i32) {
    %c0_i32 = arith.constant 0 : i32
    %c0_i32_0 = arith.constant 0 : i32
    %c0_i32_1 = arith.constant 0 : i32
    return %arg0, %c0_i32, %c0_i32_0 : i32, i32, i32
  }
}

module attributes {stable_mosaic.version = 11 : i64} {
  func.func @_rpn_loss_kernel(%arg0: memref<2x256xf32, #tpu.memory_space<vmem>>, %arg1: memref<2x256xf32, #tpu.memory_space<vmem>>, %arg2: memref<2x256xf32, #tpu.memory_space<vmem>>, %arg3: memref<2x640xf32, #tpu.memory_space<vmem>>, %arg4: memref<2x640xf32, #tpu.memory_space<vmem>>, %arg5: memref<2x640xf32, #tpu.memory_space<vmem>>, %arg6: memref<1x1xf32, #tpu.memory_space<vmem>>) attributes {dimension_semantics = [], scalar_prefetch = 0 : i64, scratch_operands = 0 : i64, tpu.core_type = #tpu.core_type<tc>} {
    %c0 = arith.constant 0 : index
    %c0_0 = arith.constant 0 : index
    %0 = vector.load %arg0[%c0, %c0_0] : memref<2x256xf32, #tpu.memory_space<vmem>>, vector<2x256xf32>
    %c0_1 = arith.constant 0 : index
    %c0_2 = arith.constant 0 : index
    %1 = vector.load %arg1[%c0_1, %c0_2] : memref<2x256xf32, #tpu.memory_space<vmem>>, vector<2x256xf32>
    %c0_3 = arith.constant 0 : index
    %c0_4 = arith.constant 0 : index
    %2 = vector.load %arg2[%c0_3, %c0_4] : memref<2x256xf32, #tpu.memory_space<vmem>>, vector<2x256xf32>
    %cst = arith.constant 0.000000e+00 : f32
    %3 = vector.broadcast %cst : f32 to vector<2x256xf32>
    %4 = arith.maximumf %0, %3 : vector<2x256xf32>
    %5 = arith.mulf %0, %1 : vector<2x256xf32>
    %6 = arith.subf %4, %5 : vector<2x256xf32>
    %7 = math.absf %0 : vector<2x256xf32>
    %cst_5 = arith.constant 0.000000e+00 : f32
    %8 = vector.broadcast %cst_5 : f32 to vector<2x256xf32>
    %9 = arith.subf %8, %7 : vector<2x256xf32>
    %10 = math.exp %9 : vector<2x256xf32>
    %11 = math.log1p %10 : vector<2x256xf32>
    %12 = arith.addf %6, %11 : vector<2x256xf32>
    %13 = vector.shape_cast %2 : vector<2x256xf32> to vector<1x2x256xf32>
    %cst_6 = arith.constant dense<0.000000e+00> : vector<1xf32>
    %14 = vector.multi_reduction <add>, %13, %cst_6 [1, 2] : vector<1x2x256xf32> to vector<1xf32>
    %15 = vector.shape_cast %14 : vector<1xf32> to vector<1x1x1xf32>
    %16 = vector.extract %15[0, 0, 0] : f32 from vector<1x1x1xf32>
    %cst_7 = arith.constant 1.000000e+00 : f32
    %17 = arith.maximumf %16, %cst_7 : f32
    %18 = arith.mulf %12, %2 : vector<2x256xf32>
    %19 = vector.shape_cast %18 : vector<2x256xf32> to vector<1x2x256xf32>
    %cst_8 = arith.constant dense<0.000000e+00> : vector<1xf32>
    %20 = vector.multi_reduction <add>, %19, %cst_8 [1, 2] : vector<1x2x256xf32> to vector<1xf32>
    %21 = vector.shape_cast %20 : vector<1xf32> to vector<1x1x1xf32>
    %22 = vector.extract %21[0, 0, 0] : f32 from vector<1x1x1xf32>
    %23 = arith.divf %22, %17 : f32
    %c0_9 = arith.constant 0 : index
    %c0_10 = arith.constant 0 : index
    %24 = vector.load %arg3[%c0_9, %c0_10] : memref<2x640xf32, #tpu.memory_space<vmem>>, vector<2x640xf32>
    %c0_11 = arith.constant 0 : index
    %c0_12 = arith.constant 0 : index
    %25 = vector.load %arg4[%c0_11, %c0_12] : memref<2x640xf32, #tpu.memory_space<vmem>>, vector<2x640xf32>
    %26 = arith.subf %24, %25 : vector<2x640xf32>
    %27 = math.absf %26 : vector<2x640xf32>
    %cst_13 = arith.constant 1.000000e+00 : f32
    %28 = vector.broadcast %cst_13 : f32 to vector<2x640xf32>
    %29 = arith.cmpf olt, %27, %28 : vector<2x640xf32>
    %cst_14 = arith.constant 5.000000e-01 : f32
    %30 = vector.broadcast %cst_14 : f32 to vector<2x640xf32>
    %31 = arith.mulf %30, %26 : vector<2x640xf32>
    %32 = arith.mulf %31, %26 : vector<2x640xf32>
    %cst_15 = arith.constant 5.000000e-01 : f32
    %33 = vector.broadcast %cst_15 : f32 to vector<2x640xf32>
    %34 = arith.subf %27, %33 : vector<2x640xf32>
    %35 = arith.select %29, %32, %34 : vector<2x640xi1>, vector<2x640xf32>
    %c0_16 = arith.constant 0 : index
    %c0_17 = arith.constant 0 : index
    %36 = vector.load %arg5[%c0_16, %c0_17] : memref<2x640xf32, #tpu.memory_space<vmem>>, vector<2x640xf32>
    %37 = vector.shape_cast %36 : vector<2x640xf32> to vector<1x2x640xf32>
    %cst_18 = arith.constant dense<0.000000e+00> : vector<1xf32>
    %38 = vector.multi_reduction <add>, %37, %cst_18 [1, 2] : vector<1x2x640xf32> to vector<1xf32>
    %39 = vector.shape_cast %38 : vector<1xf32> to vector<1x1x1xf32>
    %40 = vector.extract %39[0, 0, 0] : f32 from vector<1x1x1xf32>
    %cst_19 = arith.constant 2.500000e-01 : f32
    %41 = arith.mulf %cst_19, %40 : f32
    %cst_20 = arith.constant 1.000000e+00 : f32
    %42 = arith.maximumf %41, %cst_20 : f32
    %43 = arith.mulf %35, %36 : vector<2x640xf32>
    %44 = vector.shape_cast %43 : vector<2x640xf32> to vector<1x2x640xf32>
    %cst_21 = arith.constant dense<0.000000e+00> : vector<1xf32>
    %45 = vector.multi_reduction <add>, %44, %cst_21 [1, 2] : vector<1x2x640xf32> to vector<1xf32>
    %46 = vector.shape_cast %45 : vector<1xf32> to vector<1x1x1xf32>
    %47 = vector.extract %46[0, 0, 0] : f32 from vector<1x1x1xf32>
    %48 = arith.divf %47, %42 : f32
    %cst_22 = arith.constant 1.000000e+00 : f32
    %49 = arith.mulf %cst_22, %23 : f32
    %cst_23 = arith.constant 1.000000e+01 : f32
    %50 = arith.mulf %cst_23, %48 : f32
    %51 = arith.addf %49, %50 : f32
    %52 = vector.broadcast %51 : f32 to vector<1x1xf32>
    %c0_24 = arith.constant 0 : index
    %c0_25 = arith.constant 0 : index
    %53 = vector.load %arg6[%c0_24, %c0_25] : memref<1x1xf32, #tpu.memory_space<vmem>>, vector<1x1xf32>
    tpu.vector_store %arg6[%c0_24, %c0_25], %52 {strides = array<i32>} : memref<1x1xf32, #tpu.memory_space<vmem>>, vector<1x1xf32>,
    return
  }
}

</mosaic_0001>

<llo_original>
// kernel: _forward_impl.6
$region0: #{_forward_impl.6}
  #allocation0 [shape = 'u32[]', space=smem, size = 0x4, offset = 0x4, fixed_abs, tag = 'smem constant byte address 0x4 - core index']
  #allocation1 [shape = 'u32[144,128]{1,0:T(1,128)}', space=vmem, size = 0x12000, scoped, tag = 'internal scratch']
  %s0 = inlined_call_operand.vmem [shape: bf16[2,6,6,64], index: 0, kind: input, shape index: {}]
  %s1 = inlined_call_operand.vmem [shape: bf16[9,64,64], index: 1, kind: input, shape index: {}]
  %s2 = inlined_call_operand.vmem [shape: f32[1,64], index: 2, kind: input, shape index: {}]
  %s3 = inlined_call_operand.vmem [shape: bf16[64,128], index: 3, kind: input, shape index: {}]
  %s4 = inlined_call_operand.vmem [shape: f32[1,128], index: 4, kind: input, shape index: {}]
  %s5 = inlined_call_operand.vmem [shape: f32[2,16,128], index: 5, kind: output, shape index: {}]
  %s6 = sld [smem:[#allocation0]]
  $region53: #{_forward_impl.6} parent=0
    _
  %s8 = ssub.s32 1, %s6
  %s9 = scalar_select 0, %s8, %s6
  loop: start=0, step=1, limit=4
  $region2: #{_forward_impl.6} parent=0 // loop_pre_header
    _
  $region3: #{_forward_impl.6} parent=0 // loop_header
    %s11 = sphi 0, %s15
    %p12 = scmp.ge.s32.totalorder %s11, 4
    %s21 = sphi 0, %s23
    %s24 = sphi 0, %s21
    %s25 = sphi 0, %s24
    %s41 = sphi 0, %s25
    %s45 = sphi 0, %s45
    %s47 = sphi 0, %s45
    %s48 = sphi 0, %s47
    %s62 = sphi 0, %s48
    %s66 = sphi 0, %s66
    %s68 = sphi 0, %s66
    %s69 = sphi 0, %s68
    %s83 = sphi 0, %s69
    %s87 = sphi 0, %s87
    %s89 = sphi 0, %s87
    %s90 = sphi 0, %s89
    %s104 = sphi 0, %s90
    %s108 = sphi 0, %s108
    %s110 = sphi 0, %s108
    %s111 = sphi 0, %s110
    %s125 = sphi 0, %s111
    %s131 = sphi 0, %s133
    %s134 = sphi 0, %s131
    %s135 = sphi 0, %s134
    %s151 = sphi 0, %s135
  $region4: #{_forward_impl.6} parent=0 // loop_header_branch
    %14 = sbr.rel (%p12) target = $region8
  $region5: #{_forward_impl.6} parent=0 // loop_body
    %s16 = ssub.s32 %s11, 1
    %s17 = ssub.s32 %s11, 2
    %s18 = sadd.s32 %s11, 1
    %s19 = ssub.s32 %s11, %s18
    %p20 = scmp.eq.s32.totalorder %s19, 0
    %s22 = sadd.s32 %s21, 1
    %s23 = scalar_select %p20, %s21, %s22
    %p26 = pneg %p20
    %p27 = scmp.eq.s32.totalorder %s11, 1
    %p28 = por %p26, %p27
    %p29 = scmp.ne.s32.totalorder %s21, %s24
    %p30 = scmp.eq.s32.totalorder %s11, 0
    %p31 = por %p29, %p30
    %p32 = scmp.ne.s32.totalorder %s21, %s24
    %p33 = scmp.eq.s32.totalorder %s16, 1
    %p34 = por %p32, %p33
    %p35 = scmp.ne.s32.totalorder %s24, %s25
    %p36 = scmp.eq.s32.totalorder %s16, 0
    %p37 = por %p35, %p36
    %p38 = scmp.ne.s32.totalorder %s24, %s25
    %p39 = scmp.eq.s32.totalorder %s17, 1
    %p40 = por %p38, %p39
    %p42 = scmp.ne.s32.totalorder %s25, %s41
    %p43 = scmp.eq.s32.totalorder %s17, 0
    %p44 = por %p42, %p43
    %s46 = sadd.s32 %s45, 1
    %p49 = scmp.eq.s32.totalorder %s11, 1
    %p50 = scmp.ne.s32.totalorder %s45, %s47
    %p51 = scmp.eq.s32.totalorder %s11, 0
    %p52 = por %p50, %p51
    %p53 = scmp.ne.s32.totalorder %s45, %s47
    %p54 = scmp.eq.s32.totalorder %s16, 1
    %p55 = por %p53, %p54
    %p56 = scmp.ne.s32.totalorder %s47, %s48
    %p57 = scmp.eq.s32.totalorder %s16, 0
    %p58 = por %p56, %p57
    %p59 = scmp.ne.s32.totalorder %s47, %s48
    %p60 = scmp.eq.s32.totalorder %s17, 1
    %p61 = por %p59, %p60
    %p63 = scmp.ne.s32.totalorder %s48, %s62
    %p64 = scmp.eq.s32.totalorder %s17, 0
    %p65 = por %p63, %p64
    %s67 = sadd.s32 %s66, 1
    %p70 = scmp.eq.s32.totalorder %s11, 1
    %p71 = scmp.ne.s32.totalorder %s66, %s68
    %p72 = scmp.eq.s32.totalorder %s11, 0
    %p73 = por %p71, %p72
    %p74 = scmp.ne.s32.totalorder %s66, %s68
    %p75 = scmp.eq.s32.totalorder %s16, 1
    %p76 = por %p74, %p75
    %p77 = scmp.ne.s32.totalorder %s68, %s69
    %p78 = scmp.eq.s32.totalorder %s16, 0
    %p79 = por %p77, %p78
    %p80 = scmp.ne.s32.totalorder %s68, %s69
    %p81 = scmp.eq.s32.totalorder %s17, 1
    %p82 = por %p80, %p81
    %p84 = scmp.ne.s32.totalorder %s69, %s83
    %p85 = scmp.eq.s32.totalorder %s17, 0
    %p86 = por %p84, %p85
    %s88 = sadd.s32 %s87, 1
    %p91 = scmp.eq.s32.totalorder %s11, 1
    %p92 = scmp.ne.s32.totalorder %s87, %s89
    %p93 = scmp.eq.s32.totalorder %s11, 0
    %p94 = por %p92, %p93
    %p95 = scmp.ne.s32.totalorder %s87, %s89
    %p96 = scmp.eq.s32.totalorder %s16, 1
    %p97 = por %p95, %p96
    %p98 = scmp.ne.s32.totalorder %s89, %s90
    %p99 = scmp.eq.s32.totalorder %s16, 0
    %p100 = por %p98, %p99
    %p101 = scmp.ne.s32.totalorder %s89, %s90
    %p102 = scmp.eq.s32.totalorder %s17, 1
    %p103 = por %p101, %p102
    %p105 = scmp.ne.s32.totalorder %s90, %s104
    %p106 = scmp.eq.s32.totalorder %s17, 0
    %p107 = por %p105, %p106
    %s109 = sadd.s32 %s108, 1
    %p112 = scmp.eq.s32.totalorder %s11, 1
    %p113 = scmp.ne.s32.totalorder %s108, %s110
    %p114 = scmp.eq.s32.totalorder %s11, 0
    %p115 = por %p113, %p114
    %p116 = scmp.ne.s32.totalorder %s108, %s110
    %p117 = scmp.eq.s32.totalorder %s16, 1
    %p118 = por %p116, %p117
    %p119 = scmp.ne.s32.totalorder %s110, %s111
    %p120 = scmp.eq.s32.totalorder %s16, 0
    %p121 = por %p119, %p120
    %p122 = scmp.ne.s32.totalorder %s110, %s111
    %p123 = scmp.eq.s32.totalorder %s17, 1
    %p124 = por %p122, %p123
    %p126 = scmp.ne.s32.totalorder %s111, %s125
    %p127 = scmp.eq.s32.totalorder %s17, 0
    %p128 = por %p126, %p127
    %s129 = ssub.s32 %s11, %s18
    %p130 = scmp.eq.s32.totalorder %s129, 0
    %s132 = sadd.s32 %s131, 1
    %s133 = scalar_select %p130, %s131, %s132
    %p136 = pneg %p130
    %p137 = scmp.eq.s32.totalorder %s11, 1
    %p138 = por %p136, %p137
    %p139 = scmp.ne.s32.totalorder %s131, %s134
    %p140 = scmp.eq.s32.totalorder %s11, 0
    %p141 = por %p139, %p140
    %p142 = scmp.ne.s32.totalorder %s131, %s134
    %p143 = scmp.eq.s32.totalorder %s16, 1
    %p144 = por %p142, %p143
    %p145 = scmp.ne.s32.totalorder %s134, %s135
    %p146 = scmp.eq.s32.totalorder %s16, 0
    %p147 = por %p145, %p146
    %p148 = scmp.ne.s32.totalorder %s134, %s135
    %p149 = scmp.eq.s32.totalorder %s17, 1
    %p150 = por %p148, %p149
    %p152 = scmp.ne.s32.totalorder %s135, %s151
    %p153 = scmp.eq.s32.totalorder %s17, 0
    %p154 = por %p152, %p153
    %p155 = scmp.le.s32.totalorder 1, %s11
    %p156 = scmp.lt.s32.totalorder %s11, 3
    %p157 = pnand %p155, %p156
    %p158 = pneg %p157
    // Predicated region
    $region9: #{_forward_impl.6} parent=5 // pred_check
      _
    $region10: #{_forward_impl.6} parent=5 // pred_check_branch
      %160 = sbr.rel (%p157) target = $region12
    $region11: #{_forward_impl.6} parent=5 // pred_region
      %s161 = ssub.s32 %s11, 1
      // Predicated region
      $region13: #{_forward_impl.6} parent=11 // pred_check
        %p162 = pneg %p58
      $region14: #{_forward_impl.6} parent=11 // pred_check_branch
        %164 = sbr.rel (%p162) target = $region16
      $region15: #{_forward_impl.6} parent=11 // pred_region
        _
      $region16: #{_forward_impl.6} parent=11 // pred_fallthru
        _
      // Predicated region
      $region17: #{_forward_impl.6} parent=11 // pred_check
        %p165 = pneg %p79
      $region18: #{_forward_impl.6} parent=11 // pred_check_branch
        %167 = sbr.rel (%p165) target = $region20
      $region19: #{_forward_impl.6} parent=11 // pred_region
        _
      $region20: #{_forward_impl.6} parent=11 // pred_fallthru
        _
      // Predicated region
      $region21: #{_forward_impl.6} parent=11 // pred_check
        %p168 = pneg %p100
      $region22: #{_forward_impl.6} parent=11 // pred_check_branch
        %170 = sbr.rel (%p168) target = $region24
      $region23: #{_forward_impl.6} parent=11 // pred_region
        _
      $region24: #{_forward_impl.6} parent=11 // pred_fallthru
        _
      // Predicated region
      $region25: #{_forward_impl.6} parent=11 // pred_check
        %p171 = pneg %p121
      $region26: #{_forward_impl.6} parent=11 // pred_check_branch
        %173 = sbr.rel (%p171) target = $region28
      $region27: #{_forward_impl.6} parent=11 // pred_region
        _
      $region28: #{_forward_impl.6} parent=11 // pred_fallthru
        _
    $region12: #{_forward_impl.6} parent=5 // pred_fallthru
      _
    %p174 = scmp.lt.s32.totalorder %s11, 2
    // Predicated region
    $region29: #{_forward_impl.6} parent=5 // pred_check
      %p175 = pneg %p174
    $region30: #{_forward_impl.6} parent=5 // pred_check_branch
      %177 = sbr.rel (%p175) target = $region32
    $region31: #{_forward_impl.6} parent=5 // pred_region
      // Predicated region
      $region33: #{_forward_impl.6} parent=31 // pred_check
        %p178 = pneg %p31
      $region34: #{_forward_impl.6} parent=31 // pred_check_branch
        %180 = sbr.rel (%p178) target = $region36
      $region35: #{_forward_impl.6} parent=31 // pred_region
        %p181 = scmp.lt.s32.totalorder %s11, 1
        %s182 = scalar_select %p181, %s11, 1
        %s183 = smul.addr %s182, 6
        %s184 = smul.addr %s183, 4
        %s185 = scalar_lea.vmem %s0, %s184
      $region36: #{_forward_impl.6} parent=31 // pred_fallthru
        _
    $region32: #{_forward_impl.6} parent=5 // pred_fallthru
      _
    %p186 = scmp.le.s32.totalorder 1, %s11
    %p187 = scmp.lt.s32.totalorder %s11, 3
    %p188 = pnand %p186, %p187
    %p189 = pneg %p188
    // Predicated region
    $region37: #{_forward_impl.6} parent=5 // pred_check
      _
    $region38: #{_forward_impl.6} parent=5 // pred_check_branch
      %191 = sbr.rel (%p188) target = $region40
    $region39: #{_forward_impl.6} parent=5 // pred_region
      %s192 = ssub.s32 %s11, 1
      %p193 = scmp.lt.s32.totalorder %s16, 1
      %s194 = scalar_select %p193, %s16, 1
      %s195 = smul.addr %s194, 6
      %s196 = smul.addr %s195, 4
      %s197 = scalar_lea.vmem %s0, %s196
      %p198 = pneg %p37
      %p199 = pneg %p34
      %p200 = pneg %p58
      %p201 = pneg %p55
      %p202 = pneg %p79
      %p203 = pneg %p76
      %p204 = pneg %p100
      %p205 = pneg %p97
      %p206 = pneg %p121
      %p207 = pneg %p118
      %p208 = pneg %p147
      %p209 = pneg %p144
      %p210 = scmp.lt.s32.totalorder %s16, 1
      %s211 = scalar_select %p210, %s16, 1
      %s212 = smul.addr %s211, 2
      %s213 = smul.addr %s212, 8
      %s214 = scalar_lea.vmem %s5, %s213
      %p215 = scmp.lt.s32.totalorder %s16, 1
      %s216 = scalar_select %p215, %s16, 1
      %s217 = smul.addr %s216, 6
      %s218 = smul.addr %s217, 4
      %s219 = scalar_lea.vmem %s0, %s218
      %p220 = scmp.lt.s32.totalorder %s16, 1
      %s221 = scalar_select %p220, %s16, 1
      %s222 = smul.addr %s221, 2
      %s223 = smul.addr %s222, 8
      %s224 = scalar_lea.vmem %s5, %s223
      %v226 = vld [vmem:[%s219] sm:$0x7]
      %v227 = vld [vmem:[%s219 + $0x4] sm:$0x7]
      %v228 = vld [vmem:[%s219 + $0x8] sm:$0x7]
      %v229 = vld [vmem:[%s219 + $0xc] sm:$0x7]
      %v230 = vld [vmem:[%s219 + $0x10] sm:$0x7]
      %v231 = vld [vmem:[%s219 + $0x14] sm:$0x7]
      %v232 = vld [vmem:[%s1] sm:$0xf]
      %v233 = vld [vmem:[%s1 + $0x4] sm:$0xf]
      %v234 = vld [vmem:[%s1 + $0x8] sm:$0xf]
      %v235 = vld [vmem:[%s1 + $0xc] sm:$0xf]
      %v236 = vld [vmem:[%s1 + $0x10] sm:$0xf]
      %v237 = vld [vmem:[%s1 + $0x14] sm:$0xf]
      %v238 = vld [vmem:[%s1 + $0x18] sm:$0xf]
      %v239 = vld [vmem:[%s1 + $0x1c] sm:$0xf]
      %v245 = vunpack.c.l.s4 1983009808
      %v246 = vunpack.c.0.s8 %v245
      %v247 = vlaneseq
      %v248 = vshrl.u32 %v247, 7
      %v249 = vsub.s32 %v246, %v248
      %v250 = vrot.slane %v226, %v249
      %v251 = vcombine.high %v250, %v250
      %v253 = vunpack.c.l.s4 1983009808
      %v254 = vunpack.c.0.s8 %v253
      %v255 = vlaneseq
      %v256 = vshrl.u32 %v255, 7
      %v257 = vsub.s32 %v254, %v256
      %v258 = vrot.slane %v227, %v257
      %v259 = vcombine.high %v258, %v258
      %v261 = vunpack.c.l.s4 1983009808
      %v262 = vunpack.c.0.s8 %v261
      %v263 = vlaneseq
      %v264 = vshrl.u32 %v263, 7
      %v265 = vsub.s32 %v262, %v264
      %v266 = vrot.slane %v228, %v265
      %v267 = vcombine.high %v266, %v266
      %v269 = vunpack.c.l.s4 1983009808
      %v270 = vunpack.c.0.s8 %v269
      %v271 = vlaneseq
      %v272 = vshrl.u32 %v271, 7
      %v273 = vsub.s32 %v270, %v272
      %v274 = vrot.slane %v229, %v273
      %v275 = vcombine.high %v274, %v274
      %vm276 = vsmask.f32 1280
      %vm277 = vsmask.f32 3336
      %vm278 = vmor %vm276, %vm277
      %vm279 = vsmask.f32 5392
      %vm280 = vmor %vm278, %vm279
      %vm281 = vsmask.f32 7448
      %vm282 = vmor %vm280, %vm281
      %v284 = vshrl.u32 %v250, 16
      %v286 = vrot.slane %v284, 6
      %v287 = vshll.u32 %v250, 16
      %v289 = vrot.slane %v287, 7
      %v290 = vor.u32 %v286, %v289
      %v291 = vrot.slane %v290, 2
      %v293 = vshll.u32 %v251, 16
      %v295 = vrot.slane %v293, 7
      %v296 = vsel %vm282, %v291, %v295
      %v298 = vshrl.u32 %v258, 16
      %v300 = vrot.slane %v298, 6
      %v301 = vshll.u32 %v258, 16
      %v303 = vrot.slane %v301, 7
      %v304 = vor.u32 %v300, %v303
      %v305 = vrot.slane %v304, 2
      %v307 = vshll.u32 %v259, 16
      %v309 = vrot.slane %v307, 7
      %v310 = vsel %vm282, %v305, %v309
      %v312 = vshrl.u32 %v266, 16
      %v314 = vrot.slane %v312, 6
      %v315 = vshll.u32 %v266, 16
      %v317 = vrot.slane %v315, 7
      %v318 = vor.u32 %v314, %v317
      %v319 = vrot.slane %v318, 2
      %v321 = vshll.u32 %v267, 16
      %v323 = vrot.slane %v321, 7
      %v324 = vsel %vm282, %v319, %v323
      %v326 = vshrl.u32 %v274, 16
      %v328 = vrot.slane %v326, 6
      %v329 = vshll.u32 %v274, 16
      %v331 = vrot.slane %v329, 7
      %v332 = vor.u32 %v328, %v331
      %v333 = vrot.slane %v332, 2
      %v335 = vshll.u32 %v275, 16
      %v337 = vrot.slane %v335, 7
      %v338 = vsel %vm282, %v333, %v337
      %s339 = scalar_lea.vmem %s1, 32
      %v340 = vld [vmem:[%s339] sm:$0xf]
      %v341 = vld [vmem:[%s339 + $0x4] sm:$0xf]
      %v342 = vld [vmem:[%s339 + $0x8] sm:$0xf]
      %v343 = vld [vmem:[%s339 + $0xc] sm:$0xf]
      %v344 = vld [vmem:[%s339 + $0x10] sm:$0xf]
      %v345 = vld [vmem:[%s339 + $0x14] sm:$0xf]
      %v346 = vld [vmem:[%s339 + $0x18] sm:$0xf]
      %v347 = vld [vmem:[%s339 + $0x1c] sm:$0xf]
      %v348 = vcombine.low %v296, %v310
      %v349 = vcombine.low %v324, %v338
      %v351 = vunpack.c.l.s4 1983009808
      %v352 = vunpack.c.0.s8 %v351
      %v353 = vlaneseq
      %v354 = vshrl.u32 %v353, 7
      %v355 = vsub.s32 %v352, %v354
      %v356 = vrot.slane %v348, %v355
      %v358 = vunpack.c.l.s4 1983009808
      %v359 = vunpack.c.0.s8 %v358
      %v360 = vlaneseq
      %v361 = vshrl.u32 %v360, 7
      %v362 = vsub.s32 %v359, %v361
      %v363 = vrot.slane %v349, %v362
      %v364 = vcombine.low %v356, %v363
      %v373 = vunpack.c.l.b16 %v340
      %v374 = vunpack.c.l.b16 %v341
      %v375 = vunpack.c.l.b16 %v342
      %v376 = vunpack.c.l.b16 %v343
      %v377 = vunpack.c.l.b16 %v344
      %v378 = vunpack.c.l.b16 %v345
      %v379 = vunpack.c.l.b16 %v346
      %v380 = vunpack.c.l.b16 %v347
      %v381 = vpack.c.b16 %v374, %v373
      %v382 = vpack.c.b16 %v376, %v375
      %v383 = vpack.c.b16 %v378, %v377
      %v384 = vpack.c.b16 %v380, %v379
      %vm389 = vcmask 523264
      %v391 = vsel %vm389, %v364, 0
      %393 = vmatprep.subr.bf16.mxu0 0
      %394 = vmatpush1.bf16.msra.mxu0 0
      %395 = vmatprep.subr.bf16.mxu0 0
      %396 = vmatpush1.bf16.msra.mxu0 0
      %397 = vmatprep.subr.bf16.mxu0 0
      %398 = vmatpush1.bf16.msra.mxu0 0
      %399 = vmatprep.subr.bf16.mxu0 0
      %400 = vmatpush1.bf16.msra.mxu0 0
      %401 = vmatprep.subr.bf16.mxu0 0
      %402 = vmatpush1.bf16.msra.mxu0 %v384
      %403 = vmatprep.subr.bf16.mxu0 0
      %404 = vmatpush1.bf16.msra.mxu0 %v383
      %405 = vmatprep.subr.bf16.mxu0 0
      %406 = vmatpush1.bf16.msra.mxu0 %v382
      %407 = vmatprep.subr.bf16.mxu0 0
      %408 = vmatpush1.bf16.msra.mxu0 %v381
      %409 = vmatprep.subr.bf16.mxu0 0
      %410 = vmatpush2.bf16.msra.mxu0 0
      %411 = vmatprep.subr.bf16.mxu0 0
      %412 = vmatpush2.bf16.msra.mxu0 0
      %413 = vmatprep.subr.bf16.mxu0 0
      %414 = vmatpush2.bf16.msra.mxu0 0
      %415 = vmatprep.subr.bf16.mxu0 0
      %416 = vmatpush2.bf16.msra.mxu0 0
      %417 = vmatprep.subr.bf16.mxu0 0
      %418 = vmatpush2.bf16.msra.mxu0 0
      %419 = vmatprep.subr.bf16.mxu0 0
      %420 = vmatpush2.bf16.msra.mxu0 0
      %421 = vmatprep.subr.bf16.mxu0 0
      %422 = vmatpush2.bf16.msra.mxu0 0
      %423 = vmatprep.subr.bf16.mxu0 0
      %424 = vmatpush2.bf16.msra.mxu0 0
      %425 = vmatprep.mubr.bf16.mxu0 0
      %426 = vmatmul.mubr.bf16.gmra.mxu0 %v391
      %v427 = vpop.f32.mrf.mxu0
      %v428 = vadd.f32 0.0, %v427
      %v429 = vpop.f32.mrf.mxu0
      %v430 = vpop.f32.mrf.mxu0
      %v431 = vadd.f32 0.0, %v430
      %v432 = vpop.f32.mrf.mxu0
      %433 = vdwg.mxu0
      %v434 = vcombine.low %v226, %v227
      %v435 = vcombine.low %v228, %v229
      %v437 = vunpack.c.l.s4 1983009808
      %v438 = vunpack.c.0.s8 %v437
      %v439 = vlaneseq
      %v440 = vshrl.u32 %v439, 7
      %v441 = vsub.s32 %v438, %v440
      %v442 = vrot.slane %v434, %v441
      %v444 = vunpack.c.l.s4 1983009808
      %v445 = vunpack.c.0.s8 %v444
      %v446 = vlaneseq
      %v447 = vshrl.u32 %v446, 7
      %v448 = vsub.s32 %v445, %v447
      %v449 = vrot.slane %v435, %v448
      %v450 = vcombine.low %v442, %v449
      %v459 = vunpack.c.l.b16 %v232
      %v460 = vunpack.c.l.b16 %v233
      %v461 = vunpack.c.l.b16 %v234
      %v462 = vunpack.c.l.b16 %v235
      %v463 = vunpack.c.l.b16 %v236
      %v464 = vunpack.c.l.b16 %v237
      %v465 = vunpack.c.l.b16 %v238
      %v466 = vunpack.c.l.b16 %v239
      %v467 = vpack.c.b16 %v460, %v459
      %v468 = vpack.c.b16 %v462, %v461
      %v469 = vpack.c.b16 %v464, %v463
      %v470 = vpack.c.b16 %v466, %v465
      %v476 = vsel %vm389, %v450, 0
      %478 = vmatprep.subr.bf16.mxu0 0
      %479 = vmatpush1.bf16.msra.mxu0 0
      %480 = vmatprep.subr.bf16.mxu0 0
      %481 = vmatpush1.bf16.msra.mxu0 0
      %482 = vmatprep.subr.bf16.mxu0 0
      %483 = vmatpush1.bf16.msra.mxu0 0
      %484 = vmatprep.subr.bf16.mxu0 0
      %485 = vmatpush1.bf16.msra.mxu0 0
      %486 = vmatprep.subr.bf16.mxu0 0
      %487 = vmatpush1.bf16.msra.mxu0 %v470
      %488 = vmatprep.subr.bf16.mxu0 0
      %489 = vmatpush1.bf16.msra.mxu0 %v469
      %490 = vmatprep.subr.bf16.mxu0 0
      %491 = vmatpush1.bf16.msra.mxu0 %v468
      %492 = vmatprep.subr.bf16.mxu0 0
      %493 = vmatpush1.bf16.msra.mxu0 %v467
      %494 = vmatprep.subr.bf16.mxu0 0
      %495 = vmatpush2.bf16.msra.mxu0 0
      %496 = vmatprep.subr.bf16.mxu0 0
      %497 = vmatpush2.bf16.msra.mxu0 0
      %498 = vmatprep.subr.bf16.mxu0 0
      %499 = vmatpush2.bf16.msra.mxu0 0
      %500 = vmatprep.subr.bf16.mxu0 0
      %501 = vmatpush2.bf16.msra.mxu0 0
      %502 = vmatprep.subr.bf16.mxu0 0
      %503 = vmatpush2.bf16.msra.mxu0 0
      %504 = vmatprep.subr.bf16.mxu0 0
      %505 = vmatpush2.bf16.msra.mxu0 0
      %506 = vmatprep.subr.bf16.mxu0 0
      %507 = vmatpush2.bf16.msra.mxu0 0
      %508 = vmatprep.subr.bf16.mxu0 0
      %509 = vmatpush2.bf16.msra.mxu0 0
      %510 = vmatprep.mubr.bf16.mxu0 0
      %511 = vmatmul.mubr.bf16.gmra.mxu0 %v476
      %v512 = vpop.f32.mrf.mxu0
      %v513 = vadd.f32 %v428, %v512
      %v514 = vpop.f32.mrf.mxu0
      %v515 = vpop.f32.mrf.mxu0
      %v516 = vadd.f32 %v431, %v515
      %v517 = vpop.f32.mrf.mxu0
      %518 = vdwg.mxu0
      %vm519 = vcmask 1040384
      %vm520 = vcmask 1042434
      %vm521 = vmor %vm519, %vm520
      %vm522 = vcmask 1044484
      %vm523 = vmor %vm521, %vm522
      %vm524 = vcmask 1046534
      %vm525 = vmor %vm523, %vm524
      %v526 = vrot.slane %v250, 7
      %v527 = vrot.slane %v526, 2
      %v528 = vrot.slane %v251, 7
      %v529 = vsel %vm525, %v527, %v528
      %v530 = vrot.slane %v258, 7
      %v531 = vrot.slane %v530, 2
      %v532 = vrot.slane %v259, 7
      %v533 = vsel %vm525, %v531, %v532
      %v534 = vrot.slane %v266, 7
      %v535 = vrot.slane %v534, 2
      %v536 = vrot.slane %v267, 7
      %v537 = vsel %vm525, %v535, %v536
      %v538 = vrot.slane %v274, 7
      %v539 = vrot.slane %v538, 2
      %v540 = vrot.slane %v275, 7
      %v541 = vsel %vm525, %v539, %v540
      %s542 = scalar_lea.vmem %s1, 64
      %v543 = vld [vmem:[%s542] sm:$0xf]
      %v544 = vld [vmem:[%s542 + $0x4] sm:$0xf]
      %v545 = vld [vmem:[%s542 + $0x8] sm:$0xf]
      %v546 = vld [vmem:[%s542 + $0xc] sm:$0xf]
      %v547 = vld [vmem:[%s542 + $0x10] sm:$0xf]
      %v548 = vld [vmem:[%s542 + $0x14] sm:$0xf]
      %v549 = vld [vmem:[%s542 + $0x18] sm:$0xf]
      %v550 = vld [vmem:[%s542 + $0x1c] sm:$0xf]
      %v551 = vcombine.low %v529, %v533
      %v552 = vcombine.low %v537, %v541
      %v554 = vunpack.c.l.s4 1983009808
      %v555 = vunpack.c.0.s8 %v554
      %v556 = vlaneseq
      %v557 = vshrl.u32 %v556, 7
      %v558 = vsub.s32 %v555, %v557
      %v559 = vrot.slane %v551, %v558
      %v561 = vunpack.c.l.s4 1983009808
      %v562 = vunpack.c.0.s8 %v561
      %v563 = vlaneseq
      %v564 = vshrl.u32 %v563, 7
      %v565 = vsub.s32 %v562, %v564
      %v566 = vrot.slane %v552, %v565
      %v567 = vcombine.low %v559, %v566
      %v576 = vunpack.c.l.b16 %v543
      %v577 = vunpack.c.l.b16 %v544
      %v578 = vunpack.c.l.b16 %v545
      %v579 = vunpack.c.l.b16 %v546
      %v580 = vunpack.c.l.b16 %v547
      %v581 = vunpack.c.l.b16 %v548
      %v582 = vunpack.c.l.b16 %v549
      %v583 = vunpack.c.l.b16 %v550
      %v584 = vpack.c.b16 %v577, %v576
      %v585 = vpack.c.b16 %v579, %v578
      %v586 = vpack.c.b16 %v581, %v580
      %v587 = vpack.c.b16 %v583, %v582
      %v593 = vsel %vm389, %v567, 0
      %595 = vmatprep.subr.bf16.mxu0 0
      %596 = vmatpush1.bf16.msra.mxu0 0
      %597 = vmatprep.subr.bf16.mxu0 0
      %598 = vmatpush1.bf16.msra.mxu0 0
      %599 = vmatprep.subr.bf16.mxu0 0
      %600 = vmatpush1.bf16.msra.mxu0 0
      %601 = vmatprep.subr.bf16.mxu0 0
      %602 = vmatpush1.bf16.msra.mxu0 0
      %603 = vmatprep.subr.bf16.mxu0 0
      %604 = vmatpush1.bf16.msra.mxu0 %v587
      %605 = vmatprep.subr.bf16.mxu0 0
      %606 = vmatpush1.bf16.msra.mxu0 %v586
      %607 = vmatprep.subr.bf16.mxu0 0
      %608 = vmatpush1.bf16.msra.mxu0 %v585
      %609 = vmatprep.subr.bf16.mxu0 0
      %610 = vmatpush1.bf16.msra.mxu0 %v584
      %611 = vmatprep.subr.bf16.mxu0 0
      %612 = vmatpush2.bf16.msra.mxu0 0
      %613 = vmatprep.subr.bf16.mxu0 0
      %614 = vmatpush2.bf16.msra.mxu0 0
      %615 = vmatprep.subr.bf16.mxu0 0
      %616 = vmatpush2.bf16.msra.mxu0 0
      %617 = vmatprep.subr.bf16.mxu0 0
      %618 = vmatpush2.bf16.msra.mxu0 0
      %619 = vmatprep.subr.bf16.mxu0 0
      %620 = vmatpush2.bf16.msra.mxu0 0
      %621 = vmatprep.subr.bf16.mxu0 0
      %622 = vmatpush2.bf16.msra.mxu0 0
      %623 = vmatprep.subr.bf16.mxu0 0
      %624 = vmatpush2.bf16.msra.mxu0 0
      %625 = vmatprep.subr.bf16.mxu0 0
      %626 = vmatpush2.bf16.msra.mxu0 0
      %627 = vmatprep.mubr.bf16.mxu0 0
      %628 = vmatmul.mubr.bf16.gmra.mxu0 %v593
      %v629 = vpop.f32.mrf.mxu0
      %v630 = vadd.f32 0.0, %v629
      %v631 = vpop.f32.mrf.mxu0
      %v632 = vpop.f32.mrf.mxu0
      %v633 = vadd.f32 0.0, %v632
      %v634 = vpop.f32.mrf.mxu0
      %635 = vdwg.mxu0
      %v636 = vadd.f32 %v513, %v630
      %v637 = vadd.f32 %v516, %v633
      %s638 = scalar_lea.vmem %s1, 96
      %v639 = vld [vmem:[%s638] sm:$0xf]
      %v640 = vld [vmem:[%s638 + $0x4] sm:$0xf]
      %v641 = vld [vmem:[%s638 + $0x8] sm:$0xf]
      %v642 = vld [vmem:[%s638 + $0xc] sm:$0xf]
      %v643 = vld [vmem:[%s638 + $0x10] sm:$0xf]
      %v644 = vld [vmem:[%s638 + $0x14] sm:$0xf]
      %v645 = vld [vmem:[%s638 + $0x18] sm:$0xf]
      %v646 = vld [vmem:[%s638 + $0x1c] sm:$0xf]
      %v648 = vcombine.low %v227, %v228
      %v649 = vcombine.low %v229, %v230
      %v651 = vunpack.c.l.s4 1983009808
      %v652 = vunpack.c.0.s8 %v651
      %v653 = vlaneseq
      %v654 = vshrl.u32 %v653, 7
      %v655 = vsub.s32 %v652, %v654
      %v656 = vrot.slane %v648, %v655
      %v658 = vunpack.c.l.s4 1983009808
      %v659 = vunpack.c.0.s8 %v658
      %v660 = vlaneseq
      %v661 = vshrl.u32 %v660, 7
      %v662 = vsub.s32 %v659, %v661
      %v663 = vrot.slane %v649, %v662
      %v664 = vcombine.low %v656, %v663
      %v673 = vunpack.c.l.b16 %v639
      %v674 = vunpack.c.l.b16 %v640
      %v675 = vunpack.c.l.b16 %v641
      %v676 = vunpack.c.l.b16 %v642
      %v677 = vunpack.c.l.b16 %v643
      %v678 = vunpack.c.l.b16 %v644
      %v679 = vunpack.c.l.b16 %v645
      %v680 = vunpack.c.l.b16 %v646
      %v681 = vpack.c.b16 %v674, %v673
      %v682 = vpack.c.b16 %v676, %v675
      %v683 = vpack.c.b16 %v678, %v677
      %v684 = vpack.c.b16 %v680, %v679
      %v690 = vsel %vm389, %v664, 0
      %692 = vmatprep.subr.bf16.mxu0 0
      %693 = vmatpush1.bf16.msra.mxu0 0
      %694 = vmatprep.subr.bf16.mxu0 0
      %695 = vmatpush1.bf16.msra.mxu0 0
      %696 = vmatprep.subr.bf16.mxu0 0
      %697 = vmatpush1.bf16.msra.mxu0 0
      %698 = vmatprep.subr.bf16.mxu0 0
      %699 = vmatpush1.bf16.msra.mxu0 0
      %700 = vmatprep.subr.bf16.mxu0 0
      %701 = vmatpush1.bf16.msra.mxu0 %v684
      %702 = vmatprep.subr.bf16.mxu0 0
      %703 = vmatpush1.bf16.msra.mxu0 %v683
      %704 = vmatprep.subr.bf16.mxu0 0
      %705 = vmatpush1.bf16.msra.mxu0 %v682
      %706 = vmatprep.subr.bf16.mxu0 0
      %707 = vmatpush1.bf16.msra.mxu0 %v681
      %708 = vmatprep.subr.bf16.mxu0 0
      %709 = vmatpush2.bf16.msra.mxu0 0
      %710 = vmatprep.subr.bf16.mxu0 0
      %711 = vmatpush2.bf16.msra.mxu0 0
      %712 = vmatprep.subr.bf16.mxu0 0
      %713 = vmatpush2.bf16.msra.mxu0 0
      %714 = vmatprep.subr.bf16.mxu0 0
      %715 = vmatpush2.bf16.msra.mxu0 0
      %716 = vmatprep.subr.bf16.mxu0 0
      %717 = vmatpush2.bf16.msra.mxu0 0
      %718 = vmatprep.subr.bf16.mxu0 0
      %719 = vmatpush2.bf16.msra.mxu0 0
      %720 = vmatprep.subr.bf16.mxu0 0
      %721 = vmatpush2.bf16.msra.mxu0 0
      %722 = vmatprep.subr.bf16.mxu0 0
      %723 = vmatpush2.bf16.msra.mxu0 0
      %724 = vmatprep.mubr.bf16.mxu0 0
      %725 = vmatmul.mubr.bf16.gmra.mxu0 %v690
      %v726 = vpop.f32.mrf.mxu0
      %v727 = vadd.f32 0.0, %v726
      %v728 = vpop.f32.mrf.mxu0
      %v729 = vpop.f32.mrf.mxu0
      %v730 = vadd.f32 0.0, %v729
      %v731 = vpop.f32.mrf.mxu0
      %732 = vdwg.mxu0
      %v733 = vadd.f32 %v636, %v727
      %v734 = vadd.f32 %v637, %v730
      %v736 = vunpack.c.l.s4 1983009808
      %v737 = vunpack.c.0.s8 %v736
      %v738 = vlaneseq
      %v739 = vshrl.u32 %v738, 7
      %v740 = vsub.s32 %v737, %v739
      %v741 = vrot.slane %v230, %v740
      %v742 = vcombine.high %v741, %v741
      %v744 = vshrl.u32 %v741, 16
      %v746 = vrot.slane %v744, 6
      %v747 = vshll.u32 %v741, 16
      %v749 = vrot.slane %v747, 7
      %v750 = vor.u32 %v746, %v749
      %v751 = vrot.slane %v750, 2
      %v753 = vshll.u32 %v742, 16
      %v755 = vrot.slane %v753, 7
      %v756 = vsel %vm282, %v751, %v755
      %s757 = scalar_lea.vmem %s1, 128
      %v758 = vld [vmem:[%s757] sm:$0xf]
      %v759 = vld [vmem:[%s757 + $0x4] sm:$0xf]
      %v760 = vld [vmem:[%s757 + $0x8] sm:$0xf]
      %v761 = vld [vmem:[%s757 + $0xc] sm:$0xf]
      %v762 = vld [vmem:[%s757 + $0x10] sm:$0xf]
      %v763 = vld [vmem:[%s757 + $0x14] sm:$0xf]
      %v764 = vld [vmem:[%s757 + $0x18] sm:$0xf]
      %v765 = vld [vmem:[%s757 + $0x1c] sm:$0xf]
      %v766 = vcombine.low %v310, %v324
      %v767 = vcombine.low %v338, %v756
      %v769 = vunpack.c.l.s4 1983009808
      %v770 = vunpack.c.0.s8 %v769
      %v771 = vlaneseq
      %v772 = vshrl.u32 %v771, 7
      %v773 = vsub.s32 %v770, %v772
      %v774 = vrot.slane %v766, %v773
      %v776 = vunpack.c.l.s4 1983009808
      %v777 = vunpack.c.0.s8 %v776
      %v778 = vlaneseq
      %v779 = vshrl.u32 %v778, 7
      %v780 = vsub.s32 %v777, %v779
      %v781 = vrot.slane %v767, %v780
      %v782 = vcombine.low %v774, %v781
      %v791 = vunpack.c.l.b16 %v758
      %v792 = vunpack.c.l.b16 %v759
      %v793 = vunpack.c.l.b16 %v760
      %v794 = vunpack.c.l.b16 %v761
      %v795 = vunpack.c.l.b16 %v762
      %v796 = vunpack.c.l.b16 %v763
      %v797 = vunpack.c.l.b16 %v764
      %v798 = vunpack.c.l.b16 %v765
      %v799 = vpack.c.b16 %v792, %v791
      %v800 = vpack.c.b16 %v794, %v793
      %v801 = vpack.c.b16 %v796, %v795
      %v802 = vpack.c.b16 %v798, %v797
      %v808 = vsel %vm389, %v782, 0
      %810 = vmatprep.subr.bf16.mxu0 0
      %811 = vmatpush1.bf16.msra.mxu0 0
      %812 = vmatprep.subr.bf16.mxu0 0
      %813 = vmatpush1.bf16.msra.mxu0 0
      %814 = vmatprep.subr.bf16.mxu0 0
      %815 = vmatpush1.bf16.msra.mxu0 0
      %816 = vmatprep.subr.bf16.mxu0 0
      %817 = vmatpush1.bf16.msra.mxu0 0
      %818 = vmatprep.subr.bf16.mxu0 0
      %819 = vmatpush1.bf16.msra.mxu0 %v802
      %820 = vmatprep.subr.bf16.mxu0 0
      %821 = vmatpush1.bf16.msra.mxu0 %v801
      %822 = vmatprep.subr.bf16.mxu0 0
      %823 = vmatpush1.bf16.msra.mxu0 %v800
      %824 = vmatprep.subr.bf16.mxu0 0
      %825 = vmatpush1.bf16.msra.mxu0 %v799
      %826 = vmatprep.subr.bf16.mxu0 0
      %827 = vmatpush2.bf16.msra.mxu0 0
      %828 = vmatprep.subr.bf16.mxu0 0
      %829 = vmatpush2.bf16.msra.mxu0 0
      %830 = vmatprep.subr.bf16.mxu0 0
      %831 = vmatpush2.bf16.msra.mxu0 0
      %832 = vmatprep.subr.bf16.mxu0 0
      %833 = vmatpush2.bf16.msra.mxu0 0
      %834 = vmatprep.subr.bf16.mxu0 0
      %835 = vmatpush2.bf16.msra.mxu0 0
      %836 = vmatprep.subr.bf16.mxu0 0
      %837 = vmatpush2.bf16.msra.mxu0 0
      %838 = vmatprep.subr.bf16.mxu0 0
      %839 = vmatpush2.bf16.msra.mxu0 0
      %840 = vmatprep.subr.bf16.mxu0 0
      %841 = vmatpush2.bf16.msra.mxu0 0
      %842 = vmatprep.mubr.bf16.mxu0 0
      %843 = vmatmul.mubr.bf16.gmra.mxu0 %v808
      %v844 = vpop.f32.mrf.mxu0
      %v845 = vadd.f32 0.0, %v844
      %v846 = vpop.f32.mrf.mxu0
      %v847 = vpop.f32.mrf.mxu0
      %v848 = vadd.f32 0.0, %v847
      %v849 = vpop.f32.mrf.mxu0
      %850 = vdwg.mxu0
      %v851 = vadd.f32 %v733, %v845
      %v852 = vadd.f32 %v734, %v848
      %v853 = vrot.slane %v741, 7
      %v854 = vrot.slane %v853, 2
      %v855 = vrot.slane %v742, 7
      %v856 = vsel %vm525, %v854, %v855
      %s857 = scalar_lea.vmem %s1, 160
      %v858 = vld [vmem:[%s857] sm:$0xf]
      %v859 = vld [vmem:[%s857 + $0x4] sm:$0xf]
      %v860 = vld [vmem:[%s857 + $0x8] sm:$0xf]
      %v861 = vld [vmem:[%s857 + $0xc] sm:$0xf]
      %v862 = vld [vmem:[%s857 + $0x10] sm:$0xf]
      %v863 = vld [vmem:[%s857 + $0x14] sm:$0xf]
      %v864 = vld [vmem:[%s857 + $0x18] sm:$0xf]
      %v865 = vld [vmem:[%s857 + $0x1c] sm:$0xf]
      %v866 = vcombine.low %v533, %v537
      %v867 = vcombine.low %v541, %v856
      %v869 = vunpack.c.l.s4 1983009808
      %v870 = vunpack.c.0.s8 %v869
      %v871 = vlaneseq
      %v872 = vshrl.u32 %v871, 7
      %v873 = vsub.s32 %v870, %v872
      %v874 = vrot.slane %v866, %v873
      %v876 = vunpack.c.l.s4 1983009808
      %v877 = vunpack.c.0.s8 %v876
      %v878 = vlaneseq
      %v879 = vshrl.u32 %v878, 7
      %v880 = vsub.s32 %v877, %v879
      %v881 = vrot.slane %v867, %v880
      %v882 = vcombine.low %v874, %v881
      %v891 = vunpack.c.l.b16 %v858
      %v892 = vunpack.c.l.b16 %v859
      %v893 = vunpack.c.l.b16 %v860
      %v894 = vunpack.c.l.b16 %v861
      %v895 = vunpack.c.l.b16 %v862
      %v896 = vunpack.c.l.b16 %v863
      %v897 = vunpack.c.l.b16 %v864
      %v898 = vunpack.c.l.b16 %v865
      %v899 = vpack.c.b16 %v892, %v891
      %v900 = vpack.c.b16 %v894, %v893
      %v901 = vpack.c.b16 %v896, %v895
      %v902 = vpack.c.b16 %v898, %v897
      %v908 = vsel %vm389, %v882, 0
      %910 = vmatprep.subr.bf16.mxu0 0
      %911 = vmatpush1.bf16.msra.mxu0 0
      %912 = vmatprep.subr.bf16.mxu0 0
      %913 = vmatpush1.bf16.msra.mxu0 0
      %914 = vmatprep.subr.bf16.mxu0 0
      %915 = vmatpush1.bf16.msra.mxu0 0
      %916 = vmatprep.subr.bf16.mxu0 0
      %917 = vmatpush1.bf16.msra.mxu0 0
      %918 = vmatprep.subr.bf16.mxu0 0
      %919 = vmatpush1.bf16.msra.mxu0 %v902
      %920 = vmatprep.subr.bf16.mxu0 0
      %921 = vmatpush1.bf16.msra.mxu0 %v901
      %922 = vmatprep.subr.bf16.mxu0 0
      %923 = vmatpush1.bf16.msra.mxu0 %v900
      %924 = vmatprep.subr.bf16.mxu0 0
      %925 = vmatpush1.bf16.msra.mxu0 %v899
      %926 = vmatprep.subr.bf16.mxu0 0
      %927 = vmatpush2.bf16.msra.mxu0 0
      %928 = vmatprep.subr.bf16.mxu0 0
      %929 = vmatpush2.bf16.msra.mxu0 0
      %930 = vmatprep.subr.bf16.mxu0 0
      %931 = vmatpush2.bf16.msra.mxu0 0
      %932 = vmatprep.subr.bf16.mxu0 0
      %933 = vmatpush2.bf16.msra.mxu0 0
      %934 = vmatprep.subr.bf16.mxu0 0
      %935 = vmatpush2.bf16.msra.mxu0 0
      %936 = vmatprep.subr.bf16.mxu0 0
      %937 = vmatpush2.bf16.msra.mxu0 0
      %938 = vmatprep.subr.bf16.mxu0 0
      %939 = vmatpush2.bf16.msra.mxu0 0
      %940 = vmatprep.subr.bf16.mxu0 0
      %941 = vmatpush2.bf16.msra.mxu0 0
      %942 = vmatprep.mubr.bf16.mxu0 0
      %943 = vmatmul.mubr.bf16.gmra.mxu0 %v908
      %v944 = vpop.f32.mrf.mxu0
      %v945 = vadd.f32 0.0, %v944
      %v946 = vpop.f32.mrf.mxu0
      %v947 = vpop.f32.mrf.mxu0
      %v948 = vadd.f32 0.0, %v947
      %v949 = vpop.f32.mrf.mxu0
      %950 = vdwg.mxu0
      %v951 = vadd.f32 %v851, %v945
      %v952 = vadd.f32 %v852, %v948
      %s953 = scalar_lea.vmem %s1, 192
      %v954 = vld [vmem:[%s953] sm:$0xf]
      %v955 = vld [vmem:[%s953 + $0x4] sm:$0xf]
      %v956 = vld [vmem:[%s953 + $0x8] sm:$0xf]
      %v957 = vld [vmem:[%s953 + $0xc] sm:$0xf]
      %v958 = vld [vmem:[%s953 + $0x10] sm:$0xf]
      %v959 = vld [vmem:[%s953 + $0x14] sm:$0xf]
      %v960 = vld [vmem:[%s953 + $0x18] sm:$0xf]
      %v961 = vld [vmem:[%s953 + $0x1c] sm:$0xf]
      %v963 = vcombine.low %v230, %v231
      %v965 = vunpack.c.l.s4 1983009808
      %v966 = vunpack.c.0.s8 %v965
      %v967 = vlaneseq
      %v968 = vshrl.u32 %v967, 7
      %v969 = vsub.s32 %v966, %v968
      %v970 = vrot.slane %v963, %v969
      %v971 = vcombine.low %v449, %v970
      %v980 = vunpack.c.l.b16 %v954
      %v981 = vunpack.c.l.b16 %v955
      %v982 = vunpack.c.l.b16 %v956
      %v983 = vunpack.c.l.b16 %v957
      %v984 = vunpack.c.l.b16 %v958
      %v985 = vunpack.c.l.b16 %v959
      %v986 = vunpack.c.l.b16 %v960
      %v987 = vunpack.c.l.b16 %v961
      %v988 = vpack.c.b16 %v981, %v980
      %v989 = vpack.c.b16 %v983, %v982
      %v990 = vpack.c.b16 %v985, %v984
      %v991 = vpack.c.b16 %v987, %v986
      %v997 = vsel %vm389, %v971, 0
      %999 = vmatprep.subr.bf16.mxu0 0
      %1000 = vmatpush1.bf16.msra.mxu0 0
      %1001 = vmatprep.subr.bf16.mxu0 0
      %1002 = vmatpush1.bf16.msra.mxu0 0
      %1003 = vmatprep.subr.bf16.mxu0 0
      %1004 = vmatpush1.bf16.msra.mxu0 0
      %1005 = vmatprep.subr.bf16.mxu0 0
      %1006 = vmatpush1.bf16.msra.mxu0 0
      %1007 = vmatprep.subr.bf16.mxu0 0
      %1008 = vmatpush1.bf16.msra.mxu0 %v991
      %1009 = vmatprep.subr.bf16.mxu0 0
      %1010 = vmatpush1.bf16.msra.mxu0 %v990
      %1011 = vmatprep.subr.bf16.mxu0 0
      %1012 = vmatpush1.bf16.msra.mxu0 %v989
      %1013 = vmatprep.subr.bf16.mxu0 0
      %1014 = vmatpush1.bf16.msra.mxu0 %v988
      %1015 = vmatprep.subr.bf16.mxu0 0
      %1016 = vmatpush2.bf16.msra.mxu0 0
      %1017 = vmatprep.subr.bf16.mxu0 0
      %1018 = vmatpush2.bf16.msra.mxu0 0
      %1019 = vmatprep.subr.bf16.mxu0 0
      %1020 = vmatpush2.bf16.msra.mxu0 0
      %1021 = vmatprep.subr.bf16.mxu0 0
      %1022 = vmatpush2.bf16.msra.mxu0 0
      %1023 = vmatprep.subr.bf16.mxu0 0
      %1024 = vmatpush2.bf16.msra.mxu0 0
      %1025 = vmatprep.subr.bf16.mxu0 0
      %1026 = vmatpush2.bf16.msra.mxu0 0
      %1027 = vmatprep.subr.bf16.mxu0 0
      %1028 = vmatpush2.bf16.msra.mxu0 0
      %1029 = vmatprep.subr.bf16.mxu0 0
      %1030 = vmatpush2.bf16.msra.mxu0 0
      %1031 = vmatprep.mubr.bf16.mxu0 0
      %1032 = vmatmul.mubr.bf16.gmra.mxu0 %v997
      %v1033 = vpop.f32.mrf.mxu0
      %v1034 = vadd.f32 0.0, %v1033
      %v1035 = vpop.f32.mrf.mxu0
      %v1036 = vpop.f32.mrf.mxu0
      %v1037 = vadd.f32 0.0, %v1036
      %v1038 = vpop.f32.mrf.mxu0
      %1039 = vdwg.mxu0
      %v1040 = vadd.f32 %v951, %v1034
      %v1041 = vadd.f32 %v952, %v1037
      %v1043 = vunpack.c.l.s4 1983009808
      %v1044 = vunpack.c.0.s8 %v1043
      %v1045 = vlaneseq
      %v1046 = vshrl.u32 %v1045, 7
      %v1047 = vsub.s32 %v1044, %v1046
      %v1048 = vrot.slane %v231, %v1047
      %v1049 = vcombine.high %v1048, %v1048
      %v1051 = vshrl.u32 %v1048, 16
      %v1053 = vrot.slane %v1051, 6
      %v1054 = vshll.u32 %v1048, 16
      %v1056 = vrot.slane %v1054, 7
      %v1057 = vor.u32 %v1053, %v1056
      %v1058 = vrot.slane %v1057, 2
      %v1060 = vshll.u32 %v1049, 16
      %v1062 = vrot.slane %v1060, 7
      %v1063 = vsel %vm282, %v1058, %v1062
      %s1064 = scalar_lea.vmem %s1, 224
      %v1065 = vld [vmem:[%s1064] sm:$0xf]
      %v1066 = vld [vmem:[%s1064 + $0x4] sm:$0xf]
      %v1067 = vld [vmem:[%s1064 + $0x8] sm:$0xf]
      %v1068 = vld [vmem:[%s1064 + $0xc] sm:$0xf]
      %v1069 = vld [vmem:[%s1064 + $0x10] sm:$0xf]
      %v1070 = vld [vmem:[%s1064 + $0x14] sm:$0xf]
      %v1071 = vld [vmem:[%s1064 + $0x18] sm:$0xf]
      %v1072 = vld [vmem:[%s1064 + $0x1c] sm:$0xf]
      %v1073 = vcombine.low %v756, %v1063
      %v1075 = vunpack.c.l.s4 1983009808
      %v1076 = vunpack.c.0.s8 %v1075
      %v1077 = vlaneseq
      %v1078 = vshrl.u32 %v1077, 7
      %v1079 = vsub.s32 %v1076, %v1078
      %v1080 = vrot.slane %v1073, %v1079
      %v1081 = vcombine.low %v363, %v1080
      %v1090 = vunpack.c.l.b16 %v1065
      %v1091 = vunpack.c.l.b16 %v1066
      %v1092 = vunpack.c.l.b16 %v1067
      %v1093 = vunpack.c.l.b16 %v1068
      %v1094 = vunpack.c.l.b16 %v1069
      %v1095 = vunpack.c.l.b16 %v1070
      %v1096 = vunpack.c.l.b16 %v1071
      %v1097 = vunpack.c.l.b16 %v1072
      %v1098 = vpack.c.b16 %v1091, %v1090
      %v1099 = vpack.c.b16 %v1093, %v1092
      %v1100 = vpack.c.b16 %v1095, %v1094
      %v1101 = vpack.c.b16 %v1097, %v1096
      %v1107 = vsel %vm389, %v1081, 0
      %1109 = vmatprep.subr.bf16.mxu0 0
      %1110 = vmatpush1.bf16.msra.mxu0 0
      %1111 = vmatprep.subr.bf16.mxu0 0
      %1112 = vmatpush1.bf16.msra.mxu0 0
      %1113 = vmatprep.subr.bf16.mxu0 0
      %1114 = vmatpush1.bf16.msra.mxu0 0
      %1115 = vmatprep.subr.bf16.mxu0 0
      %1116 = vmatpush1.bf16.msra.mxu0 0
      %1117 = vmatprep.subr.bf16.mxu0 0
      %1118 = vmatpush1.bf16.msra.mxu0 %v1101
      %1119 = vmatprep.subr.bf16.mxu0 0
      %1120 = vmatpush1.bf16.msra.mxu0 %v1100
      %1121 = vmatprep.subr.bf16.mxu0 0
      %1122 = vmatpush1.bf16.msra.mxu0 %v1099
      %1123 = vmatprep.subr.bf16.mxu0 0
      %1124 = vmatpush1.bf16.msra.mxu0 %v1098
      %1125 = vmatprep.subr.bf16.mxu0 0
      %1126 = vmatpush2.bf16.msra.mxu0 0
      %1127 = vmatprep.subr.bf16.mxu0 0
      %1128 = vmatpush2.bf16.msra.mxu0 0
      %1129 = vmatprep.subr.bf16.mxu0 0
      %1130 = vmatpush2.bf16.msra.mxu0 0
      %1131 = vmatprep.subr.bf16.mxu0 0
      %1132 = vmatpush2.bf16.msra.mxu0 0
      %1133 = vmatprep.subr.bf16.mxu0 0
      %1134 = vmatpush2.bf16.msra.mxu0 0
      %1135 = vmatprep.subr.bf16.mxu0 0
      %1136 = vmatpush2.bf16.msra.mxu0 0
      %1137 = vmatprep.subr.bf16.mxu0 0
      %1138 = vmatpush2.bf16.msra.mxu0 0
      %1139 = vmatprep.subr.bf16.mxu0 0
      %1140 = vmatpush2.bf16.msra.mxu0 0
      %1141 = vmatprep.mubr.bf16.mxu0 0
      %1142 = vmatmul.mubr.bf16.gmra.mxu0 %v1107
      %v1143 = vpop.f32.mrf.mxu0
      %v1144 = vadd.f32 0.0, %v1143
      %v1145 = vpop.f32.mrf.mxu0
      %v1146 = vpop.f32.mrf.mxu0
      %v1147 = vadd.f32 0.0, %v1146
      %v1148 = vpop.f32.mrf.mxu0
      %1149 = vdwg.mxu0
      %v1150 = vadd.f32 %v1040, %v1144
      %v1151 = vadd.f32 %v1041, %v1147
      %v1152 = vrot.slane %v1048, 7
      %v1153 = vrot.slane %v1152, 2
      %v1154 = vrot.slane %v1049, 7
      %v1155 = vsel %vm525, %v1153, %v1154
      %s1156 = scalar_lea.vmem %s1, 256
      %v1157 = vld [vmem:[%s1156] sm:$0xf]
      %v1158 = vld [vmem:[%s1156 + $0x4] sm:$0xf]
      %v1159 = vld [vmem:[%s1156 + $0x8] sm:$0xf]
      %v1160 = vld [vmem:[%s1156 + $0xc] sm:$0xf]
      %v1161 = vld [vmem:[%s1156 + $0x10] sm:$0xf]
      %v1162 = vld [vmem:[%s1156 + $0x14] sm:$0xf]
      %v1163 = vld [vmem:[%s1156 + $0x18] sm:$0xf]
      %v1164 = vld [vmem:[%s1156 + $0x1c] sm:$0xf]
      %v1165 = vcombine.low %v856, %v1155
      %v1167 = vunpack.c.l.s4 1983009808
      %v1168 = vunpack.c.0.s8 %v1167
      %v1169 = vlaneseq
      %v1170 = vshrl.u32 %v1169, 7
      %v1171 = vsub.s32 %v1168, %v1170
      %v1172 = vrot.slane %v1165, %v1171
      %v1173 = vcombine.low %v566, %v1172
      %v1182 = vunpack.c.l.b16 %v1157
      %v1183 = vunpack.c.l.b16 %v1158
      %v1184 = vunpack.c.l.b16 %v1159
      %v1185 = vunpack.c.l.b16 %v1160
      %v1186 = vunpack.c.l.b16 %v1161
      %v1187 = vunpack.c.l.b16 %v1162
      %v1188 = vunpack.c.l.b16 %v1163
      %v1189 = vunpack.c.l.b16 %v1164
      %v1190 = vpack.c.b16 %v1183, %v1182
      %v1191 = vpack.c.b16 %v1185, %v1184
      %v1192 = vpack.c.b16 %v1187, %v1186
      %v1193 = vpack.c.b16 %v1189, %v1188
      %v1199 = vsel %vm389, %v1173, 0
      %1201 = vmatprep.subr.bf16.mxu0 0
      %1202 = vmatpush1.bf16.msra.mxu0 0
      %1203 = vmatprep.subr.bf16.mxu0 0
      %1204 = vmatpush1.bf16.msra.mxu0 0
      %1205 = vmatprep.subr.bf16.mxu0 0
      %1206 = vmatpush1.bf16.msra.mxu0 0
      %1207 = vmatprep.subr.bf16.mxu0 0
      %1208 = vmatpush1.bf16.msra.mxu0 0
      %1209 = vmatprep.subr.bf16.mxu0 0
      %1210 = vmatpush1.bf16.msra.mxu0 %v1193
      %1211 = vmatprep.subr.bf16.mxu0 0
      %1212 = vmatpush1.bf16.msra.mxu0 %v1192
      %1213 = vmatprep.subr.bf16.mxu0 0
      %1214 = vmatpush1.bf16.msra.mxu0 %v1191
      %1215 = vmatprep.subr.bf16.mxu0 0
      %1216 = vmatpush1.bf16.msra.mxu0 %v1190
      %1217 = vmatprep.subr.bf16.mxu0 0
      %1218 = vmatpush2.bf16.msra.mxu0 0
      %1219 = vmatprep.subr.bf16.mxu0 0
      %1220 = vmatpush2.bf16.msra.mxu0 0
      %1221 = vmatprep.subr.bf16.mxu0 0
      %1222 = vmatpush2.bf16.msra.mxu0 0
      %1223 = vmatprep.subr.bf16.mxu0 0
      %1224 = vmatpush2.bf16.msra.mxu0 0
      %1225 = vmatprep.subr.bf16.mxu0 0
      %1226 = vmatpush2.bf16.msra.mxu0 0
      %1227 = vmatprep.subr.bf16.mxu0 0
      %1228 = vmatpush2.bf16.msra.mxu0 0
      %1229 = vmatprep.subr.bf16.mxu0 0
      %1230 = vmatpush2.bf16.msra.mxu0 0
      %1231 = vmatprep.subr.bf16.mxu0 0
      %1232 = vmatpush2.bf16.msra.mxu0 0
      %1233 = vmatprep.mubr.bf16.mxu0 0
      %1234 = vmatmul.mubr.bf16.gmra.mxu0 %v1199
      %v1235 = vpop.f32.mrf.mxu0
      %v1236 = vadd.f32 0.0, %v1235
      %v1237 = vpop.f32.mrf.mxu0
      %v1238 = vpop.f32.mrf.mxu0
      %v1239 = vadd.f32 0.0, %v1238
      %v1240 = vpop.f32.mrf.mxu0
      %1241 = vdwg.mxu0
      %v1242 = vadd.f32 %v1150, %v1236
      %v1243 = vadd.f32 %v1151, %v1239
      %v1244 = vld [vmem:[%s2] sm:$0x1]
      %v1246 = vlaneseq
      %v1247 = vshrl.u32 %v1246, 7
      %v1248 = vsub.s32 0, %v1247
      %v1249 = vrot.slane %v1244, %v1248
      %v1251 = vadd.f32 %v1242, %v1249
      %v1252 = vadd.f32 %v1243, %v1249
      %v1253 = vmax.f32 %v1251, 0.0
      %v1254 = vmax.f32 %v1252, 0.0
      %v1255 = vpack.c.bf16 %v1254, %v1253
      %v1256 = vld [vmem:[%s3] sm:$0xf]
      %v1257 = vld [vmem:[%s3 + $0x4] sm:$0xf]
      %v1258 = vld [vmem:[%s3 + $0x8] sm:$0xf]
      %v1259 = vld [vmem:[%s3 + $0xc] sm:$0xf]
      %v1260 = vld [vmem:[%s3 + $0x10] sm:$0xf]
      %v1261 = vld [vmem:[%s3 + $0x14] sm:$0xf]
      %v1262 = vld [vmem:[%s3 + $0x18] sm:$0xf]
      %v1263 = vld [vmem:[%s3 + $0x1c] sm:$0xf]
      %v1264 = vld [vmem:[%s4] sm:$0x1]
      %v1266 = vlaneseq
      %v1267 = vshrl.u32 %v1266, 7
      %v1268 = vsub.s32 0, %v1267
      %v1269 = vrot.slane %v1264, %v1268
      %v1279 = vunpack.c.l.b16 %v1256
      %v1280 = vunpack.c.l.b16 %v1257
      %v1281 = vunpack.c.l.b16 %v1258
      %v1282 = vunpack.c.l.b16 %v1259
      %v1283 = vunpack.c.l.b16 %v1260
      %v1284 = vunpack.c.l.b16 %v1261
      %v1285 = vunpack.c.l.b16 %v1262
      %v1286 = vunpack.c.l.b16 %v1263
      %v1287 = vpack.c.b16 %v1280, %v1279
      %v1288 = vpack.c.b16 %v1282, %v1281
      %v1289 = vpack.c.b16 %v1284, %v1283
      %v1290 = vpack.c.b16 %v1286, %v1285
      %v1296 = vsel %vm389, %v1255, 0
      %1298 = vmatprep.subr.bf16.mxu0 0
      %1299 = vmatpush1.bf16.msra.mxu0 0
      %1300 = vmatprep.subr.bf16.mxu0 0
      %1301 = vmatpush1.bf16.msra.mxu0 0
      %1302 = vmatprep.subr.bf16.mxu0 0
      %1303 = vmatpush1.bf16.msra.mxu0 0
      %1304 = vmatprep.subr.bf16.mxu0 0
      %1305 = vmatpush1.bf16.msra.mxu0 0
      %1306 = vmatprep.subr.bf16.mxu0 0
      %1307 = vmatpush1.bf16.msra.mxu0 %v1290
      %1308 = vmatprep.subr.bf16.mxu0 0
      %1309 = vmatpush1.bf16.msra.mxu0 %v1289
      %1310 = vmatprep.subr.bf16.mxu0 0
      %1311 = vmatpush1.bf16.msra.mxu0 %v1288
      %1312 = vmatprep.subr.bf16.mxu0 0
      %1313 = vmatpush1.bf16.msra.mxu0 %v1287
      %1314 = vmatprep.subr.bf16.mxu0 0
      %1315 = vmatpush2.bf16.msra.mxu0 0
      %1316 = vmatprep.subr.bf16.mxu0 0
      %1317 = vmatpush2.bf16.msra.mxu0 0
      %1318 = vmatprep.subr.bf16.mxu0 0
      %1319 = vmatpush2.bf16.msra.mxu0 0
      %1320 = vmatprep.subr.bf16.mxu0 0
      %1321 = vmatpush2.bf16.msra.mxu0 0
      %1322 = vmatprep.subr.bf16.mxu0 0
      %1323 = vmatpush2.bf16.msra.mxu0 0
      %1324 = vmatprep.subr.bf16.mxu0 0
      %1325 = vmatpush2.bf16.msra.mxu0 0
      %1326 = vmatprep.subr.bf16.mxu0 0
      %1327 = vmatpush2.bf16.msra.mxu0 0
      %1328 = vmatprep.subr.bf16.mxu0 0
      %1329 = vmatpush2.bf16.msra.mxu0 0
      %1330 = vmatprep.mubr.bf16.mxu0 0
      %1331 = vmatmul.mubr.bf16.gmra.mxu0 %v1296
      %v1332 = vpop.f32.mrf.mxu0
      %v1333 = vadd.f32 %v1269, %v1332
      %v1334 = vpop.f32.mrf.mxu0
      %v1335 = vpop.f32.mrf.mxu0
      %v1336 = vadd.f32 %v1269, %v1335
      %v1337 = vpop.f32.mrf.mxu0
      %1338 = vdwg.mxu0
      %1339 = vst [vmem:[%s224] sm:$0xff] %v1333
      %1340 = vst [vmem:[%s224 + $0x8] sm:$0xff] %v1336
      %p1341 = scmp.lt.s32.totalorder %s16, 1
      %s1342 = scalar_select %p1341, %s16, 1
      %s1343 = smul.addr %s1342, 2
      %s1344 = smul.addr %s1343, 8
      %s1345 = scalar_lea.vmem %s5, %s1344
      // Predicated region
      $region41: #{_forward_impl.6} parent=39 // pred_check
        %p1346 = pneg %p144
      $region42: #{_forward_impl.6} parent=39 // pred_check_branch
        %1348 = sbr.rel (%p1346) target = $region44
      $region43: #{_forward_impl.6} parent=39 // pred_region
        _
      $region44: #{_forward_impl.6} parent=39 // pred_fallthru
        _
    $region40: #{_forward_impl.6} parent=5 // pred_fallthru
      _
    %p1349 = scmp.le.s32.totalorder 2, %s11
    // Predicated region
    $region45: #{_forward_impl.6} parent=5 // pred_check
      %p1350 = pneg %p1349
    $region46: #{_forward_impl.6} parent=5 // pred_check_branch
      %1352 = sbr.rel (%p1350) target = $region48
    $region47: #{_forward_impl.6} parent=5 // pred_region
      %s1353 = ssub.s32 %s11, 2
      // Predicated region
      $region49: #{_forward_impl.6} parent=47 // pred_check
        %p1354 = pneg %p150
      $region50: #{_forward_impl.6} parent=47 // pred_check_branch
        %1356 = sbr.rel (%p1354) target = $region52
      $region51: #{_forward_impl.6} parent=47 // pred_region
        %p1357 = scmp.lt.s32.totalorder %s17, 1
        %s1358 = scalar_select %p1357, %s17, 1
        %s1359 = smul.addr %s1358, 2
        %s1360 = smul.addr %s1359, 8
        %s1361 = scalar_lea.vmem %s5, %s1360
      $region52: #{_forward_impl.6} parent=47 // pred_fallthru
        _
    $region48: #{_forward_impl.6} parent=5 // pred_fallthru
      _
  $region6: #{_forward_impl.6} parent=0 // loop_footer
    %s15 = sadd.s32 1, %s11
  $region7: #{_forward_impl.6} parent=0 // loop_footer_branch
    %10 = sbr.rel target = $region3
  $region8: #{_forward_impl.6} parent=0 // loop_exit
    _

// kernel: _forward_impl.5
$region0: #{_forward_impl.5}
  #allocation0 [shape = 'u32[]', space=smem, size = 0x4, offset = 0x4, fixed_abs, tag = 'smem constant byte address 0x4 - core index']
  #allocation1 [shape = 'u32[144,128]{1,0:T(1,128)}', space=vmem, size = 0x12000, scoped, tag = 'internal scratch']
  %s0 = inlined_call_operand.vmem [shape: bf16[2,10,10,32], index: 0, kind: input, shape index: {}]
  %s1 = inlined_call_operand.vmem [shape: bf16[9,32,64], index: 1, kind: input, shape index: {}]
  %s2 = inlined_call_operand.vmem [shape: f32[1,64], index: 2, kind: input, shape index: {}]
  %s3 = inlined_call_operand.vmem [shape: bf16[2,4,4,64], index: 3, kind: output, shape index: {}]
  %s4 = sld [smem:[#allocation0]]
  $region45: #{_forward_impl.5} parent=0
    _
  %s6 = ssub.s32 1, %s4
  %s7 = scalar_select 0, %s6, %s4
  loop: start=0, step=1, limit=4
  $region2: #{_forward_impl.5} parent=0 // loop_pre_header
    _
  $region3: #{_forward_impl.5} parent=0 // loop_header
    %s9 = sphi 0, %s13
    %p10 = scmp.ge.s32.totalorder %s9, 4
    %s19 = sphi 0, %s21
    %s22 = sphi 0, %s19
    %s23 = sphi 0, %s22
    %s39 = sphi 0, %s23
    %s43 = sphi 0, %s43
    %s45 = sphi 0, %s43
    %s46 = sphi 0, %s45
    %s60 = sphi 0, %s46
    %s64 = sphi 0, %s64
    %s66 = sphi 0, %s64
    %s67 = sphi 0, %s66
    %s81 = sphi 0, %s67
    %s87 = sphi 0, %s89
    %s90 = sphi 0, %s87
    %s91 = sphi 0, %s90
    %s107 = sphi 0, %s91
  $region4: #{_forward_impl.5} parent=0 // loop_header_branch
    %12 = sbr.rel (%p10) target = $region8
  $region5: #{_forward_impl.5} parent=0 // loop_body
    %s14 = ssub.s32 %s9, 1
    %s15 = ssub.s32 %s9, 2
    %s16 = sadd.s32 %s9, 1
    %s17 = ssub.s32 %s9, %s16
    %p18 = scmp.eq.s32.totalorder %s17, 0
    %s20 = sadd.s32 %s19, 1
    %s21 = scalar_select %p18, %s19, %s20
    %p24 = pneg %p18
    %p25 = scmp.eq.s32.totalorder %s9, 1
    %p26 = por %p24, %p25
    %p27 = scmp.ne.s32.totalorder %s19, %s22
    %p28 = scmp.eq.s32.totalorder %s9, 0
    %p29 = por %p27, %p28
    %p30 = scmp.ne.s32.totalorder %s19, %s22
    %p31 = scmp.eq.s32.totalorder %s14, 1
    %p32 = por %p30, %p31
    %p33 = scmp.ne.s32.totalorder %s22, %s23
    %p34 = scmp.eq.s32.totalorder %s14, 0
    %p35 = por %p33, %p34
    %p36 = scmp.ne.s32.totalorder %s22, %s23
    %p37 = scmp.eq.s32.totalorder %s15, 1
    %p38 = por %p36, %p37
    %p40 = scmp.ne.s32.totalorder %s23, %s39
    %p41 = scmp.eq.s32.totalorder %s15, 0
    %p42 = por %p40, %p41
    %s44 = sadd.s32 %s43, 1
    %p47 = scmp.eq.s32.totalorder %s9, 1
    %p48 = scmp.ne.s32.totalorder %s43, %s45
    %p49 = scmp.eq.s32.totalorder %s9, 0
    %p50 = por %p48, %p49
    %p51 = scmp.ne.s32.totalorder %s43, %s45
    %p52 = scmp.eq.s32.totalorder %s14, 1
    %p53 = por %p51, %p52
    %p54 = scmp.ne.s32.totalorder %s45, %s46
    %p55 = scmp.eq.s32.totalorder %s14, 0
    %p56 = por %p54, %p55
    %p57 = scmp.ne.s32.totalorder %s45, %s46
    %p58 = scmp.eq.s32.totalorder %s15, 1
    %p59 = por %p57, %p58
    %p61 = scmp.ne.s32.totalorder %s46, %s60
    %p62 = scmp.eq.s32.totalorder %s15, 0
    %p63 = por %p61, %p62
    %s65 = sadd.s32 %s64, 1
    %p68 = scmp.eq.s32.totalorder %s9, 1
    %p69 = scmp.ne.s32.totalorder %s64, %s66
    %p70 = scmp.eq.s32.totalorder %s9, 0
    %p71 = por %p69, %p70
    %p72 = scmp.ne.s32.totalorder %s64, %s66
    %p73 = scmp.eq.s32.totalorder %s14, 1
    %p74 = por %p72, %p73
    %p75 = scmp.ne.s32.totalorder %s66, %s67
    %p76 = scmp.eq.s32.totalorder %s14, 0
    %p77 = por %p75, %p76
    %p78 = scmp.ne.s32.totalorder %s66, %s67
    %p79 = scmp.eq.s32.totalorder %s15, 1
    %p80 = por %p78, %p79
    %p82 = scmp.ne.s32.totalorder %s67, %s81
    %p83 = scmp.eq.s32.totalorder %s15, 0
    %p84 = por %p82, %p83
    %s85 = ssub.s32 %s9, %s16
    %p86 = scmp.eq.s32.totalorder %s85, 0
    %s88 = sadd.s32 %s87, 1
    %s89 = scalar_select %p86, %s87, %s88
    %p92 = pneg %p86
    %p93 = scmp.eq.s32.totalorder %s9, 1
    %p94 = por %p92, %p93
    %p95 = scmp.ne.s32.totalorder %s87, %s90
    %p96 = scmp.eq.s32.totalorder %s9, 0
    %p97 = por %p95, %p96
    %p98 = scmp.ne.s32.totalorder %s87, %s90
    %p99 = scmp.eq.s32.totalorder %s14, 1
    %p100 = por %p98, %p99
    %p101 = scmp.ne.s32.totalorder %s90, %s91
    %p102 = scmp.eq.s32.totalorder %s14, 0
    %p103 = por %p101, %p102
    %p104 = scmp.ne.s32.totalorder %s90, %s91
    %p105 = scmp.eq.s32.totalorder %s15, 1
    %p106 = por %p104, %p105
    %p108 = scmp.ne.s32.totalorder %s91, %s107
    %p109 = scmp.eq.s32.totalorder %s15, 0
    %p110 = por %p108, %p109
    %p111 = scmp.le.s32.totalorder 1, %s9
    %p112 = scmp.lt.s32.totalorder %s9, 3
    %p113 = pnand %p111, %p112
    %p114 = pneg %p113
    // Predicated region
    $region9: #{_forward_impl.5} parent=5 // pred_check
      _
    $region10: #{_forward_impl.5} parent=5 // pred_check_branch
      %116 = sbr.rel (%p113) target = $region12
    $region11: #{_forward_impl.5} parent=5 // pred_region
      %s117 = ssub.s32 %s9, 1
      // Predicated region
      $region13: #{_forward_impl.5} parent=11 // pred_check
        %p118 = pneg %p56
      $region14: #{_forward_impl.5} parent=11 // pred_check_branch
        %120 = sbr.rel (%p118) target = $region16
      $region15: #{_forward_impl.5} parent=11 // pred_region
        _
      $region16: #{_forward_impl.5} parent=11 // pred_fallthru
        _
      // Predicated region
      $region17: #{_forward_impl.5} parent=11 // pred_check
        %p121 = pneg %p77
      $region18: #{_forward_impl.5} parent=11 // pred_check_branch
        %123 = sbr.rel (%p121) target = $region20
      $region19: #{_forward_impl.5} parent=11 // pred_region
        _
      $region20: #{_forward_impl.5} parent=11 // pred_fallthru
        _
    $region12: #{_forward_impl.5} parent=5 // pred_fallthru
      _
    %p124 = scmp.lt.s32.totalorder %s9, 2
    // Predicated region
    $region21: #{_forward_impl.5} parent=5 // pred_check
      %p125 = pneg %p124
    $region22: #{_forward_impl.5} parent=5 // pred_check_branch
      %127 = sbr.rel (%p125) target = $region24
    $region23: #{_forward_impl.5} parent=5 // pred_region
      // Predicated region
      $region25: #{_forward_impl.5} parent=23 // pred_check
        %p128 = pneg %p29
      $region26: #{_forward_impl.5} parent=23 // pred_check_branch
        %130 = sbr.rel (%p128) target = $region28
      $region27: #{_forward_impl.5} parent=23 // pred_region
        %p131 = scmp.lt.s32.totalorder %s9, 1
        %s132 = scalar_select %p131, %s9, 1
        %s133 = smul.addr %s132, 20
        %s134 = smul.addr %s133, 4
        %s135 = scalar_lea.vmem %s0, %s134
      $region28: #{_forward_impl.5} parent=23 // pred_fallthru
        _
    $region24: #{_forward_impl.5} parent=5 // pred_fallthru
      _
    %p136 = scmp.le.s32.totalorder 1, %s9
    %p137 = scmp.lt.s32.totalorder %s9, 3
    %p138 = pnand %p136, %p137
    %p139 = pneg %p138
    // Predicated region
    $region29: #{_forward_impl.5} parent=5 // pred_check
      _
    $region30: #{_forward_impl.5} parent=5 // pred_check_branch
      %141 = sbr.rel (%p138) target = $region32
    $region31: #{_forward_impl.5} parent=5 // pred_region
      %s142 = ssub.s32 %s9, 1
      %p143 = scmp.lt.s32.totalorder %s14, 1
      %s144 = scalar_select %p143, %s14, 1
      %s145 = smul.addr %s144, 20
      %s146 = smul.addr %s145, 4
      %s147 = scalar_lea.vmem %s0, %s146
      %p148 = pneg %p35
      %p149 = pneg %p32
      %p150 = pneg %p56
      %p151 = pneg %p53
      %p152 = pneg %p77
      %p153 = pneg %p74
      %p154 = pneg %p103
      %p155 = pneg %p100
      %p156 = scmp.lt.s32.totalorder %s14, 1
      %s157 = scalar_select %p156, %s14, 1
      %s158 = smul.addr %s157, 4
      %s159 = smul.addr %s158, 2
      %s160 = scalar_lea.vmem %s3, %s159
      %p161 = scmp.lt.s32.totalorder %s14, 1
      %s162 = scalar_select %p161, %s14, 1
      %s163 = smul.addr %s162, 20
      %s164 = smul.addr %s163, 4
      %s165 = scalar_lea.vmem %s0, %s164
      %p166 = scmp.lt.s32.totalorder %s14, 1
      %s167 = scalar_select %p166, %s14, 1
      %s168 = smul.addr %s167, 4
      %s169 = smul.addr %s168, 2
      %s170 = scalar_lea.vmem %s3, %s169
      %v172 = vld [vmem:[%s165] sm:$0xf]
      %v173 = vld [vmem:[%s165 + $0x4] sm:$0x1]
      %v174 = vld [vmem:[%s165 + $0x8] sm:$0xf]
      %v175 = vld [vmem:[%s165 + $0xc] sm:$0x1]
      %v176 = vld [vmem:[%s165 + $0x10] sm:$0xf]
      %v177 = vld [vmem:[%s165 + $0x14] sm:$0x1]
      %v178 = vld [vmem:[%s165 + $0x18] sm:$0xf]
      %v179 = vld [vmem:[%s165 + $0x1c] sm:$0x1]
      %v180 = vld [vmem:[%s165 + $0x20] sm:$0xf]
      %v181 = vld [vmem:[%s165 + $0x24] sm:$0x1]
      %v182 = vld [vmem:[%s165 + $0x28] sm:$0xf]
      %v183 = vld [vmem:[%s165 + $0x2c] sm:$0x1]
      %v184 = vld [vmem:[%s165 + $0x30] sm:$0xf]
      %v185 = vld [vmem:[%s165 + $0x34] sm:$0x1]
      %v186 = vld [vmem:[%s165 + $0x38] sm:$0xf]
      %v187 = vld [vmem:[%s165 + $0x3c] sm:$0x1]
      %v188 = vld [vmem:[%s165 + $0x40] sm:$0xf]
      %v189 = vld [vmem:[%s165 + $0x44] sm:$0x1]
      %v190 = vld [vmem:[%s165 + $0x48] sm:$0xf]
      %v191 = vld [vmem:[%s165 + $0x4c] sm:$0x1]
      %v192 = vld [vmem:[%s1] sm:$0xf]
      %v193 = vld [vmem:[%s1 + $0x4] sm:$0xf]
      %v194 = vld [vmem:[%s1 + $0x8] sm:$0xf]
      %v195 = vld [vmem:[%s1 + $0xc] sm:$0xf]
      %vm196 = vsmask.f32 3328
      %vm197 = vsmask.f32 7440
      %vm198 = vmor %vm196, %vm197
      %v200 = vshrl.u32 %v172, 16
      %v202 = vrot.slane %v200, 4
      %v203 = vshll.u32 %v172, 16
      %v205 = vrot.slane %v203, 5
      %v206 = vor.u32 %v202, %v205
      %v207 = vrot.slane %v206, 4
      %v209 = vshll.u32 %v173, 16
      %v211 = vrot.slane %v209, 5
      %v212 = vsel %vm198, %v207, %v211
      %v214 = vshrl.u32 %v174, 16
      %v216 = vrot.slane %v214, 4
      %v217 = vshll.u32 %v174, 16
      %v219 = vrot.slane %v217, 5
      %v220 = vor.u32 %v216, %v219
      %v221 = vrot.slane %v220, 4
      %v223 = vshll.u32 %v175, 16
      %v225 = vrot.slane %v223, 5
      %v226 = vsel %vm198, %v221, %v225
      %v228 = vshrl.u32 %v176, 16
      %v230 = vrot.slane %v228, 4
      %v231 = vshll.u32 %v176, 16
      %v233 = vrot.slane %v231, 5
      %v234 = vor.u32 %v230, %v233
      %v235 = vrot.slane %v234, 4
      %v237 = vshll.u32 %v177, 16
      %v239 = vrot.slane %v237, 5
      %v240 = vsel %vm198, %v235, %v239
      %v242 = vshrl.u32 %v178, 16
      %v244 = vrot.slane %v242, 4
      %v245 = vshll.u32 %v178, 16
      %v247 = vrot.slane %v245, 5
      %v248 = vor.u32 %v244, %v247
      %v249 = vrot.slane %v248, 4
      %v251 = vshll.u32 %v179, 16
      %v253 = vrot.slane %v251, 5
      %v254 = vsel %vm198, %v249, %v253
      %v256 = vshrl.u32 %v180, 16
      %v258 = vrot.slane %v256, 4
      %v259 = vshll.u32 %v180, 16
      %v261 = vrot.slane %v259, 5
      %v262 = vor.u32 %v258, %v261
      %v263 = vrot.slane %v262, 4
      %v265 = vshll.u32 %v181, 16
      %v267 = vrot.slane %v265, 5
      %v268 = vsel %vm198, %v263, %v267
      %v270 = vshrl.u32 %v182, 16
      %v272 = vrot.slane %v270, 4
      %v273 = vshll.u32 %v182, 16
      %v275 = vrot.slane %v273, 5
      %v276 = vor.u32 %v272, %v275
      %v277 = vrot.slane %v276, 4
      %v279 = vshll.u32 %v183, 16
      %v281 = vrot.slane %v279, 5
      %v282 = vsel %vm198, %v277, %v281
      %v284 = vshrl.u32 %v184, 16
      %v286 = vrot.slane %v284, 4
      %v287 = vshll.u32 %v184, 16
      %v289 = vrot.slane %v287, 5
      %v290 = vor.u32 %v286, %v289
      %v291 = vrot.slane %v290, 4
      %v293 = vshll.u32 %v185, 16
      %v295 = vrot.slane %v293, 5
      %v296 = vsel %vm198, %v291, %v295
      %v298 = vshrl.u32 %v186, 16
      %v300 = vrot.slane %v298, 4
      %v301 = vshll.u32 %v186, 16
      %v303 = vrot.slane %v301, 5
      %v304 = vor.u32 %v300, %v303
      %v305 = vrot.slane %v304, 4
      %v307 = vshll.u32 %v187, 16
      %v309 = vrot.slane %v307, 5
      %v310 = vsel %vm198, %v305, %v309
      %s311 = scalar_lea.vmem %s1, 16
      %v312 = vld [vmem:[%s311] sm:$0xf]
      %v313 = vld [vmem:[%s311 + $0x4] sm:$0xf]
      %v314 = vld [vmem:[%s311 + $0x8] sm:$0xf]
      %v315 = vld [vmem:[%s311 + $0xc] sm:$0xf]
      %v316 = vunpack.c.l.b16 %v212
      %v317 = vunpack.c.l.b16 %v226
      %v318 = vunpack.c.l.b16 %v240
      %v319 = vunpack.c.l.b16 %v254
      %v320 = vunpack.c.l.b16 %v268
      %v321 = vunpack.c.l.b16 %v282
      %v322 = vunpack.c.l.b16 %v296
      %v323 = vunpack.c.l.b16 %v310
      %v324 = vpack.c.b16 %v317, %v316
      %v325 = vpack.c.b16 %v319, %v318
      %v326 = vpack.c.b16 %v321, %v320
      %v327 = vpack.c.b16 %v323, %v322
      %v332 = vunpack.c.l.b16 %v312
      %v333 = vunpack.c.l.b16 %v313
      %v334 = vunpack.c.l.b16 %v314
      %v335 = vunpack.c.l.b16 %v315
      %v336 = vpack.c.b16 %v333, %v332
      %v337 = vpack.c.b16 %v335, %v334
      %vm340 = vcmask 261120
      %v342 = vsel %vm340, %v324, 0
      %v345 = vsel %vm340, %v325, 0
      %v348 = vsel %vm340, %v326, 0
      %v351 = vsel %vm340, %v327, 0
      %353 = vmatprep.subr.bf16.mxu0 0
      %354 = vmatpush1.bf16.msra.mxu0 0
      %355 = vmatprep.subr.bf16.mxu0 0
      %356 = vmatpush1.bf16.msra.mxu0 0
      %357 = vmatprep.subr.bf16.mxu0 0
      %358 = vmatpush1.bf16.msra.mxu0 0
      %359 = vmatprep.subr.bf16.mxu0 0
      %360 = vmatpush1.bf16.msra.mxu0 0
      %361 = vmatprep.subr.bf16.mxu0 0
      %362 = vmatpush1.bf16.msra.mxu0 0
      %363 = vmatprep.subr.bf16.mxu0 0
      %364 = vmatpush1.bf16.msra.mxu0 0
      %365 = vmatprep.subr.bf16.mxu0 0
      %366 = vmatpush1.bf16.msra.mxu0 %v337
      %367 = vmatprep.subr.bf16.mxu0 0
      %368 = vmatpush1.bf16.msra.mxu0 %v336
      %369 = vmatprep.subr.bf16.mxu0 0
      %370 = vmatpush2.bf16.msra.mxu0 0
      %371 = vmatprep.subr.bf16.mxu0 0
      %372 = vmatpush2.bf16.msra.mxu0 0
      %373 = vmatprep.subr.bf16.mxu0 0
      %374 = vmatpush2.bf16.msra.mxu0 0
      %375 = vmatprep.subr.bf16.mxu0 0
      %376 = vmatpush2.bf16.msra.mxu0 0
      %377 = vmatprep.subr.bf16.mxu0 0
      %378 = vmatpush2.bf16.msra.mxu0 0
      %379 = vmatprep.subr.bf16.mxu0 0
      %380 = vmatpush2.bf16.msra.mxu0 0
      %381 = vmatprep.subr.bf16.mxu0 0
      %382 = vmatpush2.bf16.msra.mxu0 0
      %383 = vmatprep.subr.bf16.mxu0 0
      %384 = vmatpush2.bf16.msra.mxu0 0
      %385 = vmatprep.mubr.bf16.mxu0 0
      %386 = vmatmul.mubr.bf16.gmra.mxu0 %v342
      %v387 = vpop.f32.mrf.mxu0
      %v388 = vadd.f32 0.0, %v387
      %v389 = vpop.f32.mrf.mxu0
      %v390 = vpop.f32.mrf.mxu0
      %v391 = vadd.f32 0.0, %v390
      %v392 = vpop.f32.mrf.mxu0
      %393 = vmatprep.mubr.bf16.mxu0 0
      %394 = vmatmul.mubr.bf16.gmra.mxu0 %v345
      %v395 = vpop.f32.mrf.mxu0
      %v396 = vadd.f32 0.0, %v395
      %v397 = vpop.f32.mrf.mxu0
      %v398 = vpop.f32.mrf.mxu0
      %v399 = vadd.f32 0.0, %v398
      %v400 = vpop.f32.mrf.mxu0
      %401 = vmatprep.mubr.bf16.mxu0 0
      %402 = vmatmul.mubr.bf16.gmra.mxu0 %v348
      %v403 = vpop.f32.mrf.mxu0
      %v404 = vadd.f32 0.0, %v403
      %v405 = vpop.f32.mrf.mxu0
      %v406 = vpop.f32.mrf.mxu0
      %v407 = vadd.f32 0.0, %v406
      %v408 = vpop.f32.mrf.mxu0
      %409 = vmatprep.mubr.bf16.mxu0 0
      %410 = vmatmul.mubr.bf16.gmra.mxu0 %v351
      %v411 = vpop.f32.mrf.mxu0
      %v412 = vadd.f32 0.0, %v411
      %v413 = vpop.f32.mrf.mxu0
      %v414 = vpop.f32.mrf.mxu0
      %v415 = vadd.f32 0.0, %v414
      %v416 = vpop.f32.mrf.mxu0
      %417 = vdwg.mxu0
      %v426 = vunpack.c.l.b16 %v172
      %v427 = vunpack.c.l.b16 %v174
      %v428 = vunpack.c.l.b16 %v176
      %v429 = vunpack.c.l.b16 %v178
      %v430 = vunpack.c.l.b16 %v180
      %v431 = vunpack.c.l.b16 %v182
      %v432 = vunpack.c.l.b16 %v184
      %v433 = vunpack.c.l.b16 %v186
      %v434 = vpack.c.b16 %v427, %v426
      %v435 = vpack.c.b16 %v429, %v428
      %v436 = vpack.c.b16 %v431, %v430
      %v437 = vpack.c.b16 %v433, %v432
      %v442 = vunpack.c.l.b16 %v192
      %v443 = vunpack.c.l.b16 %v193
      %v444 = vunpack.c.l.b16 %v194
      %v445 = vunpack.c.l.b16 %v195
      %v446 = vpack.c.b16 %v443, %v442
      %v447 = vpack.c.b16 %v445, %v444
      %v451 = vsel %vm340, %v434, 0
      %v454 = vsel %vm340, %v435, 0
      %v457 = vsel %vm340, %v436, 0
      %v460 = vsel %vm340, %v437, 0
      %462 = vmatprep.subr.bf16.mxu0 0
      %463 = vmatpush1.bf16.msra.mxu0 0
      %464 = vmatprep.subr.bf16.mxu0 0
      %465 = vmatpush1.bf16.msra.mxu0 0
      %466 = vmatprep.subr.bf16.mxu0 0
      %467 = vmatpush1.bf16.msra.mxu0 0
      %468 = vmatprep.subr.bf16.mxu0 0
      %469 = vmatpush1.bf16.msra.mxu0 0
      %470 = vmatprep.subr.bf16.mxu0 0
      %471 = vmatpush1.bf16.msra.mxu0 0
      %472 = vmatprep.subr.bf16.mxu0 0
      %473 = vmatpush1.bf16.msra.mxu0 0
      %474 = vmatprep.subr.bf16.mxu0 0
      %475 = vmatpush1.bf16.msra.mxu0 %v447
      %476 = vmatprep.subr.bf16.mxu0 0
      %477 = vmatpush1.bf16.msra.mxu0 %v446
      %478 = vmatprep.subr.bf16.mxu0 0
      %479 = vmatpush2.bf16.msra.mxu0 0
      %480 = vmatprep.subr.bf16.mxu0 0
      %481 = vmatpush2.bf16.msra.mxu0 0
      %482 = vmatprep.subr.bf16.mxu0 0
      %483 = vmatpush2.bf16.msra.mxu0 0
      %484 = vmatprep.subr.bf16.mxu0 0
      %485 = vmatpush2.bf16.msra.mxu0 0
      %486 = vmatprep.subr.bf16.mxu0 0
      %487 = vmatpush2.bf16.msra.mxu0 0
      %488 = vmatprep.subr.bf16.mxu0 0
      %489 = vmatpush2.bf16.msra.mxu0 0
      %490 = vmatprep.subr.bf16.mxu0 0
      %491 = vmatpush2.bf16.msra.mxu0 0
      %492 = vmatprep.subr.bf16.mxu0 0
      %493 = vmatpush2.bf16.msra.mxu0 0
      %494 = vmatprep.mubr.bf16.mxu0 0
      %495 = vmatmul.mubr.bf16.gmra.mxu0 %v451
      %v496 = vpop.f32.mrf.mxu0
      %v497 = vadd.f32 %v388, %v496
      %v498 = vpop.f32.mrf.mxu0
      %v499 = vpop.f32.mrf.mxu0
      %v500 = vadd.f32 %v391, %v499
      %v501 = vpop.f32.mrf.mxu0
      %502 = vmatprep.mubr.bf16.mxu0 0
      %503 = vmatmul.mubr.bf16.gmra.mxu0 %v454
      %v504 = vpop.f32.mrf.mxu0
      %v505 = vadd.f32 %v396, %v504
      %v506 = vpop.f32.mrf.mxu0
      %v507 = vpop.f32.mrf.mxu0
      %v508 = vadd.f32 %v399, %v507
      %v509 = vpop.f32.mrf.mxu0
      %510 = vmatprep.mubr.bf16.mxu0 0
      %511 = vmatmul.mubr.bf16.gmra.mxu0 %v457
      %v512 = vpop.f32.mrf.mxu0
      %v513 = vadd.f32 %v404, %v512
      %v514 = vpop.f32.mrf.mxu0
      %v515 = vpop.f32.mrf.mxu0
      %v516 = vadd.f32 %v407, %v515
      %v517 = vpop.f32.mrf.mxu0
      %518 = vmatprep.mubr.bf16.mxu0 0
      %519 = vmatmul.mubr.bf16.gmra.mxu0 %v460
      %v520 = vpop.f32.mrf.mxu0
      %v521 = vadd.f32 %v412, %v520
      %v522 = vpop.f32.mrf.mxu0
      %v523 = vpop.f32.mrf.mxu0
      %v524 = vadd.f32 %v415, %v523
      %v525 = vpop.f32.mrf.mxu0
      %526 = vdwg.mxu0
      %vm535 = vcmask 1042432
      %vm536 = vcmask 1046532
      %vm537 = vmor %vm535, %vm536
      %v538 = vrot.slane %v172, 5
      %v539 = vrot.slane %v538, 4
      %v540 = vrot.slane %v173, 5
      %v541 = vsel %vm537, %v539, %v540
      %v542 = vrot.slane %v174, 5
      %v543 = vrot.slane %v542, 4
      %v544 = vrot.slane %v175, 5
      %v545 = vsel %vm537, %v543, %v544
      %v546 = vrot.slane %v176, 5
      %v547 = vrot.slane %v546, 4
      %v548 = vrot.slane %v177, 5
      %v549 = vsel %vm537, %v547, %v548
      %v550 = vrot.slane %v178, 5
      %v551 = vrot.slane %v550, 4
      %v552 = vrot.slane %v179, 5
      %v553 = vsel %vm537, %v551, %v552
      %v554 = vrot.slane %v180, 5
      %v555 = vrot.slane %v554, 4
      %v556 = vrot.slane %v181, 5
      %v557 = vsel %vm537, %v555, %v556
      %v558 = vrot.slane %v182, 5
      %v559 = vrot.slane %v558, 4
      %v560 = vrot.slane %v183, 5
      %v561 = vsel %vm537, %v559, %v560
      %v562 = vrot.slane %v184, 5
      %v563 = vrot.slane %v562, 4
      %v564 = vrot.slane %v185, 5
      %v565 = vsel %vm537, %v563, %v564
      %v566 = vrot.slane %v186, 5
      %v567 = vrot.slane %v566, 4
      %v568 = vrot.slane %v187, 5
      %v569 = vsel %vm537, %v567, %v568
      %s570 = scalar_lea.vmem %s1, 32
      %v571 = vld [vmem:[%s570] sm:$0xf]
      %v572 = vld [vmem:[%s570 + $0x4] sm:$0xf]
      %v573 = vld [vmem:[%s570 + $0x8] sm:$0xf]
      %v574 = vld [vmem:[%s570 + $0xc] sm:$0xf]
      %v575 = vunpack.c.l.b16 %v541
      %v576 = vunpack.c.l.b16 %v545
      %v577 = vunpack.c.l.b16 %v549
      %v578 = vunpack.c.l.b16 %v553
      %v579 = vunpack.c.l.b16 %v557
      %v580 = vunpack.c.l.b16 %v561
      %v581 = vunpack.c.l.b16 %v565
      %v582 = vunpack.c.l.b16 %v569
      %v583 = vpack.c.b16 %v576, %v575
      %v584 = vpack.c.b16 %v578, %v577
      %v585 = vpack.c.b16 %v580, %v579
      %v586 = vpack.c.b16 %v582, %v581
      %v591 = vunpack.c.l.b16 %v571
      %v592 = vunpack.c.l.b16 %v572
      %v593 = vunpack.c.l.b16 %v573
      %v594 = vunpack.c.l.b16 %v574
      %v595 = vpack.c.b16 %v592, %v591
      %v596 = vpack.c.b16 %v594, %v593
      %v600 = vsel %vm340, %v583, 0
      %v603 = vsel %vm340, %v584, 0
      %v606 = vsel %vm340, %v585, 0
      %v609 = vsel %vm340, %v586, 0
      %611 = vmatprep.subr.bf16.mxu0 0
      %612 = vmatpush1.bf16.msra.mxu0 0
      %613 = vmatprep.subr.bf16.mxu0 0
      %614 = vmatpush1.bf16.msra.mxu0 0
      %615 = vmatprep.subr.bf16.mxu0 0
      %616 = vmatpush1.bf16.msra.mxu0 0
      %617 = vmatprep.subr.bf16.mxu0 0
      %618 = vmatpush1.bf16.msra.mxu0 0
      %619 = vmatprep.subr.bf16.mxu0 0
      %620 = vmatpush1.bf16.msra.mxu0 0
      %621 = vmatprep.subr.bf16.mxu0 0
      %622 = vmatpush1.bf16.msra.mxu0 0
      %623 = vmatprep.subr.bf16.mxu0 0
      %624 = vmatpush1.bf16.msra.mxu0 %v596
      %625 = vmatprep.subr.bf16.mxu0 0
      %626 = vmatpush1.bf16.msra.mxu0 %v595
      %627 = vmatprep.subr.bf16.mxu0 0
      %628 = vmatpush2.bf16.msra.mxu0 0
      %629 = vmatprep.subr.bf16.mxu0 0
      %630 = vmatpush2.bf16.msra.mxu0 0
      %631 = vmatprep.subr.bf16.mxu0 0
      %632 = vmatpush2.bf16.msra.mxu0 0
      %633 = vmatprep.subr.bf16.mxu0 0
      %634 = vmatpush2.bf16.msra.mxu0 0
      %635 = vmatprep.subr.bf16.mxu0 0
      %636 = vmatpush2.bf16.msra.mxu0 0
      %637 = vmatprep.subr.bf16.mxu0 0
      %638 = vmatpush2.bf16.msra.mxu0 0
      %639 = vmatprep.subr.bf16.mxu0 0
      %640 = vmatpush2.bf16.msra.mxu0 0
      %641 = vmatprep.subr.bf16.mxu0 0
      %642 = vmatpush2.bf16.msra.mxu0 0
      %643 = vmatprep.mubr.bf16.mxu0 0
      %644 = vmatmul.mubr.bf16.gmra.mxu0 %v600
      %v645 = vpop.f32.mrf.mxu0
      %v646 = vadd.f32 0.0, %v645
      %v647 = vpop.f32.mrf.mxu0
      %v648 = vpop.f32.mrf.mxu0
      %v649 = vadd.f32 0.0, %v648
      %v650 = vpop.f32.mrf.mxu0
      %651 = vmatprep.mubr.bf16.mxu0 0
      %652 = vmatmul.mubr.bf16.gmra.mxu0 %v603
      %v653 = vpop.f32.mrf.mxu0
      %v654 = vadd.f32 0.0, %v653
      %v655 = vpop.f32.mrf.mxu0
      %v656 = vpop.f32.mrf.mxu0
      %v657 = vadd.f32 0.0, %v656
      %v658 = vpop.f32.mrf.mxu0
      %659 = vmatprep.mubr.bf16.mxu0 0
      %660 = vmatmul.mubr.bf16.gmra.mxu0 %v606
      %v661 = vpop.f32.mrf.mxu0
      %v662 = vadd.f32 0.0, %v661
      %v663 = vpop.f32.mrf.mxu0
      %v664 = vpop.f32.mrf.mxu0
      %v665 = vadd.f32 0.0, %v664
      %v666 = vpop.f32.mrf.mxu0
      %667 = vmatprep.mubr.bf16.mxu0 0
      %668 = vmatmul.mubr.bf16.gmra.mxu0 %v609
      %v669 = vpop.f32.mrf.mxu0
      %v670 = vadd.f32 0.0, %v669
      %v671 = vpop.f32.mrf.mxu0
      %v672 = vpop.f32.mrf.mxu0
      %v673 = vadd.f32 0.0, %v672
      %v674 = vpop.f32.mrf.mxu0
      %675 = vdwg.mxu0
      %v676 = vadd.f32 %v497, %v646
      %v677 = vadd.f32 %v500, %v649
      %v678 = vadd.f32 %v505, %v654
      %v679 = vadd.f32 %v508, %v657
      %v680 = vadd.f32 %v513, %v662
      %v681 = vadd.f32 %v516, %v665
      %v682 = vadd.f32 %v521, %v670
      %v683 = vadd.f32 %v524, %v673
      %s684 = scalar_lea.vmem %s1, 48
      %v685 = vld [vmem:[%s684] sm:$0xf]
      %v686 = vld [vmem:[%s684 + $0x4] sm:$0xf]
      %v687 = vld [vmem:[%s684 + $0x8] sm:$0xf]
      %v688 = vld [vmem:[%s684 + $0xc] sm:$0xf]
      %v690 = vunpack.c.l.b16 %v188
      %v691 = vpack.c.b16 %v428, %v427
      %v692 = vpack.c.b16 %v430, %v429
      %v693 = vpack.c.b16 %v432, %v431
      %v694 = vpack.c.b16 %v690, %v433
      %v699 = vunpack.c.l.b16 %v685
      %v700 = vunpack.c.l.b16 %v686
      %v701 = vunpack.c.l.b16 %v687
      %v702 = vunpack.c.l.b16 %v688
      %v703 = vpack.c.b16 %v700, %v699
      %v704 = vpack.c.b16 %v702, %v701
      %v708 = vsel %vm340, %v691, 0
      %v711 = vsel %vm340, %v692, 0
      %v714 = vsel %vm340, %v693, 0
      %v717 = vsel %vm340, %v694, 0
      %719 = vmatprep.subr.bf16.mxu0 0
      %720 = vmatpush1.bf16.msra.mxu0 0
      %721 = vmatprep.subr.bf16.mxu0 0
      %722 = vmatpush1.bf16.msra.mxu0 0
      %723 = vmatprep.subr.bf16.mxu0 0
      %724 = vmatpush1.bf16.msra.mxu0 0
      %725 = vmatprep.subr.bf16.mxu0 0
      %726 = vmatpush1.bf16.msra.mxu0 0
      %727 = vmatprep.subr.bf16.mxu0 0
      %728 = vmatpush1.bf16.msra.mxu0 0
      %729 = vmatprep.subr.bf16.mxu0 0
      %730 = vmatpush1.bf16.msra.mxu0 0
      %731 = vmatprep.subr.bf16.mxu0 0
      %732 = vmatpush1.bf16.msra.mxu0 %v704
      %733 = vmatprep.subr.bf16.mxu0 0
      %734 = vmatpush1.bf16.msra.mxu0 %v703
      %735 = vmatprep.subr.bf16.mxu0 0
      %736 = vmatpush2.bf16.msra.mxu0 0
      %737 = vmatprep.subr.bf16.mxu0 0
      %738 = vmatpush2.bf16.msra.mxu0 0
      %739 = vmatprep.subr.bf16.mxu0 0
      %740 = vmatpush2.bf16.msra.mxu0 0
      %741 = vmatprep.subr.bf16.mxu0 0
      %742 = vmatpush2.bf16.msra.mxu0 0
      %743 = vmatprep.subr.bf16.mxu0 0
      %744 = vmatpush2.bf16.msra.mxu0 0
      %745 = vmatprep.subr.bf16.mxu0 0
      %746 = vmatpush2.bf16.msra.mxu0 0
      %747 = vmatprep.subr.bf16.mxu0 0
      %748 = vmatpush2.bf16.msra.mxu0 0
      %749 = vmatprep.subr.bf16.mxu0 0
      %750 = vmatpush2.bf16.msra.mxu0 0
      %751 = vmatprep.mubr.bf16.mxu0 0
      %752 = vmatmul.mubr.bf16.gmra.mxu0 %v708
      %v753 = vpop.f32.mrf.mxu0
      %v754 = vadd.f32 0.0, %v753
      %v755 = vpop.f32.mrf.mxu0
      %v756 = vpop.f32.mrf.mxu0
      %v757 = vadd.f32 0.0, %v756
      %v758 = vpop.f32.mrf.mxu0
      %759 = vmatprep.mubr.bf16.mxu0 0
      %760 = vmatmul.mubr.bf16.gmra.mxu0 %v711
      %v761 = vpop.f32.mrf.mxu0
      %v762 = vadd.f32 0.0, %v761
      %v763 = vpop.f32.mrf.mxu0
      %v764 = vpop.f32.mrf.mxu0
      %v765 = vadd.f32 0.0, %v764
      %v766 = vpop.f32.mrf.mxu0
      %767 = vmatprep.mubr.bf16.mxu0 0
      %768 = vmatmul.mubr.bf16.gmra.mxu0 %v714
      %v769 = vpop.f32.mrf.mxu0
      %v770 = vadd.f32 0.0, %v769
      %v771 = vpop.f32.mrf.mxu0
      %v772 = vpop.f32.mrf.mxu0
      %v773 = vadd.f32 0.0, %v772
      %v774 = vpop.f32.mrf.mxu0
      %775 = vmatprep.mubr.bf16.mxu0 0
      %776 = vmatmul.mubr.bf16.gmra.mxu0 %v717
      %v777 = vpop.f32.mrf.mxu0
      %v778 = vadd.f32 0.0, %v777
      %v779 = vpop.f32.mrf.mxu0
      %v780 = vpop.f32.mrf.mxu0
      %v781 = vadd.f32 0.0, %v780
      %v782 = vpop.f32.mrf.mxu0
      %783 = vdwg.mxu0
      %v784 = vadd.f32 %v676, %v754
      %v785 = vadd.f32 %v677, %v757
      %v786 = vadd.f32 %v678, %v762
      %v787 = vadd.f32 %v679, %v765
      %v788 = vadd.f32 %v680, %v770
      %v789 = vadd.f32 %v681, %v773
      %v790 = vadd.f32 %v682, %v778
      %v791 = vadd.f32 %v683, %v781
      %v793 = vshrl.u32 %v188, 16
      %v795 = vrot.slane %v793, 4
      %v796 = vshll.u32 %v188, 16
      %v798 = vrot.slane %v796, 5
      %v799 = vor.u32 %v795, %v798
      %v800 = vrot.slane %v799, 4
      %v802 = vshll.u32 %v189, 16
      %v804 = vrot.slane %v802, 5
      %v805 = vsel %vm198, %v800, %v804
      %s806 = scalar_lea.vmem %s1, 64
      %v807 = vld [vmem:[%s806] sm:$0xf]
      %v808 = vld [vmem:[%s806 + $0x4] sm:$0xf]
      %v809 = vld [vmem:[%s806 + $0x8] sm:$0xf]
      %v810 = vld [vmem:[%s806 + $0xc] sm:$0xf]
      %v811 = vunpack.c.l.b16 %v805
      %v812 = vpack.c.b16 %v318, %v317
      %v813 = vpack.c.b16 %v320, %v319
      %v814 = vpack.c.b16 %v322, %v321
      %v815 = vpack.c.b16 %v811, %v323
      %v820 = vunpack.c.l.b16 %v807
      %v821 = vunpack.c.l.b16 %v808
      %v822 = vunpack.c.l.b16 %v809
      %v823 = vunpack.c.l.b16 %v810
      %v824 = vpack.c.b16 %v821, %v820
      %v825 = vpack.c.b16 %v823, %v822
      %v829 = vsel %vm340, %v812, 0
      %v832 = vsel %vm340, %v813, 0
      %v835 = vsel %vm340, %v814, 0
      %v838 = vsel %vm340, %v815, 0
      %840 = vmatprep.subr.bf16.mxu0 0
      %841 = vmatpush1.bf16.msra.mxu0 0
      %842 = vmatprep.subr.bf16.mxu0 0
      %843 = vmatpush1.bf16.msra.mxu0 0
      %844 = vmatprep.subr.bf16.mxu0 0
      %845 = vmatpush1.bf16.msra.mxu0 0
      %846 = vmatprep.subr.bf16.mxu0 0
      %847 = vmatpush1.bf16.msra.mxu0 0
      %848 = vmatprep.subr.bf16.mxu0 0
      %849 = vmatpush1.bf16.msra.mxu0 0
      %850 = vmatprep.subr.bf16.mxu0 0
      %851 = vmatpush1.bf16.msra.mxu0 0
      %852 = vmatprep.subr.bf16.mxu0 0
      %853 = vmatpush1.bf16.msra.mxu0 %v825
      %854 = vmatprep.subr.bf16.mxu0 0
      %855 = vmatpush1.bf16.msra.mxu0 %v824
      %856 = vmatprep.subr.bf16.mxu0 0
      %857 = vmatpush2.bf16.msra.mxu0 0
      %858 = vmatprep.subr.bf16.mxu0 0
      %859 = vmatpush2.bf16.msra.mxu0 0
      %860 = vmatprep.subr.bf16.mxu0 0
      %861 = vmatpush2.bf16.msra.mxu0 0
      %862 = vmatprep.subr.bf16.mxu0 0
      %863 = vmatpush2.bf16.msra.mxu0 0
      %864 = vmatprep.subr.bf16.mxu0 0
      %865 = vmatpush2.bf16.msra.mxu0 0
      %866 = vmatprep.subr.bf16.mxu0 0
      %867 = vmatpush2.bf16.msra.mxu0 0
      %868 = vmatprep.subr.bf16.mxu0 0
      %869 = vmatpush2.bf16.msra.mxu0 0
      %870 = vmatprep.subr.bf16.mxu0 0
      %871 = vmatpush2.bf16.msra.mxu0 0
      %872 = vmatprep.mubr.bf16.mxu0 0
      %873 = vmatmul.mubr.bf16.gmra.mxu0 %v829
      %v874 = vpop.f32.mrf.mxu0
      %v875 = vadd.f32 0.0, %v874
      %v876 = vpop.f32.mrf.mxu0
      %v877 = vpop.f32.mrf.mxu0
      %v878 = vadd.f32 0.0, %v877
      %v879 = vpop.f32.mrf.mxu0
      %880 = vmatprep.mubr.bf16.mxu0 0
      %881 = vmatmul.mubr.bf16.gmra.mxu0 %v832
      %v882 = vpop.f32.mrf.mxu0
      %v883 = vadd.f32 0.0, %v882
      %v884 = vpop.f32.mrf.mxu0
      %v885 = vpop.f32.mrf.mxu0
      %v886 = vadd.f32 0.0, %v885
      %v887 = vpop.f32.mrf.mxu0
      %888 = vmatprep.mubr.bf16.mxu0 0
      %889 = vmatmul.mubr.bf16.gmra.mxu0 %v835
      %v890 = vpop.f32.mrf.mxu0
      %v891 = vadd.f32 0.0, %v890
      %v892 = vpop.f32.mrf.mxu0
      %v893 = vpop.f32.mrf.mxu0
      %v894 = vadd.f32 0.0, %v893
      %v895 = vpop.f32.mrf.mxu0
      %896 = vmatprep.mubr.bf16.mxu0 0
      %897 = vmatmul.mubr.bf16.gmra.mxu0 %v838
      %v898 = vpop.f32.mrf.mxu0
      %v899 = vadd.f32 0.0, %v898
      %v900 = vpop.f32.mrf.mxu0
      %v901 = vpop.f32.mrf.mxu0
      %v902 = vadd.f32 0.0, %v901
      %v903 = vpop.f32.mrf.mxu0
      %904 = vdwg.mxu0
      %v905 = vadd.f32 %v784, %v875
      %v906 = vadd.f32 %v785, %v878
      %v907 = vadd.f32 %v786, %v883
      %v908 = vadd.f32 %v787, %v886
      %v909 = vadd.f32 %v788, %v891
      %v910 = vadd.f32 %v789, %v894
      %v911 = vadd.f32 %v790, %v899
      %v912 = vadd.f32 %v791, %v902
      %v914 = vrot.slane %v188, 5
      %v915 = vrot.slane %v914, 4
      %v916 = vrot.slane %v189, 5
      %v917 = vsel %vm537, %v915, %v916
      %s918 = scalar_lea.vmem %s1, 80
      %v919 = vld [vmem:[%s918] sm:$0xf]
      %v920 = vld [vmem:[%s918 + $0x4] sm:$0xf]
      %v921 = vld [vmem:[%s918 + $0x8] sm:$0xf]
      %v922 = vld [vmem:[%s918 + $0xc] sm:$0xf]
      %v923 = vunpack.c.l.b16 %v917
      %v924 = vpack.c.b16 %v577, %v576
      %v925 = vpack.c.b16 %v579, %v578
      %v926 = vpack.c.b16 %v581, %v580
      %v927 = vpack.c.b16 %v923, %v582
      %v932 = vunpack.c.l.b16 %v919
      %v933 = vunpack.c.l.b16 %v920
      %v934 = vunpack.c.l.b16 %v921
      %v935 = vunpack.c.l.b16 %v922
      %v936 = vpack.c.b16 %v933, %v932
      %v937 = vpack.c.b16 %v935, %v934
      %v941 = vsel %vm340, %v924, 0
      %v944 = vsel %vm340, %v925, 0
      %v947 = vsel %vm340, %v926, 0
      %v950 = vsel %vm340, %v927, 0
      %952 = vmatprep.subr.bf16.mxu0 0
      %953 = vmatpush1.bf16.msra.mxu0 0
      %954 = vmatprep.subr.bf16.mxu0 0
      %955 = vmatpush1.bf16.msra.mxu0 0
      %956 = vmatprep.subr.bf16.mxu0 0
      %957 = vmatpush1.bf16.msra.mxu0 0
      %958 = vmatprep.subr.bf16.mxu0 0
      %959 = vmatpush1.bf16.msra.mxu0 0
      %960 = vmatprep.subr.bf16.mxu0 0
      %961 = vmatpush1.bf16.msra.mxu0 0
      %962 = vmatprep.subr.bf16.mxu0 0
      %963 = vmatpush1.bf16.msra.mxu0 0
      %964 = vmatprep.subr.bf16.mxu0 0
      %965 = vmatpush1.bf16.msra.mxu0 %v937
      %966 = vmatprep.subr.bf16.mxu0 0
      %967 = vmatpush1.bf16.msra.mxu0 %v936
      %968 = vmatprep.subr.bf16.mxu0 0
      %969 = vmatpush2.bf16.msra.mxu0 0
      %970 = vmatprep.subr.bf16.mxu0 0
      %971 = vmatpush2.bf16.msra.mxu0 0
      %972 = vmatprep.subr.bf16.mxu0 0
      %973 = vmatpush2.bf16.msra.mxu0 0
      %974 = vmatprep.subr.bf16.mxu0 0
      %975 = vmatpush2.bf16.msra.mxu0 0
      %976 = vmatprep.subr.bf16.mxu0 0
      %977 = vmatpush2.bf16.msra.mxu0 0
      %978 = vmatprep.subr.bf16.mxu0 0
      %979 = vmatpush2.bf16.msra.mxu0 0
      %980 = vmatprep.subr.bf16.mxu0 0
      %981 = vmatpush2.bf16.msra.mxu0 0
      %982 = vmatprep.subr.bf16.mxu0 0
      %983 = vmatpush2.bf16.msra.mxu0 0
      %984 = vmatprep.mubr.bf16.mxu0 0
      %985 = vmatmul.mubr.bf16.gmra.mxu0 %v941
      %v986 = vpop.f32.mrf.mxu0
      %v987 = vadd.f32 0.0, %v986
      %v988 = vpop.f32.mrf.mxu0
      %v989 = vpop.f32.mrf.mxu0
      %v990 = vadd.f32 0.0, %v989
      %v991 = vpop.f32.mrf.mxu0
      %992 = vmatprep.mubr.bf16.mxu0 0
      %993 = vmatmul.mubr.bf16.gmra.mxu0 %v944
      %v994 = vpop.f32.mrf.mxu0
      %v995 = vadd.f32 0.0, %v994
      %v996 = vpop.f32.mrf.mxu0
      %v997 = vpop.f32.mrf.mxu0
      %v998 = vadd.f32 0.0, %v997
      %v999 = vpop.f32.mrf.mxu0
      %1000 = vmatprep.mubr.bf16.mxu0 0
      %1001 = vmatmul.mubr.bf16.gmra.mxu0 %v947
      %v1002 = vpop.f32.mrf.mxu0
      %v1003 = vadd.f32 0.0, %v1002
      %v1004 = vpop.f32.mrf.mxu0
      %v1005 = vpop.f32.mrf.mxu0
      %v1006 = vadd.f32 0.0, %v1005
      %v1007 = vpop.f32.mrf.mxu0
      %1008 = vmatprep.mubr.bf16.mxu0 0
      %1009 = vmatmul.mubr.bf16.gmra.mxu0 %v950
      %v1010 = vpop.f32.mrf.mxu0
      %v1011 = vadd.f32 0.0, %v1010
      %v1012 = vpop.f32.mrf.mxu0
      %v1013 = vpop.f32.mrf.mxu0
      %v1014 = vadd.f32 0.0, %v1013
      %v1015 = vpop.f32.mrf.mxu0
      %1016 = vdwg.mxu0
      %v1017 = vadd.f32 %v905, %v987
      %v1018 = vadd.f32 %v906, %v990
      %v1019 = vadd.f32 %v907, %v995
      %v1020 = vadd.f32 %v908, %v998
      %v1021 = vadd.f32 %v909, %v1003
      %v1022 = vadd.f32 %v910, %v1006
      %v1023 = vadd.f32 %v911, %v1011
      %v1024 = vadd.f32 %v912, %v1014
      %s1025 = scalar_lea.vmem %s1, 96
      %v1026 = vld [vmem:[%s1025] sm:$0xf]
      %v1027 = vld [vmem:[%s1025 + $0x4] sm:$0xf]
      %v1028 = vld [vmem:[%s1025 + $0x8] sm:$0xf]
      %v1029 = vld [vmem:[%s1025 + $0xc] sm:$0xf]
      %v1031 = vunpack.c.l.b16 %v190
      %v1032 = vpack.c.b16 %v1031, %v690
      %v1037 = vunpack.c.l.b16 %v1026
      %v1038 = vunpack.c.l.b16 %v1027
      %v1039 = vunpack.c.l.b16 %v1028
      %v1040 = vunpack.c.l.b16 %v1029
      %v1041 = vpack.c.b16 %v1038, %v1037
      %v1042 = vpack.c.b16 %v1040, %v1039
      %v1046 = vsel %vm340, %v1032, 0
      %1048 = vmatprep.subr.bf16.mxu0 0
      %1049 = vmatpush1.bf16.msra.mxu0 0
      %1050 = vmatprep.subr.bf16.mxu0 0
      %1051 = vmatpush1.bf16.msra.mxu0 0
      %1052 = vmatprep.subr.bf16.mxu0 0
      %1053 = vmatpush1.bf16.msra.mxu0 0
      %1054 = vmatprep.subr.bf16.mxu0 0
      %1055 = vmatpush1.bf16.msra.mxu0 0
      %1056 = vmatprep.subr.bf16.mxu0 0
      %1057 = vmatpush1.bf16.msra.mxu0 0
      %1058 = vmatprep.subr.bf16.mxu0 0
      %1059 = vmatpush1.bf16.msra.mxu0 0
      %1060 = vmatprep.subr.bf16.mxu0 0
      %1061 = vmatpush1.bf16.msra.mxu0 %v1042
      %1062 = vmatprep.subr.bf16.mxu0 0
      %1063 = vmatpush1.bf16.msra.mxu0 %v1041
      %1064 = vmatprep.subr.bf16.mxu0 0
      %1065 = vmatpush2.bf16.msra.mxu0 0
      %1066 = vmatprep.subr.bf16.mxu0 0
      %1067 = vmatpush2.bf16.msra.mxu0 0
      %1068 = vmatprep.subr.bf16.mxu0 0
      %1069 = vmatpush2.bf16.msra.mxu0 0
      %1070 = vmatprep.subr.bf16.mxu0 0
      %1071 = vmatpush2.bf16.msra.mxu0 0
      %1072 = vmatprep.subr.bf16.mxu0 0
      %1073 = vmatpush2.bf16.msra.mxu0 0
      %1074 = vmatprep.subr.bf16.mxu0 0
      %1075 = vmatpush2.bf16.msra.mxu0 0
      %1076 = vmatprep.subr.bf16.mxu0 0
      %1077 = vmatpush2.bf16.msra.mxu0 0
      %1078 = vmatprep.subr.bf16.mxu0 0
      %1079 = vmatpush2.bf16.msra.mxu0 0
      %1080 = vmatprep.mubr.bf16.mxu0 0
      %1081 = vmatmul.mubr.bf16.gmra.mxu0 %v454
      %v1082 = vpop.f32.mrf.mxu0
      %v1083 = vadd.f32 0.0, %v1082
      %v1084 = vpop.f32.mrf.mxu0
      %v1085 = vpop.f32.mrf.mxu0
      %v1086 = vadd.f32 0.0, %v1085
      %v1087 = vpop.f32.mrf.mxu0
      %1088 = vmatprep.mubr.bf16.mxu0 0
      %1089 = vmatmul.mubr.bf16.gmra.mxu0 %v457
      %v1090 = vpop.f32.mrf.mxu0
      %v1091 = vadd.f32 0.0, %v1090
      %v1092 = vpop.f32.mrf.mxu0
      %v1093 = vpop.f32.mrf.mxu0
      %v1094 = vadd.f32 0.0, %v1093
      %v1095 = vpop.f32.mrf.mxu0
      %1096 = vmatprep.mubr.bf16.mxu0 0
      %1097 = vmatmul.mubr.bf16.gmra.mxu0 %v460
      %v1098 = vpop.f32.mrf.mxu0
      %v1099 = vadd.f32 0.0, %v1098
      %v1100 = vpop.f32.mrf.mxu0
      %v1101 = vpop.f32.mrf.mxu0
      %v1102 = vadd.f32 0.0, %v1101
      %v1103 = vpop.f32.mrf.mxu0
      %1104 = vmatprep.mubr.bf16.mxu0 0
      %1105 = vmatmul.mubr.bf16.gmra.mxu0 %v1046
      %v1106 = vpop.f32.mrf.mxu0
      %v1107 = vadd.f32 0.0, %v1106
      %v1108 = vpop.f32.mrf.mxu0
      %v1109 = vpop.f32.mrf.mxu0
      %v1110 = vadd.f32 0.0, %v1109
      %v1111 = vpop.f32.mrf.mxu0
      %1112 = vdwg.mxu0
      %v1113 = vadd.f32 %v1017, %v1083
      %v1114 = vadd.f32 %v1018, %v1086
      %v1115 = vadd.f32 %v1019, %v1091
      %v1116 = vadd.f32 %v1020, %v1094
      %v1117 = vadd.f32 %v1021, %v1099
      %v1118 = vadd.f32 %v1022, %v1102
      %v1119 = vadd.f32 %v1023, %v1107
      %v1120 = vadd.f32 %v1024, %v1110
      %v1122 = vshrl.u32 %v190, 16
      %v1124 = vrot.slane %v1122, 4
      %v1125 = vshll.u32 %v190, 16
      %v1127 = vrot.slane %v1125, 5
      %v1128 = vor.u32 %v1124, %v1127
      %v1129 = vrot.slane %v1128, 4
      %v1131 = vshll.u32 %v191, 16
      %v1133 = vrot.slane %v1131, 5
      %v1134 = vsel %vm198, %v1129, %v1133
      %s1135 = scalar_lea.vmem %s1, 112
      %v1136 = vld [vmem:[%s1135] sm:$0xf]
      %v1137 = vld [vmem:[%s1135 + $0x4] sm:$0xf]
      %v1138 = vld [vmem:[%s1135 + $0x8] sm:$0xf]
      %v1139 = vld [vmem:[%s1135 + $0xc] sm:$0xf]
      %v1140 = vunpack.c.l.b16 %v1134
      %v1141 = vpack.c.b16 %v1140, %v811
      %v1146 = vunpack.c.l.b16 %v1136
      %v1147 = vunpack.c.l.b16 %v1137
      %v1148 = vunpack.c.l.b16 %v1138
      %v1149 = vunpack.c.l.b16 %v1139
      %v1150 = vpack.c.b16 %v1147, %v1146
      %v1151 = vpack.c.b16 %v1149, %v1148
      %v1155 = vsel %vm340, %v1141, 0
      %1157 = vmatprep.subr.bf16.mxu0 0
      %1158 = vmatpush1.bf16.msra.mxu0 0
      %1159 = vmatprep.subr.bf16.mxu0 0
      %1160 = vmatpush1.bf16.msra.mxu0 0
      %1161 = vmatprep.subr.bf16.mxu0 0
      %1162 = vmatpush1.bf16.msra.mxu0 0
      %1163 = vmatprep.subr.bf16.mxu0 0
      %1164 = vmatpush1.bf16.msra.mxu0 0
      %1165 = vmatprep.subr.bf16.mxu0 0
      %1166 = vmatpush1.bf16.msra.mxu0 0
      %1167 = vmatprep.subr.bf16.mxu0 0
      %1168 = vmatpush1.bf16.msra.mxu0 0
      %1169 = vmatprep.subr.bf16.mxu0 0
      %1170 = vmatpush1.bf16.msra.mxu0 %v1151
      %1171 = vmatprep.subr.bf16.mxu0 0
      %1172 = vmatpush1.bf16.msra.mxu0 %v1150
      %1173 = vmatprep.subr.bf16.mxu0 0
      %1174 = vmatpush2.bf16.msra.mxu0 0
      %1175 = vmatprep.subr.bf16.mxu0 0
      %1176 = vmatpush2.bf16.msra.mxu0 0
      %1177 = vmatprep.subr.bf16.mxu0 0
      %1178 = vmatpush2.bf16.msra.mxu0 0
      %1179 = vmatprep.subr.bf16.mxu0 0
      %1180 = vmatpush2.bf16.msra.mxu0 0
      %1181 = vmatprep.subr.bf16.mxu0 0
      %1182 = vmatpush2.bf16.msra.mxu0 0
      %1183 = vmatprep.subr.bf16.mxu0 0
      %1184 = vmatpush2.bf16.msra.mxu0 0
      %1185 = vmatprep.subr.bf16.mxu0 0
      %1186 = vmatpush2.bf16.msra.mxu0 0
      %1187 = vmatprep.subr.bf16.mxu0 0
      %1188 = vmatpush2.bf16.msra.mxu0 0
      %1189 = vmatprep.mubr.bf16.mxu0 0
      %1190 = vmatmul.mubr.bf16.gmra.mxu0 %v345
      %v1191 = vpop.f32.mrf.mxu0
      %v1192 = vadd.f32 0.0, %v1191
      %v1193 = vpop.f32.mrf.mxu0
      %v1194 = vpop.f32.mrf.mxu0
      %v1195 = vadd.f32 0.0, %v1194
      %v1196 = vpop.f32.mrf.mxu0
      %1197 = vmatprep.mubr.bf16.mxu0 0
      %1198 = vmatmul.mubr.bf16.gmra.mxu0 %v348
      %v1199 = vpop.f32.mrf.mxu0
      %v1200 = vadd.f32 0.0, %v1199
      %v1201 = vpop.f32.mrf.mxu0
      %v1202 = vpop.f32.mrf.mxu0
      %v1203 = vadd.f32 0.0, %v1202
      %v1204 = vpop.f32.mrf.mxu0
      %1205 = vmatprep.mubr.bf16.mxu0 0
      %1206 = vmatmul.mubr.bf16.gmra.mxu0 %v351
      %v1207 = vpop.f32.mrf.mxu0
      %v1208 = vadd.f32 0.0, %v1207
      %v1209 = vpop.f32.mrf.mxu0
      %v1210 = vpop.f32.mrf.mxu0
      %v1211 = vadd.f32 0.0, %v1210
      %v1212 = vpop.f32.mrf.mxu0
      %1213 = vmatprep.mubr.bf16.mxu0 0
      %1214 = vmatmul.mubr.bf16.gmra.mxu0 %v1155
      %v1215 = vpop.f32.mrf.mxu0
      %v1216 = vadd.f32 0.0, %v1215
      %v1217 = vpop.f32.mrf.mxu0
      %v1218 = vpop.f32.mrf.mxu0
      %v1219 = vadd.f32 0.0, %v1218
      %v1220 = vpop.f32.mrf.mxu0
      %1221 = vdwg.mxu0
      %v1222 = vadd.f32 %v1113, %v1192
      %v1223 = vadd.f32 %v1114, %v1195
      %v1224 = vadd.f32 %v1115, %v1200
      %v1225 = vadd.f32 %v1116, %v1203
      %v1226 = vadd.f32 %v1117, %v1208
      %v1227 = vadd.f32 %v1118, %v1211
      %v1228 = vadd.f32 %v1119, %v1216
      %v1229 = vadd.f32 %v1120, %v1219
      %v1231 = vrot.slane %v190, 5
      %v1232 = vrot.slane %v1231, 4
      %v1233 = vrot.slane %v191, 5
      %v1234 = vsel %vm537, %v1232, %v1233
      %s1235 = scalar_lea.vmem %s1, 128
      %v1236 = vld [vmem:[%s1235] sm:$0xf]
      %v1237 = vld [vmem:[%s1235 + $0x4] sm:$0xf]
      %v1238 = vld [vmem:[%s1235 + $0x8] sm:$0xf]
      %v1239 = vld [vmem:[%s1235 + $0xc] sm:$0xf]
      %v1240 = vunpack.c.l.b16 %v1234
      %v1241 = vpack.c.b16 %v1240, %v923
      %v1246 = vunpack.c.l.b16 %v1236
      %v1247 = vunpack.c.l.b16 %v1237
      %v1248 = vunpack.c.l.b16 %v1238
      %v1249 = vunpack.c.l.b16 %v1239
      %v1250 = vpack.c.b16 %v1247, %v1246
      %v1251 = vpack.c.b16 %v1249, %v1248
      %v1255 = vsel %vm340, %v1241, 0
      %1257 = vmatprep.subr.bf16.mxu0 0
      %1258 = vmatpush1.bf16.msra.mxu0 0
      %1259 = vmatprep.subr.bf16.mxu0 0
      %1260 = vmatpush1.bf16.msra.mxu0 0
      %1261 = vmatprep.subr.bf16.mxu0 0
      %1262 = vmatpush1.bf16.msra.mxu0 0
      %1263 = vmatprep.subr.bf16.mxu0 0
      %1264 = vmatpush1.bf16.msra.mxu0 0
      %1265 = vmatprep.subr.bf16.mxu0 0
      %1266 = vmatpush1.bf16.msra.mxu0 0
      %1267 = vmatprep.subr.bf16.mxu0 0
      %1268 = vmatpush1.bf16.msra.mxu0 0
      %1269 = vmatprep.subr.bf16.mxu0 0
      %1270 = vmatpush1.bf16.msra.mxu0 %v1251
      %1271 = vmatprep.subr.bf16.mxu0 0
      %1272 = vmatpush1.bf16.msra.mxu0 %v1250
      %1273 = vmatprep.subr.bf16.mxu0 0
      %1274 = vmatpush2.bf16.msra.mxu0 0
      %1275 = vmatprep.subr.bf16.mxu0 0
      %1276 = vmatpush2.bf16.msra.mxu0 0
      %1277 = vmatprep.subr.bf16.mxu0 0
      %1278 = vmatpush2.bf16.msra.mxu0 0
      %1279 = vmatprep.subr.bf16.mxu0 0
      %1280 = vmatpush2.bf16.msra.mxu0 0
      %1281 = vmatprep.subr.bf16.mxu0 0
      %1282 = vmatpush2.bf16.msra.mxu0 0
      %1283 = vmatprep.subr.bf16.mxu0 0
      %1284 = vmatpush2.bf16.msra.mxu0 0
      %1285 = vmatprep.subr.bf16.mxu0 0
      %1286 = vmatpush2.bf16.msra.mxu0 0
      %1287 = vmatprep.subr.bf16.mxu0 0
      %1288 = vmatpush2.bf16.msra.mxu0 0
      %1289 = vmatprep.mubr.bf16.mxu0 0
      %1290 = vmatmul.mubr.bf16.gmra.mxu0 %v603
      %v1291 = vpop.f32.mrf.mxu0
      %v1292 = vadd.f32 0.0, %v1291
      %v1293 = vpop.f32.mrf.mxu0
      %v1294 = vpop.f32.mrf.mxu0
      %v1295 = vadd.f32 0.0, %v1294
      %v1296 = vpop.f32.mrf.mxu0
      %1297 = vmatprep.mubr.bf16.mxu0 0
      %1298 = vmatmul.mubr.bf16.gmra.mxu0 %v606
      %v1299 = vpop.f32.mrf.mxu0
      %v1300 = vadd.f32 0.0, %v1299
      %v1301 = vpop.f32.mrf.mxu0
      %v1302 = vpop.f32.mrf.mxu0
      %v1303 = vadd.f32 0.0, %v1302
      %v1304 = vpop.f32.mrf.mxu0
      %1305 = vmatprep.mubr.bf16.mxu0 0
      %1306 = vmatmul.mubr.bf16.gmra.mxu0 %v609
      %v1307 = vpop.f32.mrf.mxu0
      %v1308 = vadd.f32 0.0, %v1307
      %v1309 = vpop.f32.mrf.mxu0
      %v1310 = vpop.f32.mrf.mxu0
      %v1311 = vadd.f32 0.0, %v1310
      %v1312 = vpop.f32.mrf.mxu0
      %1313 = vmatprep.mubr.bf16.mxu0 0
      %1314 = vmatmul.mubr.bf16.gmra.mxu0 %v1255
      %v1315 = vpop.f32.mrf.mxu0
      %v1316 = vadd.f32 0.0, %v1315
      %v1317 = vpop.f32.mrf.mxu0
      %v1318 = vpop.f32.mrf.mxu0
      %v1319 = vadd.f32 0.0, %v1318
      %v1320 = vpop.f32.mrf.mxu0
      %1321 = vdwg.mxu0
      %v1322 = vadd.f32 %v1222, %v1292
      %v1323 = vadd.f32 %v1223, %v1295
      %v1324 = vadd.f32 %v1224, %v1300
      %v1325 = vadd.f32 %v1225, %v1303
      %v1326 = vadd.f32 %v1226, %v1308
      %v1327 = vadd.f32 %v1227, %v1311
      %v1328 = vadd.f32 %v1228, %v1316
      %v1329 = vadd.f32 %v1229, %v1319
      %v1330 = vld [vmem:[%s2] sm:$0x1]
      %v1332 = vlaneseq
      %v1333 = vshrl.u32 %v1332, 7
      %v1334 = vsub.s32 0, %v1333
      %v1335 = vrot.slane %v1330, %v1334
      %v1337 = vadd.f32 %v1322, %v1335
      %v1338 = vadd.f32 %v1323, %v1335
      %v1339 = vadd.f32 %v1324, %v1335
      %v1340 = vadd.f32 %v1325, %v1335
      %v1341 = vadd.f32 %v1326, %v1335
      %v1342 = vadd.f32 %v1327, %v1335
      %v1343 = vadd.f32 %v1328, %v1335
      %v1344 = vadd.f32 %v1329, %v1335
      %v1345 = vmax.f32 %v1337, 0.0
      %v1346 = vmax.f32 %v1338, 0.0
      %v1347 = vmax.f32 %v1339, 0.0
      %v1348 = vmax.f32 %v1340, 0.0
      %v1349 = vmax.f32 %v1341, 0.0
      %v1350 = vmax.f32 %v1342, 0.0
      %v1351 = vmax.f32 %v1343, 0.0
      %v1352 = vmax.f32 %v1344, 0.0
      %v1361 = vcombine.high %v1345, %v1345
      %v1363 = vunpack.c.l.s4 1983009808
      %v1364 = vunpack.c.0.s8 %v1363
      %v1365 = vlaneseq
      %v1366 = vshrl.u32 %v1365, 7
      %v1367 = vsub.s32 %v1364, %v1366
      %v1368 = vrot.slane %v1345, %v1367
      %v1370 = vunpack.c.l.s4 1983009808
      %v1371 = vunpack.c.0.s8 %v1370
      %v1372 = vlaneseq
      %v1373 = vshrl.u32 %v1372, 7
      %v1374 = vsub.s32 %v1371, %v1373
      %v1375 = vrot.slane %v1361, %v1374
      %v1376 = vcombine.high %v1368, %v1368
      %v1377 = vcombine.high %v1375, %v1375
      %v1378 = vcombine.high %v1346, %v1346
      %v1380 = vunpack.c.l.s4 1983009808
      %v1381 = vunpack.c.0.s8 %v1380
      %v1382 = vlaneseq
      %v1383 = vshrl.u32 %v1382, 7
      %v1384 = vsub.s32 %v1381, %v1383
      %v1385 = vrot.slane %v1346, %v1384
      %v1387 = vunpack.c.l.s4 1983009808
      %v1388 = vunpack.c.0.s8 %v1387
      %v1389 = vlaneseq
      %v1390 = vshrl.u32 %v1389, 7
      %v1391 = vsub.s32 %v1388, %v1390
      %v1392 = vrot.slane %v1378, %v1391
      %v1393 = vcombine.high %v1385, %v1385
      %v1394 = vcombine.high %v1392, %v1392
      %v1395 = vcombine.high %v1347, %v1347
      %v1397 = vunpack.c.l.s4 1983009808
      %v1398 = vunpack.c.0.s8 %v1397
      %v1399 = vlaneseq
      %v1400 = vshrl.u32 %v1399, 7
      %v1401 = vsub.s32 %v1398, %v1400
      %v1402 = vrot.slane %v1347, %v1401
      %v1404 = vunpack.c.l.s4 1983009808
      %v1405 = vunpack.c.0.s8 %v1404
      %v1406 = vlaneseq
      %v1407 = vshrl.u32 %v1406, 7
      %v1408 = vsub.s32 %v1405, %v1407
      %v1409 = vrot.slane %v1395, %v1408
      %v1410 = vcombine.high %v1402, %v1402
      %v1411 = vcombine.high %v1409, %v1409
      %v1412 = vcombine.high %v1348, %v1348
      %v1414 = vunpack.c.l.s4 1983009808
      %v1415 = vunpack.c.0.s8 %v1414
      %v1416 = vlaneseq
      %v1417 = vshrl.u32 %v1416, 7
      %v1418 = vsub.s32 %v1415, %v1417
      %v1419 = vrot.slane %v1348, %v1418
      %v1421 = vunpack.c.l.s4 1983009808
      %v1422 = vunpack.c.0.s8 %v1421
      %v1423 = vlaneseq
      %v1424 = vshrl.u32 %v1423, 7
      %v1425 = vsub.s32 %v1422, %v1424
      %v1426 = vrot.slane %v1412, %v1425
      %v1427 = vcombine.high %v1419, %v1419
      %v1428 = vcombine.high %v1426, %v1426
      %v1429 = vcombine.high %v1349, %v1349
      %v1431 = vunpack.c.l.s4 1983009808
      %v1432 = vunpack.c.0.s8 %v1431
      %v1433 = vlaneseq
      %v1434 = vshrl.u32 %v1433, 7
      %v1435 = vsub.s32 %v1432, %v1434
      %v1436 = vrot.slane %v1349, %v1435
      %v1438 = vunpack.c.l.s4 1983009808
      %v1439 = vunpack.c.0.s8 %v1438
      %v1440 = vlaneseq
      %v1441 = vshrl.u32 %v1440, 7
      %v1442 = vsub.s32 %v1439, %v1441
      %v1443 = vrot.slane %v1429, %v1442
      %v1444 = vcombine.high %v1436, %v1436
      %v1445 = vcombine.high %v1443, %v1443
      %v1446 = vcombine.high %v1350, %v1350
      %v1448 = vunpack.c.l.s4 1983009808
      %v1449 = vunpack.c.0.s8 %v1448
      %v1450 = vlaneseq
      %v1451 = vshrl.u32 %v1450, 7
      %v1452 = vsub.s32 %v1449, %v1451
      %v1453 = vrot.slane %v1350, %v1452
      %v1455 = vunpack.c.l.s4 1983009808
      %v1456 = vunpack.c.0.s8 %v1455
      %v1457 = vlaneseq
      %v1458 = vshrl.u32 %v1457, 7
      %v1459 = vsub.s32 %v1456, %v1458
      %v1460 = vrot.slane %v1446, %v1459
      %v1461 = vcombine.high %v1453, %v1453
      %v1462 = vcombine.high %v1460, %v1460
      %v1463 = vcombine.high %v1351, %v1351
      %v1465 = vunpack.c.l.s4 1983009808
      %v1466 = vunpack.c.0.s8 %v1465
      %v1467 = vlaneseq
      %v1468 = vshrl.u32 %v1467, 7
      %v1469 = vsub.s32 %v1466, %v1468
      %v1470 = vrot.slane %v1351, %v1469
      %v1472 = vunpack.c.l.s4 1983009808
      %v1473 = vunpack.c.0.s8 %v1472
      %v1474 = vlaneseq
      %v1475 = vshrl.u32 %v1474, 7
      %v1476 = vsub.s32 %v1473, %v1475
      %v1477 = vrot.slane %v1463, %v1476
      %v1478 = vcombine.high %v1470, %v1470
      %v1479 = vcombine.high %v1477, %v1477
      %v1480 = vcombine.high %v1352, %v1352
      %v1482 = vunpack.c.l.s4 1983009808
      %v1483 = vunpack.c.0.s8 %v1482
      %v1484 = vlaneseq
      %v1485 = vshrl.u32 %v1484, 7
      %v1486 = vsub.s32 %v1483, %v1485
      %v1487 = vrot.slane %v1352, %v1486
      %v1489 = vunpack.c.l.s4 1983009808
      %v1490 = vunpack.c.0.s8 %v1489
      %v1491 = vlaneseq
      %v1492 = vshrl.u32 %v1491, 7
      %v1493 = vsub.s32 %v1490, %v1492
      %v1494 = vrot.slane %v1480, %v1493
      %v1495 = vcombine.high %v1487, %v1487
      %v1496 = vcombine.high %v1494, %v1494
      %v1529 = vrot.slane %v1368, 7
      %v1530 = vrot.slane %v1529, 2
      %v1531 = vrot.slane %v1376, 7
      %v1532 = vrot.slane %v1531, 2
      %v1533 = vrot.slane %v1375, 7
      %v1534 = vrot.slane %v1533, 2
      %v1535 = vrot.slane %v1377, 7
      %v1536 = vrot.slane %v1535, 2
      %v1537 = vrot.slane %v1385, 7
      %v1538 = vrot.slane %v1537, 2
      %v1539 = vrot.slane %v1393, 7
      %v1540 = vrot.slane %v1539, 2
      %v1541 = vrot.slane %v1392, 7
      %v1542 = vrot.slane %v1541, 2
      %v1543 = vrot.slane %v1394, 7
      %v1544 = vrot.slane %v1543, 2
      %v1545 = vrot.slane %v1402, 7
      %v1546 = vrot.slane %v1545, 2
      %v1547 = vrot.slane %v1410, 7
      %v1548 = vrot.slane %v1547, 2
      %v1549 = vrot.slane %v1409, 7
      %v1550 = vrot.slane %v1549, 2
      %v1551 = vrot.slane %v1411, 7
      %v1552 = vrot.slane %v1551, 2
      %v1553 = vrot.slane %v1419, 7
      %v1554 = vrot.slane %v1553, 2
      %v1555 = vrot.slane %v1427, 7
      %v1556 = vrot.slane %v1555, 2
      %v1557 = vrot.slane %v1426, 7
      %v1558 = vrot.slane %v1557, 2
      %v1559 = vrot.slane %v1428, 7
      %v1560 = vrot.slane %v1559, 2
      %v1561 = vrot.slane %v1436, 7
      %v1562 = vrot.slane %v1561, 2
      %v1563 = vrot.slane %v1444, 7
      %v1564 = vrot.slane %v1563, 2
      %v1565 = vrot.slane %v1443, 7
      %v1566 = vrot.slane %v1565, 2
      %v1567 = vrot.slane %v1445, 7
      %v1568 = vrot.slane %v1567, 2
      %v1569 = vrot.slane %v1453, 7
      %v1570 = vrot.slane %v1569, 2
      %v1571 = vrot.slane %v1461, 7
      %v1572 = vrot.slane %v1571, 2
      %v1573 = vrot.slane %v1460, 7
      %v1574 = vrot.slane %v1573, 2
      %v1575 = vrot.slane %v1462, 7
      %v1576 = vrot.slane %v1575, 2
      %v1577 = vrot.slane %v1470, 7
      %v1578 = vrot.slane %v1577, 2
      %v1579 = vrot.slane %v1478, 7
      %v1580 = vrot.slane %v1579, 2
      %v1581 = vrot.slane %v1477, 7
      %v1582 = vrot.slane %v1581, 2
      %v1583 = vrot.slane %v1479, 7
      %v1584 = vrot.slane %v1583, 2
      %v1585 = vrot.slane %v1487, 7
      %v1586 = vrot.slane %v1585, 2
      %v1587 = vrot.slane %v1495, 7
      %v1588 = vrot.slane %v1587, 2
      %v1589 = vrot.slane %v1494, 7
      %v1590 = vrot.slane %v1589, 2
      %v1591 = vrot.slane %v1496, 7
      %v1592 = vrot.slane %v1591, 2
      %v1625 = vmax.f32 %v1368, %v1530
      %v1626 = vmax.f32 %v1376, %v1532
      %v1627 = vmax.f32 %v1375, %v1534
      %v1628 = vmax.f32 %v1377, %v1536
      %v1629 = vmax.f32 %v1385, %v1538
      %v1630 = vmax.f32 %v1393, %v1540
      %v1631 = vmax.f32 %v1392, %v1542
      %v1632 = vmax.f32 %v1394, %v1544
      %v1633 = vmax.f32 %v1402, %v1546
      %v1634 = vmax.f32 %v1410, %v1548
      %v1635 = vmax.f32 %v1409, %v1550
      %v1636 = vmax.f32 %v1411, %v1552
      %v1637 = vmax.f32 %v1419, %v1554
      %v1638 = vmax.f32 %v1427, %v1556
      %v1639 = vmax.f32 %v1426, %v1558
      %v1640 = vmax.f32 %v1428, %v1560
      %v1641 = vmax.f32 %v1436, %v1562
      %v1642 = vmax.f32 %v1444, %v1564
      %v1643 = vmax.f32 %v1443, %v1566
      %v1644 = vmax.f32 %v1445, %v1568
      %v1645 = vmax.f32 %v1453, %v1570
      %v1646 = vmax.f32 %v1461, %v1572
      %v1647 = vmax.f32 %v1460, %v1574
      %v1648 = vmax.f32 %v1462, %v1576
      %v1649 = vmax.f32 %v1470, %v1578
      %v1650 = vmax.f32 %v1478, %v1580
      %v1651 = vmax.f32 %v1477, %v1582
      %v1652 = vmax.f32 %v1479, %v1584
      %v1653 = vmax.f32 %v1487, %v1586
      %v1654 = vmax.f32 %v1495, %v1588
      %v1655 = vmax.f32 %v1494, %v1590
      %v1656 = vmax.f32 %v1496, %v1592
      %v1657 = vmax.f32 %v1625, %v1629
      %v1658 = vmax.f32 %v1626, %v1630
      %v1659 = vmax.f32 %v1627, %v1631
      %v1660 = vmax.f32 %v1628, %v1632
      %v1661 = vmax.f32 %v1633, %v1637
      %v1662 = vmax.f32 %v1634, %v1638
      %v1663 = vmax.f32 %v1635, %v1639
      %v1664 = vmax.f32 %v1636, %v1640
      %v1665 = vmax.f32 %v1641, %v1645
      %v1666 = vmax.f32 %v1642, %v1646
      %v1667 = vmax.f32 %v1643, %v1647
      %v1668 = vmax.f32 %v1644, %v1648
      %v1669 = vmax.f32 %v1649, %v1653
      %v1670 = vmax.f32 %v1650, %v1654
      %v1671 = vmax.f32 %v1651, %v1655
      %v1672 = vmax.f32 %v1652, %v1656
      %v1673 = vpack.c.bf16 %v1657, %v1657
      %v1674 = vpack.c.bf16 %v1658, %v1658
      %v1675 = vpack.c.bf16 %v1659, %v1659
      %v1676 = vpack.c.bf16 %v1660, %v1660
      %v1677 = vpack.c.bf16 %v1661, %v1661
      %v1678 = vpack.c.bf16 %v1662, %v1662
      %v1679 = vpack.c.bf16 %v1663, %v1663
      %v1680 = vpack.c.bf16 %v1664, %v1664
      %v1681 = vpack.c.bf16 %v1665, %v1665
      %v1682 = vpack.c.bf16 %v1666, %v1666
      %v1683 = vpack.c.bf16 %v1667, %v1667
      %v1684 = vpack.c.bf16 %v1668, %v1668
      %v1685 = vpack.c.bf16 %v1669, %v1669
      %v1686 = vpack.c.bf16 %v1670, %v1670
      %v1687 = vpack.c.bf16 %v1671, %v1671
      %v1688 = vpack.c.bf16 %v1672, %v1672
      %v1706 = vunpack.c.l.s4 1983009808
      %v1707 = vunpack.c.0.s8 %v1706
      %v1708 = vlaneseq
      %v1709 = vshrl.u32 %v1708, 7
      %v1710 = vsub.s32 %v1707, %v1709
      %v1711 = vrot.slane %v1673, %v1710
      %v1713 = vunpack.c.l.s4 1983009808
      %v1714 = vunpack.c.0.s8 %v1713
      %v1715 = vlaneseq
      %v1716 = vshrl.u32 %v1715, 7
      %v1717 = vsub.s32 %v1714, %v1716
      %v1718 = vrot.slane %v1674, %v1717
      %v1720 = vunpack.c.l.s4 1983009808
      %v1721 = vunpack.c.0.s8 %v1720
      %v1722 = vlaneseq
      %v1723 = vshrl.u32 %v1722, 7
      %v1724 = vsub.s32 %v1721, %v1723
      %v1725 = vrot.slane %v1675, %v1724
      %v1727 = vunpack.c.l.s4 1983009808
      %v1728 = vunpack.c.0.s8 %v1727
      %v1729 = vlaneseq
      %v1730 = vshrl.u32 %v1729, 7
      %v1731 = vsub.s32 %v1728, %v1730
      %v1732 = vrot.slane %v1676, %v1731
      %v1734 = vunpack.c.l.s4 1983009808
      %v1735 = vunpack.c.0.s8 %v1734
      %v1736 = vlaneseq
      %v1737 = vshrl.u32 %v1736, 7
      %v1738 = vsub.s32 %v1735, %v1737
      %v1739 = vrot.slane %v1677, %v1738
      %v1741 = vunpack.c.l.s4 1983009808
      %v1742 = vunpack.c.0.s8 %v1741
      %v1743 = vlaneseq
      %v1744 = vshrl.u32 %v1743, 7
      %v1745 = vsub.s32 %v1742, %v1744
      %v1746 = vrot.slane %v1678, %v1745
      %v1748 = vunpack.c.l.s4 1983009808
      %v1749 = vunpack.c.0.s8 %v1748
      %v1750 = vlaneseq
      %v1751 = vshrl.u32 %v1750, 7
      %v1752 = vsub.s32 %v1749, %v1751
      %v1753 = vrot.slane %v1679, %v1752
      %v1755 = vunpack.c.l.s4 1983009808
      %v1756 = vunpack.c.0.s8 %v1755
      %v1757 = vlaneseq
      %v1758 = vshrl.u32 %v1757, 7
      %v1759 = vsub.s32 %v1756, %v1758
      %v1760 = vrot.slane %v1680, %v1759
      %v1762 = vunpack.c.l.s4 1983009808
      %v1763 = vunpack.c.0.s8 %v1762
      %v1764 = vlaneseq
      %v1765 = vshrl.u32 %v1764, 7
      %v1766 = vsub.s32 %v1763, %v1765
      %v1767 = vrot.slane %v1681, %v1766
      %v1769 = vunpack.c.l.s4 1983009808
      %v1770 = vunpack.c.0.s8 %v1769
      %v1771 = vlaneseq
      %v1772 = vshrl.u32 %v1771, 7
      %v1773 = vsub.s32 %v1770, %v1772
      %v1774 = vrot.slane %v1682, %v1773
      %v1776 = vunpack.c.l.s4 1983009808
      %v1777 = vunpack.c.0.s8 %v1776
      %v1778 = vlaneseq
      %v1779 = vshrl.u32 %v1778, 7
      %v1780 = vsub.s32 %v1777, %v1779
      %v1781 = vrot.slane %v1683, %v1780
      %v1783 = vunpack.c.l.s4 1983009808
      %v1784 = vunpack.c.0.s8 %v1783
      %v1785 = vlaneseq
      %v1786 = vshrl.u32 %v1785, 7
      %v1787 = vsub.s32 %v1784, %v1786
      %v1788 = vrot.slane %v1684, %v1787
      %v1790 = vunpack.c.l.s4 1983009808
      %v1791 = vunpack.c.0.s8 %v1790
      %v1792 = vlaneseq
      %v1793 = vshrl.u32 %v1792, 7
      %v1794 = vsub.s32 %v1791, %v1793
      %v1795 = vrot.slane %v1685, %v1794
      %v1797 = vunpack.c.l.s4 1983009808
      %v1798 = vunpack.c.0.s8 %v1797
      %v1799 = vlaneseq
      %v1800 = vshrl.u32 %v1799, 7
      %v1801 = vsub.s32 %v1798, %v1800
      %v1802 = vrot.slane %v1686, %v1801
      %v1804 = vunpack.c.l.s4 1983009808
      %v1805 = vunpack.c.0.s8 %v1804
      %v1806 = vlaneseq
      %v1807 = vshrl.u32 %v1806, 7
      %v1808 = vsub.s32 %v1805, %v1807
      %v1809 = vrot.slane %v1687, %v1808
      %v1811 = vunpack.c.l.s4 1983009808
      %v1812 = vunpack.c.0.s8 %v1811
      %v1813 = vlaneseq
      %v1814 = vshrl.u32 %v1813, 7
      %v1815 = vsub.s32 %v1812, %v1814
      %v1816 = vrot.slane %v1688, %v1815
      %v1818 = vunpack.c.l.s4 1983009808
      %v1819 = vunpack.c.0.s8 %v1818
      %v1820 = vlaneseq
      %v1821 = vshrl.u32 %v1820, 7
      %v1822 = vsub.s32 %v1819, %v1821
      %v1823 = vrot.slane %v1711, %v1822
      %v1825 = vunpack.c.l.s4 1983009808
      %v1826 = vunpack.c.0.s8 %v1825
      %v1827 = vlaneseq
      %v1828 = vshrl.u32 %v1827, 7
      %v1829 = vsub.s32 %v1826, %v1828
      %v1830 = vrot.slane %v1718, %v1829
      %v1832 = vunpack.c.l.s4 1983009808
      %v1833 = vunpack.c.0.s8 %v1832
      %v1834 = vlaneseq
      %v1835 = vshrl.u32 %v1834, 7
      %v1836 = vsub.s32 %v1833, %v1835
      %v1837 = vrot.slane %v1725, %v1836
      %v1839 = vunpack.c.l.s4 1983009808
      %v1840 = vunpack.c.0.s8 %v1839
      %v1841 = vlaneseq
      %v1842 = vshrl.u32 %v1841, 7
      %v1843 = vsub.s32 %v1840, %v1842
      %v1844 = vrot.slane %v1732, %v1843
      %v1846 = vunpack.c.l.s4 1983009808
      %v1847 = vunpack.c.0.s8 %v1846
      %v1848 = vlaneseq
      %v1849 = vshrl.u32 %v1848, 7
      %v1850 = vsub.s32 %v1847, %v1849
      %v1851 = vrot.slane %v1739, %v1850
      %v1853 = vunpack.c.l.s4 1983009808
      %v1854 = vunpack.c.0.s8 %v1853
      %v1855 = vlaneseq
      %v1856 = vshrl.u32 %v1855, 7
      %v1857 = vsub.s32 %v1854, %v1856
      %v1858 = vrot.slane %v1746, %v1857
      %v1860 = vunpack.c.l.s4 1983009808
      %v1861 = vunpack.c.0.s8 %v1860
      %v1862 = vlaneseq
      %v1863 = vshrl.u32 %v1862, 7
      %v1864 = vsub.s32 %v1861, %v1863
      %v1865 = vrot.slane %v1753, %v1864
      %v1867 = vunpack.c.l.s4 1983009808
      %v1868 = vunpack.c.0.s8 %v1867
      %v1869 = vlaneseq
      %v1870 = vshrl.u32 %v1869, 7
      %v1871 = vsub.s32 %v1868, %v1870
      %v1872 = vrot.slane %v1760, %v1871
      %v1874 = vunpack.c.l.s4 1983009808
      %v1875 = vunpack.c.0.s8 %v1874
      %v1876 = vlaneseq
      %v1877 = vshrl.u32 %v1876, 7
      %v1878 = vsub.s32 %v1875, %v1877
      %v1879 = vrot.slane %v1767, %v1878
      %v1881 = vunpack.c.l.s4 1983009808
      %v1882 = vunpack.c.0.s8 %v1881
      %v1883 = vlaneseq
      %v1884 = vshrl.u32 %v1883, 7
      %v1885 = vsub.s32 %v1882, %v1884
      %v1886 = vrot.slane %v1774, %v1885
      %v1888 = vunpack.c.l.s4 1983009808
      %v1889 = vunpack.c.0.s8 %v1888
      %v1890 = vlaneseq
      %v1891 = vshrl.u32 %v1890, 7
      %v1892 = vsub.s32 %v1889, %v1891
      %v1893 = vrot.slane %v1781, %v1892
      %v1895 = vunpack.c.l.s4 1983009808
      %v1896 = vunpack.c.0.s8 %v1895
      %v1897 = vlaneseq
      %v1898 = vshrl.u32 %v1897, 7
      %v1899 = vsub.s32 %v1896, %v1898
      %v1900 = vrot.slane %v1788, %v1899
      %v1902 = vunpack.c.l.s4 1983009808
      %v1903 = vunpack.c.0.s8 %v1902
      %v1904 = vlaneseq
      %v1905 = vshrl.u32 %v1904, 7
      %v1906 = vsub.s32 %v1903, %v1905
      %v1907 = vrot.slane %v1795, %v1906
      %v1909 = vunpack.c.l.s4 1983009808
      %v1910 = vunpack.c.0.s8 %v1909
      %v1911 = vlaneseq
      %v1912 = vshrl.u32 %v1911, 7
      %v1913 = vsub.s32 %v1910, %v1912
      %v1914 = vrot.slane %v1802, %v1913
      %v1916 = vunpack.c.l.s4 1983009808
      %v1917 = vunpack.c.0.s8 %v1916
      %v1918 = vlaneseq
      %v1919 = vshrl.u32 %v1918, 7
      %v1920 = vsub.s32 %v1917, %v1919
      %v1921 = vrot.slane %v1809, %v1920
      %v1923 = vunpack.c.l.s4 1983009808
      %v1924 = vunpack.c.0.s8 %v1923
      %v1925 = vlaneseq
      %v1926 = vshrl.u32 %v1925, 7
      %v1927 = vsub.s32 %v1924, %v1926
      %v1928 = vrot.slane %v1816, %v1927
      %v1929 = vunpack.c.l.b16 %v1823
      %v1930 = vunpack.c.l.b16 %v1830
      %v1931 = vunpack.c.l.b16 %v1837
      %v1932 = vunpack.c.l.b16 %v1844
      %v1933 = vunpack.c.l.b16 %v1851
      %v1934 = vunpack.c.l.b16 %v1858
      %v1935 = vunpack.c.l.b16 %v1865
      %v1936 = vunpack.c.l.b16 %v1872
      %v1937 = vunpack.c.l.b16 %v1879
      %v1938 = vunpack.c.l.b16 %v1886
      %v1939 = vunpack.c.l.b16 %v1893
      %v1940 = vunpack.c.l.b16 %v1900
      %v1941 = vunpack.c.l.b16 %v1907
      %v1942 = vunpack.c.l.b16 %v1914
      %v1943 = vunpack.c.l.b16 %v1921
      %v1944 = vunpack.c.l.b16 %v1928
      %v1945 = vrot.slane %v1930, 7
      %vm1946 = vcmask 1041409
      %v1947 = vsel %vm1946, %v1945, %v1929
      %v1948 = vrot.slane %v1931, 6
      %vm1949 = vcmask 1042434
      %v1950 = vsel %vm1949, %v1948, %v1947
      %v1951 = vrot.slane %v1932, 5
      %vm1952 = vcmask 1043459
      %v1953 = vsel %vm1952, %v1951, %v1950
      %v1954 = vrot.slane %v1934, 7
      %v1955 = vsel %vm1946, %v1954, %v1933
      %v1956 = vrot.slane %v1935, 6
      %v1957 = vsel %vm1949, %v1956, %v1955
      %v1958 = vrot.slane %v1936, 5
      %v1959 = vsel %vm1952, %v1958, %v1957
      %v1960 = vrot.slane %v1938, 7
      %v1961 = vsel %vm1946, %v1960, %v1937
      %v1962 = vrot.slane %v1939, 6
      %v1963 = vsel %vm1949, %v1962, %v1961
      %v1964 = vrot.slane %v1940, 5
      %v1965 = vsel %vm1952, %v1964, %v1963
      %v1966 = vrot.slane %v1942, 7
      %v1967 = vsel %vm1946, %v1966, %v1941
      %v1968 = vrot.slane %v1943, 6
      %v1969 = vsel %vm1949, %v1968, %v1967
      %v1970 = vrot.slane %v1944, 5
      %v1971 = vsel %vm1952, %v1970, %v1969
      %v1972 = vpack.c.b16 %v1953, %v1953
      %v1973 = vpack.c.b16 %v1959, %v1959
      %v1974 = vpack.c.b16 %v1965, %v1965
      %v1975 = vpack.c.b16 %v1971, %v1971
      %v1977 = vunpack.c.l.s4 1983009808
      %v1978 = vunpack.c.0.s8 %v1977
      %v1979 = vlaneseq
      %v1980 = vshrl.u32 %v1979, 7
      %v1981 = vsub.s32 %v1978, %v1980
      %v1982 = vrot.slane %v1972, %v1981
      %v1984 = vunpack.c.l.s4 1983009808
      %v1985 = vunpack.c.0.s8 %v1984
      %v1986 = vlaneseq
      %v1987 = vshrl.u32 %v1986, 7
      %v1988 = vsub.s32 %v1985, %v1987
      %v1989 = vrot.slane %v1973, %v1988
      %v1991 = vunpack.c.l.s4 1983009808
      %v1992 = vunpack.c.0.s8 %v1991
      %v1993 = vlaneseq
      %v1994 = vshrl.u32 %v1993, 7
      %v1995 = vsub.s32 %v1992, %v1994
      %v1996 = vrot.slane %v1974, %v1995
      %v1998 = vunpack.c.l.s4 1983009808
      %v1999 = vunpack.c.0.s8 %v1998
      %v2000 = vlaneseq
      %v2001 = vshrl.u32 %v2000, 7
      %v2002 = vsub.s32 %v1999, %v2001
      %v2003 = vrot.slane %v1975, %v2002
      %vm2008 = vcmask 517120
      %2009 = vst.msk [vmem:[%s170] sm:$0x3] %vm2008, %v1982
      %2010 = vst.msk [vmem:[%s170 + $0x2] sm:$0x3] %vm2008, %v1989
      %2011 = vst.msk [vmem:[%s170 + $0x4] sm:$0x3] %vm2008, %v1996
      %2012 = vst.msk [vmem:[%s170 + $0x6] sm:$0x3] %vm2008, %v2003
      %p2013 = scmp.lt.s32.totalorder %s14, 1
      %s2014 = scalar_select %p2013, %s14, 1
      %s2015 = smul.addr %s2014, 4
      %s2016 = smul.addr %s2015, 2
      %s2017 = scalar_lea.vmem %s3, %s2016
      // Predicated region
      $region33: #{_forward_impl.5} parent=31 // pred_check
        %p2018 = pneg %p100
      $region34: #{_forward_impl.5} parent=31 // pred_check_branch
        %2020 = sbr.rel (%p2018) target = $region36
      $region35: #{_forward_impl.5} parent=31 // pred_region
        _
      $region36: #{_forward_impl.5} parent=31 // pred_fallthru
        _
    $region32: #{_forward_impl.5} parent=5 // pred_fallthru
      _
    %p2021 = scmp.le.s32.totalorder 2, %s9
    // Predicated region
    $region37: #{_forward_impl.5} parent=5 // pred_check
      %p2022 = pneg %p2021
    $region38: #{_forward_impl.5} parent=5 // pred_check_branch
      %2024 = sbr.rel (%p2022) target = $region40
    $region39: #{_forward_impl.5} parent=5 // pred_region
      %s2025 = ssub.s32 %s9, 2
      // Predicated region
      $region41: #{_forward_impl.5} parent=39 // pred_check
        %p2026 = pneg %p106
      $region42: #{_forward_impl.5} parent=39 // pred_check_branch
        %2028 = sbr.rel (%p2026) target = $region44
      $region43: #{_forward_impl.5} parent=39 // pred_region
        %p2029 = scmp.lt.s32.totalorder %s15, 1
        %s2030 = scalar_select %p2029, %s15, 1
        %s2031 = smul.addr %s2030, 4
        %s2032 = smul.addr %s2031, 2
        %s2033 = scalar_lea.vmem %s3, %s2032
      $region44: #{_forward_impl.5} parent=39 // pred_fallthru
        _
    $region40: #{_forward_impl.5} parent=5 // pred_fallthru
      _
  $region6: #{_forward_impl.5} parent=0 // loop_footer
    %s13 = sadd.s32 1, %s9
  $region7: #{_forward_impl.5} parent=0 // loop_footer_branch
    %8 = sbr.rel target = $region3
  $region8: #{_forward_impl.5} parent=0 // loop_exit
    _

// kernel: _forward_impl.4
$region0: #{_forward_impl.4}
  #allocation0 [shape = 'u32[]', space=smem, size = 0x4, offset = 0x4, fixed_abs, tag = 'smem constant byte address 0x4 - core index']
  #allocation1 [shape = 'u32[144,128]{1,0:T(1,128)}', space=vmem, size = 0x12000, scoped, tag = 'internal scratch']
  %s0 = inlined_call_operand.vmem [shape: bf16[2,18,18,3], index: 0, kind: input, shape index: {}]
  %s1 = inlined_call_operand.vmem [shape: bf16[9,3,32], index: 1, kind: input, shape index: {}]
  %s2 = inlined_call_operand.vmem [shape: f32[1,32], index: 2, kind: input, shape index: {}]
  %s3 = inlined_call_operand.vmem [shape: bf16[2,8,8,32], index: 3, kind: output, shape index: {}]
  %s4 = sld [smem:[#allocation0]]
  $region45: #{_forward_impl.4} parent=0
    _
  %s6 = ssub.s32 1, %s4
  %s7 = scalar_select 0, %s6, %s4
  loop: start=0, step=1, limit=4
  $region2: #{_forward_impl.4} parent=0 // loop_pre_header
    _
  $region3: #{_forward_impl.4} parent=0 // loop_header
    %s9 = sphi 0, %s13
    %p10 = scmp.ge.s32.totalorder %s9, 4
    %s19 = sphi 0, %s21
    %s22 = sphi 0, %s19
    %s23 = sphi 0, %s22
    %s39 = sphi 0, %s23
    %s43 = sphi 0, %s43
    %s45 = sphi 0, %s43
    %s46 = sphi 0, %s45
    %s60 = sphi 0, %s46
    %s64 = sphi 0, %s64
    %s66 = sphi 0, %s64
    %s67 = sphi 0, %s66
    %s81 = sphi 0, %s67
    %s87 = sphi 0, %s89
    %s90 = sphi 0, %s87
    %s91 = sphi 0, %s90
    %s107 = sphi 0, %s91
  $region4: #{_forward_impl.4} parent=0 // loop_header_branch
    %12 = sbr.rel (%p10) target = $region8
  $region5: #{_forward_impl.4} parent=0 // loop_body
    %s14 = ssub.s32 %s9, 1
    %s15 = ssub.s32 %s9, 2
    %s16 = sadd.s32 %s9, 1
    %s17 = ssub.s32 %s9, %s16
    %p18 = scmp.eq.s32.totalorder %s17, 0
    %s20 = sadd.s32 %s19, 1
    %s21 = scalar_select %p18, %s19, %s20
    %p24 = pneg %p18
    %p25 = scmp.eq.s32.totalorder %s9, 1
    %p26 = por %p24, %p25
    %p27 = scmp.ne.s32.totalorder %s19, %s22
    %p28 = scmp.eq.s32.totalorder %s9, 0
    %p29 = por %p27, %p28
    %p30 = scmp.ne.s32.totalorder %s19, %s22
    %p31 = scmp.eq.s32.totalorder %s14, 1
    %p32 = por %p30, %p31
    %p33 = scmp.ne.s32.totalorder %s22, %s23
    %p34 = scmp.eq.s32.totalorder %s14, 0
    %p35 = por %p33, %p34
    %p36 = scmp.ne.s32.totalorder %s22, %s23
    %p37 = scmp.eq.s32.totalorder %s15, 1
    %p38 = por %p36, %p37
    %p40 = scmp.ne.s32.totalorder %s23, %s39
    %p41 = scmp.eq.s32.totalorder %s15, 0
    %p42 = por %p40, %p41
    %s44 = sadd.s32 %s43, 1
    %p47 = scmp.eq.s32.totalorder %s9, 1
    %p48 = scmp.ne.s32.totalorder %s43, %s45
    %p49 = scmp.eq.s32.totalorder %s9, 0
    %p50 = por %p48, %p49
    %p51 = scmp.ne.s32.totalorder %s43, %s45
    %p52 = scmp.eq.s32.totalorder %s14, 1
    %p53 = por %p51, %p52
    %p54 = scmp.ne.s32.totalorder %s45, %s46
    %p55 = scmp.eq.s32.totalorder %s14, 0
    %p56 = por %p54, %p55
    %p57 = scmp.ne.s32.totalorder %s45, %s46
    %p58 = scmp.eq.s32.totalorder %s15, 1
    %p59 = por %p57, %p58
    %p61 = scmp.ne.s32.totalorder %s46, %s60
    %p62 = scmp.eq.s32.totalorder %s15, 0
    %p63 = por %p61, %p62
    %s65 = sadd.s32 %s64, 1
    %p68 = scmp.eq.s32.totalorder %s9, 1
    %p69 = scmp.ne.s32.totalorder %s64, %s66
    %p70 = scmp.eq.s32.totalorder %s9, 0
    %p71 = por %p69, %p70
    %p72 = scmp.ne.s32.totalorder %s64, %s66
    %p73 = scmp.eq.s32.totalorder %s14, 1
    %p74 = por %p72, %p73
    %p75 = scmp.ne.s32.totalorder %s66, %s67
    %p76 = scmp.eq.s32.totalorder %s14, 0
    %p77 = por %p75, %p76
    %p78 = scmp.ne.s32.totalorder %s66, %s67
    %p79 = scmp.eq.s32.totalorder %s15, 1
    %p80 = por %p78, %p79
    %p82 = scmp.ne.s32.totalorder %s67, %s81
    %p83 = scmp.eq.s32.totalorder %s15, 0
    %p84 = por %p82, %p83
    %s85 = ssub.s32 %s9, %s16
    %p86 = scmp.eq.s32.totalorder %s85, 0
    %s88 = sadd.s32 %s87, 1
    %s89 = scalar_select %p86, %s87, %s88
    %p92 = pneg %p86
    %p93 = scmp.eq.s32.totalorder %s9, 1
    %p94 = por %p92, %p93
    %p95 = scmp.ne.s32.totalorder %s87, %s90
    %p96 = scmp.eq.s32.totalorder %s9, 0
    %p97 = por %p95, %p96
    %p98 = scmp.ne.s32.totalorder %s87, %s90
    %p99 = scmp.eq.s32.totalorder %s14, 1
    %p100 = por %p98, %p99
    %p101 = scmp.ne.s32.totalorder %s90, %s91
    %p102 = scmp.eq.s32.totalorder %s14, 0
    %p103 = por %p101, %p102
    %p104 = scmp.ne.s32.totalorder %s90, %s91
    %p105 = scmp.eq.s32.totalorder %s15, 1
    %p106 = por %p104, %p105
    %p108 = scmp.ne.s32.totalorder %s91, %s107
    %p109 = scmp.eq.s32.totalorder %s15, 0
    %p110 = por %p108, %p109
    %p111 = scmp.le.s32.totalorder 1, %s9
    %p112 = scmp.lt.s32.totalorder %s9, 3
    %p113 = pnand %p111, %p112
    %p114 = pneg %p113
    // Predicated region
    $region9: #{_forward_impl.4} parent=5 // pred_check
      _
    $region10: #{_forward_impl.4} parent=5 // pred_check_branch
      %116 = sbr.rel (%p113) target = $region12
    $region11: #{_forward_impl.4} parent=5 // pred_region
      %s117 = ssub.s32 %s9, 1
      // Predicated region
      $region13: #{_forward_impl.4} parent=11 // pred_check
        %p118 = pneg %p56
      $region14: #{_forward_impl.4} parent=11 // pred_check_branch
        %120 = sbr.rel (%p118) target = $region16
      $region15: #{_forward_impl.4} parent=11 // pred_region
        _
      $region16: #{_forward_impl.4} parent=11 // pred_fallthru
        _
      // Predicated region
      $region17: #{_forward_impl.4} parent=11 // pred_check
        %p121 = pneg %p77
      $region18: #{_forward_impl.4} parent=11 // pred_check_branch
        %123 = sbr.rel (%p121) target = $region20
      $region19: #{_forward_impl.4} parent=11 // pred_region
        _
      $region20: #{_forward_impl.4} parent=11 // pred_fallthru
        _
    $region12: #{_forward_impl.4} parent=5 // pred_fallthru
      _
    %p124 = scmp.lt.s32.totalorder %s9, 2
    // Predicated region
    $region21: #{_forward_impl.4} parent=5 // pred_check
      %p125 = pneg %p124
    $region22: #{_forward_impl.4} parent=5 // pred_check_branch
      %127 = sbr.rel (%p125) target = $region24
    $region23: #{_forward_impl.4} parent=5 // pred_region
      // Predicated region
      $region25: #{_forward_impl.4} parent=23 // pred_check
        %p128 = pneg %p29
      $region26: #{_forward_impl.4} parent=23 // pred_check_branch
        %130 = sbr.rel (%p128) target = $region28
      $region27: #{_forward_impl.4} parent=23 // pred_region
        %p131 = scmp.lt.s32.totalorder %s9, 1
        %s132 = scalar_select %p131, %s9, 1
        %s133 = smul.addr %s132, 54
        %s134 = smul.addr %s133, 4
        %s135 = scalar_lea.vmem %s0, %s134
      $region28: #{_forward_impl.4} parent=23 // pred_fallthru
        _
    $region24: #{_forward_impl.4} parent=5 // pred_fallthru
      _
    %p136 = scmp.le.s32.totalorder 1, %s9
    %p137 = scmp.lt.s32.totalorder %s9, 3
    %p138 = pnand %p136, %p137
    %p139 = pneg %p138
    // Predicated region
    $region29: #{_forward_impl.4} parent=5 // pred_check
      _
    $region30: #{_forward_impl.4} parent=5 // pred_check_branch
      %141 = sbr.rel (%p138) target = $region32
    $region31: #{_forward_impl.4} parent=5 // pred_region
      %s142 = ssub.s32 %s9, 1
      %p143 = scmp.lt.s32.totalorder %s14, 1
      %s144 = scalar_select %p143, %s14, 1
      %s145 = smul.addr %s144, 54
      %s146 = smul.addr %s145, 4
      %s147 = scalar_lea.vmem %s0, %s146
      %p148 = pneg %p35
      %p149 = pneg %p32
      %p150 = pneg %p56
      %p151 = pneg %p53
      %p152 = pneg %p77
      %p153 = pneg %p74
      %p154 = pneg %p103
      %p155 = pneg %p100
      %p156 = scmp.lt.s32.totalorder %s14, 1
      %s157 = scalar_select %p156, %s14, 1
      %s158 = smul.addr %s157, 8
      %s159 = smul.addr %s158, 4
      %s160 = scalar_lea.vmem %s3, %s159
      %p161 = scmp.lt.s32.totalorder %s14, 1
      %s162 = scalar_select %p161, %s14, 1
      %s163 = smul.addr %s162, 54
      %s164 = smul.addr %s163, 4
      %s165 = scalar_lea.vmem %s0, %s164
      %p166 = scmp.lt.s32.totalorder %s14, 1
      %s167 = scalar_select %p166, %s14, 1
      %s168 = smul.addr %s167, 8
      %s169 = smul.addr %s168, 4
      %s170 = scalar_lea.vmem %s3, %s169
      %v172 = vld [vmem:[%s165] sm:$0xf]
      %v173 = vld [vmem:[%s165 + $0x4] sm:$0xf]
      %v174 = vld [vmem:[%s165 + $0x8] sm:$0x1]
      %v175 = vld [vmem:[%s165 + $0xc] sm:$0xf]
      %v176 = vld [vmem:[%s165 + $0x10] sm:$0xf]
      %v177 = vld [vmem:[%s165 + $0x14] sm:$0x1]
      %v178 = vld [vmem:[%s165 + $0x18] sm:$0xf]
      %v179 = vld [vmem:[%s165 + $0x1c] sm:$0xf]
      %v180 = vld [vmem:[%s165 + $0x20] sm:$0x1]
      %v181 = vld [vmem:[%s165 + $0x24] sm:$0xf]
      %v182 = vld [vmem:[%s165 + $0x28] sm:$0xf]
      %v183 = vld [vmem:[%s165 + $0x2c] sm:$0x1]
      %v184 = vld [vmem:[%s165 + $0x30] sm:$0xf]
      %v185 = vld [vmem:[%s165 + $0x34] sm:$0xf]
      %v186 = vld [vmem:[%s165 + $0x38] sm:$0x1]
      %v187 = vld [vmem:[%s165 + $0x3c] sm:$0xf]
      %v188 = vld [vmem:[%s165 + $0x40] sm:$0xf]
      %v189 = vld [vmem:[%s165 + $0x44] sm:$0x1]
      %v190 = vld [vmem:[%s165 + $0x48] sm:$0xf]
      %v191 = vld [vmem:[%s165 + $0x4c] sm:$0xf]
      %v192 = vld [vmem:[%s165 + $0x50] sm:$0x1]
      %v193 = vld [vmem:[%s165 + $0x54] sm:$0xf]
      %v194 = vld [vmem:[%s165 + $0x58] sm:$0xf]
      %v195 = vld [vmem:[%s165 + $0x5c] sm:$0x1]
      %v196 = vld [vmem:[%s165 + $0x60] sm:$0xf]
      %v197 = vld [vmem:[%s165 + $0x64] sm:$0xf]
      %v198 = vld [vmem:[%s165 + $0x68] sm:$0x1]
      %v199 = vld [vmem:[%s165 + $0x6c] sm:$0xf]
      %v200 = vld [vmem:[%s165 + $0x70] sm:$0xf]
      %v201 = vld [vmem:[%s165 + $0x74] sm:$0x1]
      %v202 = vld [vmem:[%s165 + $0x78] sm:$0xf]
      %v203 = vld [vmem:[%s165 + $0x7c] sm:$0xf]
      %v204 = vld [vmem:[%s165 + $0x80] sm:$0x1]
      %v205 = vld [vmem:[%s165 + $0x84] sm:$0xf]
      %v206 = vld [vmem:[%s165 + $0x88] sm:$0xf]
      %v207 = vld [vmem:[%s165 + $0x8c] sm:$0x1]
      %v208 = vld [vmem:[%s165 + $0x90] sm:$0xf]
      %v209 = vld [vmem:[%s165 + $0x94] sm:$0xf]
      %v210 = vld [vmem:[%s165 + $0x98] sm:$0x1]
      %v211 = vld [vmem:[%s165 + $0x9c] sm:$0xf]
      %v212 = vld [vmem:[%s165 + $0xa0] sm:$0xf]
      %v213 = vld [vmem:[%s165 + $0xa4] sm:$0x1]
      %v214 = vld [vmem:[%s165 + $0xa8] sm:$0xf]
      %v215 = vld [vmem:[%s165 + $0xac] sm:$0xf]
      %v216 = vld [vmem:[%s165 + $0xb0] sm:$0x1]
      %v217 = vld [vmem:[%s165 + $0xb4] sm:$0xf]
      %v218 = vld [vmem:[%s165 + $0xb8] sm:$0xf]
      %v219 = vld [vmem:[%s165 + $0xbc] sm:$0x1]
      %v220 = vld [vmem:[%s165 + $0xc0] sm:$0xf]
      %v221 = vld [vmem:[%s165 + $0xc4] sm:$0xf]
      %v222 = vld [vmem:[%s165 + $0xc8] sm:$0x1]
      %v223 = vld [vmem:[%s165 + $0xcc] sm:$0xf]
      %v224 = vld [vmem:[%s165 + $0xd0] sm:$0xf]
      %v225 = vld [vmem:[%s165 + $0xd4] sm:$0x1]
      %v226 = vld [vmem:[%s1] sm:$0x3]
      %vm227 = vsmask.f32 3328
      %vm228 = vsmask.f32 7440
      %vm229 = vmor %vm227, %vm228
      %v231 = vshrl.u32 %v172, 16
      %v233 = vrot.slane %v231, 4
      %v234 = vshll.u32 %v172, 16
      %v236 = vrot.slane %v234, 5
      %v237 = vor.u32 %v233, %v236
      %v238 = vrot.slane %v237, 4
      %v240 = vshll.u32 %v173, 16
      %v242 = vrot.slane %v240, 5
      %v243 = vsel %vm229, %v238, %v242
      %v244 = vshrl.u32 %v173, 16
      %v246 = vrot.slane %v244, 4
      %v247 = vor.u32 %v246, %v242
      %v248 = vrot.slane %v247, 4
      %v250 = vshll.u32 %v174, 16
      %v252 = vrot.slane %v250, 5
      %v253 = vsel %vm229, %v248, %v252
      %v255 = vshrl.u32 %v175, 16
      %v257 = vrot.slane %v255, 4
      %v258 = vshll.u32 %v175, 16
      %v260 = vrot.slane %v258, 5
      %v261 = vor.u32 %v257, %v260
      %v262 = vrot.slane %v261, 4
      %v264 = vshll.u32 %v176, 16
      %v266 = vrot.slane %v264, 5
      %v267 = vsel %vm229, %v262, %v266
      %v268 = vshrl.u32 %v176, 16
      %v270 = vrot.slane %v268, 4
      %v271 = vor.u32 %v270, %v266
      %v272 = vrot.slane %v271, 4
      %v274 = vshll.u32 %v177, 16
      %v276 = vrot.slane %v274, 5
      %v277 = vsel %vm229, %v272, %v276
      %v279 = vshrl.u32 %v178, 16
      %v281 = vrot.slane %v279, 4
      %v282 = vshll.u32 %v178, 16
      %v284 = vrot.slane %v282, 5
      %v285 = vor.u32 %v281, %v284
      %v286 = vrot.slane %v285, 4
      %v288 = vshll.u32 %v179, 16
      %v290 = vrot.slane %v288, 5
      %v291 = vsel %vm229, %v286, %v290
      %v292 = vshrl.u32 %v179, 16
      %v294 = vrot.slane %v292, 4
      %v295 = vor.u32 %v294, %v290
      %v296 = vrot.slane %v295, 4
      %v298 = vshll.u32 %v180, 16
      %v300 = vrot.slane %v298, 5
      %v301 = vsel %vm229, %v296, %v300
      %v303 = vshrl.u32 %v181, 16
      %v305 = vrot.slane %v303, 4
      %v306 = vshll.u32 %v181, 16
      %v308 = vrot.slane %v306, 5
      %v309 = vor.u32 %v305, %v308
      %v310 = vrot.slane %v309, 4
      %v312 = vshll.u32 %v182, 16
      %v314 = vrot.slane %v312, 5
      %v315 = vsel %vm229, %v310, %v314
      %v316 = vshrl.u32 %v182, 16
      %v318 = vrot.slane %v316, 4
      %v319 = vor.u32 %v318, %v314
      %v320 = vrot.slane %v319, 4
      %v322 = vshll.u32 %v183, 16
      %v324 = vrot.slane %v322, 5
      %v325 = vsel %vm229, %v320, %v324
      %v327 = vshrl.u32 %v184, 16
      %v329 = vrot.slane %v327, 4
      %v330 = vshll.u32 %v184, 16
      %v332 = vrot.slane %v330, 5
      %v333 = vor.u32 %v329, %v332
      %v334 = vrot.slane %v333, 4
      %v336 = vshll.u32 %v185, 16
      %v338 = vrot.slane %v336, 5
      %v339 = vsel %vm229, %v334, %v338
      %v340 = vshrl.u32 %v185, 16
      %v342 = vrot.slane %v340, 4
      %v343 = vor.u32 %v342, %v338
      %v344 = vrot.slane %v343, 4
      %v346 = vshll.u32 %v186, 16
      %v348 = vrot.slane %v346, 5
      %v349 = vsel %vm229, %v344, %v348
      %v351 = vshrl.u32 %v187, 16
      %v353 = vrot.slane %v351, 4
      %v354 = vshll.u32 %v187, 16
      %v356 = vrot.slane %v354, 5
      %v357 = vor.u32 %v353, %v356
      %v358 = vrot.slane %v357, 4
      %v360 = vshll.u32 %v188, 16
      %v362 = vrot.slane %v360, 5
      %v363 = vsel %vm229, %v358, %v362
      %v364 = vshrl.u32 %v188, 16
      %v366 = vrot.slane %v364, 4
      %v367 = vor.u32 %v366, %v362
      %v368 = vrot.slane %v367, 4
      %v370 = vshll.u32 %v189, 16
      %v372 = vrot.slane %v370, 5
      %v373 = vsel %vm229, %v368, %v372
      %v375 = vshrl.u32 %v190, 16
      %v377 = vrot.slane %v375, 4
      %v378 = vshll.u32 %v190, 16
      %v380 = vrot.slane %v378, 5
      %v381 = vor.u32 %v377, %v380
      %v382 = vrot.slane %v381, 4
      %v384 = vshll.u32 %v191, 16
      %v386 = vrot.slane %v384, 5
      %v387 = vsel %vm229, %v382, %v386
      %v388 = vshrl.u32 %v191, 16
      %v390 = vrot.slane %v388, 4
      %v391 = vor.u32 %v390, %v386
      %v392 = vrot.slane %v391, 4
      %v394 = vshll.u32 %v192, 16
      %v396 = vrot.slane %v394, 5
      %v397 = vsel %vm229, %v392, %v396
      %v399 = vshrl.u32 %v193, 16
      %v401 = vrot.slane %v399, 4
      %v402 = vshll.u32 %v193, 16
      %v404 = vrot.slane %v402, 5
      %v405 = vor.u32 %v401, %v404
      %v406 = vrot.slane %v405, 4
      %v408 = vshll.u32 %v194, 16
      %v410 = vrot.slane %v408, 5
      %v411 = vsel %vm229, %v406, %v410
      %v412 = vshrl.u32 %v194, 16
      %v414 = vrot.slane %v412, 4
      %v415 = vor.u32 %v414, %v410
      %v416 = vrot.slane %v415, 4
      %v418 = vshll.u32 %v195, 16
      %v420 = vrot.slane %v418, 5
      %v421 = vsel %vm229, %v416, %v420
      %v423 = vshrl.u32 %v196, 16
      %v425 = vrot.slane %v423, 4
      %v426 = vshll.u32 %v196, 16
      %v428 = vrot.slane %v426, 5
      %v429 = vor.u32 %v425, %v428
      %v430 = vrot.slane %v429, 4
      %v432 = vshll.u32 %v197, 16
      %v434 = vrot.slane %v432, 5
      %v435 = vsel %vm229, %v430, %v434
      %v436 = vshrl.u32 %v197, 16
      %v438 = vrot.slane %v436, 4
      %v439 = vor.u32 %v438, %v434
      %v440 = vrot.slane %v439, 4
      %v442 = vshll.u32 %v198, 16
      %v444 = vrot.slane %v442, 5
      %v445 = vsel %vm229, %v440, %v444
      %v447 = vshrl.u32 %v199, 16
      %v449 = vrot.slane %v447, 4
      %v450 = vshll.u32 %v199, 16
      %v452 = vrot.slane %v450, 5
      %v453 = vor.u32 %v449, %v452
      %v454 = vrot.slane %v453, 4
      %v456 = vshll.u32 %v200, 16
      %v458 = vrot.slane %v456, 5
      %v459 = vsel %vm229, %v454, %v458
      %v460 = vshrl.u32 %v200, 16
      %v462 = vrot.slane %v460, 4
      %v463 = vor.u32 %v462, %v458
      %v464 = vrot.slane %v463, 4
      %v466 = vshll.u32 %v201, 16
      %v468 = vrot.slane %v466, 5
      %v469 = vsel %vm229, %v464, %v468
      %v471 = vshrl.u32 %v202, 16
      %v473 = vrot.slane %v471, 4
      %v474 = vshll.u32 %v202, 16
      %v476 = vrot.slane %v474, 5
      %v477 = vor.u32 %v473, %v476
      %v478 = vrot.slane %v477, 4
      %v480 = vshll.u32 %v203, 16
      %v482 = vrot.slane %v480, 5
      %v483 = vsel %vm229, %v478, %v482
      %v484 = vshrl.u32 %v203, 16
      %v486 = vrot.slane %v484, 4
      %v487 = vor.u32 %v486, %v482
      %v488 = vrot.slane %v487, 4
      %v490 = vshll.u32 %v204, 16
      %v492 = vrot.slane %v490, 5
      %v493 = vsel %vm229, %v488, %v492
      %v495 = vshrl.u32 %v205, 16
      %v497 = vrot.slane %v495, 4
      %v498 = vshll.u32 %v205, 16
      %v500 = vrot.slane %v498, 5
      %v501 = vor.u32 %v497, %v500
      %v502 = vrot.slane %v501, 4
      %v504 = vshll.u32 %v206, 16
      %v506 = vrot.slane %v504, 5
      %v507 = vsel %vm229, %v502, %v506
      %v508 = vshrl.u32 %v206, 16
      %v510 = vrot.slane %v508, 4
      %v511 = vor.u32 %v510, %v506
      %v512 = vrot.slane %v511, 4
      %v514 = vshll.u32 %v207, 16
      %v516 = vrot.slane %v514, 5
      %v517 = vsel %vm229, %v512, %v516
      %v519 = vshrl.u32 %v208, 16
      %v521 = vrot.slane %v519, 4
      %v522 = vshll.u32 %v208, 16
      %v524 = vrot.slane %v522, 5
      %v525 = vor.u32 %v521, %v524
      %v526 = vrot.slane %v525, 4
      %v528 = vshll.u32 %v209, 16
      %v530 = vrot.slane %v528, 5
      %v531 = vsel %vm229, %v526, %v530
      %v532 = vshrl.u32 %v209, 16
      %v534 = vrot.slane %v532, 4
      %v535 = vor.u32 %v534, %v530
      %v536 = vrot.slane %v535, 4
      %v538 = vshll.u32 %v210, 16
      %v540 = vrot.slane %v538, 5
      %v541 = vsel %vm229, %v536, %v540
      %v543 = vshrl.u32 %v211, 16
      %v545 = vrot.slane %v543, 4
      %v546 = vshll.u32 %v211, 16
      %v548 = vrot.slane %v546, 5
      %v549 = vor.u32 %v545, %v548
      %v550 = vrot.slane %v549, 4
      %v552 = vshll.u32 %v212, 16
      %v554 = vrot.slane %v552, 5
      %v555 = vsel %vm229, %v550, %v554
      %v556 = vshrl.u32 %v212, 16
      %v558 = vrot.slane %v556, 4
      %v559 = vor.u32 %v558, %v554
      %v560 = vrot.slane %v559, 4
      %v562 = vshll.u32 %v213, 16
      %v564 = vrot.slane %v562, 5
      %v565 = vsel %vm229, %v560, %v564
      %v567 = vshrl.u32 %v214, 16
      %v569 = vrot.slane %v567, 4
      %v570 = vshll.u32 %v214, 16
      %v572 = vrot.slane %v570, 5
      %v573 = vor.u32 %v569, %v572
      %v574 = vrot.slane %v573, 4
      %v576 = vshll.u32 %v215, 16
      %v578 = vrot.slane %v576, 5
      %v579 = vsel %vm229, %v574, %v578
      %v580 = vshrl.u32 %v215, 16
      %v582 = vrot.slane %v580, 4
      %v583 = vor.u32 %v582, %v578
      %v584 = vrot.slane %v583, 4
      %v586 = vshll.u32 %v216, 16
      %v588 = vrot.slane %v586, 5
      %v589 = vsel %vm229, %v584, %v588
      %v591 = vshrl.u32 %v217, 16
      %v593 = vrot.slane %v591, 4
      %v594 = vshll.u32 %v217, 16
      %v596 = vrot.slane %v594, 5
      %v597 = vor.u32 %v593, %v596
      %v598 = vrot.slane %v597, 4
      %v600 = vshll.u32 %v218, 16
      %v602 = vrot.slane %v600, 5
      %v603 = vsel %vm229, %v598, %v602
      %v604 = vshrl.u32 %v218, 16
      %v606 = vrot.slane %v604, 4
      %v607 = vor.u32 %v606, %v602
      %v608 = vrot.slane %v607, 4
      %v610 = vshll.u32 %v219, 16
      %v612 = vrot.slane %v610, 5
      %v613 = vsel %vm229, %v608, %v612
      %s614 = scalar_lea.vmem %s1, 2
      %v615 = vld [vmem:[%s614] sm:$0x3]
      %v616 = vunpack.c.l.b16 %v243
      %v617 = vunpack.c.l.b16 %v253
      %v618 = vunpack.c.l.b16 %v267
      %v619 = vunpack.c.l.b16 %v277
      %v620 = vunpack.c.l.b16 %v291
      %v621 = vunpack.c.l.b16 %v301
      %v622 = vunpack.c.l.b16 %v315
      %v623 = vunpack.c.l.b16 %v325
      %v624 = vunpack.c.l.b16 %v339
      %v625 = vunpack.c.l.b16 %v349
      %v626 = vunpack.c.l.b16 %v363
      %v627 = vunpack.c.l.b16 %v373
      %v628 = vunpack.c.l.b16 %v387
      %v629 = vunpack.c.l.b16 %v397
      %v630 = vunpack.c.l.b16 %v411
      %v631 = vunpack.c.l.b16 %v421
      %v632 = vunpack.c.l.b16 %v435
      %v633 = vunpack.c.l.b16 %v445
      %v634 = vunpack.c.l.b16 %v459
      %v635 = vunpack.c.l.b16 %v469
      %v636 = vunpack.c.l.b16 %v483
      %v637 = vunpack.c.l.b16 %v493
      %v638 = vunpack.c.l.b16 %v507
      %v639 = vunpack.c.l.b16 %v517
      %v640 = vunpack.c.l.b16 %v531
      %v641 = vunpack.c.l.b16 %v541
      %v642 = vunpack.c.l.b16 %v555
      %v643 = vunpack.c.l.b16 %v565
      %v644 = vunpack.c.l.b16 %v579
      %v645 = vunpack.c.l.b16 %v589
      %v646 = vunpack.c.l.b16 %v603
      %v647 = vunpack.c.l.b16 %v613
      %v648 = vpack.c.b16 %v617, %v616
      %v649 = vpack.c.b16 %v619, %v618
      %v650 = vpack.c.b16 %v621, %v620
      %v651 = vpack.c.b16 %v623, %v622
      %v652 = vpack.c.b16 %v625, %v624
      %v653 = vpack.c.b16 %v627, %v626
      %v654 = vpack.c.b16 %v629, %v628
      %v655 = vpack.c.b16 %v631, %v630
      %v656 = vpack.c.b16 %v633, %v632
      %v657 = vpack.c.b16 %v635, %v634
      %v658 = vpack.c.b16 %v637, %v636
      %v659 = vpack.c.b16 %v639, %v638
      %v660 = vpack.c.b16 %v641, %v640
      %v661 = vpack.c.b16 %v643, %v642
      %v662 = vpack.c.b16 %v645, %v644
      %v663 = vpack.c.b16 %v647, %v646
      %vm664 = vcmask 23552
      %v666 = vsel %vm664, %v648, 0
      %v669 = vsel %vm664, %v649, 0
      %v672 = vsel %vm664, %v650, 0
      %v675 = vsel %vm664, %v651, 0
      %v678 = vsel %vm664, %v652, 0
      %v681 = vsel %vm664, %v653, 0
      %v684 = vsel %vm664, %v654, 0
      %v687 = vsel %vm664, %v655, 0
      %v690 = vsel %vm664, %v656, 0
      %v693 = vsel %vm664, %v657, 0
      %v696 = vsel %vm664, %v658, 0
      %v699 = vsel %vm664, %v659, 0
      %v702 = vsel %vm664, %v660, 0
      %v705 = vsel %vm664, %v661, 0
      %v708 = vsel %vm664, %v662, 0
      %v711 = vsel %vm664, %v663, 0
      %vm713 = vcmask 1040384
      %vm714 = vcmask 1041408
      %v715 = vsel %vm713, 4294967295, 65535
      %v716 = vsel %vm714, %v715, 0
      %v718 = vand.u32 %v615, %v716
      %720 = vmatprep.subr.bf16.mxu0 0
      %721 = vmatpush1.bf16.msra.mxu0 0
      %722 = vmatprep.subr.bf16.mxu0 0
      %723 = vmatpush1.bf16.msra.mxu0 0
      %724 = vmatprep.subr.bf16.mxu0 0
      %725 = vmatpush1.bf16.msra.mxu0 0
      %726 = vmatprep.subr.bf16.mxu0 0
      %727 = vmatpush1.bf16.msra.mxu0 0
      %728 = vmatprep.subr.bf16.mxu0 0
      %729 = vmatpush1.bf16.msra.mxu0 0
      %730 = vmatprep.subr.bf16.mxu0 0
      %731 = vmatpush1.bf16.msra.mxu0 0
      %732 = vmatprep.subr.bf16.mxu0 0
      %733 = vmatpush1.bf16.msra.mxu0 0
      %734 = vmatprep.subr.bf16.mxu0 0
      %735 = vmatpush1.bf16.msra.mxu0 %v718
      %736 = vmatprep.subr.bf16.mxu0 0
      %737 = vmatpush2.bf16.msra.mxu0 0
      %738 = vmatprep.subr.bf16.mxu0 0
      %739 = vmatpush2.bf16.msra.mxu0 0
      %740 = vmatprep.subr.bf16.mxu0 0
      %741 = vmatpush2.bf16.msra.mxu0 0
      %742 = vmatprep.subr.bf16.mxu0 0
      %743 = vmatpush2.bf16.msra.mxu0 0
      %744 = vmatprep.subr.bf16.mxu0 0
      %745 = vmatpush2.bf16.msra.mxu0 0
      %746 = vmatprep.subr.bf16.mxu0 0
      %747 = vmatpush2.bf16.msra.mxu0 0
      %748 = vmatprep.subr.bf16.mxu0 0
      %749 = vmatpush2.bf16.msra.mxu0 0
      %750 = vmatprep.subr.bf16.mxu0 0
      %751 = vmatpush2.bf16.msra.mxu0 0
      %752 = vmatprep.mubr.bf16.mxu0 0
      %753 = vmatmul.mubr.bf16.gmra.mxu0 %v666
      %v754 = vpop.f32.mrf.mxu0
      %v755 = vadd.f32 0.0, %v754
      %v756 = vpop.f32.mrf.mxu0
      %v757 = vpop.f32.mrf.mxu0
      %v758 = vadd.f32 0.0, %v757
      %v759 = vpop.f32.mrf.mxu0
      %760 = vmatprep.mubr.bf16.mxu0 0
      %761 = vmatmul.mubr.bf16.gmra.mxu0 %v669
      %v762 = vpop.f32.mrf.mxu0
      %v763 = vadd.f32 0.0, %v762
      %v764 = vpop.f32.mrf.mxu0
      %v765 = vpop.f32.mrf.mxu0
      %v766 = vadd.f32 0.0, %v765
      %v767 = vpop.f32.mrf.mxu0
      %768 = vmatprep.mubr.bf16.mxu0 0
      %769 = vmatmul.mubr.bf16.gmra.mxu0 %v672
      %v770 = vpop.f32.mrf.mxu0
      %v771 = vadd.f32 0.0, %v770
      %v772 = vpop.f32.mrf.mxu0
      %v773 = vpop.f32.mrf.mxu0
      %v774 = vadd.f32 0.0, %v773
      %v775 = vpop.f32.mrf.mxu0
      %776 = vmatprep.mubr.bf16.mxu0 0
      %777 = vmatmul.mubr.bf16.gmra.mxu0 %v675
      %v778 = vpop.f32.mrf.mxu0
      %v779 = vadd.f32 0.0, %v778
      %v780 = vpop.f32.mrf.mxu0
      %v781 = vpop.f32.mrf.mxu0
      %v782 = vadd.f32 0.0, %v781
      %v783 = vpop.f32.mrf.mxu0
      %784 = vmatprep.mubr.bf16.mxu0 0
      %785 = vmatmul.mubr.bf16.gmra.mxu0 %v678
      %v786 = vpop.f32.mrf.mxu0
      %v787 = vadd.f32 0.0, %v786
      %v788 = vpop.f32.mrf.mxu0
      %v789 = vpop.f32.mrf.mxu0
      %v790 = vadd.f32 0.0, %v789
      %v791 = vpop.f32.mrf.mxu0
      %792 = vmatprep.mubr.bf16.mxu0 0
      %793 = vmatmul.mubr.bf16.gmra.mxu0 %v681
      %v794 = vpop.f32.mrf.mxu0
      %v795 = vadd.f32 0.0, %v794
      %v796 = vpop.f32.mrf.mxu0
      %v797 = vpop.f32.mrf.mxu0
      %v798 = vadd.f32 0.0, %v797
      %v799 = vpop.f32.mrf.mxu0
      %800 = vmatprep.mubr.bf16.mxu0 0
      %801 = vmatmul.mubr.bf16.gmra.mxu0 %v684
      %v802 = vpop.f32.mrf.mxu0
      %v803 = vadd.f32 0.0, %v802
      %v804 = vpop.f32.mrf.mxu0
      %v805 = vpop.f32.mrf.mxu0
      %v806 = vadd.f32 0.0, %v805
      %v807 = vpop.f32.mrf.mxu0
      %808 = vmatprep.mubr.bf16.mxu0 0
      %809 = vmatmul.mubr.bf16.gmra.mxu0 %v687
      %v810 = vpop.f32.mrf.mxu0
      %v811 = vadd.f32 0.0, %v810
      %v812 = vpop.f32.mrf.mxu0
      %v813 = vpop.f32.mrf.mxu0
      %v814 = vadd.f32 0.0, %v813
      %v815 = vpop.f32.mrf.mxu0
      %816 = vmatprep.mubr.bf16.mxu0 0
      %817 = vmatmul.mubr.bf16.gmra.mxu0 %v690
      %v818 = vpop.f32.mrf.mxu0
      %v819 = vadd.f32 0.0, %v818
      %v820 = vpop.f32.mrf.mxu0
      %v821 = vpop.f32.mrf.mxu0
      %v822 = vadd.f32 0.0, %v821
      %v823 = vpop.f32.mrf.mxu0
      %824 = vmatprep.mubr.bf16.mxu0 0
      %825 = vmatmul.mubr.bf16.gmra.mxu0 %v693
      %v826 = vpop.f32.mrf.mxu0
      %v827 = vadd.f32 0.0, %v826
      %v828 = vpop.f32.mrf.mxu0
      %v829 = vpop.f32.mrf.mxu0
      %v830 = vadd.f32 0.0, %v829
      %v831 = vpop.f32.mrf.mxu0
      %832 = vmatprep.mubr.bf16.mxu0 0
      %833 = vmatmul.mubr.bf16.gmra.mxu0 %v696
      %v834 = vpop.f32.mrf.mxu0
      %v835 = vadd.f32 0.0, %v834
      %v836 = vpop.f32.mrf.mxu0
      %v837 = vpop.f32.mrf.mxu0
      %v838 = vadd.f32 0.0, %v837
      %v839 = vpop.f32.mrf.mxu0
      %840 = vmatprep.mubr.bf16.mxu0 0
      %841 = vmatmul.mubr.bf16.gmra.mxu0 %v699
      %v842 = vpop.f32.mrf.mxu0
      %v843 = vadd.f32 0.0, %v842
      %v844 = vpop.f32.mrf.mxu0
      %v845 = vpop.f32.mrf.mxu0
      %v846 = vadd.f32 0.0, %v845
      %v847 = vpop.f32.mrf.mxu0
      %848 = vmatprep.mubr.bf16.mxu0 0
      %849 = vmatmul.mubr.bf16.gmra.mxu0 %v702
      %v850 = vpop.f32.mrf.mxu0
      %v851 = vadd.f32 0.0, %v850
      %v852 = vpop.f32.mrf.mxu0
      %v853 = vpop.f32.mrf.mxu0
      %v854 = vadd.f32 0.0, %v853
      %v855 = vpop.f32.mrf.mxu0
      %856 = vmatprep.mubr.bf16.mxu0 0
      %857 = vmatmul.mubr.bf16.gmra.mxu0 %v705
      %v858 = vpop.f32.mrf.mxu0
      %v859 = vadd.f32 0.0, %v858
      %v860 = vpop.f32.mrf.mxu0
      %v861 = vpop.f32.mrf.mxu0
      %v862 = vadd.f32 0.0, %v861
      %v863 = vpop.f32.mrf.mxu0
      %864 = vmatprep.mubr.bf16.mxu0 0
      %865 = vmatmul.mubr.bf16.gmra.mxu0 %v708
      %v866 = vpop.f32.mrf.mxu0
      %v867 = vadd.f32 0.0, %v866
      %v868 = vpop.f32.mrf.mxu0
      %v869 = vpop.f32.mrf.mxu0
      %v870 = vadd.f32 0.0, %v869
      %v871 = vpop.f32.mrf.mxu0
      %872 = vmatprep.mubr.bf16.mxu0 0
      %873 = vmatmul.mubr.bf16.gmra.mxu0 %v711
      %v874 = vpop.f32.mrf.mxu0
      %v875 = vadd.f32 0.0, %v874
      %v876 = vpop.f32.mrf.mxu0
      %v877 = vpop.f32.mrf.mxu0
      %v878 = vadd.f32 0.0, %v877
      %v879 = vpop.f32.mrf.mxu0
      %880 = vdwg.mxu0
      %v913 = vunpack.c.l.b16 %v172
      %v914 = vunpack.c.l.b16 %v173
      %v915 = vunpack.c.l.b16 %v175
      %v916 = vunpack.c.l.b16 %v176
      %v917 = vunpack.c.l.b16 %v178
      %v918 = vunpack.c.l.b16 %v179
      %v919 = vunpack.c.l.b16 %v181
      %v920 = vunpack.c.l.b16 %v182
      %v921 = vunpack.c.l.b16 %v184
      %v922 = vunpack.c.l.b16 %v185
      %v923 = vunpack.c.l.b16 %v187
      %v924 = vunpack.c.l.b16 %v188
      %v925 = vunpack.c.l.b16 %v190
      %v926 = vunpack.c.l.b16 %v191
      %v927 = vunpack.c.l.b16 %v193
      %v928 = vunpack.c.l.b16 %v194
      %v929 = vunpack.c.l.b16 %v196
      %v930 = vunpack.c.l.b16 %v197
      %v931 = vunpack.c.l.b16 %v199
      %v932 = vunpack.c.l.b16 %v200
      %v933 = vunpack.c.l.b16 %v202
      %v934 = vunpack.c.l.b16 %v203
      %v935 = vunpack.c.l.b16 %v205
      %v936 = vunpack.c.l.b16 %v206
      %v937 = vunpack.c.l.b16 %v208
      %v938 = vunpack.c.l.b16 %v209
      %v939 = vunpack.c.l.b16 %v211
      %v940 = vunpack.c.l.b16 %v212
      %v941 = vunpack.c.l.b16 %v214
      %v942 = vunpack.c.l.b16 %v215
      %v943 = vunpack.c.l.b16 %v217
      %v944 = vunpack.c.l.b16 %v218
      %v945 = vpack.c.b16 %v914, %v913
      %v946 = vpack.c.b16 %v916, %v915
      %v947 = vpack.c.b16 %v918, %v917
      %v948 = vpack.c.b16 %v920, %v919
      %v949 = vpack.c.b16 %v922, %v921
      %v950 = vpack.c.b16 %v924, %v923
      %v951 = vpack.c.b16 %v926, %v925
      %v952 = vpack.c.b16 %v928, %v927
      %v953 = vpack.c.b16 %v930, %v929
      %v954 = vpack.c.b16 %v932, %v931
      %v955 = vpack.c.b16 %v934, %v933
      %v956 = vpack.c.b16 %v936, %v935
      %v957 = vpack.c.b16 %v938, %v937
      %v958 = vpack.c.b16 %v940, %v939
      %v959 = vpack.c.b16 %v942, %v941
      %v960 = vpack.c.b16 %v944, %v943
      %v962 = vsel %vm664, %v945, 0
      %v965 = vsel %vm664, %v946, 0
      %v968 = vsel %vm664, %v947, 0
      %v971 = vsel %vm664, %v948, 0
      %v974 = vsel %vm664, %v949, 0
      %v977 = vsel %vm664, %v950, 0
      %v980 = vsel %vm664, %v951, 0
      %v983 = vsel %vm664, %v952, 0
      %v986 = vsel %vm664, %v953, 0
      %v989 = vsel %vm664, %v954, 0
      %v992 = vsel %vm664, %v955, 0
      %v995 = vsel %vm664, %v956, 0
      %v998 = vsel %vm664, %v957, 0
      %v1001 = vsel %vm664, %v958, 0
      %v1004 = vsel %vm664, %v959, 0
      %v1007 = vsel %vm664, %v960, 0
      %v1010 = vand.u32 %v226, %v716
      %1012 = vmatprep.subr.bf16.mxu0 0
      %1013 = vmatpush1.bf16.msra.mxu0 0
      %1014 = vmatprep.subr.bf16.mxu0 0
      %1015 = vmatpush1.bf16.msra.mxu0 0
      %1016 = vmatprep.subr.bf16.mxu0 0
      %1017 = vmatpush1.bf16.msra.mxu0 0
      %1018 = vmatprep.subr.bf16.mxu0 0
      %1019 = vmatpush1.bf16.msra.mxu0 0
      %1020 = vmatprep.subr.bf16.mxu0 0
      %1021 = vmatpush1.bf16.msra.mxu0 0
      %1022 = vmatprep.subr.bf16.mxu0 0
      %1023 = vmatpush1.bf16.msra.mxu0 0
      %1024 = vmatprep.subr.bf16.mxu0 0
      %1025 = vmatpush1.bf16.msra.mxu0 0
      %1026 = vmatprep.subr.bf16.mxu0 0
      %1027 = vmatpush1.bf16.msra.mxu0 %v1010
      %1028 = vmatprep.subr.bf16.mxu0 0
      %1029 = vmatpush2.bf16.msra.mxu0 0
      %1030 = vmatprep.subr.bf16.mxu0 0
      %1031 = vmatpush2.bf16.msra.mxu0 0
      %1032 = vmatprep.subr.bf16.mxu0 0
      %1033 = vmatpush2.bf16.msra.mxu0 0
      %1034 = vmatprep.subr.bf16.mxu0 0
      %1035 = vmatpush2.bf16.msra.mxu0 0
      %1036 = vmatprep.subr.bf16.mxu0 0
      %1037 = vmatpush2.bf16.msra.mxu0 0
      %1038 = vmatprep.subr.bf16.mxu0 0
      %1039 = vmatpush2.bf16.msra.mxu0 0
      %1040 = vmatprep.subr.bf16.mxu0 0
      %1041 = vmatpush2.bf16.msra.mxu0 0
      %1042 = vmatprep.subr.bf16.mxu0 0
      %1043 = vmatpush2.bf16.msra.mxu0 0
      %1044 = vmatprep.mubr.bf16.mxu0 0
      %1045 = vmatmul.mubr.bf16.gmra.mxu0 %v962
      %v1046 = vpop.f32.mrf.mxu0
      %v1047 = vadd.f32 %v755, %v1046
      %v1048 = vpop.f32.mrf.mxu0
      %v1049 = vpop.f32.mrf.mxu0
      %v1050 = vadd.f32 %v758, %v1049
      %v1051 = vpop.f32.mrf.mxu0
      %1052 = vmatprep.mubr.bf16.mxu0 0
      %1053 = vmatmul.mubr.bf16.gmra.mxu0 %v965
      %v1054 = vpop.f32.mrf.mxu0
      %v1055 = vadd.f32 %v763, %v1054
      %v1056 = vpop.f32.mrf.mxu0
      %v1057 = vpop.f32.mrf.mxu0
      %v1058 = vadd.f32 %v766, %v1057
      %v1059 = vpop.f32.mrf.mxu0
      %1060 = vmatprep.mubr.bf16.mxu0 0
      %1061 = vmatmul.mubr.bf16.gmra.mxu0 %v968
      %v1062 = vpop.f32.mrf.mxu0
      %v1063 = vadd.f32 %v771, %v1062
      %v1064 = vpop.f32.mrf.mxu0
      %v1065 = vpop.f32.mrf.mxu0
      %v1066 = vadd.f32 %v774, %v1065
      %v1067 = vpop.f32.mrf.mxu0
      %1068 = vmatprep.mubr.bf16.mxu0 0
      %1069 = vmatmul.mubr.bf16.gmra.mxu0 %v971
      %v1070 = vpop.f32.mrf.mxu0
      %v1071 = vadd.f32 %v779, %v1070
      %v1072 = vpop.f32.mrf.mxu0
      %v1073 = vpop.f32.mrf.mxu0
      %v1074 = vadd.f32 %v782, %v1073
      %v1075 = vpop.f32.mrf.mxu0
      %1076 = vmatprep.mubr.bf16.mxu0 0
      %1077 = vmatmul.mubr.bf16.gmra.mxu0 %v974
      %v1078 = vpop.f32.mrf.mxu0
      %v1079 = vadd.f32 %v787, %v1078
      %v1080 = vpop.f32.mrf.mxu0
      %v1081 = vpop.f32.mrf.mxu0
      %v1082 = vadd.f32 %v790, %v1081
      %v1083 = vpop.f32.mrf.mxu0
      %1084 = vmatprep.mubr.bf16.mxu0 0
      %1085 = vmatmul.mubr.bf16.gmra.mxu0 %v977
      %v1086 = vpop.f32.mrf.mxu0
      %v1087 = vadd.f32 %v795, %v1086
      %v1088 = vpop.f32.mrf.mxu0
      %v1089 = vpop.f32.mrf.mxu0
      %v1090 = vadd.f32 %v798, %v1089
      %v1091 = vpop.f32.mrf.mxu0
      %1092 = vmatprep.mubr.bf16.mxu0 0
      %1093 = vmatmul.mubr.bf16.gmra.mxu0 %v980
      %v1094 = vpop.f32.mrf.mxu0
      %v1095 = vadd.f32 %v803, %v1094
      %v1096 = vpop.f32.mrf.mxu0
      %v1097 = vpop.f32.mrf.mxu0
      %v1098 = vadd.f32 %v806, %v1097
      %v1099 = vpop.f32.mrf.mxu0
      %1100 = vmatprep.mubr.bf16.mxu0 0
      %1101 = vmatmul.mubr.bf16.gmra.mxu0 %v983
      %v1102 = vpop.f32.mrf.mxu0
      %v1103 = vadd.f32 %v811, %v1102
      %v1104 = vpop.f32.mrf.mxu0
      %v1105 = vpop.f32.mrf.mxu0
      %v1106 = vadd.f32 %v814, %v1105
      %v1107 = vpop.f32.mrf.mxu0
      %1108 = vmatprep.mubr.bf16.mxu0 0
      %1109 = vmatmul.mubr.bf16.gmra.mxu0 %v986
      %v1110 = vpop.f32.mrf.mxu0
      %v1111 = vadd.f32 %v819, %v1110
      %v1112 = vpop.f32.mrf.mxu0
      %v1113 = vpop.f32.mrf.mxu0
      %v1114 = vadd.f32 %v822, %v1113
      %v1115 = vpop.f32.mrf.mxu0
      %1116 = vmatprep.mubr.bf16.mxu0 0
      %1117 = vmatmul.mubr.bf16.gmra.mxu0 %v989
      %v1118 = vpop.f32.mrf.mxu0
      %v1119 = vadd.f32 %v827, %v1118
      %v1120 = vpop.f32.mrf.mxu0
      %v1121 = vpop.f32.mrf.mxu0
      %v1122 = vadd.f32 %v830, %v1121
      %v1123 = vpop.f32.mrf.mxu0
      %1124 = vmatprep.mubr.bf16.mxu0 0
      %1125 = vmatmul.mubr.bf16.gmra.mxu0 %v992
      %v1126 = vpop.f32.mrf.mxu0
      %v1127 = vadd.f32 %v835, %v1126
      %v1128 = vpop.f32.mrf.mxu0
      %v1129 = vpop.f32.mrf.mxu0
      %v1130 = vadd.f32 %v838, %v1129
      %v1131 = vpop.f32.mrf.mxu0
      %1132 = vmatprep.mubr.bf16.mxu0 0
      %1133 = vmatmul.mubr.bf16.gmra.mxu0 %v995
      %v1134 = vpop.f32.mrf.mxu0
      %v1135 = vadd.f32 %v843, %v1134
      %v1136 = vpop.f32.mrf.mxu0
      %v1137 = vpop.f32.mrf.mxu0
      %v1138 = vadd.f32 %v846, %v1137
      %v1139 = vpop.f32.mrf.mxu0
      %1140 = vmatprep.mubr.bf16.mxu0 0
      %1141 = vmatmul.mubr.bf16.gmra.mxu0 %v998
      %v1142 = vpop.f32.mrf.mxu0
      %v1143 = vadd.f32 %v851, %v1142
      %v1144 = vpop.f32.mrf.mxu0
      %v1145 = vpop.f32.mrf.mxu0
      %v1146 = vadd.f32 %v854, %v1145
      %v1147 = vpop.f32.mrf.mxu0
      %1148 = vmatprep.mubr.bf16.mxu0 0
      %1149 = vmatmul.mubr.bf16.gmra.mxu0 %v1001
      %v1150 = vpop.f32.mrf.mxu0
      %v1151 = vadd.f32 %v859, %v1150
      %v1152 = vpop.f32.mrf.mxu0
      %v1153 = vpop.f32.mrf.mxu0
      %v1154 = vadd.f32 %v862, %v1153
      %v1155 = vpop.f32.mrf.mxu0
      %1156 = vmatprep.mubr.bf16.mxu0 0
      %1157 = vmatmul.mubr.bf16.gmra.mxu0 %v1004
      %v1158 = vpop.f32.mrf.mxu0
      %v1159 = vadd.f32 %v867, %v1158
      %v1160 = vpop.f32.mrf.mxu0
      %v1161 = vpop.f32.mrf.mxu0
      %v1162 = vadd.f32 %v870, %v1161
      %v1163 = vpop.f32.mrf.mxu0
      %1164 = vmatprep.mubr.bf16.mxu0 0
      %1165 = vmatmul.mubr.bf16.gmra.mxu0 %v1007
      %v1166 = vpop.f32.mrf.mxu0
      %v1167 = vadd.f32 %v875, %v1166
      %v1168 = vpop.f32.mrf.mxu0
      %v1169 = vpop.f32.mrf.mxu0
      %v1170 = vadd.f32 %v878, %v1169
      %v1171 = vpop.f32.mrf.mxu0
      %1172 = vdwg.mxu0
      %vm1189 = vcmask 1042432
      %vm1190 = vcmask 1046532
      %vm1191 = vmor %vm1189, %vm1190
      %v1192 = vrot.slane %v172, 5
      %v1193 = vrot.slane %v1192, 4
      %v1194 = vrot.slane %v173, 5
      %v1195 = vsel %vm1191, %v1193, %v1194
      %v1196 = vrot.slane %v1194, 4
      %v1197 = vrot.slane %v174, 5
      %v1198 = vsel %vm1191, %v1196, %v1197
      %v1199 = vrot.slane %v175, 5
      %v1200 = vrot.slane %v1199, 4
      %v1201 = vrot.slane %v176, 5
      %v1202 = vsel %vm1191, %v1200, %v1201
      %v1203 = vrot.slane %v1201, 4
      %v1204 = vrot.slane %v177, 5
      %v1205 = vsel %vm1191, %v1203, %v1204
      %v1206 = vrot.slane %v178, 5
      %v1207 = vrot.slane %v1206, 4
      %v1208 = vrot.slane %v179, 5
      %v1209 = vsel %vm1191, %v1207, %v1208
      %v1210 = vrot.slane %v1208, 4
      %v1211 = vrot.slane %v180, 5
      %v1212 = vsel %vm1191, %v1210, %v1211
      %v1213 = vrot.slane %v181, 5
      %v1214 = vrot.slane %v1213, 4
      %v1215 = vrot.slane %v182, 5
      %v1216 = vsel %vm1191, %v1214, %v1215
      %v1217 = vrot.slane %v1215, 4
      %v1218 = vrot.slane %v183, 5
      %v1219 = vsel %vm1191, %v1217, %v1218
      %v1220 = vrot.slane %v184, 5
      %v1221 = vrot.slane %v1220, 4
      %v1222 = vrot.slane %v185, 5
      %v1223 = vsel %vm1191, %v1221, %v1222
      %v1224 = vrot.slane %v1222, 4
      %v1225 = vrot.slane %v186, 5
      %v1226 = vsel %vm1191, %v1224, %v1225
      %v1227 = vrot.slane %v187, 5
      %v1228 = vrot.slane %v1227, 4
      %v1229 = vrot.slane %v188, 5
      %v1230 = vsel %vm1191, %v1228, %v1229
      %v1231 = vrot.slane %v1229, 4
      %v1232 = vrot.slane %v189, 5
      %v1233 = vsel %vm1191, %v1231, %v1232
      %v1234 = vrot.slane %v190, 5
      %v1235 = vrot.slane %v1234, 4
      %v1236 = vrot.slane %v191, 5
      %v1237 = vsel %vm1191, %v1235, %v1236
      %v1238 = vrot.slane %v1236, 4
      %v1239 = vrot.slane %v192, 5
      %v1240 = vsel %vm1191, %v1238, %v1239
      %v1241 = vrot.slane %v193, 5
      %v1242 = vrot.slane %v1241, 4
      %v1243 = vrot.slane %v194, 5
      %v1244 = vsel %vm1191, %v1242, %v1243
      %v1245 = vrot.slane %v1243, 4
      %v1246 = vrot.slane %v195, 5
      %v1247 = vsel %vm1191, %v1245, %v1246
      %v1248 = vrot.slane %v196, 5
      %v1249 = vrot.slane %v1248, 4
      %v1250 = vrot.slane %v197, 5
      %v1251 = vsel %vm1191, %v1249, %v1250
      %v1252 = vrot.slane %v1250, 4
      %v1253 = vrot.slane %v198, 5
      %v1254 = vsel %vm1191, %v1252, %v1253
      %v1255 = vrot.slane %v199, 5
      %v1256 = vrot.slane %v1255, 4
      %v1257 = vrot.slane %v200, 5
      %v1258 = vsel %vm1191, %v1256, %v1257
      %v1259 = vrot.slane %v1257, 4
      %v1260 = vrot.slane %v201, 5
      %v1261 = vsel %vm1191, %v1259, %v1260
      %v1262 = vrot.slane %v202, 5
      %v1263 = vrot.slane %v1262, 4
      %v1264 = vrot.slane %v203, 5
      %v1265 = vsel %vm1191, %v1263, %v1264
      %v1266 = vrot.slane %v1264, 4
      %v1267 = vrot.slane %v204, 5
      %v1268 = vsel %vm1191, %v1266, %v1267
      %v1269 = vrot.slane %v205, 5
      %v1270 = vrot.slane %v1269, 4
      %v1271 = vrot.slane %v206, 5
      %v1272 = vsel %vm1191, %v1270, %v1271
      %v1273 = vrot.slane %v1271, 4
      %v1274 = vrot.slane %v207, 5
      %v1275 = vsel %vm1191, %v1273, %v1274
      %v1276 = vrot.slane %v208, 5
      %v1277 = vrot.slane %v1276, 4
      %v1278 = vrot.slane %v209, 5
      %v1279 = vsel %vm1191, %v1277, %v1278
      %v1280 = vrot.slane %v1278, 4
      %v1281 = vrot.slane %v210, 5
      %v1282 = vsel %vm1191, %v1280, %v1281
      %v1283 = vrot.slane %v211, 5
      %v1284 = vrot.slane %v1283, 4
      %v1285 = vrot.slane %v212, 5
      %v1286 = vsel %vm1191, %v1284, %v1285
      %v1287 = vrot.slane %v1285, 4
      %v1288 = vrot.slane %v213, 5
      %v1289 = vsel %vm1191, %v1287, %v1288
      %v1290 = vrot.slane %v214, 5
      %v1291 = vrot.slane %v1290, 4
      %v1292 = vrot.slane %v215, 5
      %v1293 = vsel %vm1191, %v1291, %v1292
      %v1294 = vrot.slane %v1292, 4
      %v1295 = vrot.slane %v216, 5
      %v1296 = vsel %vm1191, %v1294, %v1295
      %v1297 = vrot.slane %v217, 5
      %v1298 = vrot.slane %v1297, 4
      %v1299 = vrot.slane %v218, 5
      %v1300 = vsel %vm1191, %v1298, %v1299
      %v1301 = vrot.slane %v1299, 4
      %v1302 = vrot.slane %v219, 5
      %v1303 = vsel %vm1191, %v1301, %v1302
      %s1304 = scalar_lea.vmem %s1, 4
      %v1305 = vld [vmem:[%s1304] sm:$0x3]
      %v1306 = vunpack.c.l.b16 %v1195
      %v1307 = vunpack.c.l.b16 %v1198
      %v1308 = vunpack.c.l.b16 %v1202
      %v1309 = vunpack.c.l.b16 %v1205
      %v1310 = vunpack.c.l.b16 %v1209
      %v1311 = vunpack.c.l.b16 %v1212
      %v1312 = vunpack.c.l.b16 %v1216
      %v1313 = vunpack.c.l.b16 %v1219
      %v1314 = vunpack.c.l.b16 %v1223
      %v1315 = vunpack.c.l.b16 %v1226
      %v1316 = vunpack.c.l.b16 %v1230
      %v1317 = vunpack.c.l.b16 %v1233
      %v1318 = vunpack.c.l.b16 %v1237
      %v1319 = vunpack.c.l.b16 %v1240
      %v1320 = vunpack.c.l.b16 %v1244
      %v1321 = vunpack.c.l.b16 %v1247
      %v1322 = vunpack.c.l.b16 %v1251
      %v1323 = vunpack.c.l.b16 %v1254
      %v1324 = vunpack.c.l.b16 %v1258
      %v1325 = vunpack.c.l.b16 %v1261
      %v1326 = vunpack.c.l.b16 %v1265
      %v1327 = vunpack.c.l.b16 %v1268
      %v1328 = vunpack.c.l.b16 %v1272
      %v1329 = vunpack.c.l.b16 %v1275
      %v1330 = vunpack.c.l.b16 %v1279
      %v1331 = vunpack.c.l.b16 %v1282
      %v1332 = vunpack.c.l.b16 %v1286
      %v1333 = vunpack.c.l.b16 %v1289
      %v1334 = vunpack.c.l.b16 %v1293
      %v1335 = vunpack.c.l.b16 %v1296
      %v1336 = vunpack.c.l.b16 %v1300
      %v1337 = vunpack.c.l.b16 %v1303
      %v1338 = vpack.c.b16 %v1307, %v1306
      %v1339 = vpack.c.b16 %v1309, %v1308
      %v1340 = vpack.c.b16 %v1311, %v1310
      %v1341 = vpack.c.b16 %v1313, %v1312
      %v1342 = vpack.c.b16 %v1315, %v1314
      %v1343 = vpack.c.b16 %v1317, %v1316
      %v1344 = vpack.c.b16 %v1319, %v1318
      %v1345 = vpack.c.b16 %v1321, %v1320
      %v1346 = vpack.c.b16 %v1323, %v1322
      %v1347 = vpack.c.b16 %v1325, %v1324
      %v1348 = vpack.c.b16 %v1327, %v1326
      %v1349 = vpack.c.b16 %v1329, %v1328
      %v1350 = vpack.c.b16 %v1331, %v1330
      %v1351 = vpack.c.b16 %v1333, %v1332
      %v1352 = vpack.c.b16 %v1335, %v1334
      %v1353 = vpack.c.b16 %v1337, %v1336
      %v1355 = vsel %vm664, %v1338, 0
      %v1358 = vsel %vm664, %v1339, 0
      %v1361 = vsel %vm664, %v1340, 0
      %v1364 = vsel %vm664, %v1341, 0
      %v1367 = vsel %vm664, %v1342, 0
      %v1370 = vsel %vm664, %v1343, 0
      %v1373 = vsel %vm664, %v1344, 0
      %v1376 = vsel %vm664, %v1345, 0
      %v1379 = vsel %vm664, %v1346, 0
      %v1382 = vsel %vm664, %v1347, 0
      %v1385 = vsel %vm664, %v1348, 0
      %v1388 = vsel %vm664, %v1349, 0
      %v1391 = vsel %vm664, %v1350, 0
      %v1394 = vsel %vm664, %v1351, 0
      %v1397 = vsel %vm664, %v1352, 0
      %v1400 = vsel %vm664, %v1353, 0
      %v1403 = vand.u32 %v1305, %v716
      %1405 = vmatprep.subr.bf16.mxu0 0
      %1406 = vmatpush1.bf16.msra.mxu0 0
      %1407 = vmatprep.subr.bf16.mxu0 0
      %1408 = vmatpush1.bf16.msra.mxu0 0
      %1409 = vmatprep.subr.bf16.mxu0 0
      %1410 = vmatpush1.bf16.msra.mxu0 0
      %1411 = vmatprep.subr.bf16.mxu0 0
      %1412 = vmatpush1.bf16.msra.mxu0 0
      %1413 = vmatprep.subr.bf16.mxu0 0
      %1414 = vmatpush1.bf16.msra.mxu0 0
      %1415 = vmatprep.subr.bf16.mxu0 0
      %1416 = vmatpush1.bf16.msra.mxu0 0
      %1417 = vmatprep.subr.bf16.mxu0 0
      %1418 = vmatpush1.bf16.msra.mxu0 0
      %1419 = vmatprep.subr.bf16.mxu0 0
      %1420 = vmatpush1.bf16.msra.mxu0 %v1403
      %1421 = vmatprep.subr.bf16.mxu0 0
      %1422 = vmatpush2.bf16.msra.mxu0 0
      %1423 = vmatprep.subr.bf16.mxu0 0
      %1424 = vmatpush2.bf16.msra.mxu0 0
      %1425 = vmatprep.subr.bf16.mxu0 0
      %1426 = vmatpush2.bf16.msra.mxu0 0
      %1427 = vmatprep.subr.bf16.mxu0 0
      %1428 = vmatpush2.bf16.msra.mxu0 0
      %1429 = vmatprep.subr.bf16.mxu0 0
      %1430 = vmatpush2.bf16.msra.mxu0 0
      %1431 = vmatprep.subr.bf16.mxu0 0
      %1432 = vmatpush2.bf16.msra.mxu0 0
      %1433 = vmatprep.subr.bf16.mxu0 0
      %1434 = vmatpush2.bf16.msra.mxu0 0
      %1435 = vmatprep.subr.bf16.mxu0 0
      %1436 = vmatpush2.bf16.msra.mxu0 0
      %1437 = vmatprep.mubr.bf16.mxu0 0
      %1438 = vmatmul.mubr.bf16.gmra.mxu0 %v1355
      %v1439 = vpop.f32.mrf.mxu0
      %v1440 = vadd.f32 0.0, %v1439
      %v1441 = vpop.f32.mrf.mxu0
      %v1442 = vpop.f32.mrf.mxu0
      %v1443 = vadd.f32 0.0, %v1442
      %v1444 = vpop.f32.mrf.mxu0
      %1445 = vmatprep.mubr.bf16.mxu0 0
      %1446 = vmatmul.mubr.bf16.gmra.mxu0 %v1358
      %v1447 = vpop.f32.mrf.mxu0
      %v1448 = vadd.f32 0.0, %v1447
      %v1449 = vpop.f32.mrf.mxu0
      %v1450 = vpop.f32.mrf.mxu0
      %v1451 = vadd.f32 0.0, %v1450
      %v1452 = vpop.f32.mrf.mxu0
      %1453 = vmatprep.mubr.bf16.mxu0 0
      %1454 = vmatmul.mubr.bf16.gmra.mxu0 %v1361
      %v1455 = vpop.f32.mrf.mxu0
      %v1456 = vadd.f32 0.0, %v1455
      %v1457 = vpop.f32.mrf.mxu0
      %v1458 = vpop.f32.mrf.mxu0
      %v1459 = vadd.f32 0.0, %v1458
      %v1460 = vpop.f32.mrf.mxu0
      %1461 = vmatprep.mubr.bf16.mxu0 0
      %1462 = vmatmul.mubr.bf16.gmra.mxu0 %v1364
      %v1463 = vpop.f32.mrf.mxu0
      %v1464 = vadd.f32 0.0, %v1463
      %v1465 = vpop.f32.mrf.mxu0
      %v1466 = vpop.f32.mrf.mxu0
      %v1467 = vadd.f32 0.0, %v1466
      %v1468 = vpop.f32.mrf.mxu0
      %1469 = vmatprep.mubr.bf16.mxu0 0
      %1470 = vmatmul.mubr.bf16.gmra.mxu0 %v1367
      %v1471 = vpop.f32.mrf.mxu0
      %v1472 = vadd.f32 0.0, %v1471
      %v1473 = vpop.f32.mrf.mxu0
      %v1474 = vpop.f32.mrf.mxu0
      %v1475 = vadd.f32 0.0, %v1474
      %v1476 = vpop.f32.mrf.mxu0
      %1477 = vmatprep.mubr.bf16.mxu0 0
      %1478 = vmatmul.mubr.bf16.gmra.mxu0 %v1370
      %v1479 = vpop.f32.mrf.mxu0
      %v1480 = vadd.f32 0.0, %v1479
      %v1481 = vpop.f32.mrf.mxu0
      %v1482 = vpop.f32.mrf.mxu0
      %v1483 = vadd.f32 0.0, %v1482
      %v1484 = vpop.f32.mrf.mxu0
      %1485 = vmatprep.mubr.bf16.mxu0 0
      %1486 = vmatmul.mubr.bf16.gmra.mxu0 %v1373
      %v1487 = vpop.f32.mrf.mxu0
      %v1488 = vadd.f32 0.0, %v1487
      %v1489 = vpop.f32.mrf.mxu0
      %v1490 = vpop.f32.mrf.mxu0
      %v1491 = vadd.f32 0.0, %v1490
      %v1492 = vpop.f32.mrf.mxu0
      %1493 = vmatprep.mubr.bf16.mxu0 0
      %1494 = vmatmul.mubr.bf16.gmra.mxu0 %v1376
      %v1495 = vpop.f32.mrf.mxu0
      %v1496 = vadd.f32 0.0, %v1495
      %v1497 = vpop.f32.mrf.mxu0
      %v1498 = vpop.f32.mrf.mxu0
      %v1499 = vadd.f32 0.0, %v1498
      %v1500 = vpop.f32.mrf.mxu0
      %1501 = vmatprep.mubr.bf16.mxu0 0
      %1502 = vmatmul.mubr.bf16.gmra.mxu0 %v1379
      %v1503 = vpop.f32.mrf.mxu0
      %v1504 = vadd.f32 0.0, %v1503
      %v1505 = vpop.f32.mrf.mxu0
      %v1506 = vpop.f32.mrf.mxu0
      %v1507 = vadd.f32 0.0, %v1506
      %v1508 = vpop.f32.mrf.mxu0
      %1509 = vmatprep.mubr.bf16.mxu0 0
      %1510 = vmatmul.mubr.bf16.gmra.mxu0 %v1382
      %v1511 = vpop.f32.mrf.mxu0
      %v1512 = vadd.f32 0.0, %v1511
      %v1513 = vpop.f32.mrf.mxu0
      %v1514 = vpop.f32.mrf.mxu0
      %v1515 = vadd.f32 0.0, %v1514
      %v1516 = vpop.f32.mrf.mxu0
      %1517 = vmatprep.mubr.bf16.mxu0 0
      %1518 = vmatmul.mubr.bf16.gmra.mxu0 %v1385
      %v1519 = vpop.f32.mrf.mxu0
      %v1520 = vadd.f32 0.0, %v1519
      %v1521 = vpop.f32.mrf.mxu0
      %v1522 = vpop.f32.mrf.mxu0
      %v1523 = vadd.f32 0.0, %v1522
      %v1524 = vpop.f32.mrf.mxu0
      %1525 = vmatprep.mubr.bf16.mxu0 0
      %1526 = vmatmul.mubr.bf16.gmra.mxu0 %v1388
      %v1527 = vpop.f32.mrf.mxu0
      %v1528 = vadd.f32 0.0, %v1527
      %v1529 = vpop.f32.mrf.mxu0
      %v1530 = vpop.f32.mrf.mxu0
      %v1531 = vadd.f32 0.0, %v1530
      %v1532 = vpop.f32.mrf.mxu0
      %1533 = vmatprep.mubr.bf16.mxu0 0
      %1534 = vmatmul.mubr.bf16.gmra.mxu0 %v1391
      %v1535 = vpop.f32.mrf.mxu0
      %v1536 = vadd.f32 0.0, %v1535
      %v1537 = vpop.f32.mrf.mxu0
      %v1538 = vpop.f32.mrf.mxu0
      %v1539 = vadd.f32 0.0, %v1538
      %v1540 = vpop.f32.mrf.mxu0
      %1541 = vmatprep.mubr.bf16.mxu0 0
      %1542 = vmatmul.mubr.bf16.gmra.mxu0 %v1394
      %v1543 = vpop.f32.mrf.mxu0
      %v1544 = vadd.f32 0.0, %v1543
      %v1545 = vpop.f32.mrf.mxu0
      %v1546 = vpop.f32.mrf.mxu0
      %v1547 = vadd.f32 0.0, %v1546
      %v1548 = vpop.f32.mrf.mxu0
      %1549 = vmatprep.mubr.bf16.mxu0 0
      %1550 = vmatmul.mubr.bf16.gmra.mxu0 %v1397
      %v1551 = vpop.f32.mrf.mxu0
      %v1552 = vadd.f32 0.0, %v1551
      %v1553 = vpop.f32.mrf.mxu0
      %v1554 = vpop.f32.mrf.mxu0
      %v1555 = vadd.f32 0.0, %v1554
      %v1556 = vpop.f32.mrf.mxu0
      %1557 = vmatprep.mubr.bf16.mxu0 0
      %1558 = vmatmul.mubr.bf16.gmra.mxu0 %v1400
      %v1559 = vpop.f32.mrf.mxu0
      %v1560 = vadd.f32 0.0, %v1559
      %v1561 = vpop.f32.mrf.mxu0
      %v1562 = vpop.f32.mrf.mxu0
      %v1563 = vadd.f32 0.0, %v1562
      %v1564 = vpop.f32.mrf.mxu0
      %1565 = vdwg.mxu0
      %v1566 = vadd.f32 %v1047, %v1440
      %v1567 = vadd.f32 %v1050, %v1443
      %v1568 = vadd.f32 %v1055, %v1448
      %v1569 = vadd.f32 %v1058, %v1451
      %v1570 = vadd.f32 %v1063, %v1456
      %v1571 = vadd.f32 %v1066, %v1459
      %v1572 = vadd.f32 %v1071, %v1464
      %v1573 = vadd.f32 %v1074, %v1467
      %v1574 = vadd.f32 %v1079, %v1472
      %v1575 = vadd.f32 %v1082, %v1475
      %v1576 = vadd.f32 %v1087, %v1480
      %v1577 = vadd.f32 %v1090, %v1483
      %v1578 = vadd.f32 %v1095, %v1488
      %v1579 = vadd.f32 %v1098, %v1491
      %v1580 = vadd.f32 %v1103, %v1496
      %v1581 = vadd.f32 %v1106, %v1499
      %v1582 = vadd.f32 %v1111, %v1504
      %v1583 = vadd.f32 %v1114, %v1507
      %v1584 = vadd.f32 %v1119, %v1512
      %v1585 = vadd.f32 %v1122, %v1515
      %v1586 = vadd.f32 %v1127, %v1520
      %v1587 = vadd.f32 %v1130, %v1523
      %v1588 = vadd.f32 %v1135, %v1528
      %v1589 = vadd.f32 %v1138, %v1531
      %v1590 = vadd.f32 %v1143, %v1536
      %v1591 = vadd.f32 %v1146, %v1539
      %v1592 = vadd.f32 %v1151, %v1544
      %v1593 = vadd.f32 %v1154, %v1547
      %v1594 = vadd.f32 %v1159, %v1552
      %v1595 = vadd.f32 %v1162, %v1555
      %v1596 = vadd.f32 %v1167, %v1560
      %v1597 = vadd.f32 %v1170, %v1563
      %s1598 = scalar_lea.vmem %s1, 6
      %v1599 = vld [vmem:[%s1598] sm:$0x3]
      %v1602 = vunpack.c.l.b16 %v220
      %v1603 = vunpack.c.l.b16 %v221
      %v1604 = vpack.c.b16 %v1603, %v1602
      %v1606 = vsel %vm664, %v1604, 0
      %v1609 = vand.u32 %v1599, %v716
      %1611 = vmatprep.subr.bf16.mxu0 0
      %1612 = vmatpush1.bf16.msra.mxu0 0
      %1613 = vmatprep.subr.bf16.mxu0 0
      %1614 = vmatpush1.bf16.msra.mxu0 0
      %1615 = vmatprep.subr.bf16.mxu0 0
      %1616 = vmatpush1.bf16.msra.mxu0 0
      %1617 = vmatprep.subr.bf16.mxu0 0
      %1618 = vmatpush1.bf16.msra.mxu0 0
      %1619 = vmatprep.subr.bf16.mxu0 0
      %1620 = vmatpush1.bf16.msra.mxu0 0
      %1621 = vmatprep.subr.bf16.mxu0 0
      %1622 = vmatpush1.bf16.msra.mxu0 0
      %1623 = vmatprep.subr.bf16.mxu0 0
      %1624 = vmatpush1.bf16.msra.mxu0 0
      %1625 = vmatprep.subr.bf16.mxu0 0
      %1626 = vmatpush1.bf16.msra.mxu0 %v1609
      %1627 = vmatprep.subr.bf16.mxu0 0
      %1628 = vmatpush2.bf16.msra.mxu0 0
      %1629 = vmatprep.subr.bf16.mxu0 0
      %1630 = vmatpush2.bf16.msra.mxu0 0
      %1631 = vmatprep.subr.bf16.mxu0 0
      %1632 = vmatpush2.bf16.msra.mxu0 0
      %1633 = vmatprep.subr.bf16.mxu0 0
      %1634 = vmatpush2.bf16.msra.mxu0 0
      %1635 = vmatprep.subr.bf16.mxu0 0
      %1636 = vmatpush2.bf16.msra.mxu0 0
      %1637 = vmatprep.subr.bf16.mxu0 0
      %1638 = vmatpush2.bf16.msra.mxu0 0
      %1639 = vmatprep.subr.bf16.mxu0 0
      %1640 = vmatpush2.bf16.msra.mxu0 0
      %1641 = vmatprep.subr.bf16.mxu0 0
      %1642 = vmatpush2.bf16.msra.mxu0 0
      %1643 = vmatprep.mubr.bf16.mxu0 0
      %1644 = vmatmul.mubr.bf16.gmra.mxu0 %v965
      %v1645 = vpop.f32.mrf.mxu0
      %v1646 = vadd.f32 0.0, %v1645
      %v1647 = vpop.f32.mrf.mxu0
      %v1648 = vpop.f32.mrf.mxu0
      %v1649 = vadd.f32 0.0, %v1648
      %v1650 = vpop.f32.mrf.mxu0
      %1651 = vmatprep.mubr.bf16.mxu0 0
      %1652 = vmatmul.mubr.bf16.gmra.mxu0 %v968
      %v1653 = vpop.f32.mrf.mxu0
      %v1654 = vadd.f32 0.0, %v1653
      %v1655 = vpop.f32.mrf.mxu0
      %v1656 = vpop.f32.mrf.mxu0
      %v1657 = vadd.f32 0.0, %v1656
      %v1658 = vpop.f32.mrf.mxu0
      %1659 = vmatprep.mubr.bf16.mxu0 0
      %1660 = vmatmul.mubr.bf16.gmra.mxu0 %v971
      %v1661 = vpop.f32.mrf.mxu0
      %v1662 = vadd.f32 0.0, %v1661
      %v1663 = vpop.f32.mrf.mxu0
      %v1664 = vpop.f32.mrf.mxu0
      %v1665 = vadd.f32 0.0, %v1664
      %v1666 = vpop.f32.mrf.mxu0
      %1667 = vmatprep.mubr.bf16.mxu0 0
      %1668 = vmatmul.mubr.bf16.gmra.mxu0 %v974
      %v1669 = vpop.f32.mrf.mxu0
      %v1670 = vadd.f32 0.0, %v1669
      %v1671 = vpop.f32.mrf.mxu0
      %v1672 = vpop.f32.mrf.mxu0
      %v1673 = vadd.f32 0.0, %v1672
      %v1674 = vpop.f32.mrf.mxu0
      %1675 = vmatprep.mubr.bf16.mxu0 0
      %1676 = vmatmul.mubr.bf16.gmra.mxu0 %v977
      %v1677 = vpop.f32.mrf.mxu0
      %v1678 = vadd.f32 0.0, %v1677
      %v1679 = vpop.f32.mrf.mxu0
      %v1680 = vpop.f32.mrf.mxu0
      %v1681 = vadd.f32 0.0, %v1680
      %v1682 = vpop.f32.mrf.mxu0
      %1683 = vmatprep.mubr.bf16.mxu0 0
      %1684 = vmatmul.mubr.bf16.gmra.mxu0 %v980
      %v1685 = vpop.f32.mrf.mxu0
      %v1686 = vadd.f32 0.0, %v1685
      %v1687 = vpop.f32.mrf.mxu0
      %v1688 = vpop.f32.mrf.mxu0
      %v1689 = vadd.f32 0.0, %v1688
      %v1690 = vpop.f32.mrf.mxu0
      %1691 = vmatprep.mubr.bf16.mxu0 0
      %1692 = vmatmul.mubr.bf16.gmra.mxu0 %v983
      %v1693 = vpop.f32.mrf.mxu0
      %v1694 = vadd.f32 0.0, %v1693
      %v1695 = vpop.f32.mrf.mxu0
      %v1696 = vpop.f32.mrf.mxu0
      %v1697 = vadd.f32 0.0, %v1696
      %v1698 = vpop.f32.mrf.mxu0
      %1699 = vmatprep.mubr.bf16.mxu0 0
      %1700 = vmatmul.mubr.bf16.gmra.mxu0 %v986
      %v1701 = vpop.f32.mrf.mxu0
      %v1702 = vadd.f32 0.0, %v1701
      %v1703 = vpop.f32.mrf.mxu0
      %v1704 = vpop.f32.mrf.mxu0
      %v1705 = vadd.f32 0.0, %v1704
      %v1706 = vpop.f32.mrf.mxu0
      %1707 = vmatprep.mubr.bf16.mxu0 0
      %1708 = vmatmul.mubr.bf16.gmra.mxu0 %v989
      %v1709 = vpop.f32.mrf.mxu0
      %v1710 = vadd.f32 0.0, %v1709
      %v1711 = vpop.f32.mrf.mxu0
      %v1712 = vpop.f32.mrf.mxu0
      %v1713 = vadd.f32 0.0, %v1712
      %v1714 = vpop.f32.mrf.mxu0
      %1715 = vmatprep.mubr.bf16.mxu0 0
      %1716 = vmatmul.mubr.bf16.gmra.mxu0 %v992
      %v1717 = vpop.f32.mrf.mxu0
      %v1718 = vadd.f32 0.0, %v1717
      %v1719 = vpop.f32.mrf.mxu0
      %v1720 = vpop.f32.mrf.mxu0
      %v1721 = vadd.f32 0.0, %v1720
      %v1722 = vpop.f32.mrf.mxu0
      %1723 = vmatprep.mubr.bf16.mxu0 0
      %1724 = vmatmul.mubr.bf16.gmra.mxu0 %v995
      %v1725 = vpop.f32.mrf.mxu0
      %v1726 = vadd.f32 0.0, %v1725
      %v1727 = vpop.f32.mrf.mxu0
      %v1728 = vpop.f32.mrf.mxu0
      %v1729 = vadd.f32 0.0, %v1728
      %v1730 = vpop.f32.mrf.mxu0
      %1731 = vmatprep.mubr.bf16.mxu0 0
      %1732 = vmatmul.mubr.bf16.gmra.mxu0 %v998
      %v1733 = vpop.f32.mrf.mxu0
      %v1734 = vadd.f32 0.0, %v1733
      %v1735 = vpop.f32.mrf.mxu0
      %v1736 = vpop.f32.mrf.mxu0
      %v1737 = vadd.f32 0.0, %v1736
      %v1738 = vpop.f32.mrf.mxu0
      %1739 = vmatprep.mubr.bf16.mxu0 0
      %1740 = vmatmul.mubr.bf16.gmra.mxu0 %v1001
      %v1741 = vpop.f32.mrf.mxu0
      %v1742 = vadd.f32 0.0, %v1741
      %v1743 = vpop.f32.mrf.mxu0
      %v1744 = vpop.f32.mrf.mxu0
      %v1745 = vadd.f32 0.0, %v1744
      %v1746 = vpop.f32.mrf.mxu0
      %1747 = vmatprep.mubr.bf16.mxu0 0
      %1748 = vmatmul.mubr.bf16.gmra.mxu0 %v1004
      %v1749 = vpop.f32.mrf.mxu0
      %v1750 = vadd.f32 0.0, %v1749
      %v1751 = vpop.f32.mrf.mxu0
      %v1752 = vpop.f32.mrf.mxu0
      %v1753 = vadd.f32 0.0, %v1752
      %v1754 = vpop.f32.mrf.mxu0
      %1755 = vmatprep.mubr.bf16.mxu0 0
      %1756 = vmatmul.mubr.bf16.gmra.mxu0 %v1007
      %v1757 = vpop.f32.mrf.mxu0
      %v1758 = vadd.f32 0.0, %v1757
      %v1759 = vpop.f32.mrf.mxu0
      %v1760 = vpop.f32.mrf.mxu0
      %v1761 = vadd.f32 0.0, %v1760
      %v1762 = vpop.f32.mrf.mxu0
      %1763 = vmatprep.mubr.bf16.mxu0 0
      %1764 = vmatmul.mubr.bf16.gmra.mxu0 %v1606
      %v1765 = vpop.f32.mrf.mxu0
      %v1766 = vadd.f32 0.0, %v1765
      %v1767 = vpop.f32.mrf.mxu0
      %v1768 = vpop.f32.mrf.mxu0
      %v1769 = vadd.f32 0.0, %v1768
      %v1770 = vpop.f32.mrf.mxu0
      %1771 = vdwg.mxu0
      %v1772 = vadd.f32 %v1566, %v1646
      %v1773 = vadd.f32 %v1567, %v1649
      %v1774 = vadd.f32 %v1568, %v1654
      %v1775 = vadd.f32 %v1569, %v1657
      %v1776 = vadd.f32 %v1570, %v1662
      %v1777 = vadd.f32 %v1571, %v1665
      %v1778 = vadd.f32 %v1572, %v1670
      %v1779 = vadd.f32 %v1573, %v1673
      %v1780 = vadd.f32 %v1574, %v1678
      %v1781 = vadd.f32 %v1575, %v1681
      %v1782 = vadd.f32 %v1576, %v1686
      %v1783 = vadd.f32 %v1577, %v1689
      %v1784 = vadd.f32 %v1578, %v1694
      %v1785 = vadd.f32 %v1579, %v1697
      %v1786 = vadd.f32 %v1580, %v1702
      %v1787 = vadd.f32 %v1581, %v1705
      %v1788 = vadd.f32 %v1582, %v1710
      %v1789 = vadd.f32 %v1583, %v1713
      %v1790 = vadd.f32 %v1584, %v1718
      %v1791 = vadd.f32 %v1585, %v1721
      %v1792 = vadd.f32 %v1586, %v1726
      %v1793 = vadd.f32 %v1587, %v1729
      %v1794 = vadd.f32 %v1588, %v1734
      %v1795 = vadd.f32 %v1589, %v1737
      %v1796 = vadd.f32 %v1590, %v1742
      %v1797 = vadd.f32 %v1591, %v1745
      %v1798 = vadd.f32 %v1592, %v1750
      %v1799 = vadd.f32 %v1593, %v1753
      %v1800 = vadd.f32 %v1594, %v1758
      %v1801 = vadd.f32 %v1595, %v1761
      %v1802 = vadd.f32 %v1596, %v1766
      %v1803 = vadd.f32 %v1597, %v1769
      %v1805 = vshrl.u32 %v220, 16
      %v1807 = vrot.slane %v1805, 4
      %v1808 = vshll.u32 %v220, 16
      %v1810 = vrot.slane %v1808, 5
      %v1811 = vor.u32 %v1807, %v1810
      %v1812 = vrot.slane %v1811, 4
      %v1814 = vshll.u32 %v221, 16
      %v1816 = vrot.slane %v1814, 5
      %v1817 = vsel %vm229, %v1812, %v1816
      %v1818 = vshrl.u32 %v221, 16
      %v1820 = vrot.slane %v1818, 4
      %v1821 = vor.u32 %v1820, %v1816
      %v1822 = vrot.slane %v1821, 4
      %v1824 = vshll.u32 %v222, 16
      %v1826 = vrot.slane %v1824, 5
      %v1827 = vsel %vm229, %v1822, %v1826
      %s1828 = scalar_lea.vmem %s1, 8
      %v1829 = vld [vmem:[%s1828] sm:$0x3]
      %v1830 = vunpack.c.l.b16 %v1817
      %v1831 = vunpack.c.l.b16 %v1827
      %v1832 = vpack.c.b16 %v1831, %v1830
      %v1834 = vsel %vm664, %v1832, 0
      %v1837 = vand.u32 %v1829, %v716
      %1839 = vmatprep.subr.bf16.mxu0 0
      %1840 = vmatpush1.bf16.msra.mxu0 0
      %1841 = vmatprep.subr.bf16.mxu0 0
      %1842 = vmatpush1.bf16.msra.mxu0 0
      %1843 = vmatprep.subr.bf16.mxu0 0
      %1844 = vmatpush1.bf16.msra.mxu0 0
      %1845 = vmatprep.subr.bf16.mxu0 0
      %1846 = vmatpush1.bf16.msra.mxu0 0
      %1847 = vmatprep.subr.bf16.mxu0 0
      %1848 = vmatpush1.bf16.msra.mxu0 0
      %1849 = vmatprep.subr.bf16.mxu0 0
      %1850 = vmatpush1.bf16.msra.mxu0 0
      %1851 = vmatprep.subr.bf16.mxu0 0
      %1852 = vmatpush1.bf16.msra.mxu0 0
      %1853 = vmatprep.subr.bf16.mxu0 0
      %1854 = vmatpush1.bf16.msra.mxu0 %v1837
      %1855 = vmatprep.subr.bf16.mxu0 0
      %1856 = vmatpush2.bf16.msra.mxu0 0
      %1857 = vmatprep.subr.bf16.mxu0 0
      %1858 = vmatpush2.bf16.msra.mxu0 0
      %1859 = vmatprep.subr.bf16.mxu0 0
      %1860 = vmatpush2.bf16.msra.mxu0 0
      %1861 = vmatprep.subr.bf16.mxu0 0
      %1862 = vmatpush2.bf16.msra.mxu0 0
      %1863 = vmatprep.subr.bf16.mxu0 0
      %1864 = vmatpush2.bf16.msra.mxu0 0
      %1865 = vmatprep.subr.bf16.mxu0 0
      %1866 = vmatpush2.bf16.msra.mxu0 0
      %1867 = vmatprep.subr.bf16.mxu0 0
      %1868 = vmatpush2.bf16.msra.mxu0 0
      %1869 = vmatprep.subr.bf16.mxu0 0
      %1870 = vmatpush2.bf16.msra.mxu0 0
      %1871 = vmatprep.mubr.bf16.mxu0 0
      %1872 = vmatmul.mubr.bf16.gmra.mxu0 %v669
      %v1873 = vpop.f32.mrf.mxu0
      %v1874 = vadd.f32 0.0, %v1873
      %v1875 = vpop.f32.mrf.mxu0
      %v1876 = vpop.f32.mrf.mxu0
      %v1877 = vadd.f32 0.0, %v1876
      %v1878 = vpop.f32.mrf.mxu0
      %1879 = vmatprep.mubr.bf16.mxu0 0
      %1880 = vmatmul.mubr.bf16.gmra.mxu0 %v672
      %v1881 = vpop.f32.mrf.mxu0
      %v1882 = vadd.f32 0.0, %v1881
      %v1883 = vpop.f32.mrf.mxu0
      %v1884 = vpop.f32.mrf.mxu0
      %v1885 = vadd.f32 0.0, %v1884
      %v1886 = vpop.f32.mrf.mxu0
      %1887 = vmatprep.mubr.bf16.mxu0 0
      %1888 = vmatmul.mubr.bf16.gmra.mxu0 %v675
      %v1889 = vpop.f32.mrf.mxu0
      %v1890 = vadd.f32 0.0, %v1889
      %v1891 = vpop.f32.mrf.mxu0
      %v1892 = vpop.f32.mrf.mxu0
      %v1893 = vadd.f32 0.0, %v1892
      %v1894 = vpop.f32.mrf.mxu0
      %1895 = vmatprep.mubr.bf16.mxu0 0
      %1896 = vmatmul.mubr.bf16.gmra.mxu0 %v678
      %v1897 = vpop.f32.mrf.mxu0
      %v1898 = vadd.f32 0.0, %v1897
      %v1899 = vpop.f32.mrf.mxu0
      %v1900 = vpop.f32.mrf.mxu0
      %v1901 = vadd.f32 0.0, %v1900
      %v1902 = vpop.f32.mrf.mxu0
      %1903 = vmatprep.mubr.bf16.mxu0 0
      %1904 = vmatmul.mubr.bf16.gmra.mxu0 %v681
      %v1905 = vpop.f32.mrf.mxu0
      %v1906 = vadd.f32 0.0, %v1905
      %v1907 = vpop.f32.mrf.mxu0
      %v1908 = vpop.f32.mrf.mxu0
      %v1909 = vadd.f32 0.0, %v1908
      %v1910 = vpop.f32.mrf.mxu0
      %1911 = vmatprep.mubr.bf16.mxu0 0
      %1912 = vmatmul.mubr.bf16.gmra.mxu0 %v684
      %v1913 = vpop.f32.mrf.mxu0
      %v1914 = vadd.f32 0.0, %v1913
      %v1915 = vpop.f32.mrf.mxu0
      %v1916 = vpop.f32.mrf.mxu0
      %v1917 = vadd.f32 0.0, %v1916
      %v1918 = vpop.f32.mrf.mxu0
      %1919 = vmatprep.mubr.bf16.mxu0 0
      %1920 = vmatmul.mubr.bf16.gmra.mxu0 %v687
      %v1921 = vpop.f32.mrf.mxu0
      %v1922 = vadd.f32 0.0, %v1921
      %v1923 = vpop.f32.mrf.mxu0
      %v1924 = vpop.f32.mrf.mxu0
      %v1925 = vadd.f32 0.0, %v1924
      %v1926 = vpop.f32.mrf.mxu0
      %1927 = vmatprep.mubr.bf16.mxu0 0
      %1928 = vmatmul.mubr.bf16.gmra.mxu0 %v690
      %v1929 = vpop.f32.mrf.mxu0
      %v1930 = vadd.f32 0.0, %v1929
      %v1931 = vpop.f32.mrf.mxu0
      %v1932 = vpop.f32.mrf.mxu0
      %v1933 = vadd.f32 0.0, %v1932
      %v1934 = vpop.f32.mrf.mxu0
      %1935 = vmatprep.mubr.bf16.mxu0 0
      %1936 = vmatmul.mubr.bf16.gmra.mxu0 %v693
      %v1937 = vpop.f32.mrf.mxu0
      %v1938 = vadd.f32 0.0, %v1937
      %v1939 = vpop.f32.mrf.mxu0
      %v1940 = vpop.f32.mrf.mxu0
      %v1941 = vadd.f32 0.0, %v1940
      %v1942 = vpop.f32.mrf.mxu0
      %1943 = vmatprep.mubr.bf16.mxu0 0
      %1944 = vmatmul.mubr.bf16.gmra.mxu0 %v696
      %v1945 = vpop.f32.mrf.mxu0
      %v1946 = vadd.f32 0.0, %v1945
      %v1947 = vpop.f32.mrf.mxu0
      %v1948 = vpop.f32.mrf.mxu0
      %v1949 = vadd.f32 0.0, %v1948
      %v1950 = vpop.f32.mrf.mxu0
      %1951 = vmatprep.mubr.bf16.mxu0 0
      %1952 = vmatmul.mubr.bf16.gmra.mxu0 %v699
      %v1953 = vpop.f32.mrf.mxu0
      %v1954 = vadd.f32 0.0, %v1953
      %v1955 = vpop.f32.mrf.mxu0
      %v1956 = vpop.f32.mrf.mxu0
      %v1957 = vadd.f32 0.0, %v1956
      %v1958 = vpop.f32.mrf.mxu0
      %1959 = vmatprep.mubr.bf16.mxu0 0
      %1960 = vmatmul.mubr.bf16.gmra.mxu0 %v702
      %v1961 = vpop.f32.mrf.mxu0
      %v1962 = vadd.f32 0.0, %v1961
      %v1963 = vpop.f32.mrf.mxu0
      %v1964 = vpop.f32.mrf.mxu0
      %v1965 = vadd.f32 0.0, %v1964
      %v1966 = vpop.f32.mrf.mxu0
      %1967 = vmatprep.mubr.bf16.mxu0 0
      %1968 = vmatmul.mubr.bf16.gmra.mxu0 %v705
      %v1969 = vpop.f32.mrf.mxu0
      %v1970 = vadd.f32 0.0, %v1969
      %v1971 = vpop.f32.mrf.mxu0
      %v1972 = vpop.f32.mrf.mxu0
      %v1973 = vadd.f32 0.0, %v1972
      %v1974 = vpop.f32.mrf.mxu0
      %1975 = vmatprep.mubr.bf16.mxu0 0
      %1976 = vmatmul.mubr.bf16.gmra.mxu0 %v708
      %v1977 = vpop.f32.mrf.mxu0
      %v1978 = vadd.f32 0.0, %v1977
      %v1979 = vpop.f32.mrf.mxu0
      %v1980 = vpop.f32.mrf.mxu0
      %v1981 = vadd.f32 0.0, %v1980
      %v1982 = vpop.f32.mrf.mxu0
      %1983 = vmatprep.mubr.bf16.mxu0 0
      %1984 = vmatmul.mubr.bf16.gmra.mxu0 %v711
      %v1985 = vpop.f32.mrf.mxu0
      %v1986 = vadd.f32 0.0, %v1985
      %v1987 = vpop.f32.mrf.mxu0
      %v1988 = vpop.f32.mrf.mxu0
      %v1989 = vadd.f32 0.0, %v1988
      %v1990 = vpop.f32.mrf.mxu0
      %1991 = vmatprep.mubr.bf16.mxu0 0
      %1992 = vmatmul.mubr.bf16.gmra.mxu0 %v1834
      %v1993 = vpop.f32.mrf.mxu0
      %v1994 = vadd.f32 0.0, %v1993
      %v1995 = vpop.f32.mrf.mxu0
      %v1996 = vpop.f32.mrf.mxu0
      %v1997 = vadd.f32 0.0, %v1996
      %v1998 = vpop.f32.mrf.mxu0
      %1999 = vdwg.mxu0
      %v2000 = vadd.f32 %v1772, %v1874
      %v2001 = vadd.f32 %v1773, %v1877
      %v2002 = vadd.f32 %v1774, %v1882
      %v2003 = vadd.f32 %v1775, %v1885
      %v2004 = vadd.f32 %v1776, %v1890
      %v2005 = vadd.f32 %v1777, %v1893
      %v2006 = vadd.f32 %v1778, %v1898
      %v2007 = vadd.f32 %v1779, %v1901
      %v2008 = vadd.f32 %v1780, %v1906
      %v2009 = vadd.f32 %v1781, %v1909
      %v2010 = vadd.f32 %v1782, %v1914
      %v2011 = vadd.f32 %v1783, %v1917
      %v2012 = vadd.f32 %v1784, %v1922
      %v2013 = vadd.f32 %v1785, %v1925
      %v2014 = vadd.f32 %v1786, %v1930
      %v2015 = vadd.f32 %v1787, %v1933
      %v2016 = vadd.f32 %v1788, %v1938
      %v2017 = vadd.f32 %v1789, %v1941
      %v2018 = vadd.f32 %v1790, %v1946
      %v2019 = vadd.f32 %v1791, %v1949
      %v2020 = vadd.f32 %v1792, %v1954
      %v2021 = vadd.f32 %v1793, %v1957
      %v2022 = vadd.f32 %v1794, %v1962
      %v2023 = vadd.f32 %v1795, %v1965
      %v2024 = vadd.f32 %v1796, %v1970
      %v2025 = vadd.f32 %v1797, %v1973
      %v2026 = vadd.f32 %v1798, %v1978
      %v2027 = vadd.f32 %v1799, %v1981
      %v2028 = vadd.f32 %v1800, %v1986
      %v2029 = vadd.f32 %v1801, %v1989
      %v2030 = vadd.f32 %v1802, %v1994
      %v2031 = vadd.f32 %v1803, %v1997
      %v2033 = vrot.slane %v220, 5
      %v2034 = vrot.slane %v2033, 4
      %v2035 = vrot.slane %v221, 5
      %v2036 = vsel %vm1191, %v2034, %v2035
      %v2037 = vrot.slane %v2035, 4
      %v2038 = vrot.slane %v222, 5
      %v2039 = vsel %vm1191, %v2037, %v2038
      %s2040 = scalar_lea.vmem %s1, 10
      %v2041 = vld [vmem:[%s2040] sm:$0x3]
      %v2042 = vunpack.c.l.b16 %v2036
      %v2043 = vunpack.c.l.b16 %v2039
      %v2044 = vpack.c.b16 %v2043, %v2042
      %v2046 = vsel %vm664, %v2044, 0
      %v2049 = vand.u32 %v2041, %v716
      %2051 = vmatprep.subr.bf16.mxu0 0
      %2052 = vmatpush1.bf16.msra.mxu0 0
      %2053 = vmatprep.subr.bf16.mxu0 0
      %2054 = vmatpush1.bf16.msra.mxu0 0
      %2055 = vmatprep.subr.bf16.mxu0 0
      %2056 = vmatpush1.bf16.msra.mxu0 0
      %2057 = vmatprep.subr.bf16.mxu0 0
      %2058 = vmatpush1.bf16.msra.mxu0 0
      %2059 = vmatprep.subr.bf16.mxu0 0
      %2060 = vmatpush1.bf16.msra.mxu0 0
      %2061 = vmatprep.subr.bf16.mxu0 0
      %2062 = vmatpush1.bf16.msra.mxu0 0
      %2063 = vmatprep.subr.bf16.mxu0 0
      %2064 = vmatpush1.bf16.msra.mxu0 0
      %2065 = vmatprep.subr.bf16.mxu0 0
      %2066 = vmatpush1.bf16.msra.mxu0 %v2049
      %2067 = vmatprep.subr.bf16.mxu0 0
      %2068 = vmatpush2.bf16.msra.mxu0 0
      %2069 = vmatprep.subr.bf16.mxu0 0
      %2070 = vmatpush2.bf16.msra.mxu0 0
      %2071 = vmatprep.subr.bf16.mxu0 0
      %2072 = vmatpush2.bf16.msra.mxu0 0
      %2073 = vmatprep.subr.bf16.mxu0 0
      %2074 = vmatpush2.bf16.msra.mxu0 0
      %2075 = vmatprep.subr.bf16.mxu0 0
      %2076 = vmatpush2.bf16.msra.mxu0 0
      %2077 = vmatprep.subr.bf16.mxu0 0
      %2078 = vmatpush2.bf16.msra.mxu0 0
      %2079 = vmatprep.subr.bf16.mxu0 0
      %2080 = vmatpush2.bf16.msra.mxu0 0
      %2081 = vmatprep.subr.bf16.mxu0 0
      %2082 = vmatpush2.bf16.msra.mxu0 0
      %2083 = vmatprep.mubr.bf16.mxu0 0
      %2084 = vmatmul.mubr.bf16.gmra.mxu0 %v1358
      %v2085 = vpop.f32.mrf.mxu0
      %v2086 = vadd.f32 0.0, %v2085
      %v2087 = vpop.f32.mrf.mxu0
      %v2088 = vpop.f32.mrf.mxu0
      %v2089 = vadd.f32 0.0, %v2088
      %v2090 = vpop.f32.mrf.mxu0
      %2091 = vmatprep.mubr.bf16.mxu0 0
      %2092 = vmatmul.mubr.bf16.gmra.mxu0 %v1361
      %v2093 = vpop.f32.mrf.mxu0
      %v2094 = vadd.f32 0.0, %v2093
      %v2095 = vpop.f32.mrf.mxu0
      %v2096 = vpop.f32.mrf.mxu0
      %v2097 = vadd.f32 0.0, %v2096
      %v2098 = vpop.f32.mrf.mxu0
      %2099 = vmatprep.mubr.bf16.mxu0 0
      %2100 = vmatmul.mubr.bf16.gmra.mxu0 %v1364
      %v2101 = vpop.f32.mrf.mxu0
      %v2102 = vadd.f32 0.0, %v2101
      %v2103 = vpop.f32.mrf.mxu0
      %v2104 = vpop.f32.mrf.mxu0
      %v2105 = vadd.f32 0.0, %v2104
      %v2106 = vpop.f32.mrf.mxu0
      %2107 = vmatprep.mubr.bf16.mxu0 0
      %2108 = vmatmul.mubr.bf16.gmra.mxu0 %v1367
      %v2109 = vpop.f32.mrf.mxu0
      %v2110 = vadd.f32 0.0, %v2109
      %v2111 = vpop.f32.mrf.mxu0
      %v2112 = vpop.f32.mrf.mxu0
      %v2113 = vadd.f32 0.0, %v2112
      %v2114 = vpop.f32.mrf.mxu0
      %2115 = vmatprep.mubr.bf16.mxu0 0
      %2116 = vmatmul.mubr.bf16.gmra.mxu0 %v1370
      %v2117 = vpop.f32.mrf.mxu0
      %v2118 = vadd.f32 0.0, %v2117
      %v2119 = vpop.f32.mrf.mxu0
      %v2120 = vpop.f32.mrf.mxu0
      %v2121 = vadd.f32 0.0, %v2120
      %v2122 = vpop.f32.mrf.mxu0
      %2123 = vmatprep.mubr.bf16.mxu0 0
      %2124 = vmatmul.mubr.bf16.gmra.mxu0 %v1373
      %v2125 = vpop.f32.mrf.mxu0
      %v2126 = vadd.f32 0.0, %v2125
      %v2127 = vpop.f32.mrf.mxu0
      %v2128 = vpop.f32.mrf.mxu0
      %v2129 = vadd.f32 0.0, %v2128
      %v2130 = vpop.f32.mrf.mxu0
      %2131 = vmatprep.mubr.bf16.mxu0 0
      %2132 = vmatmul.mubr.bf16.gmra.mxu0 %v1376
      %v2133 = vpop.f32.mrf.mxu0
      %v2134 = vadd.f32 0.0, %v2133
      %v2135 = vpop.f32.mrf.mxu0
      %v2136 = vpop.f32.mrf.mxu0
      %v2137 = vadd.f32 0.0, %v2136
      %v2138 = vpop.f32.mrf.mxu0
      %2139 = vmatprep.mubr.bf16.mxu0 0
      %2140 = vmatmul.mubr.bf16.gmra.mxu0 %v1379
      %v2141 = vpop.f32.mrf.mxu0
      %v2142 = vadd.f32 0.0, %v2141
      %v2143 = vpop.f32.mrf.mxu0
      %v2144 = vpop.f32.mrf.mxu0
      %v2145 = vadd.f32 0.0, %v2144
      %v2146 = vpop.f32.mrf.mxu0
      %2147 = vmatprep.mubr.bf16.mxu0 0
      %2148 = vmatmul.mubr.bf16.gmra.mxu0 %v1382
      %v2149 = vpop.f32.mrf.mxu0
      %v2150 = vadd.f32 0.0, %v2149
      %v2151 = vpop.f32.mrf.mxu0
      %v2152 = vpop.f32.mrf.mxu0
      %v2153 = vadd.f32 0.0, %v2152
      %v2154 = vpop.f32.mrf.mxu0
      %2155 = vmatprep.mubr.bf16.mxu0 0
      %2156 = vmatmul.mubr.bf16.gmra.mxu0 %v1385
      %v2157 = vpop.f32.mrf.mxu0
      %v2158 = vadd.f32 0.0, %v2157
      %v2159 = vpop.f32.mrf.mxu0
      %v2160 = vpop.f32.mrf.mxu0
      %v2161 = vadd.f32 0.0, %v2160
      %v2162 = vpop.f32.mrf.mxu0
      %2163 = vmatprep.mubr.bf16.mxu0 0
      %2164 = vmatmul.mubr.bf16.gmra.mxu0 %v1388
      %v2165 = vpop.f32.mrf.mxu0
      %v2166 = vadd.f32 0.0, %v2165
      %v2167 = vpop.f32.mrf.mxu0
      %v2168 = vpop.f32.mrf.mxu0
      %v2169 = vadd.f32 0.0, %v2168
      %v2170 = vpop.f32.mrf.mxu0
      %2171 = vmatprep.mubr.bf16.mxu0 0
      %2172 = vmatmul.mubr.bf16.gmra.mxu0 %v1391
      %v2173 = vpop.f32.mrf.mxu0
      %v2174 = vadd.f32 0.0, %v2173
      %v2175 = vpop.f32.mrf.mxu0
      %v2176 = vpop.f32.mrf.mxu0
      %v2177 = vadd.f32 0.0, %v2176
      %v2178 = vpop.f32.mrf.mxu0
      %2179 = vmatprep.mubr.bf16.mxu0 0
      %2180 = vmatmul.mubr.bf16.gmra.mxu0 %v1394
      %v2181 = vpop.f32.mrf.mxu0
      %v2182 = vadd.f32 0.0, %v2181
      %v2183 = vpop.f32.mrf.mxu0
      %v2184 = vpop.f32.mrf.mxu0
      %v2185 = vadd.f32 0.0, %v2184
      %v2186 = vpop.f32.mrf.mxu0
      %2187 = vmatprep.mubr.bf16.mxu0 0
      %2188 = vmatmul.mubr.bf16.gmra.mxu0 %v1397
      %v2189 = vpop.f32.mrf.mxu0
      %v2190 = vadd.f32 0.0, %v2189
      %v2191 = vpop.f32.mrf.mxu0
      %v2192 = vpop.f32.mrf.mxu0
      %v2193 = vadd.f32 0.0, %v2192
      %v2194 = vpop.f32.mrf.mxu0
      %2195 = vmatprep.mubr.bf16.mxu0 0
      %2196 = vmatmul.mubr.bf16.gmra.mxu0 %v1400
      %v2197 = vpop.f32.mrf.mxu0
      %v2198 = vadd.f32 0.0, %v2197
      %v2199 = vpop.f32.mrf.mxu0
      %v2200 = vpop.f32.mrf.mxu0
      %v2201 = vadd.f32 0.0, %v2200
      %v2202 = vpop.f32.mrf.mxu0
      %2203 = vmatprep.mubr.bf16.mxu0 0
      %2204 = vmatmul.mubr.bf16.gmra.mxu0 %v2046
      %v2205 = vpop.f32.mrf.mxu0
      %v2206 = vadd.f32 0.0, %v2205
      %v2207 = vpop.f32.mrf.mxu0
      %v2208 = vpop.f32.mrf.mxu0
      %v2209 = vadd.f32 0.0, %v2208
      %v2210 = vpop.f32.mrf.mxu0
      %2211 = vdwg.mxu0
      %v2212 = vadd.f32 %v2000, %v2086
      %v2213 = vadd.f32 %v2001, %v2089
      %v2214 = vadd.f32 %v2002, %v2094
      %v2215 = vadd.f32 %v2003, %v2097
      %v2216 = vadd.f32 %v2004, %v2102
      %v2217 = vadd.f32 %v2005, %v2105
      %v2218 = vadd.f32 %v2006, %v2110
      %v2219 = vadd.f32 %v2007, %v2113
      %v2220 = vadd.f32 %v2008, %v2118
      %v2221 = vadd.f32 %v2009, %v2121
      %v2222 = vadd.f32 %v2010, %v2126
      %v2223 = vadd.f32 %v2011, %v2129
      %v2224 = vadd.f32 %v2012, %v2134
      %v2225 = vadd.f32 %v2013, %v2137
      %v2226 = vadd.f32 %v2014, %v2142
      %v2227 = vadd.f32 %v2015, %v2145
      %v2228 = vadd.f32 %v2016, %v2150
      %v2229 = vadd.f32 %v2017, %v2153
      %v2230 = vadd.f32 %v2018, %v2158
      %v2231 = vadd.f32 %v2019, %v2161
      %v2232 = vadd.f32 %v2020, %v2166
      %v2233 = vadd.f32 %v2021, %v2169
      %v2234 = vadd.f32 %v2022, %v2174
      %v2235 = vadd.f32 %v2023, %v2177
      %v2236 = vadd.f32 %v2024, %v2182
      %v2237 = vadd.f32 %v2025, %v2185
      %v2238 = vadd.f32 %v2026, %v2190
      %v2239 = vadd.f32 %v2027, %v2193
      %v2240 = vadd.f32 %v2028, %v2198
      %v2241 = vadd.f32 %v2029, %v2201
      %v2242 = vadd.f32 %v2030, %v2206
      %v2243 = vadd.f32 %v2031, %v2209
      %s2244 = scalar_lea.vmem %s1, 12
      %v2245 = vld [vmem:[%s2244] sm:$0x3]
      %v2248 = vunpack.c.l.b16 %v223
      %v2249 = vunpack.c.l.b16 %v224
      %v2250 = vpack.c.b16 %v2249, %v2248
      %v2252 = vsel %vm664, %v2250, 0
      %v2255 = vand.u32 %v2245, %v716
      %2257 = vmatprep.subr.bf16.mxu0 0
      %2258 = vmatpush1.bf16.msra.mxu0 0
      %2259 = vmatprep.subr.bf16.mxu0 0
      %2260 = vmatpush1.bf16.msra.mxu0 0
      %2261 = vmatprep.subr.bf16.mxu0 0
      %2262 = vmatpush1.bf16.msra.mxu0 0
      %2263 = vmatprep.subr.bf16.mxu0 0
      %2264 = vmatpush1.bf16.msra.mxu0 0
      %2265 = vmatprep.subr.bf16.mxu0 0
      %2266 = vmatpush1.bf16.msra.mxu0 0
      %2267 = vmatprep.subr.bf16.mxu0 0
      %2268 = vmatpush1.bf16.msra.mxu0 0
      %2269 = vmatprep.subr.bf16.mxu0 0
      %2270 = vmatpush1.bf16.msra.mxu0 0
      %2271 = vmatprep.subr.bf16.mxu0 0
      %2272 = vmatpush1.bf16.msra.mxu0 %v2255
      %2273 = vmatprep.subr.bf16.mxu0 0
      %2274 = vmatpush2.bf16.msra.mxu0 0
      %2275 = vmatprep.subr.bf16.mxu0 0
      %2276 = vmatpush2.bf16.msra.mxu0 0
      %2277 = vmatprep.subr.bf16.mxu0 0
      %2278 = vmatpush2.bf16.msra.mxu0 0
      %2279 = vmatprep.subr.bf16.mxu0 0
      %2280 = vmatpush2.bf16.msra.mxu0 0
      %2281 = vmatprep.subr.bf16.mxu0 0
      %2282 = vmatpush2.bf16.msra.mxu0 0
      %2283 = vmatprep.subr.bf16.mxu0 0
      %2284 = vmatpush2.bf16.msra.mxu0 0
      %2285 = vmatprep.subr.bf16.mxu0 0
      %2286 = vmatpush2.bf16.msra.mxu0 0
      %2287 = vmatprep.subr.bf16.mxu0 0
      %2288 = vmatpush2.bf16.msra.mxu0 0
      %2289 = vmatprep.mubr.bf16.mxu0 0
      %2290 = vmatmul.mubr.bf16.gmra.mxu0 %v968
      %v2291 = vpop.f32.mrf.mxu0
      %v2292 = vadd.f32 0.0, %v2291
      %v2293 = vpop.f32.mrf.mxu0
      %v2294 = vpop.f32.mrf.mxu0
      %v2295 = vadd.f32 0.0, %v2294
      %v2296 = vpop.f32.mrf.mxu0
      %2297 = vmatprep.mubr.bf16.mxu0 0
      %2298 = vmatmul.mubr.bf16.gmra.mxu0 %v971
      %v2299 = vpop.f32.mrf.mxu0
      %v2300 = vadd.f32 0.0, %v2299
      %v2301 = vpop.f32.mrf.mxu0
      %v2302 = vpop.f32.mrf.mxu0
      %v2303 = vadd.f32 0.0, %v2302
      %v2304 = vpop.f32.mrf.mxu0
      %2305 = vmatprep.mubr.bf16.mxu0 0
      %2306 = vmatmul.mubr.bf16.gmra.mxu0 %v974
      %v2307 = vpop.f32.mrf.mxu0
      %v2308 = vadd.f32 0.0, %v2307
      %v2309 = vpop.f32.mrf.mxu0
      %v2310 = vpop.f32.mrf.mxu0
      %v2311 = vadd.f32 0.0, %v2310
      %v2312 = vpop.f32.mrf.mxu0
      %2313 = vmatprep.mubr.bf16.mxu0 0
      %2314 = vmatmul.mubr.bf16.gmra.mxu0 %v977
      %v2315 = vpop.f32.mrf.mxu0
      %v2316 = vadd.f32 0.0, %v2315
      %v2317 = vpop.f32.mrf.mxu0
      %v2318 = vpop.f32.mrf.mxu0
      %v2319 = vadd.f32 0.0, %v2318
      %v2320 = vpop.f32.mrf.mxu0
      %2321 = vmatprep.mubr.bf16.mxu0 0
      %2322 = vmatmul.mubr.bf16.gmra.mxu0 %v980
      %v2323 = vpop.f32.mrf.mxu0
      %v2324 = vadd.f32 0.0, %v2323
      %v2325 = vpop.f32.mrf.mxu0
      %v2326 = vpop.f32.mrf.mxu0
      %v2327 = vadd.f32 0.0, %v2326
      %v2328 = vpop.f32.mrf.mxu0
      %2329 = vmatprep.mubr.bf16.mxu0 0
      %2330 = vmatmul.mubr.bf16.gmra.mxu0 %v983
      %v2331 = vpop.f32.mrf.mxu0
      %v2332 = vadd.f32 0.0, %v2331
      %v2333 = vpop.f32.mrf.mxu0
      %v2334 = vpop.f32.mrf.mxu0
      %v2335 = vadd.f32 0.0, %v2334
      %v2336 = vpop.f32.mrf.mxu0
      %2337 = vmatprep.mubr.bf16.mxu0 0
      %2338 = vmatmul.mubr.bf16.gmra.mxu0 %v986
      %v2339 = vpop.f32.mrf.mxu0
      %v2340 = vadd.f32 0.0, %v2339
      %v2341 = vpop.f32.mrf.mxu0
      %v2342 = vpop.f32.mrf.mxu0
      %v2343 = vadd.f32 0.0, %v2342
      %v2344 = vpop.f32.mrf.mxu0
      %2345 = vmatprep.mubr.bf16.mxu0 0
      %2346 = vmatmul.mubr.bf16.gmra.mxu0 %v989
      %v2347 = vpop.f32.mrf.mxu0
      %v2348 = vadd.f32 0.0, %v2347
      %v2349 = vpop.f32.mrf.mxu0
      %v2350 = vpop.f32.mrf.mxu0
      %v2351 = vadd.f32 0.0, %v2350
      %v2352 = vpop.f32.mrf.mxu0
      %2353 = vmatprep.mubr.bf16.mxu0 0
      %2354 = vmatmul.mubr.bf16.gmra.mxu0 %v992
      %v2355 = vpop.f32.mrf.mxu0
      %v2356 = vadd.f32 0.0, %v2355
      %v2357 = vpop.f32.mrf.mxu0
      %v2358 = vpop.f32.mrf.mxu0
      %v2359 = vadd.f32 0.0, %v2358
      %v2360 = vpop.f32.mrf.mxu0
      %2361 = vmatprep.mubr.bf16.mxu0 0
      %2362 = vmatmul.mubr.bf16.gmra.mxu0 %v995
      %v2363 = vpop.f32.mrf.mxu0
      %v2364 = vadd.f32 0.0, %v2363
      %v2365 = vpop.f32.mrf.mxu0
      %v2366 = vpop.f32.mrf.mxu0
      %v2367 = vadd.f32 0.0, %v2366
      %v2368 = vpop.f32.mrf.mxu0
      %2369 = vmatprep.mubr.bf16.mxu0 0
      %2370 = vmatmul.mubr.bf16.gmra.mxu0 %v998
      %v2371 = vpop.f32.mrf.mxu0
      %v2372 = vadd.f32 0.0, %v2371
      %v2373 = vpop.f32.mrf.mxu0
      %v2374 = vpop.f32.mrf.mxu0
      %v2375 = vadd.f32 0.0, %v2374
      %v2376 = vpop.f32.mrf.mxu0
      %2377 = vmatprep.mubr.bf16.mxu0 0
      %2378 = vmatmul.mubr.bf16.gmra.mxu0 %v1001
      %v2379 = vpop.f32.mrf.mxu0
      %v2380 = vadd.f32 0.0, %v2379
      %v2381 = vpop.f32.mrf.mxu0
      %v2382 = vpop.f32.mrf.mxu0
      %v2383 = vadd.f32 0.0, %v2382
      %v2384 = vpop.f32.mrf.mxu0
      %2385 = vmatprep.mubr.bf16.mxu0 0
      %2386 = vmatmul.mubr.bf16.gmra.mxu0 %v1004
      %v2387 = vpop.f32.mrf.mxu0
      %v2388 = vadd.f32 0.0, %v2387
      %v2389 = vpop.f32.mrf.mxu0
      %v2390 = vpop.f32.mrf.mxu0
      %v2391 = vadd.f32 0.0, %v2390
      %v2392 = vpop.f32.mrf.mxu0
      %2393 = vmatprep.mubr.bf16.mxu0 0
      %2394 = vmatmul.mubr.bf16.gmra.mxu0 %v1007
      %v2395 = vpop.f32.mrf.mxu0
      %v2396 = vadd.f32 0.0, %v2395
      %v2397 = vpop.f32.mrf.mxu0
      %v2398 = vpop.f32.mrf.mxu0
      %v2399 = vadd.f32 0.0, %v2398
      %v2400 = vpop.f32.mrf.mxu0
      %2401 = vmatprep.mubr.bf16.mxu0 0
      %2402 = vmatmul.mubr.bf16.gmra.mxu0 %v1606
      %v2403 = vpop.f32.mrf.mxu0
      %v2404 = vadd.f32 0.0, %v2403
      %v2405 = vpop.f32.mrf.mxu0
      %v2406 = vpop.f32.mrf.mxu0
      %v2407 = vadd.f32 0.0, %v2406
      %v2408 = vpop.f32.mrf.mxu0
      %2409 = vmatprep.mubr.bf16.mxu0 0
      %2410 = vmatmul.mubr.bf16.gmra.mxu0 %v2252
      %v2411 = vpop.f32.mrf.mxu0
      %v2412 = vadd.f32 0.0, %v2411
      %v2413 = vpop.f32.mrf.mxu0
      %v2414 = vpop.f32.mrf.mxu0
      %v2415 = vadd.f32 0.0, %v2414
      %v2416 = vpop.f32.mrf.mxu0
      %2417 = vdwg.mxu0
      %v2418 = vadd.f32 %v2212, %v2292
      %v2419 = vadd.f32 %v2213, %v2295
      %v2420 = vadd.f32 %v2214, %v2300
      %v2421 = vadd.f32 %v2215, %v2303
      %v2422 = vadd.f32 %v2216, %v2308
      %v2423 = vadd.f32 %v2217, %v2311
      %v2424 = vadd.f32 %v2218, %v2316
      %v2425 = vadd.f32 %v2219, %v2319
      %v2426 = vadd.f32 %v2220, %v2324
      %v2427 = vadd.f32 %v2221, %v2327
      %v2428 = vadd.f32 %v2222, %v2332
      %v2429 = vadd.f32 %v2223, %v2335
      %v2430 = vadd.f32 %v2224, %v2340
      %v2431 = vadd.f32 %v2225, %v2343
      %v2432 = vadd.f32 %v2226, %v2348
      %v2433 = vadd.f32 %v2227, %v2351
      %v2434 = vadd.f32 %v2228, %v2356
      %v2435 = vadd.f32 %v2229, %v2359
      %v2436 = vadd.f32 %v2230, %v2364
      %v2437 = vadd.f32 %v2231, %v2367
      %v2438 = vadd.f32 %v2232, %v2372
      %v2439 = vadd.f32 %v2233, %v2375
      %v2440 = vadd.f32 %v2234, %v2380
      %v2441 = vadd.f32 %v2235, %v2383
      %v2442 = vadd.f32 %v2236, %v2388
      %v2443 = vadd.f32 %v2237, %v2391
      %v2444 = vadd.f32 %v2238, %v2396
      %v2445 = vadd.f32 %v2239, %v2399
      %v2446 = vadd.f32 %v2240, %v2404
      %v2447 = vadd.f32 %v2241, %v2407
      %v2448 = vadd.f32 %v2242, %v2412
      %v2449 = vadd.f32 %v2243, %v2415
      %v2451 = vshrl.u32 %v223, 16
      %v2453 = vrot.slane %v2451, 4
      %v2454 = vshll.u32 %v223, 16
      %v2456 = vrot.slane %v2454, 5
      %v2457 = vor.u32 %v2453, %v2456
      %v2458 = vrot.slane %v2457, 4
      %v2460 = vshll.u32 %v224, 16
      %v2462 = vrot.slane %v2460, 5
      %v2463 = vsel %vm229, %v2458, %v2462
      %v2464 = vshrl.u32 %v224, 16
      %v2466 = vrot.slane %v2464, 4
      %v2467 = vor.u32 %v2466, %v2462
      %v2468 = vrot.slane %v2467, 4
      %v2470 = vshll.u32 %v225, 16
      %v2472 = vrot.slane %v2470, 5
      %v2473 = vsel %vm229, %v2468, %v2472
      %s2474 = scalar_lea.vmem %s1, 14
      %v2475 = vld [vmem:[%s2474] sm:$0x3]
      %v2476 = vunpack.c.l.b16 %v2463
      %v2477 = vunpack.c.l.b16 %v2473
      %v2478 = vpack.c.b16 %v2477, %v2476
      %v2480 = vsel %vm664, %v2478, 0
      %v2483 = vand.u32 %v2475, %v716
      %2485 = vmatprep.subr.bf16.mxu0 0
      %2486 = vmatpush1.bf16.msra.mxu0 0
      %2487 = vmatprep.subr.bf16.mxu0 0
      %2488 = vmatpush1.bf16.msra.mxu0 0
      %2489 = vmatprep.subr.bf16.mxu0 0
      %2490 = vmatpush1.bf16.msra.mxu0 0
      %2491 = vmatprep.subr.bf16.mxu0 0
      %2492 = vmatpush1.bf16.msra.mxu0 0
      %2493 = vmatprep.subr.bf16.mxu0 0
      %2494 = vmatpush1.bf16.msra.mxu0 0
      %2495 = vmatprep.subr.bf16.mxu0 0
      %2496 = vmatpush1.bf16.msra.mxu0 0
      %2497 = vmatprep.subr.bf16.mxu0 0
      %2498 = vmatpush1.bf16.msra.mxu0 0
      %2499 = vmatprep.subr.bf16.mxu0 0
      %2500 = vmatpush1.bf16.msra.mxu0 %v2483
      %2501 = vmatprep.subr.bf16.mxu0 0
      %2502 = vmatpush2.bf16.msra.mxu0 0
      %2503 = vmatprep.subr.bf16.mxu0 0
      %2504 = vmatpush2.bf16.msra.mxu0 0
      %2505 = vmatprep.subr.bf16.mxu0 0
      %2506 = vmatpush2.bf16.msra.mxu0 0
      %2507 = vmatprep.subr.bf16.mxu0 0
      %2508 = vmatpush2.bf16.msra.mxu0 0
      %2509 = vmatprep.subr.bf16.mxu0 0
      %2510 = vmatpush2.bf16.msra.mxu0 0
      %2511 = vmatprep.subr.bf16.mxu0 0
      %2512 = vmatpush2.bf16.msra.mxu0 0
      %2513 = vmatprep.subr.bf16.mxu0 0
      %2514 = vmatpush2.bf16.msra.mxu0 0
      %2515 = vmatprep.subr.bf16.mxu0 0
      %2516 = vmatpush2.bf16.msra.mxu0 0
      %2517 = vmatprep.mubr.bf16.mxu0 0
      %2518 = vmatmul.mubr.bf16.gmra.mxu0 %v672
      %v2519 = vpop.f32.mrf.mxu0
      %v2520 = vadd.f32 0.0, %v2519
      %v2521 = vpop.f32.mrf.mxu0
      %v2522 = vpop.f32.mrf.mxu0
      %v2523 = vadd.f32 0.0, %v2522
      %v2524 = vpop.f32.mrf.mxu0
      %2525 = vmatprep.mubr.bf16.mxu0 0
      %2526 = vmatmul.mubr.bf16.gmra.mxu0 %v675
      %v2527 = vpop.f32.mrf.mxu0
      %v2528 = vadd.f32 0.0, %v2527
      %v2529 = vpop.f32.mrf.mxu0
      %v2530 = vpop.f32.mrf.mxu0
      %v2531 = vadd.f32 0.0, %v2530
      %v2532 = vpop.f32.mrf.mxu0
      %2533 = vmatprep.mubr.bf16.mxu0 0
      %2534 = vmatmul.mubr.bf16.gmra.mxu0 %v678
      %v2535 = vpop.f32.mrf.mxu0
      %v2536 = vadd.f32 0.0, %v2535
      %v2537 = vpop.f32.mrf.mxu0
      %v2538 = vpop.f32.mrf.mxu0
      %v2539 = vadd.f32 0.0, %v2538
      %v2540 = vpop.f32.mrf.mxu0
      %2541 = vmatprep.mubr.bf16.mxu0 0
      %2542 = vmatmul.mubr.bf16.gmra.mxu0 %v681
      %v2543 = vpop.f32.mrf.mxu0
      %v2544 = vadd.f32 0.0, %v2543
      %v2545 = vpop.f32.mrf.mxu0
      %v2546 = vpop.f32.mrf.mxu0
      %v2547 = vadd.f32 0.0, %v2546
      %v2548 = vpop.f32.mrf.mxu0
      %2549 = vmatprep.mubr.bf16.mxu0 0
      %2550 = vmatmul.mubr.bf16.gmra.mxu0 %v684
      %v2551 = vpop.f32.mrf.mxu0
      %v2552 = vadd.f32 0.0, %v2551
      %v2553 = vpop.f32.mrf.mxu0
      %v2554 = vpop.f32.mrf.mxu0
      %v2555 = vadd.f32 0.0, %v2554
      %v2556 = vpop.f32.mrf.mxu0
      %2557 = vmatprep.mubr.bf16.mxu0 0
      %2558 = vmatmul.mubr.bf16.gmra.mxu0 %v687
      %v2559 = vpop.f32.mrf.mxu0
      %v2560 = vadd.f32 0.0, %v2559
      %v2561 = vpop.f32.mrf.mxu0
      %v2562 = vpop.f32.mrf.mxu0
      %v2563 = vadd.f32 0.0, %v2562
      %v2564 = vpop.f32.mrf.mxu0
      %2565 = vmatprep.mubr.bf16.mxu0 0
      %2566 = vmatmul.mubr.bf16.gmra.mxu0 %v690
      %v2567 = vpop.f32.mrf.mxu0
      %v2568 = vadd.f32 0.0, %v2567
      %v2569 = vpop.f32.mrf.mxu0
      %v2570 = vpop.f32.mrf.mxu0
      %v2571 = vadd.f32 0.0, %v2570
      %v2572 = vpop.f32.mrf.mxu0
      %2573 = vmatprep.mubr.bf16.mxu0 0
      %2574 = vmatmul.mubr.bf16.gmra.mxu0 %v693
      %v2575 = vpop.f32.mrf.mxu0
      %v2576 = vadd.f32 0.0, %v2575
      %v2577 = vpop.f32.mrf.mxu0
      %v2578 = vpop.f32.mrf.mxu0
      %v2579 = vadd.f32 0.0, %v2578
      %v2580 = vpop.f32.mrf.mxu0
      %2581 = vmatprep.mubr.bf16.mxu0 0
      %2582 = vmatmul.mubr.bf16.gmra.mxu0 %v696
      %v2583 = vpop.f32.mrf.mxu0
      %v2584 = vadd.f32 0.0, %v2583
      %v2585 = vpop.f32.mrf.mxu0
      %v2586 = vpop.f32.mrf.mxu0
      %v2587 = vadd.f32 0.0, %v2586
      %v2588 = vpop.f32.mrf.mxu0
      %2589 = vmatprep.mubr.bf16.mxu0 0
      %2590 = vmatmul.mubr.bf16.gmra.mxu0 %v699
      %v2591 = vpop.f32.mrf.mxu0
      %v2592 = vadd.f32 0.0, %v2591
      %v2593 = vpop.f32.mrf.mxu0
      %v2594 = vpop.f32.mrf.mxu0
      %v2595 = vadd.f32 0.0, %v2594
      %v2596 = vpop.f32.mrf.mxu0
      %2597 = vmatprep.mubr.bf16.mxu0 0
      %2598 = vmatmul.mubr.bf16.gmra.mxu0 %v702
      %v2599 = vpop.f32.mrf.mxu0
      %v2600 = vadd.f32 0.0, %v2599
      %v2601 = vpop.f32.mrf.mxu0
      %v2602 = vpop.f32.mrf.mxu0
      %v2603 = vadd.f32 0.0, %v2602
      %v2604 = vpop.f32.mrf.mxu0
      %2605 = vmatprep.mubr.bf16.mxu0 0
      %2606 = vmatmul.mubr.bf16.gmra.mxu0 %v705
      %v2607 = vpop.f32.mrf.mxu0
      %v2608 = vadd.f32 0.0, %v2607
      %v2609 = vpop.f32.mrf.mxu0
      %v2610 = vpop.f32.mrf.mxu0
      %v2611 = vadd.f32 0.0, %v2610
      %v2612 = vpop.f32.mrf.mxu0
      %2613 = vmatprep.mubr.bf16.mxu0 0
      %2614 = vmatmul.mubr.bf16.gmra.mxu0 %v708
      %v2615 = vpop.f32.mrf.mxu0
      %v2616 = vadd.f32 0.0, %v2615
      %v2617 = vpop.f32.mrf.mxu0
      %v2618 = vpop.f32.mrf.mxu0
      %v2619 = vadd.f32 0.0, %v2618
      %v2620 = vpop.f32.mrf.mxu0
      %2621 = vmatprep.mubr.bf16.mxu0 0
      %2622 = vmatmul.mubr.bf16.gmra.mxu0 %v711
      %v2623 = vpop.f32.mrf.mxu0
      %v2624 = vadd.f32 0.0, %v2623
      %v2625 = vpop.f32.mrf.mxu0
      %v2626 = vpop.f32.mrf.mxu0
      %v2627 = vadd.f32 0.0, %v2626
      %v2628 = vpop.f32.mrf.mxu0
      %2629 = vmatprep.mubr.bf16.mxu0 0
      %2630 = vmatmul.mubr.bf16.gmra.mxu0 %v1834
      %v2631 = vpop.f32.mrf.mxu0
      %v2632 = vadd.f32 0.0, %v2631
      %v2633 = vpop.f32.mrf.mxu0
      %v2634 = vpop.f32.mrf.mxu0
      %v2635 = vadd.f32 0.0, %v2634
      %v2636 = vpop.f32.mrf.mxu0
      %2637 = vmatprep.mubr.bf16.mxu0 0
      %2638 = vmatmul.mubr.bf16.gmra.mxu0 %v2480
      %v2639 = vpop.f32.mrf.mxu0
      %v2640 = vadd.f32 0.0, %v2639
      %v2641 = vpop.f32.mrf.mxu0
      %v2642 = vpop.f32.mrf.mxu0
      %v2643 = vadd.f32 0.0, %v2642
      %v2644 = vpop.f32.mrf.mxu0
      %2645 = vdwg.mxu0
      %v2646 = vadd.f32 %v2418, %v2520
      %v2647 = vadd.f32 %v2419, %v2523
      %v2648 = vadd.f32 %v2420, %v2528
      %v2649 = vadd.f32 %v2421, %v2531
      %v2650 = vadd.f32 %v2422, %v2536
      %v2651 = vadd.f32 %v2423, %v2539
      %v2652 = vadd.f32 %v2424, %v2544
      %v2653 = vadd.f32 %v2425, %v2547
      %v2654 = vadd.f32 %v2426, %v2552
      %v2655 = vadd.f32 %v2427, %v2555
      %v2656 = vadd.f32 %v2428, %v2560
      %v2657 = vadd.f32 %v2429, %v2563
      %v2658 = vadd.f32 %v2430, %v2568
      %v2659 = vadd.f32 %v2431, %v2571
      %v2660 = vadd.f32 %v2432, %v2576
      %v2661 = vadd.f32 %v2433, %v2579
      %v2662 = vadd.f32 %v2434, %v2584
      %v2663 = vadd.f32 %v2435, %v2587
      %v2664 = vadd.f32 %v2436, %v2592
      %v2665 = vadd.f32 %v2437, %v2595
      %v2666 = vadd.f32 %v2438, %v2600
      %v2667 = vadd.f32 %v2439, %v2603
      %v2668 = vadd.f32 %v2440, %v2608
      %v2669 = vadd.f32 %v2441, %v2611
      %v2670 = vadd.f32 %v2442, %v2616
      %v2671 = vadd.f32 %v2443, %v2619
      %v2672 = vadd.f32 %v2444, %v2624
      %v2673 = vadd.f32 %v2445, %v2627
      %v2674 = vadd.f32 %v2446, %v2632
      %v2675 = vadd.f32 %v2447, %v2635
      %v2676 = vadd.f32 %v2448, %v2640
      %v2677 = vadd.f32 %v2449, %v2643
      %v2679 = vrot.slane %v223, 5
      %v2680 = vrot.slane %v2679, 4
      %v2681 = vrot.slane %v224, 5
      %v2682 = vsel %vm1191, %v2680, %v2681
      %v2683 = vrot.slane %v2681, 4
      %v2684 = vrot.slane %v225, 5
      %v2685 = vsel %vm1191, %v2683, %v2684
      %s2686 = scalar_lea.vmem %s1, 16
      %v2687 = vld [vmem:[%s2686] sm:$0x3]
      %v2688 = vunpack.c.l.b16 %v2682
      %v2689 = vunpack.c.l.b16 %v2685
      %v2690 = vpack.c.b16 %v2689, %v2688
      %v2692 = vsel %vm664, %v2690, 0
      %v2695 = vand.u32 %v2687, %v716
      %2697 = vmatprep.subr.bf16.mxu0 0
      %2698 = vmatpush1.bf16.msra.mxu0 0
      %2699 = vmatprep.subr.bf16.mxu0 0
      %2700 = vmatpush1.bf16.msra.mxu0 0
      %2701 = vmatprep.subr.bf16.mxu0 0
      %2702 = vmatpush1.bf16.msra.mxu0 0
      %2703 = vmatprep.subr.bf16.mxu0 0
      %2704 = vmatpush1.bf16.msra.mxu0 0
      %2705 = vmatprep.subr.bf16.mxu0 0
      %2706 = vmatpush1.bf16.msra.mxu0 0
      %2707 = vmatprep.subr.bf16.mxu0 0
      %2708 = vmatpush1.bf16.msra.mxu0 0
      %2709 = vmatprep.subr.bf16.mxu0 0
      %2710 = vmatpush1.bf16.msra.mxu0 0
      %2711 = vmatprep.subr.bf16.mxu0 0
      %2712 = vmatpush1.bf16.msra.mxu0 %v2695
      %2713 = vmatprep.subr.bf16.mxu0 0
      %2714 = vmatpush2.bf16.msra.mxu0 0
      %2715 = vmatprep.subr.bf16.mxu0 0
      %2716 = vmatpush2.bf16.msra.mxu0 0
      %2717 = vmatprep.subr.bf16.mxu0 0
      %2718 = vmatpush2.bf16.msra.mxu0 0
      %2719 = vmatprep.subr.bf16.mxu0 0
      %2720 = vmatpush2.bf16.msra.mxu0 0
      %2721 = vmatprep.subr.bf16.mxu0 0
      %2722 = vmatpush2.bf16.msra.mxu0 0
      %2723 = vmatprep.subr.bf16.mxu0 0
      %2724 = vmatpush2.bf16.msra.mxu0 0
      %2725 = vmatprep.subr.bf16.mxu0 0
      %2726 = vmatpush2.bf16.msra.mxu0 0
      %2727 = vmatprep.subr.bf16.mxu0 0
      %2728 = vmatpush2.bf16.msra.mxu0 0
      %2729 = vmatprep.mubr.bf16.mxu0 0
      %2730 = vmatmul.mubr.bf16.gmra.mxu0 %v1361
      %v2731 = vpop.f32.mrf.mxu0
      %v2732 = vadd.f32 0.0, %v2731
      %v2733 = vpop.f32.mrf.mxu0
      %v2734 = vpop.f32.mrf.mxu0
      %v2735 = vadd.f32 0.0, %v2734
      %v2736 = vpop.f32.mrf.mxu0
      %2737 = vmatprep.mubr.bf16.mxu0 0
      %2738 = vmatmul.mubr.bf16.gmra.mxu0 %v1364
      %v2739 = vpop.f32.mrf.mxu0
      %v2740 = vadd.f32 0.0, %v2739
      %v2741 = vpop.f32.mrf.mxu0
      %v2742 = vpop.f32.mrf.mxu0
      %v2743 = vadd.f32 0.0, %v2742
      %v2744 = vpop.f32.mrf.mxu0
      %2745 = vmatprep.mubr.bf16.mxu0 0
      %2746 = vmatmul.mubr.bf16.gmra.mxu0 %v1367
      %v2747 = vpop.f32.mrf.mxu0
      %v2748 = vadd.f32 0.0, %v2747
      %v2749 = vpop.f32.mrf.mxu0
      %v2750 = vpop.f32.mrf.mxu0
      %v2751 = vadd.f32 0.0, %v2750
      %v2752 = vpop.f32.mrf.mxu0
      %2753 = vmatprep.mubr.bf16.mxu0 0
      %2754 = vmatmul.mubr.bf16.gmra.mxu0 %v1370
      %v2755 = vpop.f32.mrf.mxu0
      %v2756 = vadd.f32 0.0, %v2755
      %v2757 = vpop.f32.mrf.mxu0
      %v2758 = vpop.f32.mrf.mxu0
      %v2759 = vadd.f32 0.0, %v2758
      %v2760 = vpop.f32.mrf.mxu0
      %2761 = vmatprep.mubr.bf16.mxu0 0
      %2762 = vmatmul.mubr.bf16.gmra.mxu0 %v1373
      %v2763 = vpop.f32.mrf.mxu0
      %v2764 = vadd.f32 0.0, %v2763
      %v2765 = vpop.f32.mrf.mxu0
      %v2766 = vpop.f32.mrf.mxu0
      %v2767 = vadd.f32 0.0, %v2766
      %v2768 = vpop.f32.mrf.mxu0
      %2769 = vmatprep.mubr.bf16.mxu0 0
      %2770 = vmatmul.mubr.bf16.gmra.mxu0 %v1376
      %v2771 = vpop.f32.mrf.mxu0
      %v2772 = vadd.f32 0.0, %v2771
      %v2773 = vpop.f32.mrf.mxu0
      %v2774 = vpop.f32.mrf.mxu0
      %v2775 = vadd.f32 0.0, %v2774
      %v2776 = vpop.f32.mrf.mxu0
      %2777 = vmatprep.mubr.bf16.mxu0 0
      %2778 = vmatmul.mubr.bf16.gmra.mxu0 %v1379
      %v2779 = vpop.f32.mrf.mxu0
      %v2780 = vadd.f32 0.0, %v2779
      %v2781 = vpop.f32.mrf.mxu0
      %v2782 = vpop.f32.mrf.mxu0
      %v2783 = vadd.f32 0.0, %v2782
      %v2784 = vpop.f32.mrf.mxu0
      %2785 = vmatprep.mubr.bf16.mxu0 0
      %2786 = vmatmul.mubr.bf16.gmra.mxu0 %v1382
      %v2787 = vpop.f32.mrf.mxu0
      %v2788 = vadd.f32 0.0, %v2787
      %v2789 = vpop.f32.mrf.mxu0
      %v2790 = vpop.f32.mrf.mxu0
      %v2791 = vadd.f32 0.0, %v2790
      %v2792 = vpop.f32.mrf.mxu0
      %2793 = vmatprep.mubr.bf16.mxu0 0
      %2794 = vmatmul.mubr.bf16.gmra.mxu0 %v1385
      %v2795 = vpop.f32.mrf.mxu0
      %v2796 = vadd.f32 0.0, %v2795
      %v2797 = vpop.f32.mrf.mxu0
      %v2798 = vpop.f32.mrf.mxu0
      %v2799 = vadd.f32 0.0, %v2798
      %v2800 = vpop.f32.mrf.mxu0
      %2801 = vmatprep.mubr.bf16.mxu0 0
      %2802 = vmatmul.mubr.bf16.gmra.mxu0 %v1388
      %v2803 = vpop.f32.mrf.mxu0
      %v2804 = vadd.f32 0.0, %v2803
      %v2805 = vpop.f32.mrf.mxu0
      %v2806 = vpop.f32.mrf.mxu0
      %v2807 = vadd.f32 0.0, %v2806
      %v2808 = vpop.f32.mrf.mxu0
      %2809 = vmatprep.mubr.bf16.mxu0 0
      %2810 = vmatmul.mubr.bf16.gmra.mxu0 %v1391
      %v2811 = vpop.f32.mrf.mxu0
      %v2812 = vadd.f32 0.0, %v2811
      %v2813 = vpop.f32.mrf.mxu0
      %v2814 = vpop.f32.mrf.mxu0
      %v2815 = vadd.f32 0.0, %v2814
      %v2816 = vpop.f32.mrf.mxu0
      %2817 = vmatprep.mubr.bf16.mxu0 0
      %2818 = vmatmul.mubr.bf16.gmra.mxu0 %v1394
      %v2819 = vpop.f32.mrf.mxu0
      %v2820 = vadd.f32 0.0, %v2819
      %v2821 = vpop.f32.mrf.mxu0
      %v2822 = vpop.f32.mrf.mxu0
      %v2823 = vadd.f32 0.0, %v2822
      %v2824 = vpop.f32.mrf.mxu0
      %2825 = vmatprep.mubr.bf16.mxu0 0
      %2826 = vmatmul.mubr.bf16.gmra.mxu0 %v1397
      %v2827 = vpop.f32.mrf.mxu0
      %v2828 = vadd.f32 0.0, %v2827
      %v2829 = vpop.f32.mrf.mxu0
      %v2830 = vpop.f32.mrf.mxu0
      %v2831 = vadd.f32 0.0, %v2830
      %v2832 = vpop.f32.mrf.mxu0
      %2833 = vmatprep.mubr.bf16.mxu0 0
      %2834 = vmatmul.mubr.bf16.gmra.mxu0 %v1400
      %v2835 = vpop.f32.mrf.mxu0
      %v2836 = vadd.f32 0.0, %v2835
      %v2837 = vpop.f32.mrf.mxu0
      %v2838 = vpop.f32.mrf.mxu0
      %v2839 = vadd.f32 0.0, %v2838
      %v2840 = vpop.f32.mrf.mxu0
      %2841 = vmatprep.mubr.bf16.mxu0 0
      %2842 = vmatmul.mubr.bf16.gmra.mxu0 %v2046
      %v2843 = vpop.f32.mrf.mxu0
      %v2844 = vadd.f32 0.0, %v2843
      %v2845 = vpop.f32.mrf.mxu0
      %v2846 = vpop.f32.mrf.mxu0
      %v2847 = vadd.f32 0.0, %v2846
      %v2848 = vpop.f32.mrf.mxu0
      %2849 = vmatprep.mubr.bf16.mxu0 0
      %2850 = vmatmul.mubr.bf16.gmra.mxu0 %v2692
      %v2851 = vpop.f32.mrf.mxu0
      %v2852 = vadd.f32 0.0, %v2851
      %v2853 = vpop.f32.mrf.mxu0
      %v2854 = vpop.f32.mrf.mxu0
      %v2855 = vadd.f32 0.0, %v2854
      %v2856 = vpop.f32.mrf.mxu0
      %2857 = vdwg.mxu0
      %v2858 = vadd.f32 %v2646, %v2732
      %v2859 = vadd.f32 %v2647, %v2735
      %v2860 = vadd.f32 %v2648, %v2740
      %v2861 = vadd.f32 %v2649, %v2743
      %v2862 = vadd.f32 %v2650, %v2748
      %v2863 = vadd.f32 %v2651, %v2751
      %v2864 = vadd.f32 %v2652, %v2756
      %v2865 = vadd.f32 %v2653, %v2759
      %v2866 = vadd.f32 %v2654, %v2764
      %v2867 = vadd.f32 %v2655, %v2767
      %v2868 = vadd.f32 %v2656, %v2772
      %v2869 = vadd.f32 %v2657, %v2775
      %v2870 = vadd.f32 %v2658, %v2780
      %v2871 = vadd.f32 %v2659, %v2783
      %v2872 = vadd.f32 %v2660, %v2788
      %v2873 = vadd.f32 %v2661, %v2791
      %v2874 = vadd.f32 %v2662, %v2796
      %v2875 = vadd.f32 %v2663, %v2799
      %v2876 = vadd.f32 %v2664, %v2804
      %v2877 = vadd.f32 %v2665, %v2807
      %v2878 = vadd.f32 %v2666, %v2812
      %v2879 = vadd.f32 %v2667, %v2815
      %v2880 = vadd.f32 %v2668, %v2820
      %v2881 = vadd.f32 %v2669, %v2823
      %v2882 = vadd.f32 %v2670, %v2828
      %v2883 = vadd.f32 %v2671, %v2831
      %v2884 = vadd.f32 %v2672, %v2836
      %v2885 = vadd.f32 %v2673, %v2839
      %v2886 = vadd.f32 %v2674, %v2844
      %v2887 = vadd.f32 %v2675, %v2847
      %v2888 = vadd.f32 %v2676, %v2852
      %v2889 = vadd.f32 %v2677, %v2855
      %v2890 = vld [vmem:[%s2] sm:$0x1]
      %v2892 = vlaneseq
      %v2893 = vshrl.u32 %v2892, 7
      %v2894 = vsub.s32 0, %v2893
      %v2895 = vrot.slane %v2890, %v2894
      %v2897 = vadd.f32 %v2858, %v2895
      %v2898 = vadd.f32 %v2859, %v2895
      %v2899 = vadd.f32 %v2860, %v2895
      %v2900 = vadd.f32 %v2861, %v2895
      %v2901 = vadd.f32 %v2862, %v2895
      %v2902 = vadd.f32 %v2863, %v2895
      %v2903 = vadd.f32 %v2864, %v2895
      %v2904 = vadd.f32 %v2865, %v2895
      %v2905 = vadd.f32 %v2866, %v2895
      %v2906 = vadd.f32 %v2867, %v2895
      %v2907 = vadd.f32 %v2868, %v2895
      %v2908 = vadd.f32 %v2869, %v2895
      %v2909 = vadd.f32 %v2870, %v2895
      %v2910 = vadd.f32 %v2871, %v2895
      %v2911 = vadd.f32 %v2872, %v2895
      %v2912 = vadd.f32 %v2873, %v2895
      %v2913 = vadd.f32 %v2874, %v2895
      %v2914 = vadd.f32 %v2875, %v2895
      %v2915 = vadd.f32 %v2876, %v2895
      %v2916 = vadd.f32 %v2877, %v2895
      %v2917 = vadd.f32 %v2878, %v2895
      %v2918 = vadd.f32 %v2879, %v2895
      %v2919 = vadd.f32 %v2880, %v2895
      %v2920 = vadd.f32 %v2881, %v2895
      %v2921 = vadd.f32 %v2882, %v2895
      %v2922 = vadd.f32 %v2883, %v2895
      %v2923 = vadd.f32 %v2884, %v2895
      %v2924 = vadd.f32 %v2885, %v2895
      %v2925 = vadd.f32 %v2886, %v2895
      %v2926 = vadd.f32 %v2887, %v2895
      %v2927 = vadd.f32 %v2888, %v2895
      %v2928 = vadd.f32 %v2889, %v2895
      %v2929 = vmax.f32 %v2897, 0.0
      %v2930 = vmax.f32 %v2898, 0.0
      %v2931 = vmax.f32 %v2899, 0.0
      %v2932 = vmax.f32 %v2900, 0.0
      %v2933 = vmax.f32 %v2901, 0.0
      %v2934 = vmax.f32 %v2902, 0.0
      %v2935 = vmax.f32 %v2903, 0.0
      %v2936 = vmax.f32 %v2904, 0.0
      %v2937 = vmax.f32 %v2905, 0.0
      %v2938 = vmax.f32 %v2906, 0.0
      %v2939 = vmax.f32 %v2907, 0.0
      %v2940 = vmax.f32 %v2908, 0.0
      %v2941 = vmax.f32 %v2909, 0.0
      %v2942 = vmax.f32 %v2910, 0.0
      %v2943 = vmax.f32 %v2911, 0.0
      %v2944 = vmax.f32 %v2912, 0.0
      %v2945 = vmax.f32 %v2913, 0.0
      %v2946 = vmax.f32 %v2914, 0.0
      %v2947 = vmax.f32 %v2915, 0.0
      %v2948 = vmax.f32 %v2916, 0.0
      %v2949 = vmax.f32 %v2917, 0.0
      %v2950 = vmax.f32 %v2918, 0.0
      %v2951 = vmax.f32 %v2919, 0.0
      %v2952 = vmax.f32 %v2920, 0.0
      %v2953 = vmax.f32 %v2921, 0.0
      %v2954 = vmax.f32 %v2922, 0.0
      %v2955 = vmax.f32 %v2923, 0.0
      %v2956 = vmax.f32 %v2924, 0.0
      %v2957 = vmax.f32 %v2925, 0.0
      %v2958 = vmax.f32 %v2926, 0.0
      %v2959 = vmax.f32 %v2927, 0.0
      %v2960 = vmax.f32 %v2928, 0.0
      %v2993 = vcombine.high %v2929, %v2929
      %v2995 = vunpack.c.l.s4 1983009808
      %v2996 = vunpack.c.0.s8 %v2995
      %v2997 = vlaneseq
      %v2998 = vshrl.u32 %v2997, 7
      %v2999 = vsub.s32 %v2996, %v2998
      %v3000 = vrot.slane %v2929, %v2999
      %v3002 = vunpack.c.l.s4 1983009808
      %v3003 = vunpack.c.0.s8 %v3002
      %v3004 = vlaneseq
      %v3005 = vshrl.u32 %v3004, 7
      %v3006 = vsub.s32 %v3003, %v3005
      %v3007 = vrot.slane %v2993, %v3006
      %v3008 = vcombine.high %v3000, %v3000
      %v3009 = vcombine.high %v3007, %v3007
      %v3010 = vcombine.high %v2930, %v2930
      %v3012 = vunpack.c.l.s4 1983009808
      %v3013 = vunpack.c.0.s8 %v3012
      %v3014 = vlaneseq
      %v3015 = vshrl.u32 %v3014, 7
      %v3016 = vsub.s32 %v3013, %v3015
      %v3017 = vrot.slane %v2930, %v3016
      %v3019 = vunpack.c.l.s4 1983009808
      %v3020 = vunpack.c.0.s8 %v3019
      %v3021 = vlaneseq
      %v3022 = vshrl.u32 %v3021, 7
      %v3023 = vsub.s32 %v3020, %v3022
      %v3024 = vrot.slane %v3010, %v3023
      %v3025 = vcombine.high %v3017, %v3017
      %v3026 = vcombine.high %v3024, %v3024
      %v3027 = vcombine.high %v2931, %v2931
      %v3029 = vunpack.c.l.s4 1983009808
      %v3030 = vunpack.c.0.s8 %v3029
      %v3031 = vlaneseq
      %v3032 = vshrl.u32 %v3031, 7
      %v3033 = vsub.s32 %v3030, %v3032
      %v3034 = vrot.slane %v2931, %v3033
      %v3036 = vunpack.c.l.s4 1983009808
      %v3037 = vunpack.c.0.s8 %v3036
      %v3038 = vlaneseq
      %v3039 = vshrl.u32 %v3038, 7
      %v3040 = vsub.s32 %v3037, %v3039
      %v3041 = vrot.slane %v3027, %v3040
      %v3042 = vcombine.high %v3034, %v3034
      %v3043 = vcombine.high %v3041, %v3041
      %v3044 = vcombine.high %v2932, %v2932
      %v3046 = vunpack.c.l.s4 1983009808
      %v3047 = vunpack.c.0.s8 %v3046
      %v3048 = vlaneseq
      %v3049 = vshrl.u32 %v3048, 7
      %v3050 = vsub.s32 %v3047, %v3049
      %v3051 = vrot.slane %v2932, %v3050
      %v3053 = vunpack.c.l.s4 1983009808
      %v3054 = vunpack.c.0.s8 %v3053
      %v3055 = vlaneseq
      %v3056 = vshrl.u32 %v3055, 7
      %v3057 = vsub.s32 %v3054, %v3056
      %v3058 = vrot.slane %v3044, %v3057
      %v3059 = vcombine.high %v3051, %v3051
      %v3060 = vcombine.high %v3058, %v3058
      %v3061 = vcombine.high %v2933, %v2933
      %v3063 = vunpack.c.l.s4 1983009808
      %v3064 = vunpack.c.0.s8 %v3063
      %v3065 = vlaneseq
      %v3066 = vshrl.u32 %v3065, 7
      %v3067 = vsub.s32 %v3064, %v3066
      %v3068 = vrot.slane %v2933, %v3067
      %v3070 = vunpack.c.l.s4 1983009808
      %v3071 = vunpack.c.0.s8 %v3070
      %v3072 = vlaneseq
      %v3073 = vshrl.u32 %v3072, 7
      %v3074 = vsub.s32 %v3071, %v3073
      %v3075 = vrot.slane %v3061, %v3074
      %v3076 = vcombine.high %v3068, %v3068
      %v3077 = vcombine.high %v3075, %v3075
      %v3078 = vcombine.high %v2934, %v2934
      %v3080 = vunpack.c.l.s4 1983009808
      %v3081 = vunpack.c.0.s8 %v3080
      %v3082 = vlaneseq
      %v3083 = vshrl.u32 %v3082, 7
      %v3084 = vsub.s32 %v3081, %v3083
      %v3085 = vrot.slane %v2934, %v3084
      %v3087 = vunpack.c.l.s4 1983009808
      %v3088 = vunpack.c.0.s8 %v3087
      %v3089 = vlaneseq
      %v3090 = vshrl.u32 %v3089, 7
      %v3091 = vsub.s32 %v3088, %v3090
      %v3092 = vrot.slane %v3078, %v3091
      %v3093 = vcombine.high %v3085, %v3085
      %v3094 = vcombine.high %v3092, %v3092
      %v3095 = vcombine.high %v2935, %v2935
      %v3097 = vunpack.c.l.s4 1983009808
      %v3098 = vunpack.c.0.s8 %v3097
      %v3099 = vlaneseq
      %v3100 = vshrl.u32 %v3099, 7
      %v3101 = vsub.s32 %v3098, %v3100
      %v3102 = vrot.slane %v2935, %v3101
      %v3104 = vunpack.c.l.s4 1983009808
      %v3105 = vunpack.c.0.s8 %v3104
      %v3106 = vlaneseq
      %v3107 = vshrl.u32 %v3106, 7
      %v3108 = vsub.s32 %v3105, %v3107
      %v3109 = vrot.slane %v3095, %v3108
      %v3110 = vcombine.high %v3102, %v3102
      %v3111 = vcombine.high %v3109, %v3109
      %v3112 = vcombine.high %v2936, %v2936
      %v3114 = vunpack.c.l.s4 1983009808
      %v3115 = vunpack.c.0.s8 %v3114
      %v3116 = vlaneseq
      %v3117 = vshrl.u32 %v3116, 7
      %v3118 = vsub.s32 %v3115, %v3117
      %v3119 = vrot.slane %v2936, %v3118
      %v3121 = vunpack.c.l.s4 1983009808
      %v3122 = vunpack.c.0.s8 %v3121
      %v3123 = vlaneseq
      %v3124 = vshrl.u32 %v3123, 7
      %v3125 = vsub.s32 %v3122, %v3124
      %v3126 = vrot.slane %v3112, %v3125
      %v3127 = vcombine.high %v3119, %v3119
      %v3128 = vcombine.high %v3126, %v3126
      %v3129 = vcombine.high %v2937, %v2937
      %v3131 = vunpack.c.l.s4 1983009808
      %v3132 = vunpack.c.0.s8 %v3131
      %v3133 = vlaneseq
      %v3134 = vshrl.u32 %v3133, 7
      %v3135 = vsub.s32 %v3132, %v3134
      %v3136 = vrot.slane %v2937, %v3135
      %v3138 = vunpack.c.l.s4 1983009808
      %v3139 = vunpack.c.0.s8 %v3138
      %v3140 = vlaneseq
      %v3141 = vshrl.u32 %v3140, 7
      %v3142 = vsub.s32 %v3139, %v3141
      %v3143 = vrot.slane %v3129, %v3142
      %v3144 = vcombine.high %v3136, %v3136
      %v3145 = vcombine.high %v3143, %v3143
      %v3146 = vcombine.high %v2938, %v2938
      %v3148 = vunpack.c.l.s4 1983009808
      %v3149 = vunpack.c.0.s8 %v3148
      %v3150 = vlaneseq
      %v3151 = vshrl.u32 %v3150, 7
      %v3152 = vsub.s32 %v3149, %v3151
      %v3153 = vrot.slane %v2938, %v3152
      %v3155 = vunpack.c.l.s4 1983009808
      %v3156 = vunpack.c.0.s8 %v3155
      %v3157 = vlaneseq
      %v3158 = vshrl.u32 %v3157, 7
      %v3159 = vsub.s32 %v3156, %v3158
      %v3160 = vrot.slane %v3146, %v3159
      %v3161 = vcombine.high %v3153, %v3153
      %v3162 = vcombine.high %v3160, %v3160
      %v3163 = vcombine.high %v2939, %v2939
      %v3165 = vunpack.c.l.s4 1983009808
      %v3166 = vunpack.c.0.s8 %v3165
      %v3167 = vlaneseq
      %v3168 = vshrl.u32 %v3167, 7
      %v3169 = vsub.s32 %v3166, %v3168
      %v3170 = vrot.slane %v2939, %v3169
      %v3172 = vunpack.c.l.s4 1983009808
      %v3173 = vunpack.c.0.s8 %v3172
      %v3174 = vlaneseq
      %v3175 = vshrl.u32 %v3174, 7
      %v3176 = vsub.s32 %v3173, %v3175
      %v3177 = vrot.slane %v3163, %v3176
      %v3178 = vcombine.high %v3170, %v3170
      %v3179 = vcombine.high %v3177, %v3177
      %v3180 = vcombine.high %v2940, %v2940
      %v3182 = vunpack.c.l.s4 1983009808
      %v3183 = vunpack.c.0.s8 %v3182
      %v3184 = vlaneseq
      %v3185 = vshrl.u32 %v3184, 7
      %v3186 = vsub.s32 %v3183, %v3185
      %v3187 = vrot.slane %v2940, %v3186
      %v3189 = vunpack.c.l.s4 1983009808
      %v3190 = vunpack.c.0.s8 %v3189
      %v3191 = vlaneseq
      %v3192 = vshrl.u32 %v3191, 7
      %v3193 = vsub.s32 %v3190, %v3192
      %v3194 = vrot.slane %v3180, %v3193
      %v3195 = vcombine.high %v3187, %v3187
      %v3196 = vcombine.high %v3194, %v3194
      %v3197 = vcombine.high %v2941, %v2941
      %v3199 = vunpack.c.l.s4 1983009808
      %v3200 = vunpack.c.0.s8 %v3199
      %v3201 = vlaneseq
      %v3202 = vshrl.u32 %v3201, 7
      %v3203 = vsub.s32 %v3200, %v3202
      %v3204 = vrot.slane %v2941, %v3203
      %v3206 = vunpack.c.l.s4 1983009808
      %v3207 = vunpack.c.0.s8 %v3206
      %v3208 = vlaneseq
      %v3209 = vshrl.u32 %v3208, 7
      %v3210 = vsub.s32 %v3207, %v3209
      %v3211 = vrot.slane %v3197, %v3210
      %v3212 = vcombine.high %v3204, %v3204
      %v3213 = vcombine.high %v3211, %v3211
      %v3214 = vcombine.high %v2942, %v2942
      %v3216 = vunpack.c.l.s4 1983009808
      %v3217 = vunpack.c.0.s8 %v3216
      %v3218 = vlaneseq
      %v3219 = vshrl.u32 %v3218, 7
      %v3220 = vsub.s32 %v3217, %v3219
      %v3221 = vrot.slane %v2942, %v3220
      %v3223 = vunpack.c.l.s4 1983009808
      %v3224 = vunpack.c.0.s8 %v3223
      %v3225 = vlaneseq
      %v3226 = vshrl.u32 %v3225, 7
      %v3227 = vsub.s32 %v3224, %v3226
      %v3228 = vrot.slane %v3214, %v3227
      %v3229 = vcombine.high %v3221, %v3221
      %v3230 = vcombine.high %v3228, %v3228
      %v3231 = vcombine.high %v2943, %v2943
      %v3233 = vunpack.c.l.s4 1983009808
      %v3234 = vunpack.c.0.s8 %v3233
      %v3235 = vlaneseq
      %v3236 = vshrl.u32 %v3235, 7
      %v3237 = vsub.s32 %v3234, %v3236
      %v3238 = vrot.slane %v2943, %v3237
      %v3240 = vunpack.c.l.s4 1983009808
      %v3241 = vunpack.c.0.s8 %v3240
      %v3242 = vlaneseq
      %v3243 = vshrl.u32 %v3242, 7
      %v3244 = vsub.s32 %v3241, %v3243
      %v3245 = vrot.slane %v3231, %v3244
      %v3246 = vcombine.high %v3238, %v3238
      %v3247 = vcombine.high %v3245, %v3245
      %v3248 = vcombine.high %v2944, %v2944
      %v3250 = vunpack.c.l.s4 1983009808
      %v3251 = vunpack.c.0.s8 %v3250
      %v3252 = vlaneseq
      %v3253 = vshrl.u32 %v3252, 7
      %v3254 = vsub.s32 %v3251, %v3253
      %v3255 = vrot.slane %v2944, %v3254
      %v3257 = vunpack.c.l.s4 1983009808
      %v3258 = vunpack.c.0.s8 %v3257
      %v3259 = vlaneseq
      %v3260 = vshrl.u32 %v3259, 7
      %v3261 = vsub.s32 %v3258, %v3260
      %v3262 = vrot.slane %v3248, %v3261
      %v3263 = vcombine.high %v3255, %v3255
      %v3264 = vcombine.high %v3262, %v3262
      %v3265 = vcombine.high %v2945, %v2945
      %v3267 = vunpack.c.l.s4 1983009808
      %v3268 = vunpack.c.0.s8 %v3267
      %v3269 = vlaneseq
      %v3270 = vshrl.u32 %v3269, 7
      %v3271 = vsub.s32 %v3268, %v3270
      %v3272 = vrot.slane %v2945, %v3271
      %v3274 = vunpack.c.l.s4 1983009808
      %v3275 = vunpack.c.0.s8 %v3274
      %v3276 = vlaneseq
      %v3277 = vshrl.u32 %v3276, 7
      %v3278 = vsub.s32 %v3275, %v3277
      %v3279 = vrot.slane %v3265, %v3278
      %v3280 = vcombine.high %v3272, %v3272
      %v3281 = vcombine.high %v3279, %v3279
      %v3282 = vcombine.high %v2946, %v2946
      %v3284 = vunpack.c.l.s4 1983009808
      %v3285 = vunpack.c.0.s8 %v3284
      %v3286 = vlaneseq
      %v3287 = vshrl.u32 %v3286, 7
      %v3288 = vsub.s32 %v3285, %v3287
      %v3289 = vrot.slane %v2946, %v3288
      %v3291 = vunpack.c.l.s4 1983009808
      %v3292 = vunpack.c.0.s8 %v3291
      %v3293 = vlaneseq
      %v3294 = vshrl.u32 %v3293, 7
      %v3295 = vsub.s32 %v3292, %v3294
      %v3296 = vrot.slane %v3282, %v3295
      %v3297 = vcombine.high %v3289, %v3289
      %v3298 = vcombine.high %v3296, %v3296
      %v3299 = vcombine.high %v2947, %v2947
      %v3301 = vunpack.c.l.s4 1983009808
      %v3302 = vunpack.c.0.s8 %v3301
      %v3303 = vlaneseq
      %v3304 = vshrl.u32 %v3303, 7
      %v3305 = vsub.s32 %v3302, %v3304
      %v3306 = vrot.slane %v2947, %v3305
      %v3308 = vunpack.c.l.s4 1983009808
      %v3309 = vunpack.c.0.s8 %v3308
      %v3310 = vlaneseq
      %v3311 = vshrl.u32 %v3310, 7
      %v3312 = vsub.s32 %v3309, %v3311
      %v3313 = vrot.slane %v3299, %v3312
      %v3314 = vcombine.high %v3306, %v3306
      %v3315 = vcombine.high %v3313, %v3313
      %v3316 = vcombine.high %v2948, %v2948
      %v3318 = vunpack.c.l.s4 1983009808
      %v3319 = vunpack.c.0.s8 %v3318
      %v3320 = vlaneseq
      %v3321 = vshrl.u32 %v3320, 7
      %v3322 = vsub.s32 %v3319, %v3321
      %v3323 = vrot.slane %v2948, %v3322
      %v3325 = vunpack.c.l.s4 1983009808
      %v3326 = vunpack.c.0.s8 %v3325
      %v3327 = vlaneseq
      %v3328 = vshrl.u32 %v3327, 7
      %v3329 = vsub.s32 %v3326, %v3328
      %v3330 = vrot.slane %v3316, %v3329
      %v3331 = vcombine.high %v3323, %v3323
      %v3332 = vcombine.high %v3330, %v3330
      %v3333 = vcombine.high %v2949, %v2949
      %v3335 = vunpack.c.l.s4 1983009808
      %v3336 = vunpack.c.0.s8 %v3335
      %v3337 = vlaneseq
      %v3338 = vshrl.u32 %v3337, 7
      %v3339 = vsub.s32 %v3336, %v3338
      %v3340 = vrot.slane %v2949, %v3339
      %v3342 = vunpack.c.l.s4 1983009808
      %v3343 = vunpack.c.0.s8 %v3342
      %v3344 = vlaneseq
      %v3345 = vshrl.u32 %v3344, 7
      %v3346 = vsub.s32 %v3343, %v3345
      %v3347 = vrot.slane %v3333, %v3346
      %v3348 = vcombine.high %v3340, %v3340
      %v3349 = vcombine.high %v3347, %v3347
      %v3350 = vcombine.high %v2950, %v2950
      %v3352 = vunpack.c.l.s4 1983009808
      %v3353 = vunpack.c.0.s8 %v3352
      %v3354 = vlaneseq
      %v3355 = vshrl.u32 %v3354, 7
      %v3356 = vsub.s32 %v3353, %v3355
      %v3357 = vrot.slane %v2950, %v3356
      %v3359 = vunpack.c.l.s4 1983009808
      %v3360 = vunpack.c.0.s8 %v3359
      %v3361 = vlaneseq
      %v3362 = vshrl.u32 %v3361, 7
      %v3363 = vsub.s32 %v3360, %v3362
      %v3364 = vrot.slane %v3350, %v3363
      %v3365 = vcombine.high %v3357, %v3357
      %v3366 = vcombine.high %v3364, %v3364
      %v3367 = vcombine.high %v2951, %v2951
      %v3369 = vunpack.c.l.s4 1983009808
      %v3370 = vunpack.c.0.s8 %v3369
      %v3371 = vlaneseq
      %v3372 = vshrl.u32 %v3371, 7
      %v3373 = vsub.s32 %v3370, %v3372
      %v3374 = vrot.slane %v2951, %v3373
      %v3376 = vunpack.c.l.s4 1983009808
      %v3377 = vunpack.c.0.s8 %v3376
      %v3378 = vlaneseq
      %v3379 = vshrl.u32 %v3378, 7
      %v3380 = vsub.s32 %v3377, %v3379
      %v3381 = vrot.slane %v3367, %v3380
      %v3382 = vcombine.high %v3374, %v3374
      %v3383 = vcombine.high %v3381, %v3381
      %v3384 = vcombine.high %v2952, %v2952
      %v3386 = vunpack.c.l.s4 1983009808
      %v3387 = vunpack.c.0.s8 %v3386
      %v3388 = vlaneseq
      %v3389 = vshrl.u32 %v3388, 7
      %v3390 = vsub.s32 %v3387, %v3389
      %v3391 = vrot.slane %v2952, %v3390
      %v3393 = vunpack.c.l.s4 1983009808
      %v3394 = vunpack.c.0.s8 %v3393
      %v3395 = vlaneseq
      %v3396 = vshrl.u32 %v3395, 7
      %v3397 = vsub.s32 %v3394, %v3396
      %v3398 = vrot.slane %v3384, %v3397
      %v3399 = vcombine.high %v3391, %v3391
      %v3400 = vcombine.high %v3398, %v3398
      %v3401 = vcombine.high %v2953, %v2953
      %v3403 = vunpack.c.l.s4 1983009808
      %v3404 = vunpack.c.0.s8 %v3403
      %v3405 = vlaneseq
      %v3406 = vshrl.u32 %v3405, 7
      %v3407 = vsub.s32 %v3404, %v3406
      %v3408 = vrot.slane %v2953, %v3407
      %v3410 = vunpack.c.l.s4 1983009808
      %v3411 = vunpack.c.0.s8 %v3410
      %v3412 = vlaneseq
      %v3413 = vshrl.u32 %v3412, 7
      %v3414 = vsub.s32 %v3411, %v3413
      %v3415 = vrot.slane %v3401, %v3414
      %v3416 = vcombine.high %v3408, %v3408
      %v3417 = vcombine.high %v3415, %v3415
      %v3418 = vcombine.high %v2954, %v2954
      %v3420 = vunpack.c.l.s4 1983009808
      %v3421 = vunpack.c.0.s8 %v3420
      %v3422 = vlaneseq
      %v3423 = vshrl.u32 %v3422, 7
      %v3424 = vsub.s32 %v3421, %v3423
      %v3425 = vrot.slane %v2954, %v3424
      %v3427 = vunpack.c.l.s4 1983009808
      %v3428 = vunpack.c.0.s8 %v3427
      %v3429 = vlaneseq
      %v3430 = vshrl.u32 %v3429, 7
      %v3431 = vsub.s32 %v3428, %v3430
      %v3432 = vrot.slane %v3418, %v3431
      %v3433 = vcombine.high %v3425, %v3425
      %v3434 = vcombine.high %v3432, %v3432
      %v3435 = vcombine.high %v2955, %v2955
      %v3437 = vunpack.c.l.s4 1983009808
      %v3438 = vunpack.c.0.s8 %v3437
      %v3439 = vlaneseq
      %v3440 = vshrl.u32 %v3439, 7
      %v3441 = vsub.s32 %v3438, %v3440
      %v3442 = vrot.slane %v2955, %v3441
      %v3444 = vunpack.c.l.s4 1983009808
      %v3445 = vunpack.c.0.s8 %v3444
      %v3446 = vlaneseq
      %v3447 = vshrl.u32 %v3446, 7
      %v3448 = vsub.s32 %v3445, %v3447
      %v3449 = vrot.slane %v3435, %v3448
      %v3450 = vcombine.high %v3442, %v3442
      %v3451 = vcombine.high %v3449, %v3449
      %v3452 = vcombine.high %v2956, %v2956
      %v3454 = vunpack.c.l.s4 1983009808
      %v3455 = vunpack.c.0.s8 %v3454
      %v3456 = vlaneseq
      %v3457 = vshrl.u32 %v3456, 7
      %v3458 = vsub.s32 %v3455, %v3457
      %v3459 = vrot.slane %v2956, %v3458
      %v3461 = vunpack.c.l.s4 1983009808
      %v3462 = vunpack.c.0.s8 %v3461
      %v3463 = vlaneseq
      %v3464 = vshrl.u32 %v3463, 7
      %v3465 = vsub.s32 %v3462, %v3464
      %v3466 = vrot.slane %v3452, %v3465
      %v3467 = vcombine.high %v3459, %v3459
      %v3468 = vcombine.high %v3466, %v3466
      %v3469 = vcombine.high %v2957, %v2957
      %v3471 = vunpack.c.l.s4 1983009808
      %v3472 = vunpack.c.0.s8 %v3471
      %v3473 = vlaneseq
      %v3474 = vshrl.u32 %v3473, 7
      %v3475 = vsub.s32 %v3472, %v3474
      %v3476 = vrot.slane %v2957, %v3475
      %v3478 = vunpack.c.l.s4 1983009808
      %v3479 = vunpack.c.0.s8 %v3478
      %v3480 = vlaneseq
      %v3481 = vshrl.u32 %v3480, 7
      %v3482 = vsub.s32 %v3479, %v3481
      %v3483 = vrot.slane %v3469, %v3482
      %v3484 = vcombine.high %v3476, %v3476
      %v3485 = vcombine.high %v3483, %v3483
      %v3486 = vcombine.high %v2958, %v2958
      %v3488 = vunpack.c.l.s4 1983009808
      %v3489 = vunpack.c.0.s8 %v3488
      %v3490 = vlaneseq
      %v3491 = vshrl.u32 %v3490, 7
      %v3492 = vsub.s32 %v3489, %v3491
      %v3493 = vrot.slane %v2958, %v3492
      %v3495 = vunpack.c.l.s4 1983009808
      %v3496 = vunpack.c.0.s8 %v3495
      %v3497 = vlaneseq
      %v3498 = vshrl.u32 %v3497, 7
      %v3499 = vsub.s32 %v3496, %v3498
      %v3500 = vrot.slane %v3486, %v3499
      %v3501 = vcombine.high %v3493, %v3493
      %v3502 = vcombine.high %v3500, %v3500
      %v3503 = vcombine.high %v2959, %v2959
      %v3505 = vunpack.c.l.s4 1983009808
      %v3506 = vunpack.c.0.s8 %v3505
      %v3507 = vlaneseq
      %v3508 = vshrl.u32 %v3507, 7
      %v3509 = vsub.s32 %v3506, %v3508
      %v3510 = vrot.slane %v2959, %v3509
      %v3512 = vunpack.c.l.s4 1983009808
      %v3513 = vunpack.c.0.s8 %v3512
      %v3514 = vlaneseq
      %v3515 = vshrl.u32 %v3514, 7
      %v3516 = vsub.s32 %v3513, %v3515
      %v3517 = vrot.slane %v3503, %v3516
      %v3518 = vcombine.high %v3510, %v3510
      %v3519 = vcombine.high %v3517, %v3517
      %v3520 = vcombine.high %v2960, %v2960
      %v3522 = vunpack.c.l.s4 1983009808
      %v3523 = vunpack.c.0.s8 %v3522
      %v3524 = vlaneseq
      %v3525 = vshrl.u32 %v3524, 7
      %v3526 = vsub.s32 %v3523, %v3525
      %v3527 = vrot.slane %v2960, %v3526
      %v3529 = vunpack.c.l.s4 1983009808
      %v3530 = vunpack.c.0.s8 %v3529
      %v3531 = vlaneseq
      %v3532 = vshrl.u32 %v3531, 7
      %v3533 = vsub.s32 %v3530, %v3532
      %v3534 = vrot.slane %v3520, %v3533
      %v3535 = vcombine.high %v3527, %v3527
      %v3536 = vcombine.high %v3534, %v3534
      %v3665 = vrot.slane %v3000, 7
      %v3666 = vrot.slane %v3665, 2
      %v3667 = vrot.slane %v3008, 7
      %v3668 = vrot.slane %v3667, 2
      %v3669 = vrot.slane %v3007, 7
      %v3670 = vrot.slane %v3669, 2
      %v3671 = vrot.slane %v3009, 7
      %v3672 = vrot.slane %v3671, 2
      %v3673 = vrot.slane %v3017, 7
      %v3674 = vrot.slane %v3673, 2
      %v3675 = vrot.slane %v3025, 7
      %v3676 = vrot.slane %v3675, 2
      %v3677 = vrot.slane %v3024, 7
      %v3678 = vrot.slane %v3677, 2
      %v3679 = vrot.slane %v3026, 7
      %v3680 = vrot.slane %v3679, 2
      %v3681 = vrot.slane %v3034, 7
      %v3682 = vrot.slane %v3681, 2
      %v3683 = vrot.slane %v3042, 7
      %v3684 = vrot.slane %v3683, 2
      %v3685 = vrot.slane %v3041, 7
      %v3686 = vrot.slane %v3685, 2
      %v3687 = vrot.slane %v3043, 7
      %v3688 = vrot.slane %v3687, 2
      %v3689 = vrot.slane %v3051, 7
      %v3690 = vrot.slane %v3689, 2
      %v3691 = vrot.slane %v3059, 7
      %v3692 = vrot.slane %v3691, 2
      %v3693 = vrot.slane %v3058, 7
      %v3694 = vrot.slane %v3693, 2
      %v3695 = vrot.slane %v3060, 7
      %v3696 = vrot.slane %v3695, 2
      %v3697 = vrot.slane %v3068, 7
      %v3698 = vrot.slane %v3697, 2
      %v3699 = vrot.slane %v3076, 7
      %v3700 = vrot.slane %v3699, 2
      %v3701 = vrot.slane %v3075, 7
      %v3702 = vrot.slane %v3701, 2
      %v3703 = vrot.slane %v3077, 7
      %v3704 = vrot.slane %v3703, 2
      %v3705 = vrot.slane %v3085, 7
      %v3706 = vrot.slane %v3705, 2
      %v3707 = vrot.slane %v3093, 7
      %v3708 = vrot.slane %v3707, 2
      %v3709 = vrot.slane %v3092, 7
      %v3710 = vrot.slane %v3709, 2
      %v3711 = vrot.slane %v3094, 7
      %v3712 = vrot.slane %v3711, 2
      %v3713 = vrot.slane %v3102, 7
      %v3714 = vrot.slane %v3713, 2
      %v3715 = vrot.slane %v3110, 7
      %v3716 = vrot.slane %v3715, 2
      %v3717 = vrot.slane %v3109, 7
      %v3718 = vrot.slane %v3717, 2
      %v3719 = vrot.slane %v3111, 7
      %v3720 = vrot.slane %v3719, 2
      %v3721 = vrot.slane %v3119, 7
      %v3722 = vrot.slane %v3721, 2
      %v3723 = vrot.slane %v3127, 7
      %v3724 = vrot.slane %v3723, 2
      %v3725 = vrot.slane %v3126, 7
      %v3726 = vrot.slane %v3725, 2
      %v3727 = vrot.slane %v3128, 7
      %v3728 = vrot.slane %v3727, 2
      %v3729 = vrot.slane %v3136, 7
      %v3730 = vrot.slane %v3729, 2
      %v3731 = vrot.slane %v3144, 7
      %v3732 = vrot.slane %v3731, 2
      %v3733 = vrot.slane %v3143, 7
      %v3734 = vrot.slane %v3733, 2
      %v3735 = vrot.slane %v3145, 7
      %v3736 = vrot.slane %v3735, 2
      %v3737 = vrot.slane %v3153, 7
      %v3738 = vrot.slane %v3737, 2
      %v3739 = vrot.slane %v3161, 7
      %v3740 = vrot.slane %v3739, 2
      %v3741 = vrot.slane %v3160, 7
      %v3742 = vrot.slane %v3741, 2
      %v3743 = vrot.slane %v3162, 7
      %v3744 = vrot.slane %v3743, 2
      %v3745 = vrot.slane %v3170, 7
      %v3746 = vrot.slane %v3745, 2
      %v3747 = vrot.slane %v3178, 7
      %v3748 = vrot.slane %v3747, 2
      %v3749 = vrot.slane %v3177, 7
      %v3750 = vrot.slane %v3749, 2
      %v3751 = vrot.slane %v3179, 7
      %v3752 = vrot.slane %v3751, 2
      %v3753 = vrot.slane %v3187, 7
      %v3754 = vrot.slane %v3753, 2
      %v3755 = vrot.slane %v3195, 7
      %v3756 = vrot.slane %v3755, 2
      %v3757 = vrot.slane %v3194, 7
      %v3758 = vrot.slane %v3757, 2
      %v3759 = vrot.slane %v3196, 7
      %v3760 = vrot.slane %v3759, 2
      %v3761 = vrot.slane %v3204, 7
      %v3762 = vrot.slane %v3761, 2
      %v3763 = vrot.slane %v3212, 7
      %v3764 = vrot.slane %v3763, 2
      %v3765 = vrot.slane %v3211, 7
      %v3766 = vrot.slane %v3765, 2
      %v3767 = vrot.slane %v3213, 7
      %v3768 = vrot.slane %v3767, 2
      %v3769 = vrot.slane %v3221, 7
      %v3770 = vrot.slane %v3769, 2
      %v3771 = vrot.slane %v3229, 7
      %v3772 = vrot.slane %v3771, 2
      %v3773 = vrot.slane %v3228, 7
      %v3774 = vrot.slane %v3773, 2
      %v3775 = vrot.slane %v3230, 7
      %v3776 = vrot.slane %v3775, 2
      %v3777 = vrot.slane %v3238, 7
      %v3778 = vrot.slane %v3777, 2
      %v3779 = vrot.slane %v3246, 7
      %v3780 = vrot.slane %v3779, 2
      %v3781 = vrot.slane %v3245, 7
      %v3782 = vrot.slane %v3781, 2
      %v3783 = vrot.slane %v3247, 7
      %v3784 = vrot.slane %v3783, 2
      %v3785 = vrot.slane %v3255, 7
      %v3786 = vrot.slane %v3785, 2
      %v3787 = vrot.slane %v3263, 7
      %v3788 = vrot.slane %v3787, 2
      %v3789 = vrot.slane %v3262, 7
      %v3790 = vrot.slane %v3789, 2
      %v3791 = vrot.slane %v3264, 7
      %v3792 = vrot.slane %v3791, 2
      %v3793 = vrot.slane %v3272, 7
      %v3794 = vrot.slane %v3793, 2
      %v3795 = vrot.slane %v3280, 7
      %v3796 = vrot.slane %v3795, 2
      %v3797 = vrot.slane %v3279, 7
      %v3798 = vrot.slane %v3797, 2
      %v3799 = vrot.slane %v3281, 7
      %v3800 = vrot.slane %v3799, 2
      %v3801 = vrot.slane %v3289, 7
      %v3802 = vrot.slane %v3801, 2
      %v3803 = vrot.slane %v3297, 7
      %v3804 = vrot.slane %v3803, 2
      %v3805 = vrot.slane %v3296, 7
      %v3806 = vrot.slane %v3805, 2
      %v3807 = vrot.slane %v3298, 7
      %v3808 = vrot.slane %v3807, 2
      %v3809 = vrot.slane %v3306, 7
      %v3810 = vrot.slane %v3809, 2
      %v3811 = vrot.slane %v3314, 7
      %v3812 = vrot.slane %v3811, 2
      %v3813 = vrot.slane %v3313, 7
      %v3814 = vrot.slane %v3813, 2
      %v3815 = vrot.slane %v3315, 7
      %v3816 = vrot.slane %v3815, 2
      %v3817 = vrot.slane %v3323, 7
      %v3818 = vrot.slane %v3817, 2
      %v3819 = vrot.slane %v3331, 7
      %v3820 = vrot.slane %v3819, 2
      %v3821 = vrot.slane %v3330, 7
      %v3822 = vrot.slane %v3821, 2
      %v3823 = vrot.slane %v3332, 7
      %v3824 = vrot.slane %v3823, 2
      %v3825 = vrot.slane %v3340, 7
      %v3826 = vrot.slane %v3825, 2
      %v3827 = vrot.slane %v3348, 7
      %v3828 = vrot.slane %v3827, 2
      %v3829 = vrot.slane %v3347, 7
      %v3830 = vrot.slane %v3829, 2
      %v3831 = vrot.slane %v3349, 7
      %v3832 = vrot.slane %v3831, 2
      %v3833 = vrot.slane %v3357, 7
      %v3834 = vrot.slane %v3833, 2
      %v3835 = vrot.slane %v3365, 7
      %v3836 = vrot.slane %v3835, 2
      %v3837 = vrot.slane %v3364, 7
      %v3838 = vrot.slane %v3837, 2
      %v3839 = vrot.slane %v3366, 7
      %v3840 = vrot.slane %v3839, 2
      %v3841 = vrot.slane %v3374, 7
      %v3842 = vrot.slane %v3841, 2
      %v3843 = vrot.slane %v3382, 7
      %v3844 = vrot.slane %v3843, 2
      %v3845 = vrot.slane %v3381, 7
      %v3846 = vrot.slane %v3845, 2
      %v3847 = vrot.slane %v3383, 7
      %v3848 = vrot.slane %v3847, 2
      %v3849 = vrot.slane %v3391, 7
      %v3850 = vrot.slane %v3849, 2
      %v3851 = vrot.slane %v3399, 7
      %v3852 = vrot.slane %v3851, 2
      %v3853 = vrot.slane %v3398, 7
      %v3854 = vrot.slane %v3853, 2
      %v3855 = vrot.slane %v3400, 7
      %v3856 = vrot.slane %v3855, 2
      %v3857 = vrot.slane %v3408, 7
      %v3858 = vrot.slane %v3857, 2
      %v3859 = vrot.slane %v3416, 7
      %v3860 = vrot.slane %v3859, 2
      %v3861 = vrot.slane %v3415, 7
      %v3862 = vrot.slane %v3861, 2
      %v3863 = vrot.slane %v3417, 7
      %v3864 = vrot.slane %v3863, 2
      %v3865 = vrot.slane %v3425, 7
      %v3866 = vrot.slane %v3865, 2
      %v3867 = vrot.slane %v3433, 7
      %v3868 = vrot.slane %v3867, 2
      %v3869 = vrot.slane %v3432, 7
      %v3870 = vrot.slane %v3869, 2
      %v3871 = vrot.slane %v3434, 7
      %v3872 = vrot.slane %v3871, 2
      %v3873 = vrot.slane %v3442, 7
      %v3874 = vrot.slane %v3873, 2
      %v3875 = vrot.slane %v3450, 7
      %v3876 = vrot.slane %v3875, 2
      %v3877 = vrot.slane %v3449, 7
      %v3878 = vrot.slane %v3877, 2
      %v3879 = vrot.slane %v3451, 7
      %v3880 = vrot.slane %v3879, 2
      %v3881 = vrot.slane %v3459, 7
      %v3882 = vrot.slane %v3881, 2
      %v3883 = vrot.slane %v3467, 7
      %v3884 = vrot.slane %v3883, 2
      %v3885 = vrot.slane %v3466, 7
      %v3886 = vrot.slane %v3885, 2
      %v3887 = vrot.slane %v3468, 7
      %v3888 = vrot.slane %v3887, 2
      %v3889 = vrot.slane %v3476, 7
      %v3890 = vrot.slane %v3889, 2
      %v3891 = vrot.slane %v3484, 7
      %v3892 = vrot.slane %v3891, 2
      %v3893 = vrot.slane %v3483, 7
      %v3894 = vrot.slane %v3893, 2
      %v3895 = vrot.slane %v3485, 7
      %v3896 = vrot.slane %v3895, 2
      %v3897 = vrot.slane %v3493, 7
      %v3898 = vrot.slane %v3897, 2
      %v3899 = vrot.slane %v3501, 7
      %v3900 = vrot.slane %v3899, 2
      %v3901 = vrot.slane %v3500, 7
      %v3902 = vrot.slane %v3901, 2
      %v3903 = vrot.slane %v3502, 7
      %v3904 = vrot.slane %v3903, 2
      %v3905 = vrot.slane %v3510, 7
      %v3906 = vrot.slane %v3905, 2
      %v3907 = vrot.slane %v3518, 7
      %v3908 = vrot.slane %v3907, 2
      %v3909 = vrot.slane %v3517, 7
      %v3910 = vrot.slane %v3909, 2
      %v3911 = vrot.slane %v3519, 7
      %v3912 = vrot.slane %v3911, 2
      %v3913 = vrot.slane %v3527, 7
      %v3914 = vrot.slane %v3913, 2
      %v3915 = vrot.slane %v3535, 7
      %v3916 = vrot.slane %v3915, 2
      %v3917 = vrot.slane %v3534, 7
      %v3918 = vrot.slane %v3917, 2
      %v3919 = vrot.slane %v3536, 7
      %v3920 = vrot.slane %v3919, 2
      %v4049 = vmax.f32 %v3000, %v3666
      %v4050 = vmax.f32 %v3008, %v3668
      %v4051 = vmax.f32 %v3007, %v3670
      %v4052 = vmax.f32 %v3009, %v3672
      %v4053 = vmax.f32 %v3017, %v3674
      %v4054 = vmax.f32 %v3025, %v3676
      %v4055 = vmax.f32 %v3024, %v3678
      %v4056 = vmax.f32 %v3026, %v3680
      %v4057 = vmax.f32 %v3034, %v3682
      %v4058 = vmax.f32 %v3042, %v3684
      %v4059 = vmax.f32 %v3041, %v3686
      %v4060 = vmax.f32 %v3043, %v3688
      %v4061 = vmax.f32 %v3051, %v3690
      %v4062 = vmax.f32 %v3059, %v3692
      %v4063 = vmax.f32 %v3058, %v3694
      %v4064 = vmax.f32 %v3060, %v3696
      %v4065 = vmax.f32 %v3068, %v3698
      %v4066 = vmax.f32 %v3076, %v3700
      %v4067 = vmax.f32 %v3075, %v3702
      %v4068 = vmax.f32 %v3077, %v3704
      %v4069 = vmax.f32 %v3085, %v3706
      %v4070 = vmax.f32 %v3093, %v3708
      %v4071 = vmax.f32 %v3092, %v3710
      %v4072 = vmax.f32 %v3094, %v3712
      %v4073 = vmax.f32 %v3102, %v3714
      %v4074 = vmax.f32 %v3110, %v3716
      %v4075 = vmax.f32 %v3109, %v3718
      %v4076 = vmax.f32 %v3111, %v3720
      %v4077 = vmax.f32 %v3119, %v3722
      %v4078 = vmax.f32 %v3127, %v3724
      %v4079 = vmax.f32 %v3126, %v3726
      %v4080 = vmax.f32 %v3128, %v3728
      %v4081 = vmax.f32 %v3136, %v3730
      %v4082 = vmax.f32 %v3144, %v3732
      %v4083 = vmax.f32 %v3143, %v3734
      %v4084 = vmax.f32 %v3145, %v3736
      %v4085 = vmax.f32 %v3153, %v3738
      %v4086 = vmax.f32 %v3161, %v3740
      %v4087 = vmax.f32 %v3160, %v3742
      %v4088 = vmax.f32 %v3162, %v3744
      %v4089 = vmax.f32 %v3170, %v3746
      %v4090 = vmax.f32 %v3178, %v3748
      %v4091 = vmax.f32 %v3177, %v3750
      %v4092 = vmax.f32 %v3179, %v3752
      %v4093 = vmax.f32 %v3187, %v3754
      %v4094 = vmax.f32 %v3195, %v3756
      %v4095 = vmax.f32 %v3194, %v3758
      %v4096 = vmax.f32 %v3196, %v3760
      %v4097 = vmax.f32 %v3204, %v3762
      %v4098 = vmax.f32 %v3212, %v3764
      %v4099 = vmax.f32 %v3211, %v3766
      %v4100 = vmax.f32 %v3213, %v3768
      %v4101 = vmax.f32 %v3221, %v3770
      %v4102 = vmax.f32 %v3229, %v3772
      %v4103 = vmax.f32 %v3228, %v3774
      %v4104 = vmax.f32 %v3230, %v3776
      %v4105 = vmax.f32 %v3238, %v3778
      %v4106 = vmax.f32 %v3246, %v3780
      %v4107 = vmax.f32 %v3245, %v3782
      %v4108 = vmax.f32 %v3247, %v3784
      %v4109 = vmax.f32 %v3255, %v3786
      %v4110 = vmax.f32 %v3263, %v3788
      %v4111 = vmax.f32 %v3262, %v3790
      %v4112 = vmax.f32 %v3264, %v3792
      %v4113 = vmax.f32 %v3272, %v3794
      %v4114 = vmax.f32 %v3280, %v3796
      %v4115 = vmax.f32 %v3279, %v3798
      %v4116 = vmax.f32 %v3281, %v3800
      %v4117 = vmax.f32 %v3289, %v3802
      %v4118 = vmax.f32 %v3297, %v3804
      %v4119 = vmax.f32 %v3296, %v3806
      %v4120 = vmax.f32 %v3298, %v3808
      %v4121 = vmax.f32 %v3306, %v3810
      %v4122 = vmax.f32 %v3314, %v3812
      %v4123 = vmax.f32 %v3313, %v3814
      %v4124 = vmax.f32 %v3315, %v3816
      %v4125 = vmax.f32 %v3323, %v3818
      %v4126 = vmax.f32 %v3331, %v3820
      %v4127 = vmax.f32 %v3330, %v3822
      %v4128 = vmax.f32 %v3332, %v3824
      %v4129 = vmax.f32 %v3340, %v3826
      %v4130 = vmax.f32 %v3348, %v3828
      %v4131 = vmax.f32 %v3347, %v3830
      %v4132 = vmax.f32 %v3349, %v3832
      %v4133 = vmax.f32 %v3357, %v3834
      %v4134 = vmax.f32 %v3365, %v3836
      %v4135 = vmax.f32 %v3364, %v3838
      %v4136 = vmax.f32 %v3366, %v3840
      %v4137 = vmax.f32 %v3374, %v3842
      %v4138 = vmax.f32 %v3382, %v3844
      %v4139 = vmax.f32 %v3381, %v3846
      %v4140 = vmax.f32 %v3383, %v3848
      %v4141 = vmax.f32 %v3391, %v3850
      %v4142 = vmax.f32 %v3399, %v3852
      %v4143 = vmax.f32 %v3398, %v3854
      %v4144 = vmax.f32 %v3400, %v3856
      %v4145 = vmax.f32 %v3408, %v3858
      %v4146 = vmax.f32 %v3416, %v3860
      %v4147 = vmax.f32 %v3415, %v3862
      %v4148 = vmax.f32 %v3417, %v3864
      %v4149 = vmax.f32 %v3425, %v3866
      %v4150 = vmax.f32 %v3433, %v3868
      %v4151 = vmax.f32 %v3432, %v3870
      %v4152 = vmax.f32 %v3434, %v3872
      %v4153 = vmax.f32 %v3442, %v3874
      %v4154 = vmax.f32 %v3450, %v3876
      %v4155 = vmax.f32 %v3449, %v3878
      %v4156 = vmax.f32 %v3451, %v3880
      %v4157 = vmax.f32 %v3459, %v3882
      %v4158 = vmax.f32 %v3467, %v3884
      %v4159 = vmax.f32 %v3466, %v3886
      %v4160 = vmax.f32 %v3468, %v3888
      %v4161 = vmax.f32 %v3476, %v3890
      %v4162 = vmax.f32 %v3484, %v3892
      %v4163 = vmax.f32 %v3483, %v3894
      %v4164 = vmax.f32 %v3485, %v3896
      %v4165 = vmax.f32 %v3493, %v3898
      %v4166 = vmax.f32 %v3501, %v3900
      %v4167 = vmax.f32 %v3500, %v3902
      %v4168 = vmax.f32 %v3502, %v3904
      %v4169 = vmax.f32 %v3510, %v3906
      %v4170 = vmax.f32 %v3518, %v3908
      %v4171 = vmax.f32 %v3517, %v3910
      %v4172 = vmax.f32 %v3519, %v3912
      %v4173 = vmax.f32 %v3527, %v3914
      %v4174 = vmax.f32 %v3535, %v3916
      %v4175 = vmax.f32 %v3534, %v3918
      %v4176 = vmax.f32 %v3536, %v3920
      %v4177 = vmax.f32 %v4049, %v4057
      %v4178 = vmax.f32 %v4050, %v4058
      %v4179 = vmax.f32 %v4051, %v4059
      %v4180 = vmax.f32 %v4052, %v4060
      %v4181 = vmax.f32 %v4053, %v4061
      %v4182 = vmax.f32 %v4054, %v4062
      %v4183 = vmax.f32 %v4055, %v4063
      %v4184 = vmax.f32 %v4056, %v4064
      %v4185 = vmax.f32 %v4065, %v4073
      %v4186 = vmax.f32 %v4066, %v4074
      %v4187 = vmax.f32 %v4067, %v4075
      %v4188 = vmax.f32 %v4068, %v4076
      %v4189 = vmax.f32 %v4069, %v4077
      %v4190 = vmax.f32 %v4070, %v4078
      %v4191 = vmax.f32 %v4071, %v4079
      %v4192 = vmax.f32 %v4072, %v4080
      %v4193 = vmax.f32 %v4081, %v4089
      %v4194 = vmax.f32 %v4082, %v4090
      %v4195 = vmax.f32 %v4083, %v4091
      %v4196 = vmax.f32 %v4084, %v4092
      %v4197 = vmax.f32 %v4085, %v4093
      %v4198 = vmax.f32 %v4086, %v4094
      %v4199 = vmax.f32 %v4087, %v4095
      %v4200 = vmax.f32 %v4088, %v4096
      %v4201 = vmax.f32 %v4097, %v4105
      %v4202 = vmax.f32 %v4098, %v4106
      %v4203 = vmax.f32 %v4099, %v4107
      %v4204 = vmax.f32 %v4100, %v4108
      %v4205 = vmax.f32 %v4101, %v4109
      %v4206 = vmax.f32 %v4102, %v4110
      %v4207 = vmax.f32 %v4103, %v4111
      %v4208 = vmax.f32 %v4104, %v4112
      %v4209 = vmax.f32 %v4113, %v4121
      %v4210 = vmax.f32 %v4114, %v4122
      %v4211 = vmax.f32 %v4115, %v4123
      %v4212 = vmax.f32 %v4116, %v4124
      %v4213 = vmax.f32 %v4117, %v4125
      %v4214 = vmax.f32 %v4118, %v4126
      %v4215 = vmax.f32 %v4119, %v4127
      %v4216 = vmax.f32 %v4120, %v4128
      %v4217 = vmax.f32 %v4129, %v4137
      %v4218 = vmax.f32 %v4130, %v4138
      %v4219 = vmax.f32 %v4131, %v4139
      %v4220 = vmax.f32 %v4132, %v4140
      %v4221 = vmax.f32 %v4133, %v4141
      %v4222 = vmax.f32 %v4134, %v4142
      %v4223 = vmax.f32 %v4135, %v4143
      %v4224 = vmax.f32 %v4136, %v4144
      %v4225 = vmax.f32 %v4145, %v4153
      %v4226 = vmax.f32 %v4146, %v4154
      %v4227 = vmax.f32 %v4147, %v4155
      %v4228 = vmax.f32 %v4148, %v4156
      %v4229 = vmax.f32 %v4149, %v4157
      %v4230 = vmax.f32 %v4150, %v4158
      %v4231 = vmax.f32 %v4151, %v4159
      %v4232 = vmax.f32 %v4152, %v4160
      %v4233 = vmax.f32 %v4161, %v4169
      %v4234 = vmax.f32 %v4162, %v4170
      %v4235 = vmax.f32 %v4163, %v4171
      %v4236 = vmax.f32 %v4164, %v4172
      %v4237 = vmax.f32 %v4165, %v4173
      %v4238 = vmax.f32 %v4166, %v4174
      %v4239 = vmax.f32 %v4167, %v4175
      %v4240 = vmax.f32 %v4168, %v4176
      %v4241 = vpack.c.bf16 %v4177, %v4177
      %v4242 = vpack.c.bf16 %v4178, %v4178
      %v4243 = vpack.c.bf16 %v4179, %v4179
      %v4244 = vpack.c.bf16 %v4180, %v4180
      %v4245 = vpack.c.bf16 %v4181, %v4181
      %v4246 = vpack.c.bf16 %v4182, %v4182
      %v4247 = vpack.c.bf16 %v4183, %v4183
      %v4248 = vpack.c.bf16 %v4184, %v4184
      %v4249 = vpack.c.bf16 %v4185, %v4185
      %v4250 = vpack.c.bf16 %v4186, %v4186
      %v4251 = vpack.c.bf16 %v4187, %v4187
      %v4252 = vpack.c.bf16 %v4188, %v4188
      %v4253 = vpack.c.bf16 %v4189, %v4189
      %v4254 = vpack.c.bf16 %v4190, %v4190
      %v4255 = vpack.c.bf16 %v4191, %v4191
      %v4256 = vpack.c.bf16 %v4192, %v4192
      %v4257 = vpack.c.bf16 %v4193, %v4193
      %v4258 = vpack.c.bf16 %v4194, %v4194
      %v4259 = vpack.c.bf16 %v4195, %v4195
      %v4260 = vpack.c.bf16 %v4196, %v4196
      %v4261 = vpack.c.bf16 %v4197, %v4197
      %v4262 = vpack.c.bf16 %v4198, %v4198
      %v4263 = vpack.c.bf16 %v4199, %v4199
      %v4264 = vpack.c.bf16 %v4200, %v4200
      %v4265 = vpack.c.bf16 %v4201, %v4201
      %v4266 = vpack.c.bf16 %v4202, %v4202
      %v4267 = vpack.c.bf16 %v4203, %v4203
      %v4268 = vpack.c.bf16 %v4204, %v4204
      %v4269 = vpack.c.bf16 %v4205, %v4205
      %v4270 = vpack.c.bf16 %v4206, %v4206
      %v4271 = vpack.c.bf16 %v4207, %v4207
      %v4272 = vpack.c.bf16 %v4208, %v4208
      %v4273 = vpack.c.bf16 %v4209, %v4209
      %v4274 = vpack.c.bf16 %v4210, %v4210
      %v4275 = vpack.c.bf16 %v4211, %v4211
      %v4276 = vpack.c.bf16 %v4212, %v4212
      %v4277 = vpack.c.bf16 %v4213, %v4213
      %v4278 = vpack.c.bf16 %v4214, %v4214
      %v4279 = vpack.c.bf16 %v4215, %v4215
      %v4280 = vpack.c.bf16 %v4216, %v4216
      %v4281 = vpack.c.bf16 %v4217, %v4217
      %v4282 = vpack.c.bf16 %v4218, %v4218
      %v4283 = vpack.c.bf16 %v4219, %v4219
      %v4284 = vpack.c.bf16 %v4220, %v4220
      %v4285 = vpack.c.bf16 %v4221, %v4221
      %v4286 = vpack.c.bf16 %v4222, %v4222
      %v4287 = vpack.c.bf16 %v4223, %v4223
      %v4288 = vpack.c.bf16 %v4224, %v4224
      %v4289 = vpack.c.bf16 %v4225, %v4225
      %v4290 = vpack.c.bf16 %v4226, %v4226
      %v4291 = vpack.c.bf16 %v4227, %v4227
      %v4292 = vpack.c.bf16 %v4228, %v4228
      %v4293 = vpack.c.bf16 %v4229, %v4229
      %v4294 = vpack.c.bf16 %v4230, %v4230
      %v4295 = vpack.c.bf16 %v4231, %v4231
      %v4296 = vpack.c.bf16 %v4232, %v4232
      %v4297 = vpack.c.bf16 %v4233, %v4233
      %v4298 = vpack.c.bf16 %v4234, %v4234
      %v4299 = vpack.c.bf16 %v4235, %v4235
      %v4300 = vpack.c.bf16 %v4236, %v4236
      %v4301 = vpack.c.bf16 %v4237, %v4237
      %v4302 = vpack.c.bf16 %v4238, %v4238
      %v4303 = vpack.c.bf16 %v4239, %v4239
      %v4304 = vpack.c.bf16 %v4240, %v4240
      %v4369 = vunpack.c.l.b16 %v4241
      %v4370 = vunpack.c.l.b16 %v4242
      %v4371 = vunpack.c.l.b16 %v4243
      %v4372 = vunpack.c.l.b16 %v4244
      %v4373 = vunpack.c.l.b16 %v4245
      %v4374 = vunpack.c.l.b16 %v4246
      %v4375 = vunpack.c.l.b16 %v4247
      %v4376 = vunpack.c.l.b16 %v4248
      %v4377 = vunpack.c.l.b16 %v4249
      %v4378 = vunpack.c.l.b16 %v4250
      %v4379 = vunpack.c.l.b16 %v4251
      %v4380 = vunpack.c.l.b16 %v4252
      %v4381 = vunpack.c.l.b16 %v4253
      %v4382 = vunpack.c.l.b16 %v4254
      %v4383 = vunpack.c.l.b16 %v4255
      %v4384 = vunpack.c.l.b16 %v4256
      %v4385 = vunpack.c.l.b16 %v4257
      %v4386 = vunpack.c.l.b16 %v4258
      %v4387 = vunpack.c.l.b16 %v4259
      %v4388 = vunpack.c.l.b16 %v4260
      %v4389 = vunpack.c.l.b16 %v4261
      %v4390 = vunpack.c.l.b16 %v4262
      %v4391 = vunpack.c.l.b16 %v4263
      %v4392 = vunpack.c.l.b16 %v4264
      %v4393 = vunpack.c.l.b16 %v4265
      %v4394 = vunpack.c.l.b16 %v4266
      %v4395 = vunpack.c.l.b16 %v4267
      %v4396 = vunpack.c.l.b16 %v4268
      %v4397 = vunpack.c.l.b16 %v4269
      %v4398 = vunpack.c.l.b16 %v4270
      %v4399 = vunpack.c.l.b16 %v4271
      %v4400 = vunpack.c.l.b16 %v4272
      %v4401 = vunpack.c.l.b16 %v4273
      %v4402 = vunpack.c.l.b16 %v4274
      %v4403 = vunpack.c.l.b16 %v4275
      %v4404 = vunpack.c.l.b16 %v4276
      %v4405 = vunpack.c.l.b16 %v4277
      %v4406 = vunpack.c.l.b16 %v4278
      %v4407 = vunpack.c.l.b16 %v4279
      %v4408 = vunpack.c.l.b16 %v4280
      %v4409 = vunpack.c.l.b16 %v4281
      %v4410 = vunpack.c.l.b16 %v4282
      %v4411 = vunpack.c.l.b16 %v4283
      %v4412 = vunpack.c.l.b16 %v4284
      %v4413 = vunpack.c.l.b16 %v4285
      %v4414 = vunpack.c.l.b16 %v4286
      %v4415 = vunpack.c.l.b16 %v4287
      %v4416 = vunpack.c.l.b16 %v4288
      %v4417 = vunpack.c.l.b16 %v4289
      %v4418 = vunpack.c.l.b16 %v4290
      %v4419 = vunpack.c.l.b16 %v4291
      %v4420 = vunpack.c.l.b16 %v4292
      %v4421 = vunpack.c.l.b16 %v4293
      %v4422 = vunpack.c.l.b16 %v4294
      %v4423 = vunpack.c.l.b16 %v4295
      %v4424 = vunpack.c.l.b16 %v4296
      %v4425 = vunpack.c.l.b16 %v4297
      %v4426 = vunpack.c.l.b16 %v4298
      %v4427 = vunpack.c.l.b16 %v4299
      %v4428 = vunpack.c.l.b16 %v4300
      %v4429 = vunpack.c.l.b16 %v4301
      %v4430 = vunpack.c.l.b16 %v4302
      %v4431 = vunpack.c.l.b16 %v4303
      %v4432 = vunpack.c.l.b16 %v4304
      %v4433 = vpack.c.b16 %v4369, %v4369
      %v4434 = vpack.c.b16 %v4370, %v4370
      %v4435 = vpack.c.b16 %v4371, %v4371
      %v4436 = vpack.c.b16 %v4372, %v4372
      %v4437 = vpack.c.b16 %v4373, %v4373
      %v4438 = vpack.c.b16 %v4374, %v4374
      %v4439 = vpack.c.b16 %v4375, %v4375
      %v4440 = vpack.c.b16 %v4376, %v4376
      %v4441 = vpack.c.b16 %v4377, %v4377
      %v4442 = vpack.c.b16 %v4378, %v4378
      %v4443 = vpack.c.b16 %v4379, %v4379
      %v4444 = vpack.c.b16 %v4380, %v4380
      %v4445 = vpack.c.b16 %v4381, %v4381
      %v4446 = vpack.c.b16 %v4382, %v4382
      %v4447 = vpack.c.b16 %v4383, %v4383
      %v4448 = vpack.c.b16 %v4384, %v4384
      %v4449 = vpack.c.b16 %v4385, %v4385
      %v4450 = vpack.c.b16 %v4386, %v4386
      %v4451 = vpack.c.b16 %v4387, %v4387
      %v4452 = vpack.c.b16 %v4388, %v4388
      %v4453 = vpack.c.b16 %v4389, %v4389
      %v4454 = vpack.c.b16 %v4390, %v4390
      %v4455 = vpack.c.b16 %v4391, %v4391
      %v4456 = vpack.c.b16 %v4392, %v4392
      %v4457 = vpack.c.b16 %v4393, %v4393
      %v4458 = vpack.c.b16 %v4394, %v4394
      %v4459 = vpack.c.b16 %v4395, %v4395
      %v4460 = vpack.c.b16 %v4396, %v4396
      %v4461 = vpack.c.b16 %v4397, %v4397
      %v4462 = vpack.c.b16 %v4398, %v4398
      %v4463 = vpack.c.b16 %v4399, %v4399
      %v4464 = vpack.c.b16 %v4400, %v4400
      %v4465 = vpack.c.b16 %v4401, %v4401
      %v4466 = vpack.c.b16 %v4402, %v4402
      %v4467 = vpack.c.b16 %v4403, %v4403
      %v4468 = vpack.c.b16 %v4404, %v4404
      %v4469 = vpack.c.b16 %v4405, %v4405
      %v4470 = vpack.c.b16 %v4406, %v4406
      %v4471 = vpack.c.b16 %v4407, %v4407
      %v4472 = vpack.c.b16 %v4408, %v4408
      %v4473 = vpack.c.b16 %v4409, %v4409
      %v4474 = vpack.c.b16 %v4410, %v4410
      %v4475 = vpack.c.b16 %v4411, %v4411
      %v4476 = vpack.c.b16 %v4412, %v4412
      %v4477 = vpack.c.b16 %v4413, %v4413
      %v4478 = vpack.c.b16 %v4414, %v4414
      %v4479 = vpack.c.b16 %v4415, %v4415
      %v4480 = vpack.c.b16 %v4416, %v4416
      %v4481 = vpack.c.b16 %v4417, %v4417
      %v4482 = vpack.c.b16 %v4418, %v4418
      %v4483 = vpack.c.b16 %v4419, %v4419
      %v4484 = vpack.c.b16 %v4420, %v4420
      %v4485 = vpack.c.b16 %v4421, %v4421
      %v4486 = vpack.c.b16 %v4422, %v4422
      %v4487 = vpack.c.b16 %v4423, %v4423
      %v4488 = vpack.c.b16 %v4424, %v4424
      %v4489 = vpack.c.b16 %v4425, %v4425
      %v4490 = vpack.c.b16 %v4426, %v4426
      %v4491 = vpack.c.b16 %v4427, %v4427
      %v4492 = vpack.c.b16 %v4428, %v4428
      %v4493 = vpack.c.b16 %v4429, %v4429
      %v4494 = vpack.c.b16 %v4430, %v4430
      %v4495 = vpack.c.b16 %v4431, %v4431
      %v4496 = vpack.c.b16 %v4432, %v4432
      %v4497 = vunpack.c.l.b16 %v4433
      %v4498 = vunpack.c.l.b16 %v4434
      %v4499 = vunpack.c.l.b16 %v4435
      %v4500 = vunpack.c.l.b16 %v4436
      %v4501 = vunpack.c.l.b16 %v4437
      %v4502 = vunpack.c.l.b16 %v4438
      %v4503 = vunpack.c.l.b16 %v4439
      %v4504 = vunpack.c.l.b16 %v4440
      %v4505 = vunpack.c.l.b16 %v4441
      %v4506 = vunpack.c.l.b16 %v4442
      %v4507 = vunpack.c.l.b16 %v4443
      %v4508 = vunpack.c.l.b16 %v4444
      %v4509 = vunpack.c.l.b16 %v4445
      %v4510 = vunpack.c.l.b16 %v4446
      %v4511 = vunpack.c.l.b16 %v4447
      %v4512 = vunpack.c.l.b16 %v4448
      %v4513 = vunpack.c.l.b16 %v4449
      %v4514 = vunpack.c.l.b16 %v4450
      %v4515 = vunpack.c.l.b16 %v4451
      %v4516 = vunpack.c.l.b16 %v4452
      %v4517 = vunpack.c.l.b16 %v4453
      %v4518 = vunpack.c.l.b16 %v4454
      %v4519 = vunpack.c.l.b16 %v4455
      %v4520 = vunpack.c.l.b16 %v4456
      %v4521 = vunpack.c.l.b16 %v4457
      %v4522 = vunpack.c.l.b16 %v4458
      %v4523 = vunpack.c.l.b16 %v4459
      %v4524 = vunpack.c.l.b16 %v4460
      %v4525 = vunpack.c.l.b16 %v4461
      %v4526 = vunpack.c.l.b16 %v4462
      %v4527 = vunpack.c.l.b16 %v4463
      %v4528 = vunpack.c.l.b16 %v4464
      %v4529 = vunpack.c.l.b16 %v4465
      %v4530 = vunpack.c.l.b16 %v4466
      %v4531 = vunpack.c.l.b16 %v4467
      %v4532 = vunpack.c.l.b16 %v4468
      %v4533 = vunpack.c.l.b16 %v4469
      %v4534 = vunpack.c.l.b16 %v4470
      %v4535 = vunpack.c.l.b16 %v4471
      %v4536 = vunpack.c.l.b16 %v4472
      %v4537 = vunpack.c.l.b16 %v4473
      %v4538 = vunpack.c.l.b16 %v4474
      %v4539 = vunpack.c.l.b16 %v4475
      %v4540 = vunpack.c.l.b16 %v4476
      %v4541 = vunpack.c.l.b16 %v4477
      %v4542 = vunpack.c.l.b16 %v4478
      %v4543 = vunpack.c.l.b16 %v4479
      %v4544 = vunpack.c.l.b16 %v4480
      %v4545 = vunpack.c.l.b16 %v4481
      %v4546 = vunpack.c.l.b16 %v4482
      %v4547 = vunpack.c.l.b16 %v4483
      %v4548 = vunpack.c.l.b16 %v4484
      %v4549 = vunpack.c.l.b16 %v4485
      %v4550 = vunpack.c.l.b16 %v4486
      %v4551 = vunpack.c.l.b16 %v4487
      %v4552 = vunpack.c.l.b16 %v4488
      %v4553 = vunpack.c.l.b16 %v4489
      %v4554 = vunpack.c.l.b16 %v4490
      %v4555 = vunpack.c.l.b16 %v4491
      %v4556 = vunpack.c.l.b16 %v4492
      %v4557 = vunpack.c.l.b16 %v4493
      %v4558 = vunpack.c.l.b16 %v4494
      %v4559 = vunpack.c.l.b16 %v4495
      %v4560 = vunpack.c.l.b16 %v4496
      %v4561 = vrot.slane %v4498, 7
      %vm4562 = vcmask 1041409
      %v4563 = vsel %vm4562, %v4561, %v4497
      %v4564 = vrot.slane %v4499, 6
      %vm4565 = vcmask 1042434
      %v4566 = vsel %vm4565, %v4564, %v4563
      %v4567 = vrot.slane %v4500, 5
      %vm4568 = vcmask 1043459
      %v4569 = vsel %vm4568, %v4567, %v4566
      %v4570 = vrot.slane %v4501, 4
      %vm4571 = vcmask 1044484
      %v4572 = vsel %vm4571, %v4570, %v4569
      %v4573 = vrot.slane %v4502, 3
      %vm4574 = vcmask 1045509
      %v4575 = vsel %vm4574, %v4573, %v4572
      %v4576 = vrot.slane %v4503, 2
      %vm4577 = vcmask 1046534
      %v4578 = vsel %vm4577, %v4576, %v4575
      %v4579 = vrot.slane %v4504, 1
      %vm4580 = vcmask 1047559
      %v4581 = vsel %vm4580, %v4579, %v4578
      %v4582 = vrot.slane %v4506, 7
      %v4583 = vsel %vm4562, %v4582, %v4505
      %v4584 = vrot.slane %v4507, 6
      %v4585 = vsel %vm4565, %v4584, %v4583
      %v4586 = vrot.slane %v4508, 5
      %v4587 = vsel %vm4568, %v4586, %v4585
      %v4588 = vrot.slane %v4509, 4
      %v4589 = vsel %vm4571, %v4588, %v4587
      %v4590 = vrot.slane %v4510, 3
      %v4591 = vsel %vm4574, %v4590, %v4589
      %v4592 = vrot.slane %v4511, 2
      %v4593 = vsel %vm4577, %v4592, %v4591
      %v4594 = vrot.slane %v4512, 1
      %v4595 = vsel %vm4580, %v4594, %v4593
      %v4596 = vrot.slane %v4514, 7
      %v4597 = vsel %vm4562, %v4596, %v4513
      %v4598 = vrot.slane %v4515, 6
      %v4599 = vsel %vm4565, %v4598, %v4597
      %v4600 = vrot.slane %v4516, 5
      %v4601 = vsel %vm4568, %v4600, %v4599
      %v4602 = vrot.slane %v4517, 4
      %v4603 = vsel %vm4571, %v4602, %v4601
      %v4604 = vrot.slane %v4518, 3
      %v4605 = vsel %vm4574, %v4604, %v4603
      %v4606 = vrot.slane %v4519, 2
      %v4607 = vsel %vm4577, %v4606, %v4605
      %v4608 = vrot.slane %v4520, 1
      %v4609 = vsel %vm4580, %v4608, %v4607
      %v4610 = vrot.slane %v4522, 7
      %v4611 = vsel %vm4562, %v4610, %v4521
      %v4612 = vrot.slane %v4523, 6
      %v4613 = vsel %vm4565, %v4612, %v4611
      %v4614 = vrot.slane %v4524, 5
      %v4615 = vsel %vm4568, %v4614, %v4613
      %v4616 = vrot.slane %v4525, 4
      %v4617 = vsel %vm4571, %v4616, %v4615
      %v4618 = vrot.slane %v4526, 3
      %v4619 = vsel %vm4574, %v4618, %v4617
      %v4620 = vrot.slane %v4527, 2
      %v4621 = vsel %vm4577, %v4620, %v4619
      %v4622 = vrot.slane %v4528, 1
      %v4623 = vsel %vm4580, %v4622, %v4621
      %v4624 = vrot.slane %v4530, 7
      %v4625 = vsel %vm4562, %v4624, %v4529
      %v4626 = vrot.slane %v4531, 6
      %v4627 = vsel %vm4565, %v4626, %v4625
      %v4628 = vrot.slane %v4532, 5
      %v4629 = vsel %vm4568, %v4628, %v4627
      %v4630 = vrot.slane %v4533, 4
      %v4631 = vsel %vm4571, %v4630, %v4629
      %v4632 = vrot.slane %v4534, 3
      %v4633 = vsel %vm4574, %v4632, %v4631
      %v4634 = vrot.slane %v4535, 2
      %v4635 = vsel %vm4577, %v4634, %v4633
      %v4636 = vrot.slane %v4536, 1
      %v4637 = vsel %vm4580, %v4636, %v4635
      %v4638 = vrot.slane %v4538, 7
      %v4639 = vsel %vm4562, %v4638, %v4537
      %v4640 = vrot.slane %v4539, 6
      %v4641 = vsel %vm4565, %v4640, %v4639
      %v4642 = vrot.slane %v4540, 5
      %v4643 = vsel %vm4568, %v4642, %v4641
      %v4644 = vrot.slane %v4541, 4
      %v4645 = vsel %vm4571, %v4644, %v4643
      %v4646 = vrot.slane %v4542, 3
      %v4647 = vsel %vm4574, %v4646, %v4645
      %v4648 = vrot.slane %v4543, 2
      %v4649 = vsel %vm4577, %v4648, %v4647
      %v4650 = vrot.slane %v4544, 1
      %v4651 = vsel %vm4580, %v4650, %v4649
      %v4652 = vrot.slane %v4546, 7
      %v4653 = vsel %vm4562, %v4652, %v4545
      %v4654 = vrot.slane %v4547, 6
      %v4655 = vsel %vm4565, %v4654, %v4653
      %v4656 = vrot.slane %v4548, 5
      %v4657 = vsel %vm4568, %v4656, %v4655
      %v4658 = vrot.slane %v4549, 4
      %v4659 = vsel %vm4571, %v4658, %v4657
      %v4660 = vrot.slane %v4550, 3
      %v4661 = vsel %vm4574, %v4660, %v4659
      %v4662 = vrot.slane %v4551, 2
      %v4663 = vsel %vm4577, %v4662, %v4661
      %v4664 = vrot.slane %v4552, 1
      %v4665 = vsel %vm4580, %v4664, %v4663
      %v4666 = vrot.slane %v4554, 7
      %v4667 = vsel %vm4562, %v4666, %v4553
      %v4668 = vrot.slane %v4555, 6
      %v4669 = vsel %vm4565, %v4668, %v4667
      %v4670 = vrot.slane %v4556, 5
      %v4671 = vsel %vm4568, %v4670, %v4669
      %v4672 = vrot.slane %v4557, 4
      %v4673 = vsel %vm4571, %v4672, %v4671
      %v4674 = vrot.slane %v4558, 3
      %v4675 = vsel %vm4574, %v4674, %v4673
      %v4676 = vrot.slane %v4559, 2
      %v4677 = vsel %vm4577, %v4676, %v4675
      %v4678 = vrot.slane %v4560, 1
      %v4679 = vsel %vm4580, %v4678, %v4677
      %v4680 = vpack.c.b16 %v4581, %v4581
      %v4681 = vpack.c.b16 %v4595, %v4595
      %v4682 = vpack.c.b16 %v4609, %v4609
      %v4683 = vpack.c.b16 %v4623, %v4623
      %v4684 = vpack.c.b16 %v4637, %v4637
      %v4685 = vpack.c.b16 %v4651, %v4651
      %v4686 = vpack.c.b16 %v4665, %v4665
      %v4687 = vpack.c.b16 %v4679, %v4679
      %vm4696 = vcmask 257024
      %4697 = vst.msk [vmem:[%s170] sm:$0xf] %vm4696, %v4680
      %4698 = vst.msk [vmem:[%s170 + $0x4] sm:$0xf] %vm4696, %v4681
      %4699 = vst.msk [vmem:[%s170 + $0x8] sm:$0xf] %vm4696, %v4682
      %4700 = vst.msk [vmem:[%s170 + $0xc] sm:$0xf] %vm4696, %v4683
      %4701 = vst.msk [vmem:[%s170 + $0x10] sm:$0xf] %vm4696, %v4684
      %4702 = vst.msk [vmem:[%s170 + $0x14] sm:$0xf] %vm4696, %v4685
      %4703 = vst.msk [vmem:[%s170 + $0x18] sm:$0xf] %vm4696, %v4686
      %4704 = vst.msk [vmem:[%s170 + $0x1c] sm:$0xf] %vm4696, %v4687
      %p4705 = scmp.lt.s32.totalorder %s14, 1
      %s4706 = scalar_select %p4705, %s14, 1
      %s4707 = smul.addr %s4706, 8
      %s4708 = smul.addr %s4707, 4
      %s4709 = scalar_lea.vmem %s3, %s4708
      // Predicated region
      $region33: #{_forward_impl.4} parent=31 // pred_check
        %p4710 = pneg %p100
      $region34: #{_forward_impl.4} parent=31 // pred_check_branch
        %4712 = sbr.rel (%p4710) target = $region36
      $region35: #{_forward_impl.4} parent=31 // pred_region
        _
      $region36: #{_forward_impl.4} parent=31 // pred_fallthru
        _
    $region32: #{_forward_impl.4} parent=5 // pred_fallthru
      _
    %p4713 = scmp.le.s32.totalorder 2, %s9
    // Predicated region
    $region37: #{_forward_impl.4} parent=5 // pred_check
      %p4714 = pneg %p4713
    $region38: #{_forward_impl.4} parent=5 // pred_check_branch
      %4716 = sbr.rel (%p4714) target = $region40
    $region39: #{_forward_impl.4} parent=5 // pred_region
      %s4717 = ssub.s32 %s9, 2
      // Predicated region
      $region41: #{_forward_impl.4} parent=39 // pred_check
        %p4718 = pneg %p106
      $region42: #{_forward_impl.4} parent=39 // pred_check_branch
        %4720 = sbr.rel (%p4718) target = $region44
      $region43: #{_forward_impl.4} parent=39 // pred_region
        %p4721 = scmp.lt.s32.totalorder %s15, 1
        %s4722 = scalar_select %p4721, %s15, 1
        %s4723 = smul.addr %s4722, 8
        %s4724 = smul.addr %s4723, 4
        %s4725 = scalar_lea.vmem %s3, %s4724
      $region44: #{_forward_impl.4} parent=39 // pred_fallthru
        _
    $region40: #{_forward_impl.4} parent=5 // pred_fallthru
      _
  $region6: #{_forward_impl.4} parent=0 // loop_footer
    %s13 = sadd.s32 1, %s9
  $region7: #{_forward_impl.4} parent=0 // loop_footer_branch
    %8 = sbr.rel target = $region3
  $region8: #{_forward_impl.4} parent=0 // loop_exit
    _

// kernel: _forward_impl.7
$region0: #{_forward_impl.7}
  #allocation0 [shape = 'u32[]', space=smem, size = 0x4, offset = 0x4, fixed_abs, tag = 'smem constant byte address 0x4 - core index']
  #allocation1 [shape = 'u32[144,128]{1,0:T(1,128)}', space=vmem, size = 0x12000, scoped, tag = 'internal scratch']
  %s0 = inlined_call_operand.vmem [shape: f32[2,256], index: 0, kind: input, shape index: {}]
  %s1 = inlined_call_operand.vmem [shape: f32[2,256], index: 1, kind: input, shape index: {}]
  %s2 = inlined_call_operand.vmem [shape: f32[2,256], index: 2, kind: input, shape index: {}]
  %s3 = inlined_call_operand.vmem [shape: f32[2,640], index: 3, kind: input, shape index: {}]
  %s4 = inlined_call_operand.vmem [shape: f32[2,640], index: 4, kind: input, shape index: {}]
  %s5 = inlined_call_operand.vmem [shape: f32[2,640], index: 5, kind: input, shape index: {}]
  %s6 = inlined_call_operand.hbm [shape: f32[1,1], index: 6, kind: output, shape index: {}]
  %s7 = sld [smem:[#allocation0]]
  $region34: #{_forward_impl.7} parent=0
    _
  %s9 = ssub.s32 1, %s7
  %s10 = scalar_select 0, %s9, %s7
  $region1: #{_forward_impl.7} parent=0
    #allocation2 [shape = 'u8[512]{0}', space=vmem, size = 0x400, scoped, tag = 'output window, operand 0, single buffered']
    #allocation3 [shape = 's32[1]{0}', space=sflag, size = 0x4, scoped, tag = 'scoped memory for _forward_impl.7']
    %11 = vsyncpa [#allocation3], 0
    // Predicated region
    $region2: #{_forward_impl.7} parent=1 // pred_check
      _
    $region3: #{_forward_impl.7} parent=1 // pred_check_branch
      %13 = sbr.rel (0) target = $region5
    $region4: #{_forward_impl.7} parent=1 // pred_region
      _
    $region5: #{_forward_impl.7} parent=1 // pred_fallthru
      _
    // Predicated region
    $region6: #{_forward_impl.7} parent=1 // pred_check
      _
    $region7: #{_forward_impl.7} parent=1 // pred_check_branch
      %15 = sbr.rel (0) target = $region9
    $region8: #{_forward_impl.7} parent=1 // pred_region
      _
    $region9: #{_forward_impl.7} parent=1 // pred_fallthru
      _
    // Predicated region
    $region10: #{_forward_impl.7} parent=1 // pred_check
      _
    $region11: #{_forward_impl.7} parent=1 // pred_check_branch
      %17 = sbr.rel (0) target = $region13
    $region12: #{_forward_impl.7} parent=1 // pred_region
      _
    $region13: #{_forward_impl.7} parent=1 // pred_fallthru
      _
    // Predicated region
    $region14: #{_forward_impl.7} parent=1 // pred_check
      _
    $region15: #{_forward_impl.7} parent=1 // pred_check_branch
      %19 = sbr.rel (0) target = $region17
    $region16: #{_forward_impl.7} parent=1 // pred_region
      _
    $region17: #{_forward_impl.7} parent=1 // pred_fallthru
      _
    // Predicated region
    $region18: #{_forward_impl.7} parent=1 // pred_check
      _
    $region19: #{_forward_impl.7} parent=1 // pred_check_branch
      %21 = sbr.rel (0) target = $region21
    $region20: #{_forward_impl.7} parent=1 // pred_region
      _
    $region21: #{_forward_impl.7} parent=1 // pred_fallthru
      _
    // Predicated region
    $region22: #{_forward_impl.7} parent=1 // pred_check
      _
    $region23: #{_forward_impl.7} parent=1 // pred_check_branch
      %23 = sbr.rel (0) target = $region25
    $region24: #{_forward_impl.7} parent=1 // pred_region
      _
    $region25: #{_forward_impl.7} parent=1 // pred_fallthru
      _
    %v24 = vld [vmem:[%s0] sm:$0xf]
    %v25 = vld [vmem:[%s1] sm:$0xf]
    %v26 = vld [vmem:[%s2] sm:$0xf]
    %v27 = vmax.f32 %v24, 0.0
    %v28 = vmul.f32 %v24, %v25
    %v29 = vsub.f32 %v27, %v28
    %v30 = vand.u32 2147483647, %v24
    %v31 = vsub.f32 0.0, %v30
    %v32 = vmul.f32 %v31, 1.442695
    %v33 = vpow.pop %v32
    %v34 = vadd.f32 %v33, 1.0
    %v35 = vlog2.pop %v34
    %v36 = vmul.f32 %v35, 0.6931472
    %v37 = vmul.f32 -0.5, %v33
    %v38 = vadd.f32 %v37, 1.0
    %v39 = vmul.f32 %v38, %v33
    %v40 = vand.u32 2147483647, %v33
    %vm41 = vcmp.lt.f32.partialorder %v40, 0.0004427343
    %v42 = vsel %vm41, %v39, %v36
    %v43 = vadd.f32 %v29, %v42
    %v46 = vunpack.c.l.s4 1983009808
    %v47 = vunpack.c.0.s8 %v46
    %v48 = vlaneseq
    %v49 = vshrl.u32 %v48, 7
    %v50 = vsub.s32 %v47, %v49
    %v51 = vrot.slane %v26, %v50
    %v52 = vcombine.high %v51, %v51
    %vm55 = vcmask 1041408
    %v56 = vsel %vm55, %v51, 0.0
    %v57 = vsel %vm55, %v52, 0.0
    %v58 = vadd.f32 %v56, %v57
    %59 = vadd.xlane.f32.xlu0 %v58
    %v60 = vpop.xlane.xlu0 %59
    %v61 = vrot.slane %v60, 4
    %v62 = vadd.f32 %v60, %v61
    %v63 = vrot.slane %v62, 2
    %v64 = vadd.f32 %v62, %v63
    %v65 = vrot.slane %v64, 1
    %v66 = vadd.f32 %v64, %v65
    %s67 = vtos %v66
    %s68 = smax.f32 %s67, 1.0
    %v69 = vmul.f32 %v43, %v26
    %v72 = vunpack.c.l.s4 1983009808
    %v73 = vunpack.c.0.s8 %v72
    %v74 = vlaneseq
    %v75 = vshrl.u32 %v74, 7
    %v76 = vsub.s32 %v73, %v75
    %v77 = vrot.slane %v69, %v76
    %v78 = vcombine.high %v77, %v77
    %v81 = vsel %vm55, %v77, 0.0
    %v82 = vsel %vm55, %v78, 0.0
    %v83 = vadd.f32 %v81, %v82
    %84 = vadd.xlane.f32.xlu0 %v83
    %v85 = vpop.xlane.xlu0 %84
    %v86 = vrot.slane %v85, 4
    %v87 = vadd.f32 %v85, %v86
    %v88 = vrot.slane %v87, 2
    %v89 = vadd.f32 %v87, %v88
    %v90 = vrot.slane %v89, 1
    %v91 = vadd.f32 %v89, %v90
    %s92 = vtos %v91
    %v93 = vstv %s68
    %v94 = vrcp.pop %v93
    %s95 = vtos %v94
    %s96 = smul.f32 %s92, %s95
    %v97 = vld [vmem:[%s3] sm:$0xff]
    %v98 = vld [vmem:[%s3 + $0x8] sm:$0x3]
    %v99 = vld [vmem:[%s4] sm:$0xff]
    %v100 = vld [vmem:[%s4 + $0x8] sm:$0x3]
    %v101 = vsub.f32 %v97, %v99
    %v102 = vsub.f32 %v98, %v100
    %v103 = vand.u32 2147483647, %v101
    %v104 = vand.u32 2147483647, %v102
    %vm105 = vcmp.lt.f32.partialorder %v103, 1.0
    %vm106 = vcmp.lt.f32.partialorder %v104, 1.0
    %v107 = vmul.f32 %v101, 0.5
    %v108 = vmul.f32 %v102, 0.5
    %v109 = vmul.f32 %v107, %v101
    %v110 = vmul.f32 %v108, %v102
    %v111 = vsub.f32 %v103, 0.5
    %v112 = vsub.f32 %v104, 0.5
    %v113 = vsel %vm105, %v109, %v111
    %v114 = vsel %vm106, %v110, %v112
    %v115 = vld [vmem:[%s5] sm:$0xff]
    %v116 = vld [vmem:[%s5 + $0x8] sm:$0x3]
    %v119 = vcombine.high %v115, %v115
    %v121 = vunpack.c.l.s4 1983009808
    %v122 = vunpack.c.0.s8 %v121
    %v123 = vlaneseq
    %v124 = vshrl.u32 %v123, 7
    %v125 = vsub.s32 %v122, %v124
    %v126 = vrot.slane %v115, %v125
    %v128 = vunpack.c.l.s4 1983009808
    %v129 = vunpack.c.0.s8 %v128
    %v130 = vlaneseq
    %v131 = vshrl.u32 %v130, 7
    %v132 = vsub.s32 %v129, %v131
    %v133 = vrot.slane %v119, %v132
    %v134 = vcombine.high %v126, %v126
    %v135 = vcombine.high %v133, %v133
    %v137 = vunpack.c.l.s4 1983009808
    %v138 = vunpack.c.0.s8 %v137
    %v139 = vlaneseq
    %v140 = vshrl.u32 %v139, 7
    %v141 = vsub.s32 %v138, %v140
    %v142 = vrot.slane %v116, %v141
    %v148 = vsel %vm55, %v126, 0.0
    %v149 = vsel %vm55, %v134, 0.0
    %v150 = vadd.f32 %v148, %v149
    %v151 = vsel %vm55, %v133, 0.0
    %v152 = vadd.f32 %v150, %v151
    %v153 = vsel %vm55, %v135, 0.0
    %v154 = vadd.f32 %v152, %v153
    %v155 = vsel %vm55, %v142, 0.0
    %v156 = vadd.f32 %v154, %v155
    %157 = vadd.xlane.f32.xlu0 %v156
    %v158 = vpop.xlane.xlu0 %157
    %v159 = vrot.slane %v158, 4
    %v160 = vadd.f32 %v158, %v159
    %v161 = vrot.slane %v160, 2
    %v162 = vadd.f32 %v160, %v161
    %v163 = vrot.slane %v162, 1
    %v164 = vadd.f32 %v162, %v163
    %s165 = vtos %v164
    %s166 = smul.f32 %s165, 0.25
    %s167 = smax.f32 %s166, 1.0
    %v168 = vmul.f32 %v113, %v115
    %v169 = vmul.f32 %v114, %v116
    %v172 = vcombine.high %v168, %v168
    %v174 = vunpack.c.l.s4 1983009808
    %v175 = vunpack.c.0.s8 %v174
    %v176 = vlaneseq
    %v177 = vshrl.u32 %v176, 7
    %v178 = vsub.s32 %v175, %v177
    %v179 = vrot.slane %v168, %v178
    %v181 = vunpack.c.l.s4 1983009808
    %v182 = vunpack.c.0.s8 %v181
    %v183 = vlaneseq
    %v184 = vshrl.u32 %v183, 7
    %v185 = vsub.s32 %v182, %v184
    %v186 = vrot.slane %v172, %v185
    %v187 = vcombine.high %v179, %v179
    %v188 = vcombine.high %v186, %v186
    %v190 = vunpack.c.l.s4 1983009808
    %v191 = vunpack.c.0.s8 %v190
    %v192 = vlaneseq
    %v193 = vshrl.u32 %v192, 7
    %v194 = vsub.s32 %v191, %v193
    %v195 = vrot.slane %v169, %v194
    %v201 = vsel %vm55, %v179, 0.0
    %v202 = vsel %vm55, %v187, 0.0
    %v203 = vadd.f32 %v201, %v202
    %v204 = vsel %vm55, %v186, 0.0
    %v205 = vadd.f32 %v203, %v204
    %v206 = vsel %vm55, %v188, 0.0
    %v207 = vadd.f32 %v205, %v206
    %v208 = vsel %vm55, %v195, 0.0
    %v209 = vadd.f32 %v207, %v208
    %210 = vadd.xlane.f32.xlu0 %v209
    %v211 = vpop.xlane.xlu0 %210
    %v212 = vrot.slane %v211, 4
    %v213 = vadd.f32 %v211, %v212
    %v214 = vrot.slane %v213, 2
    %v215 = vadd.f32 %v213, %v214
    %v216 = vrot.slane %v215, 1
    %v217 = vadd.f32 %v215, %v216
    %s218 = vtos %v217
    %v219 = vstv %s167
    %v220 = vrcp.pop %v219
    %s221 = vtos %v220
    %s222 = smul.f32 %s218, %s221
    %s223 = smul.f32 %s222, 10.0
    %s224 = sadd.f32 %s96, %s223
    %v225 = vstv %s224
    %vm226 = vcmask 0
    %227 = vst.msk [vmem:[#allocation2] sm:$0x1] %vm226, %v225
    // Predicated region
    $region26: #{_forward_impl.7} parent=1 // pred_check
      _
    $region27: #{_forward_impl.7} parent=1 // pred_check_branch
      %229 = sbr.rel (0) target = $region29
    $region28: #{_forward_impl.7} parent=1 // pred_region
      %s231 = ssub.s32 16, 16
      %232 = vsyncadd [#allocation3], %s231
      %s234 = sshll.u32 [#allocation2], 4
      %s235 = int_to_ptr.vmem [resolvable:$true] %s234
      %237 = dma.vmem_to_hbm [thread:$0]  %s235, 16, %s6, [#allocation3]
    $region29: #{_forward_impl.7} parent=1 // pred_fallthru
      _
    // Predicated region
    $region30: #{_forward_impl.7} parent=1 // pred_check
      _
    $region31: #{_forward_impl.7} parent=1 // pred_check_branch
      %239 = sbr.rel (0) target = $region33
    $region32: #{_forward_impl.7} parent=1 // pred_region
      %240 = dma.done [#allocation3], 16
    $region33: #{_forward_impl.7} parent=1 // pred_fallthru
      _
    %241 = vsyncpa [#allocation3], 1

</llo_original>
